<compile_context>
chip_gen: v6e
topology: v6e:2x2x1
jax: 0.10.0
libtpu: 0.0.40
codegen_flags: <defaults>
</compile_context>

<pallas_src>
import jax
import jax.numpy as jnp
from jax import lax
from jax.experimental import pallas as pl
from jax.experimental.pallas import tpu as pltpu


_LANE = 128  # TPU lane width; batch tiles are lane-dense.


def _crf_block_kernel(em_ref, tm_ref, start_ref, end_ref, transT_ref,
                      expT_ref, cmax_ref, out_ref,
                      score_ref, num_ref, ohprev_ref):
    """One (batch-tile, time-block) grid step of the CRF log-likelihood.

    Shapes inside the kernel (TS timesteps per block, T tags on sublanes, Bt=128 lanes):
      em_ref    : (TS, T, Bt)  emissions block              (input dtype, cast to f32)
      tm_ref    : (TS, 2, Bt)  row 0 = tags, row 1 = mask   int32
      start_ref : (T, 1)       start_transitions
      end_ref   : (T, 1)       end_transitions
      transT_ref: (T, T)       transitions.T                transT[t, p] = trans[p, t]
      expT_ref  : (T, T)       exp(trans[p, t] - colmax[t]).T (stabilized exp-domain)
      cmax_ref  : (T, 1)       per-destination-tag column max of transitions
      out_ref   : (1, Bt)      per-sequence log-likelihood (written at last time block)
      score_ref : (T, Bt)      forward-algorithm scores     (VMEM scratch, carried)
      num_ref   : (T, Bt)      numerator partial sums       (VMEM scratch, carried)
      ohprev_ref: (T, Bt)      one-hot of previous tags     (VMEM scratch, carried)
    """
    sb = pl.program_id(1)
    ts = em_ref.shape[0]
    T, Bt = score_ref.shape

    # ---- hoisted loop invariants (JAX does not CSE broadcast_in_dim) -------------
    start = start_ref[...]                                   # (T, 1)
    end = end_ref[...]                                       # (T, 1)
    transT = transT_ref[...]                                 # (T, T)
    expT = expT_ref[...]                                     # (T, T)
    cmax = cmax_ref[...]                                     # (T, 1)
    end_b = jnp.broadcast_to(end, (T, Bt))                   # (T, Bt)
    iota_t = lax.broadcasted_iota(jnp.int32, (T, Bt), 0)     # (T, Bt)

    def step(i, carry):
        s_global = sb * ts + i
        em = em_ref[i].astype(jnp.float32)                   # (T, Bt)
        tm = tm_ref[i]                                       # (2, Bt) int32
        tag = tm[0:1, :]                                     # (1, Bt)
        msk = tm[1:2, :].astype(jnp.float32)                 # (1, Bt)
        oh = (iota_t == tag).astype(jnp.float32)             # (T, Bt)

        @pl.when(s_global == 0)
        def _init():
            # numerator: start[tag0] + em[0, tag0] (+ end[tag0] as telescoping base)
            num_ref[...] = oh * (start + em + end_b)
            # denominator: forward-score init
            score_ref[...] = start + em

        @pl.when(s_global > 0)
        def _update():
            oh_prev = ohprev_ref[...]                        # (T, Bt)

            # ---- numerator: transitions[tag_{s-1}, t] via the MXU ----------------
            g = jnp.dot(transT, oh_prev,
                        preferred_element_type=jnp.float32,
                        precision=lax.Precision.HIGHEST)     # (T, Bt)
            # end-transition via telescoping:  sum_s m[s]*(end[tag_s]-end[tag_{s-1}])
            delta = oh * (em + g + end_b) - oh_prev * end_b
            num_ref[...] = num_ref[...] + msk * delta

            # ---- denominator: logsumexp over previous tag as exp-domain matmul ---
            sc = score_ref[...]
            m = jnp.max(sc, axis=0, keepdims=True)           # (1, Bt)
            a = jnp.exp(sc - m)                              # (T, Bt), T*Bt exps only
            s2 = jnp.dot(expT, a,
                         preferred_element_type=jnp.float32,
                         precision=lax.Precision.HIGHEST)    # (T, Bt)
            nxt = m + cmax + jnp.log(s2) + em
            score_ref[...] = jnp.where(msk > 0.5, nxt, sc)

        # carry the current one-hot to the next timestep
        ohprev_ref[...] = oh
        return carry

    lax.fori_loop(0, ts, step, 0, unroll=True)

    @pl.when(sb == pl.num_programs(1) - 1)
    def _finalize():
        final = score_ref[...] + end                         # (T, Bt)
        fmax = jnp.max(final, axis=0, keepdims=True)         # (1, Bt)
        denom = fmax + jnp.log(
            jnp.sum(jnp.exp(final - fmax), axis=0, keepdims=True))
        numer = jnp.sum(num_ref[...], axis=0, keepdims=True)
        out_ref[...] = numer - denom                         # lane-dense store


def crf_forward(emissions, tags, mask, start_transitions, end_transitions,
                transitions, reduction="mean", time_block=16):
    """Pallas-backed equivalent of CRF.forward (batch_first=False layout).

    emissions: (S, B, T)   tags: (S, B) int   mask: (S, B) {0,1}, mask[0] all ones.
    """
    if reduction not in ("none", "sum", "mean", "token_mean"):
        raise ValueError(f"invalid reduction: {reduction}")
    S, B, T = emissions.shape

    b_tile = _LANE
    nb = pl.cdiv(B, b_tile)
    b_pad = nb * b_tile

    ts = max(1, min(time_block, S))
    ns = pl.cdiv(S, ts)
    s_pad = ns * ts

    # Emissions time-major, tag-on-sublane, batch-on-lane: (S_pad, T, B_pad).
    # Kept in the input dtype (bf16 welcome; kernel upcasts to f32).
    # TODO(synk): producing emissions already (S, T, B)-major upstream (or fusing this
    # relayout via allow_input_fusion) would remove this extra HBM pass.
    em_t = jnp.pad(jnp.transpose(emissions, (0, 2, 1)),
                   ((0, s_pad - S), (0, 0), (0, b_pad - B)))

    # Merge tags + mask into a single int32 stream (one DMA per block instead of two).
    tags_i = jnp.pad(tags.astype(jnp.int32), ((0, s_pad - S), (0, b_pad - B)))
    mask_i = jnp.pad(mask.astype(jnp.int32), ((0, s_pad - S), (0, b_pad - B)))
    tm = jnp.stack([tags_i, mask_i], axis=1)                 # (S_pad, 2, B_pad)

    trans_f = transitions.astype(jnp.float32)                # (T, T)
    cmax = jnp.max(trans_f, axis=0)                          # (T,) per-destination max
    start_c = start_transitions.astype(jnp.float32).reshape(T, 1)
    end_c = end_transitions.astype(jnp.float32).reshape(T, 1)
    transT = trans_f.T                                       # (T, T)
    expT = jnp.exp(trans_f - cmax[None, :]).T                # (T, T), entries in (0, 1]
    cmax_c = cmax.reshape(T, 1)

    cost = pl.CostEstimate(
        flops=int(s_pad * b_pad * (4 * T * T + 12 * T)),
        transcendentals=int(2 * s_pad * b_pad * T),
        bytes_accessed=int(em_t.size * em_t.dtype.itemsize + tm.size * 4
                           + (2 * T * T + 3 * T) * 4 + b_pad * 4),
    )

    llh2d = pl.pallas_call(
        _crf_block_kernel,
        out_shape=jax.ShapeDtypeStruct((1, b_pad), jnp.float32),
        grid_spec=pltpu.PrefetchScalarGridSpec(
            num_scalar_prefetch=0,
            grid=(nb, ns),                                   # batch tiles outer, time inner
            in_specs=[
                pl.BlockSpec((ts, T, b_tile), lambda b, s: (s, 0, b)),  # emissions block
                pl.BlockSpec((ts, 2, b_tile), lambda b, s: (s, 0, b)),  # tags+mask block
                pl.BlockSpec((T, 1), lambda b, s: (0, 0)),              # start_transitions
                pl.BlockSpec((T, 1), lambda b, s: (0, 0)),              # end_transitions
                pl.BlockSpec((T, T), lambda b, s: (0, 0)),              # transitions.T
                pl.BlockSpec((T, T), lambda b, s: (0, 0)),              # exp(trans - cmax).T
                pl.BlockSpec((T, 1), lambda b, s: (0, 0)),              # column max
            ],
            out_specs=pl.BlockSpec((1, b_tile), lambda b, s: (0, b)),
            scratch_shapes=[
                pltpu.VMEM((T, b_tile), jnp.float32),   # forward scores
                pltpu.VMEM((T, b_tile), jnp.float32),   # numerator partial sums
                pltpu.VMEM((T, b_tile), jnp.float32),   # previous one-hot
            ],
        ),
        compiler_params=pltpu.CompilerParams(
            dimension_semantics=("parallel", "arbitrary"),
        ),
        cost_estimate=cost,
    )(em_t, tm, start_c, end_c, transT, expT, cmax_c)

    llh = llh2d[0, :B]
    if reduction == "none":
        return llh
    if reduction == "sum":
        return jnp.sum(llh)
    if reduction == "mean":
        return jnp.mean(llh)
    return jnp.sum(llh) / jnp.sum(mask.astype(jnp.float32))


def _crf_forward_ref(emissions, tags, mask, start, end, trans, reduction="mean"):
    """Pure-JAX mirror of the PyTorch reference, for correctness checking."""
    S, B, T = emissions.shape
    maskf = mask.astype(jnp.float32)
    ar = jnp.arange(B)
    # numerator
    score = start[tags[0]] + emissions[0, ar, tags[0]]
    for i in range(1, S):
        score = score + trans[tags[i - 1], tags[i]] * maskf[i]
        score = score + emissions[i, ar, tags[i]] * maskf[i]
    seq_ends = mask.astype(jnp.int32).sum(0) - 1
    last_tags = tags[seq_ends, ar]
    numerator = score + end[last_tags]
    # denominator
    sc = start + emissions[0]
    for i in range(1, S):
        nxt = jax.nn.logsumexp(
            sc[:, :, None] + trans[None] + emissions[i][:, None, :], axis=1)
        sc = jnp.where(maskf[i][:, None] > 0.5, nxt, sc)
    denom = jax.nn.logsumexp(sc + end, axis=1)
    llh = numerator - denom
    if reduction == "none":
        return llh
    if reduction == "sum":
        return llh.sum()
    if reduction == "mean":
        return llh.mean()
    return llh.sum() / maskf.sum()


# TODO(synk): CRF.decode (Viterbi / n-best backtracking) is not part of forward() and is
# not implemented here.

if __name__ == "__main__":
    S, B, T = 20, 4, 8   # seq_length, batch, num_tags
    key = jax.random.PRNGKey(0)
    k1, k2, k3, k4, k5 = jax.random.split(key, 5)

    emissions = jax.random.normal(k1, (S, B, T), dtype=jnp.float32)
    tags = jax.random.randint(k2, (S, B), 0, T, dtype=jnp.int32)
    # variable-length sequences; first timestep must be all-on (contiguous-prefix mask)
    lengths = jnp.array([20, 13, 20, 7], dtype=jnp.int32)
    mask = (jnp.arange(S)[:, None] < lengths[None, :]).astype(jnp.uint8)

    # deterministic parameter init, matching nn.init.uniform_(-0.1, 0.1) shapes
    start_transitions = jax.random.uniform(k3, (T,), minval=-0.1, maxval=0.1)
    end_transitions = jax.random.uniform(k4, (T,), minval=-0.1, maxval=0.1)
    transitions = jax.random.uniform(k5, (T, T), minval=-0.1, maxval=0.1)

    # per-sequence log-likelihoods (time_block=8 -> 3 time blocks, exercises the carry)
    llh = crf_forward(emissions, tags, mask, start_transitions,
                      end_transitions, transitions, reduction="none", time_block=8)
    llh = jax.block_until_ready(llh)
    llh_ref = _crf_forward_ref(emissions, tags, mask, start_transitions,
                               end_transitions, transitions, reduction="none")
    assert float(jnp.max(jnp.abs(llh - llh_ref))) < 2e-3, (llh, llh_ref)

    # mean reduction
    out = crf_forward(emissions, tags, mask, start_transitions,
                      end_transitions, transitions, reduction="mean", time_block=8)
    out = jax.block_until_ready(out)
    ref = _crf_forward_ref(emissions, tags, mask, start_transitions,
                           end_transitions, transitions, reduction="mean")
    assert abs(float(out) - float(ref)) < 2e-3, (float(out), float(ref))

    print("KERNEL_OK")
</pallas_src>

<mosaic_0001>
module attributes {stable_mosaic.version = 11 : i64} {
  func.func @_crf_block_kernel(%arg0: i32, %arg1: i32, %arg2: memref<8x8x128xf32, #tpu.memory_space<vmem>>, %arg3: memref<8x2x128xi32, #tpu.memory_space<vmem>>, %arg4: memref<8x1xf32, #tpu.memory_space<vmem>>, %arg5: memref<8x1xf32, #tpu.memory_space<vmem>>, %arg6: memref<8x8xf32, #tpu.memory_space<vmem>>, %arg7: memref<8x8xf32, #tpu.memory_space<vmem>>, %arg8: memref<8x1xf32, #tpu.memory_space<vmem>>, %arg9: memref<1x128xf32, #tpu.memory_space<vmem>>, %arg10: memref<8x128xf32, #tpu.memory_space<vmem>>, %arg11: memref<8x128xf32, #tpu.memory_space<vmem>>, %arg12: memref<8x128xf32, #tpu.memory_space<vmem>>) attributes {dimension_semantics = [#tpu.dimension_semantics<parallel>, #tpu.dimension_semantics<arbitrary>], iteration_bounds = array<i64: 1, 3>, scalar_prefetch = 0 : i64, scratch_operands = 3 : i64, tpu.core_type = #tpu.core_type<tc>, window_params = [{transform_indices = @transform_0, window_bounds = array<i64: 8, 8, 128>}, {transform_indices = @transform_1, window_bounds = array<i64: 8, 2, 128>}, {pipeline_mode = #tpu.pipeline_mode<synchronous>, transform_indices = @transform_2, window_bounds = array<i64: 8, 1>}, {pipeline_mode = #tpu.pipeline_mode<synchronous>, transform_indices = @transform_3, window_bounds = array<i64: 8, 1>}, {pipeline_mode = #tpu.pipeline_mode<synchronous>, transform_indices = @transform_4, window_bounds = array<i64: 8, 8>}, {pipeline_mode = #tpu.pipeline_mode<synchronous>, transform_indices = @transform_5, window_bounds = array<i64: 8, 8>}, {pipeline_mode = #tpu.pipeline_mode<synchronous>, transform_indices = @transform_6, window_bounds = array<i64: 8, 1>}, {transform_indices = @transform_7, window_bounds = array<i64: 1, 128>}]} {
    %c0 = arith.constant 0 : index
    %c0_0 = arith.constant 0 : index
    %0 = vector.load %arg4[%c0, %c0_0] : memref<8x1xf32, #tpu.memory_space<vmem>>, vector<8x1xf32>
    %c0_1 = arith.constant 0 : index
    %c0_2 = arith.constant 0 : index
    %1 = vector.load %arg5[%c0_1, %c0_2] : memref<8x1xf32, #tpu.memory_space<vmem>>, vector<8x1xf32>
    %c0_3 = arith.constant 0 : index
    %c0_4 = arith.constant 0 : index
    %2 = vector.load %arg6[%c0_3, %c0_4] : memref<8x8xf32, #tpu.memory_space<vmem>>, vector<8x8xf32>
    %c0_5 = arith.constant 0 : index
    %c0_6 = arith.constant 0 : index
    %3 = vector.load %arg7[%c0_5, %c0_6] : memref<8x8xf32, #tpu.memory_space<vmem>>, vector<8x8xf32>
    %c0_7 = arith.constant 0 : index
    %c0_8 = arith.constant 0 : index
    %4 = vector.load %arg8[%c0_7, %c0_8] : memref<8x1xf32, #tpu.memory_space<vmem>>, vector<8x1xf32>
    %5 = vector.shape_cast %1 : vector<8x1xf32> to vector<8x1xf32>
    %6 = vector.broadcast %5 : vector<8x1xf32> to vector<8x128xf32>
    %7 = tpu.iota {dimensions = array<i32: 0>} : vector<8x128xi32>
    %c0_i32 = arith.constant 0 : i32
    %c8_i32 = arith.constant 8 : i32
    %8 = arith.muli %arg1, %c8_i32 : i32
    %9 = arith.addi %8, %c0_i32 : i32
    %10 = arith.index_cast %c0_i32 : i32 to index
    %c0_9 = arith.constant 0 : index
    %c0_10 = arith.constant 0 : index
    %11 = vector.load %arg2[%10, %c0_9, %c0_10] : memref<8x8x128xf32, #tpu.memory_space<vmem>>, vector<1x8x128xf32>
    %12 = vector.shape_cast %11 : vector<1x8x128xf32> to vector<8x128xf32>
    %13 = arith.index_cast %c0_i32 : i32 to index
    %c0_11 = arith.constant 0 : index
    %c0_12 = arith.constant 0 : index
    %14 = vector.load %arg3[%13, %c0_11, %c0_12] : memref<8x2x128xi32, #tpu.memory_space<vmem>>, vector<1x2x128xi32>
    %15 = vector.shape_cast %14 : vector<1x2x128xi32> to vector<2x128xi32>
    %16 = vector.extract_strided_slice %15 {offsets = [0, 0], sizes = [1, 128], strides = [1, 1]} : vector<2x128xi32> to vector<1x128xi32>
    %17 = vector.extract_strided_slice %15 {offsets = [1, 0], sizes = [1, 128], strides = [1, 1]} : vector<2x128xi32> to vector<1x128xi32>
    %18 = arith.sitofp %17 : vector<1x128xi32> to vector<1x128xf32>
    %19 = vector.broadcast %16 : vector<1x128xi32> to vector<8x128xi32>
    %20 = arith.cmpi eq, %7, %19 : vector<8x128xi32>
    %21 = arith.extui %20 : vector<8x128xi1> to vector<8x128xi32>
    %22 = arith.sitofp %21 : vector<8x128xi32> to vector<8x128xf32>
    %c0_i32_13 = arith.constant 0 : i32
    %23 = arith.cmpi eq, %9, %c0_i32_13 : i32
    %24 = arith.extui %23 : i1 to i32
    %c0_i32_14 = arith.constant 0 : i32
    %25 = arith.cmpi ne, %24, %c0_i32_14 : i32
    scf.if %25 {
      %187 = vector.broadcast %0 : vector<8x1xf32> to vector<8x128xf32>
      %188 = arith.addf %187, %12 : vector<8x128xf32>
      %189 = arith.addf %188, %6 : vector<8x128xf32>
      %190 = arith.mulf %22, %189 : vector<8x128xf32>
      %c0_99 = arith.constant 0 : index
      %c0_100 = arith.constant 0 : index
      %191 = vector.load %arg11[%c0_99, %c0_100] : memref<8x128xf32, #tpu.memory_space<vmem>>, vector<8x128xf32>
      tpu.vector_store %arg11[%c0_99, %c0_100], %190 {strides = array<i32>} : memref<8x128xf32, #tpu.memory_space<vmem>>, vector<8x128xf32>,
      %192 = vector.broadcast %0 : vector<8x1xf32> to vector<8x128xf32>
      %193 = arith.addf %192, %12 : vector<8x128xf32>
      %c0_101 = arith.constant 0 : index
      %c0_102 = arith.constant 0 : index
      %194 = vector.load %arg10[%c0_101, %c0_102] : memref<8x128xf32, #tpu.memory_space<vmem>>, vector<8x128xf32>
      tpu.vector_store %arg10[%c0_101, %c0_102], %193 {strides = array<i32>} : memref<8x128xf32, #tpu.memory_space<vmem>>, vector<8x128xf32>,
    } else {
    }
    %c0_i32_15 = arith.constant 0 : i32
    %26 = arith.cmpi sgt, %9, %c0_i32_15 : i32
    %27 = arith.extui %26 : i1 to i32
    %c0_i32_16 = arith.constant 0 : i32
    %28 = arith.cmpi ne, %27, %c0_i32_16 : i32
    scf.if %28 {
      %c0_99 = arith.constant 0 : index
      %c0_100 = arith.constant 0 : index
      %187 = vector.load %arg12[%c0_99, %c0_100] : memref<8x128xf32, #tpu.memory_space<vmem>>, vector<8x128xf32>
      %cst = arith.constant dense<0.000000e+00> : vector<8x128xf32>
      %188 = tpu.matmul %2, %187, %cst {dimension_numbers = #tpu.dot_dimension_numbers<[1], [0], [0], [1], [0, 0, 1, 1], [], []>, precision = #tpu.contract_precision<fp32>} : vector<8x8xf32>, vector<8x128xf32>, vector<8x128xf32> -> vector<8x128xf32>
      %189 = arith.addf %12, %188 : vector<8x128xf32>
      %190 = arith.addf %189, %6 : vector<8x128xf32>
      %191 = arith.mulf %22, %190 : vector<8x128xf32>
      %192 = arith.mulf %187, %6 : vector<8x128xf32>
      %193 = arith.subf %191, %192 : vector<8x128xf32>
      %c0_101 = arith.constant 0 : index
      %c0_102 = arith.constant 0 : index
      %194 = vector.load %arg11[%c0_101, %c0_102] : memref<8x128xf32, #tpu.memory_space<vmem>>, vector<8x128xf32>
      %195 = vector.broadcast %18 : vector<1x128xf32> to vector<8x128xf32>
      %196 = arith.mulf %195, %193 : vector<8x128xf32>
      %197 = arith.addf %194, %196 : vector<8x128xf32>
      %c0_103 = arith.constant 0 : index
      %c0_104 = arith.constant 0 : index
      %198 = vector.load %arg11[%c0_103, %c0_104] : memref<8x128xf32, #tpu.memory_space<vmem>>, vector<8x128xf32>
      tpu.vector_store %arg11[%c0_103, %c0_104], %197 {strides = array<i32>} : memref<8x128xf32, #tpu.memory_space<vmem>>, vector<8x128xf32>,
      %c0_105 = arith.constant 0 : index
      %c0_106 = arith.constant 0 : index
      %199 = vector.load %arg10[%c0_105, %c0_106] : memref<8x128xf32, #tpu.memory_space<vmem>>, vector<8x128xf32>
      %cst_107 = arith.constant dense<0xFF800000> : vector<128xf32>
      %200 = vector.multi_reduction <maximumf>, %199, %cst_107 [0] : vector<8x128xf32> to vector<128xf32>
      %201 = vector.shape_cast %200 : vector<128xf32> to vector<1x128xf32>
      %202 = vector.broadcast %201 : vector<1x128xf32> to vector<8x128xf32>
      %203 = arith.subf %199, %202 : vector<8x128xf32>
      %204 = math.exp %203 : vector<8x128xf32>
      %cst_108 = arith.constant dense<0.000000e+00> : vector<8x128xf32>
      %205 = tpu.matmul %3, %204, %cst_108 {dimension_numbers = #tpu.dot_dimension_numbers<[1], [0], [0], [1], [0, 0, 1, 1], [], []>, precision = #tpu.contract_precision<fp32>} : vector<8x8xf32>, vector<8x128xf32>, vector<8x128xf32> -> vector<8x128xf32>
      %206 = vector.broadcast %201 : vector<1x128xf32> to vector<8x128xf32>
      %207 = vector.broadcast %4 : vector<8x1xf32> to vector<8x128xf32>
      %208 = arith.addf %206, %207 : vector<8x128xf32>
      %209 = math.log %205 : vector<8x128xf32>
      %210 = arith.addf %208, %209 : vector<8x128xf32>
      %211 = arith.addf %210, %12 : vector<8x128xf32>
      %cst_109 = arith.constant 5.000000e-01 : f32
      %212 = vector.broadcast %cst_109 : f32 to vector<1x128xf32>
      %213 = arith.cmpf ogt, %18, %212 : vector<1x128xf32>
      %214 = vector.shape_cast %213 : vector<1x128xi1> to vector<1x128xi1>
      %215 = vector.broadcast %214 : vector<1x128xi1> to vector<8x128xi1>
      %216 = arith.select %215, %211, %199 : vector<8x128xi1>, vector<8x128xf32>
      %c0_110 = arith.constant 0 : index
      %c0_111 = arith.constant 0 : index
      %217 = vector.load %arg10[%c0_110, %c0_111] : memref<8x128xf32, #tpu.memory_space<vmem>>, vector<8x128xf32>
      tpu.vector_store %arg10[%c0_110, %c0_111], %216 {strides = array<i32>} : memref<8x128xf32, #tpu.memory_space<vmem>>, vector<8x128xf32>,
    } else {
    }
    %c0_17 = arith.constant 0 : index
    %c0_18 = arith.constant 0 : index
    %29 = vector.load %arg12[%c0_17, %c0_18] : memref<8x128xf32, #tpu.memory_space<vmem>>, vector<8x128xf32>
    tpu.vector_store %arg12[%c0_17, %c0_18], %22 {strides = array<i32>} : memref<8x128xf32, #tpu.memory_space<vmem>>, vector<8x128xf32>,
    %c1_i32 = arith.constant 1 : i32
    %c8_i32_19 = arith.constant 8 : i32
    %30 = arith.muli %arg1, %c8_i32_19 : i32
    %31 = arith.addi %30, %c1_i32 : i32
    %32 = arith.index_cast %c1_i32 : i32 to index
    %c0_20 = arith.constant 0 : index
    %c0_21 = arith.constant 0 : index
    %33 = vector.load %arg2[%32, %c0_20, %c0_21] : memref<8x8x128xf32, #tpu.memory_space<vmem>>, vector<1x8x128xf32>
    %34 = vector.shape_cast %33 : vector<1x8x128xf32> to vector<8x128xf32>
    %35 = arith.index_cast %c1_i32 : i32 to index
    %c0_22 = arith.constant 0 : index
    %c0_23 = arith.constant 0 : index
    %36 = vector.load %arg3[%35, %c0_22, %c0_23] : memref<8x2x128xi32, #tpu.memory_space<vmem>>, vector<1x2x128xi32>
    %37 = vector.shape_cast %36 : vector<1x2x128xi32> to vector<2x128xi32>
    %38 = vector.extract_strided_slice %37 {offsets = [0, 0], sizes = [1, 128], strides = [1, 1]} : vector<2x128xi32> to vector<1x128xi32>
    %39 = vector.extract_strided_slice %37 {offsets = [1, 0], sizes = [1, 128], strides = [1, 1]} : vector<2x128xi32> to vector<1x128xi32>
    %40 = arith.sitofp %39 : vector<1x128xi32> to vector<1x128xf32>
    %41 = vector.broadcast %38 : vector<1x128xi32> to vector<8x128xi32>
    %42 = arith.cmpi eq, %7, %41 : vector<8x128xi32>
    %43 = arith.extui %42 : vector<8x128xi1> to vector<8x128xi32>
    %44 = arith.sitofp %43 : vector<8x128xi32> to vector<8x128xf32>
    %c0_i32_24 = arith.constant 0 : i32
    %45 = arith.cmpi eq, %31, %c0_i32_24 : i32
    %46 = arith.extui %45 : i1 to i32
    %c0_i32_25 = arith.constant 0 : i32
    %47 = arith.cmpi ne, %46, %c0_i32_25 : i32
    scf.if %47 {
      %187 = vector.broadcast %0 : vector<8x1xf32> to vector<8x128xf32>
      %188 = arith.addf %187, %34 : vector<8x128xf32>
      %189 = arith.addf %188, %6 : vector<8x128xf32>
      %190 = arith.mulf %44, %189 : vector<8x128xf32>
      %c0_99 = arith.constant 0 : index
      %c0_100 = arith.constant 0 : index
      %191 = vector.load %arg11[%c0_99, %c0_100] : memref<8x128xf32, #tpu.memory_space<vmem>>, vector<8x128xf32>
      tpu.vector_store %arg11[%c0_99, %c0_100], %190 {strides = array<i32>} : memref<8x128xf32, #tpu.memory_space<vmem>>, vector<8x128xf32>,
      %192 = vector.broadcast %0 : vector<8x1xf32> to vector<8x128xf32>
      %193 = arith.addf %192, %34 : vector<8x128xf32>
      %c0_101 = arith.constant 0 : index
      %c0_102 = arith.constant 0 : index
      %194 = vector.load %arg10[%c0_101, %c0_102] : memref<8x128xf32, #tpu.memory_space<vmem>>, vector<8x128xf32>
      tpu.vector_store %arg10[%c0_101, %c0_102], %193 {strides = array<i32>} : memref<8x128xf32, #tpu.memory_space<vmem>>, vector<8x128xf32>,
    } else {
    }
    %c0_i32_26 = arith.constant 0 : i32
    %48 = arith.cmpi sgt, %31, %c0_i32_26 : i32
    %49 = arith.extui %48 : i1 to i32
    %c0_i32_27 = arith.constant 0 : i32
    %50 = arith.cmpi ne, %49, %c0_i32_27 : i32
    scf.if %50 {
      %c0_99 = arith.constant 0 : index
      %c0_100 = arith.constant 0 : index
      %187 = vector.load %arg12[%c0_99, %c0_100] : memref<8x128xf32, #tpu.memory_space<vmem>>, vector<8x128xf32>
      %cst = arith.constant dense<0.000000e+00> : vector<8x128xf32>
      %188 = tpu.matmul %2, %187, %cst {dimension_numbers = #tpu.dot_dimension_numbers<[1], [0], [0], [1], [0, 0, 1, 1], [], []>, precision = #tpu.contract_precision<fp32>} : vector<8x8xf32>, vector<8x128xf32>, vector<8x128xf32> -> vector<8x128xf32>
      %189 = arith.addf %34, %188 : vector<8x128xf32>
      %190 = arith.addf %189, %6 : vector<8x128xf32>
      %191 = arith.mulf %44, %190 : vector<8x128xf32>
      %192 = arith.mulf %187, %6 : vector<8x128xf32>
      %193 = arith.subf %191, %192 : vector<8x128xf32>
      %c0_101 = arith.constant 0 : index
      %c0_102 = arith.constant 0 : index
      %194 = vector.load %arg11[%c0_101, %c0_102] : memref<8x128xf32, #tpu.memory_space<vmem>>, vector<8x128xf32>
      %195 = vector.broadcast %40 : vector<1x128xf32> to vector<8x128xf32>
      %196 = arith.mulf %195, %193 : vector<8x128xf32>
      %197 = arith.addf %194, %196 : vector<8x128xf32>
      %c0_103 = arith.constant 0 : index
      %c0_104 = arith.constant 0 : index
      %198 = vector.load %arg11[%c0_103, %c0_104] : memref<8x128xf32, #tpu.memory_space<vmem>>, vector<8x128xf32>
      tpu.vector_store %arg11[%c0_103, %c0_104], %197 {strides = array<i32>} : memref<8x128xf32, #tpu.memory_space<vmem>>, vector<8x128xf32>,
      %c0_105 = arith.constant 0 : index
      %c0_106 = arith.constant 0 : index
      %199 = vector.load %arg10[%c0_105, %c0_106] : memref<8x128xf32, #tpu.memory_space<vmem>>, vector<8x128xf32>
      %cst_107 = arith.constant dense<0xFF800000> : vector<128xf32>
      %200 = vector.multi_reduction <maximumf>, %199, %cst_107 [0] : vector<8x128xf32> to vector<128xf32>
      %201 = vector.shape_cast %200 : vector<128xf32> to vector<1x128xf32>
      %202 = vector.broadcast %201 : vector<1x128xf32> to vector<8x128xf32>
      %203 = arith.subf %199, %202 : vector<8x128xf32>
      %204 = math.exp %203 : vector<8x128xf32>
      %cst_108 = arith.constant dense<0.000000e+00> : vector<8x128xf32>
      %205 = tpu.matmul %3, %204, %cst_108 {dimension_numbers = #tpu.dot_dimension_numbers<[1], [0], [0], [1], [0, 0, 1, 1], [], []>, precision = #tpu.contract_precision<fp32>} : vector<8x8xf32>, vector<8x128xf32>, vector<8x128xf32> -> vector<8x128xf32>
      %206 = vector.broadcast %201 : vector<1x128xf32> to vector<8x128xf32>
      %207 = vector.broadcast %4 : vector<8x1xf32> to vector<8x128xf32>
      %208 = arith.addf %206, %207 : vector<8x128xf32>
      %209 = math.log %205 : vector<8x128xf32>
      %210 = arith.addf %208, %209 : vector<8x128xf32>
      %211 = arith.addf %210, %34 : vector<8x128xf32>
      %cst_109 = arith.constant 5.000000e-01 : f32
      %212 = vector.broadcast %cst_109 : f32 to vector<1x128xf32>
      %213 = arith.cmpf ogt, %40, %212 : vector<1x128xf32>
      %214 = vector.shape_cast %213 : vector<1x128xi1> to vector<1x128xi1>
      %215 = vector.broadcast %214 : vector<1x128xi1> to vector<8x128xi1>
      %216 = arith.select %215, %211, %199 : vector<8x128xi1>, vector<8x128xf32>
      %c0_110 = arith.constant 0 : index
      %c0_111 = arith.constant 0 : index
      %217 = vector.load %arg10[%c0_110, %c0_111] : memref<8x128xf32, #tpu.memory_space<vmem>>, vector<8x128xf32>
      tpu.vector_store %arg10[%c0_110, %c0_111], %216 {strides = array<i32>} : memref<8x128xf32, #tpu.memory_space<vmem>>, vector<8x128xf32>,
    } else {
    }
    %c0_28 = arith.constant 0 : index
    %c0_29 = arith.constant 0 : index
    %51 = vector.load %arg12[%c0_28, %c0_29] : memref<8x128xf32, #tpu.memory_space<vmem>>, vector<8x128xf32>
    tpu.vector_store %arg12[%c0_28, %c0_29], %44 {strides = array<i32>} : memref<8x128xf32, #tpu.memory_space<vmem>>, vector<8x128xf32>,
    %c2_i32 = arith.constant 2 : i32
    %c8_i32_30 = arith.constant 8 : i32
    %52 = arith.muli %arg1, %c8_i32_30 : i32
    %53 = arith.addi %52, %c2_i32 : i32
    %54 = arith.index_cast %c2_i32 : i32 to index
    %c0_31 = arith.constant 0 : index
    %c0_32 = arith.constant 0 : index
    %55 = vector.load %arg2[%54, %c0_31, %c0_32] : memref<8x8x128xf32, #tpu.memory_space<vmem>>, vector<1x8x128xf32>
    %56 = vector.shape_cast %55 : vector<1x8x128xf32> to vector<8x128xf32>
    %57 = arith.index_cast %c2_i32 : i32 to index
    %c0_33 = arith.constant 0 : index
    %c0_34 = arith.constant 0 : index
    %58 = vector.load %arg3[%57, %c0_33, %c0_34] : memref<8x2x128xi32, #tpu.memory_space<vmem>>, vector<1x2x128xi32>
    %59 = vector.shape_cast %58 : vector<1x2x128xi32> to vector<2x128xi32>
    %60 = vector.extract_strided_slice %59 {offsets = [0, 0], sizes = [1, 128], strides = [1, 1]} : vector<2x128xi32> to vector<1x128xi32>
    %61 = vector.extract_strided_slice %59 {offsets = [1, 0], sizes = [1, 128], strides = [1, 1]} : vector<2x128xi32> to vector<1x128xi32>
    %62 = arith.sitofp %61 : vector<1x128xi32> to vector<1x128xf32>
    %63 = vector.broadcast %60 : vector<1x128xi32> to vector<8x128xi32>
    %64 = arith.cmpi eq, %7, %63 : vector<8x128xi32>
    %65 = arith.extui %64 : vector<8x128xi1> to vector<8x128xi32>
    %66 = arith.sitofp %65 : vector<8x128xi32> to vector<8x128xf32>
    %c0_i32_35 = arith.constant 0 : i32
    %67 = arith.cmpi eq, %53, %c0_i32_35 : i32
    %68 = arith.extui %67 : i1 to i32
    %c0_i32_36 = arith.constant 0 : i32
    %69 = arith.cmpi ne, %68, %c0_i32_36 : i32
    scf.if %69 {
      %187 = vector.broadcast %0 : vector<8x1xf32> to vector<8x128xf32>
      %188 = arith.addf %187, %56 : vector<8x128xf32>
      %189 = arith.addf %188, %6 : vector<8x128xf32>
      %190 = arith.mulf %66, %189 : vector<8x128xf32>
      %c0_99 = arith.constant 0 : index
      %c0_100 = arith.constant 0 : index
      %191 = vector.load %arg11[%c0_99, %c0_100] : memref<8x128xf32, #tpu.memory_space<vmem>>, vector<8x128xf32>
      tpu.vector_store %arg11[%c0_99, %c0_100], %190 {strides = array<i32>} : memref<8x128xf32, #tpu.memory_space<vmem>>, vector<8x128xf32>,
      %192 = vector.broadcast %0 : vector<8x1xf32> to vector<8x128xf32>
      %193 = arith.addf %192, %56 : vector<8x128xf32>
      %c0_101 = arith.constant 0 : index
      %c0_102 = arith.constant 0 : index
      %194 = vector.load %arg10[%c0_101, %c0_102] : memref<8x128xf32, #tpu.memory_space<vmem>>, vector<8x128xf32>
      tpu.vector_store %arg10[%c0_101, %c0_102], %193 {strides = array<i32>} : memref<8x128xf32, #tpu.memory_space<vmem>>, vector<8x128xf32>,
    } else {
    }
    %c0_i32_37 = arith.constant 0 : i32
    %70 = arith.cmpi sgt, %53, %c0_i32_37 : i32
    %71 = arith.extui %70 : i1 to i32
    %c0_i32_38 = arith.constant 0 : i32
    %72 = arith.cmpi ne, %71, %c0_i32_38 : i32
    scf.if %72 {
      %c0_99 = arith.constant 0 : index
      %c0_100 = arith.constant 0 : index
      %187 = vector.load %arg12[%c0_99, %c0_100] : memref<8x128xf32, #tpu.memory_space<vmem>>, vector<8x128xf32>
      %cst = arith.constant dense<0.000000e+00> : vector<8x128xf32>
      %188 = tpu.matmul %2, %187, %cst {dimension_numbers = #tpu.dot_dimension_numbers<[1], [0], [0], [1], [0, 0, 1, 1], [], []>, precision = #tpu.contract_precision<fp32>} : vector<8x8xf32>, vector<8x128xf32>, vector<8x128xf32> -> vector<8x128xf32>
      %189 = arith.addf %56, %188 : vector<8x128xf32>
      %190 = arith.addf %189, %6 : vector<8x128xf32>
      %191 = arith.mulf %66, %190 : vector<8x128xf32>
      %192 = arith.mulf %187, %6 : vector<8x128xf32>
      %193 = arith.subf %191, %192 : vector<8x128xf32>
      %c0_101 = arith.constant 0 : index
      %c0_102 = arith.constant 0 : index
      %194 = vector.load %arg11[%c0_101, %c0_102] : memref<8x128xf32, #tpu.memory_space<vmem>>, vector<8x128xf32>
      %195 = vector.broadcast %62 : vector<1x128xf32> to vector<8x128xf32>
      %196 = arith.mulf %195, %193 : vector<8x128xf32>
      %197 = arith.addf %194, %196 : vector<8x128xf32>
      %c0_103 = arith.constant 0 : index
      %c0_104 = arith.constant 0 : index
      %198 = vector.load %arg11[%c0_103, %c0_104] : memref<8x128xf32, #tpu.memory_space<vmem>>, vector<8x128xf32>
      tpu.vector_store %arg11[%c0_103, %c0_104], %197 {strides = array<i32>} : memref<8x128xf32, #tpu.memory_space<vmem>>, vector<8x128xf32>,
      %c0_105 = arith.constant 0 : index
      %c0_106 = arith.constant 0 : index
      %199 = vector.load %arg10[%c0_105, %c0_106] : memref<8x128xf32, #tpu.memory_space<vmem>>, vector<8x128xf32>
      %cst_107 = arith.constant dense<0xFF800000> : vector<128xf32>
      %200 = vector.multi_reduction <maximumf>, %199, %cst_107 [0] : vector<8x128xf32> to vector<128xf32>
      %201 = vector.shape_cast %200 : vector<128xf32> to vector<1x128xf32>
      %202 = vector.broadcast %201 : vector<1x128xf32> to vector<8x128xf32>
      %203 = arith.subf %199, %202 : vector<8x128xf32>
      %204 = math.exp %203 : vector<8x128xf32>
      %cst_108 = arith.constant dense<0.000000e+00> : vector<8x128xf32>
      %205 = tpu.matmul %3, %204, %cst_108 {dimension_numbers = #tpu.dot_dimension_numbers<[1], [0], [0], [1], [0, 0, 1, 1], [], []>, precision = #tpu.contract_precision<fp32>} : vector<8x8xf32>, vector<8x128xf32>, vector<8x128xf32> -> vector<8x128xf32>
      %206 = vector.broadcast %201 : vector<1x128xf32> to vector<8x128xf32>
      %207 = vector.broadcast %4 : vector<8x1xf32> to vector<8x128xf32>
      %208 = arith.addf %206, %207 : vector<8x128xf32>
      %209 = math.log %205 : vector<8x128xf32>
      %210 = arith.addf %208, %209 : vector<8x128xf32>
      %211 = arith.addf %210, %56 : vector<8x128xf32>
      %cst_109 = arith.constant 5.000000e-01 : f32
      %212 = vector.broadcast %cst_109 : f32 to vector<1x128xf32>
      %213 = arith.cmpf ogt, %62, %212 : vector<1x128xf32>
      %214 = vector.shape_cast %213 : vector<1x128xi1> to vector<1x128xi1>
      %215 = vector.broadcast %214 : vector<1x128xi1> to vector<8x128xi1>
      %216 = arith.select %215, %211, %199 : vector<8x128xi1>, vector<8x128xf32>
      %c0_110 = arith.constant 0 : index
      %c0_111 = arith.constant 0 : index
      %217 = vector.load %arg10[%c0_110, %c0_111] : memref<8x128xf32, #tpu.memory_space<vmem>>, vector<8x128xf32>
      tpu.vector_store %arg10[%c0_110, %c0_111], %216 {strides = array<i32>} : memref<8x128xf32, #tpu.memory_space<vmem>>, vector<8x128xf32>,
    } else {
    }
    %c0_39 = arith.constant 0 : index
    %c0_40 = arith.constant 0 : index
    %73 = vector.load %arg12[%c0_39, %c0_40] : memref<8x128xf32, #tpu.memory_space<vmem>>, vector<8x128xf32>
    tpu.vector_store %arg12[%c0_39, %c0_40], %66 {strides = array<i32>} : memref<8x128xf32, #tpu.memory_space<vmem>>, vector<8x128xf32>,
    %c3_i32 = arith.constant 3 : i32
    %c8_i32_41 = arith.constant 8 : i32
    %74 = arith.muli %arg1, %c8_i32_41 : i32
    %75 = arith.addi %74, %c3_i32 : i32
    %76 = arith.index_cast %c3_i32 : i32 to index
    %c0_42 = arith.constant 0 : index
    %c0_43 = arith.constant 0 : index
    %77 = vector.load %arg2[%76, %c0_42, %c0_43] : memref<8x8x128xf32, #tpu.memory_space<vmem>>, vector<1x8x128xf32>
    %78 = vector.shape_cast %77 : vector<1x8x128xf32> to vector<8x128xf32>
    %79 = arith.index_cast %c3_i32 : i32 to index
    %c0_44 = arith.constant 0 : index
    %c0_45 = arith.constant 0 : index
    %80 = vector.load %arg3[%79, %c0_44, %c0_45] : memref<8x2x128xi32, #tpu.memory_space<vmem>>, vector<1x2x128xi32>
    %81 = vector.shape_cast %80 : vector<1x2x128xi32> to vector<2x128xi32>
    %82 = vector.extract_strided_slice %81 {offsets = [0, 0], sizes = [1, 128], strides = [1, 1]} : vector<2x128xi32> to vector<1x128xi32>
    %83 = vector.extract_strided_slice %81 {offsets = [1, 0], sizes = [1, 128], strides = [1, 1]} : vector<2x128xi32> to vector<1x128xi32>
    %84 = arith.sitofp %83 : vector<1x128xi32> to vector<1x128xf32>
    %85 = vector.broadcast %82 : vector<1x128xi32> to vector<8x128xi32>
    %86 = arith.cmpi eq, %7, %85 : vector<8x128xi32>
    %87 = arith.extui %86 : vector<8x128xi1> to vector<8x128xi32>
    %88 = arith.sitofp %87 : vector<8x128xi32> to vector<8x128xf32>
    %c0_i32_46 = arith.constant 0 : i32
    %89 = arith.cmpi eq, %75, %c0_i32_46 : i32
    %90 = arith.extui %89 : i1 to i32
    %c0_i32_47 = arith.constant 0 : i32
    %91 = arith.cmpi ne, %90, %c0_i32_47 : i32
    scf.if %91 {
      %187 = vector.broadcast %0 : vector<8x1xf32> to vector<8x128xf32>
      %188 = arith.addf %187, %78 : vector<8x128xf32>
      %189 = arith.addf %188, %6 : vector<8x128xf32>
      %190 = arith.mulf %88, %189 : vector<8x128xf32>
      %c0_99 = arith.constant 0 : index
      %c0_100 = arith.constant 0 : index
      %191 = vector.load %arg11[%c0_99, %c0_100] : memref<8x128xf32, #tpu.memory_space<vmem>>, vector<8x128xf32>
      tpu.vector_store %arg11[%c0_99, %c0_100], %190 {strides = array<i32>} : memref<8x128xf32, #tpu.memory_space<vmem>>, vector<8x128xf32>,
      %192 = vector.broadcast %0 : vector<8x1xf32> to vector<8x128xf32>
      %193 = arith.addf %192, %78 : vector<8x128xf32>
      %c0_101 = arith.constant 0 : index
      %c0_102 = arith.constant 0 : index
      %194 = vector.load %arg10[%c0_101, %c0_102] : memref<8x128xf32, #tpu.memory_space<vmem>>, vector<8x128xf32>
      tpu.vector_store %arg10[%c0_101, %c0_102], %193 {strides = array<i32>} : memref<8x128xf32, #tpu.memory_space<vmem>>, vector<8x128xf32>,
    } else {
    }
    %c0_i32_48 = arith.constant 0 : i32
    %92 = arith.cmpi sgt, %75, %c0_i32_48 : i32
    %93 = arith.extui %92 : i1 to i32
    %c0_i32_49 = arith.constant 0 : i32
    %94 = arith.cmpi ne, %93, %c0_i32_49 : i32
    scf.if %94 {
      %c0_99 = arith.constant 0 : index
      %c0_100 = arith.constant 0 : index
      %187 = vector.load %arg12[%c0_99, %c0_100] : memref<8x128xf32, #tpu.memory_space<vmem>>, vector<8x128xf32>
      %cst = arith.constant dense<0.000000e+00> : vector<8x128xf32>
      %188 = tpu.matmul %2, %187, %cst {dimension_numbers = #tpu.dot_dimension_numbers<[1], [0], [0], [1], [0, 0, 1, 1], [], []>, precision = #tpu.contract_precision<fp32>} : vector<8x8xf32>, vector<8x128xf32>, vector<8x128xf32> -> vector<8x128xf32>
      %189 = arith.addf %78, %188 : vector<8x128xf32>
      %190 = arith.addf %189, %6 : vector<8x128xf32>
      %191 = arith.mulf %88, %190 : vector<8x128xf32>
      %192 = arith.mulf %187, %6 : vector<8x128xf32>
      %193 = arith.subf %191, %192 : vector<8x128xf32>
      %c0_101 = arith.constant 0 : index
      %c0_102 = arith.constant 0 : index
      %194 = vector.load %arg11[%c0_101, %c0_102] : memref<8x128xf32, #tpu.memory_space<vmem>>, vector<8x128xf32>
      %195 = vector.broadcast %84 : vector<1x128xf32> to vector<8x128xf32>
      %196 = arith.mulf %195, %193 : vector<8x128xf32>
      %197 = arith.addf %194, %196 : vector<8x128xf32>
      %c0_103 = arith.constant 0 : index
      %c0_104 = arith.constant 0 : index
      %198 = vector.load %arg11[%c0_103, %c0_104] : memref<8x128xf32, #tpu.memory_space<vmem>>, vector<8x128xf32>
      tpu.vector_store %arg11[%c0_103, %c0_104], %197 {strides = array<i32>} : memref<8x128xf32, #tpu.memory_space<vmem>>, vector<8x128xf32>,
      %c0_105 = arith.constant 0 : index
      %c0_106 = arith.constant 0 : index
      %199 = vector.load %arg10[%c0_105, %c0_106] : memref<8x128xf32, #tpu.memory_space<vmem>>, vector<8x128xf32>
      %cst_107 = arith.constant dense<0xFF800000> : vector<128xf32>
      %200 = vector.multi_reduction <maximumf>, %199, %cst_107 [0] : vector<8x128xf32> to vector<128xf32>
      %201 = vector.shape_cast %200 : vector<128xf32> to vector<1x128xf32>
      %202 = vector.broadcast %201 : vector<1x128xf32> to vector<8x128xf32>
      %203 = arith.subf %199, %202 : vector<8x128xf32>
      %204 = math.exp %203 : vector<8x128xf32>
      %cst_108 = arith.constant dense<0.000000e+00> : vector<8x128xf32>
      %205 = tpu.matmul %3, %204, %cst_108 {dimension_numbers = #tpu.dot_dimension_numbers<[1], [0], [0], [1], [0, 0, 1, 1], [], []>, precision = #tpu.contract_precision<fp32>} : vector<8x8xf32>, vector<8x128xf32>, vector<8x128xf32> -> vector<8x128xf32>
      %206 = vector.broadcast %201 : vector<1x128xf32> to vector<8x128xf32>
      %207 = vector.broadcast %4 : vector<8x1xf32> to vector<8x128xf32>
      %208 = arith.addf %206, %207 : vector<8x128xf32>
      %209 = math.log %205 : vector<8x128xf32>
      %210 = arith.addf %208, %209 : vector<8x128xf32>
      %211 = arith.addf %210, %78 : vector<8x128xf32>
      %cst_109 = arith.constant 5.000000e-01 : f32
      %212 = vector.broadcast %cst_109 : f32 to vector<1x128xf32>
      %213 = arith.cmpf ogt, %84, %212 : vector<1x128xf32>
      %214 = vector.shape_cast %213 : vector<1x128xi1> to vector<1x128xi1>
      %215 = vector.broadcast %214 : vector<1x128xi1> to vector<8x128xi1>
      %216 = arith.select %215, %211, %199 : vector<8x128xi1>, vector<8x128xf32>
      %c0_110 = arith.constant 0 : index
      %c0_111 = arith.constant 0 : index
      %217 = vector.load %arg10[%c0_110, %c0_111] : memref<8x128xf32, #tpu.memory_space<vmem>>, vector<8x128xf32>
      tpu.vector_store %arg10[%c0_110, %c0_111], %216 {strides = array<i32>} : memref<8x128xf32, #tpu.memory_space<vmem>>, vector<8x128xf32>,
    } else {
    }
    %c0_50 = arith.constant 0 : index
    %c0_51 = arith.constant 0 : index
    %95 = vector.load %arg12[%c0_50, %c0_51] : memref<8x128xf32, #tpu.memory_space<vmem>>, vector<8x128xf32>
    tpu.vector_store %arg12[%c0_50, %c0_51], %88 {strides = array<i32>} : memref<8x128xf32, #tpu.memory_space<vmem>>, vector<8x128xf32>,
    %c4_i32 = arith.constant 4 : i32
    %c8_i32_52 = arith.constant 8 : i32
    %96 = arith.muli %arg1, %c8_i32_52 : i32
    %97 = arith.addi %96, %c4_i32 : i32
    %98 = arith.index_cast %c4_i32 : i32 to index
    %c0_53 = arith.constant 0 : index
    %c0_54 = arith.constant 0 : index
    %99 = vector.load %arg2[%98, %c0_53, %c0_54] : memref<8x8x128xf32, #tpu.memory_space<vmem>>, vector<1x8x128xf32>
    %100 = vector.shape_cast %99 : vector<1x8x128xf32> to vector<8x128xf32>
    %101 = arith.index_cast %c4_i32 : i32 to index
    %c0_55 = arith.constant 0 : index
    %c0_56 = arith.constant 0 : index
    %102 = vector.load %arg3[%101, %c0_55, %c0_56] : memref<8x2x128xi32, #tpu.memory_space<vmem>>, vector<1x2x128xi32>
    %103 = vector.shape_cast %102 : vector<1x2x128xi32> to vector<2x128xi32>
    %104 = vector.extract_strided_slice %103 {offsets = [0, 0], sizes = [1, 128], strides = [1, 1]} : vector<2x128xi32> to vector<1x128xi32>
    %105 = vector.extract_strided_slice %103 {offsets = [1, 0], sizes = [1, 128], strides = [1, 1]} : vector<2x128xi32> to vector<1x128xi32>
    %106 = arith.sitofp %105 : vector<1x128xi32> to vector<1x128xf32>
    %107 = vector.broadcast %104 : vector<1x128xi32> to vector<8x128xi32>
    %108 = arith.cmpi eq, %7, %107 : vector<8x128xi32>
    %109 = arith.extui %108 : vector<8x128xi1> to vector<8x128xi32>
    %110 = arith.sitofp %109 : vector<8x128xi32> to vector<8x128xf32>
    %c0_i32_57 = arith.constant 0 : i32
    %111 = arith.cmpi eq, %97, %c0_i32_57 : i32
    %112 = arith.extui %111 : i1 to i32
    %c0_i32_58 = arith.constant 0 : i32
    %113 = arith.cmpi ne, %112, %c0_i32_58 : i32
    scf.if %113 {
      %187 = vector.broadcast %0 : vector<8x1xf32> to vector<8x128xf32>
      %188 = arith.addf %187, %100 : vector<8x128xf32>
      %189 = arith.addf %188, %6 : vector<8x128xf32>
      %190 = arith.mulf %110, %189 : vector<8x128xf32>
      %c0_99 = arith.constant 0 : index
      %c0_100 = arith.constant 0 : index
      %191 = vector.load %arg11[%c0_99, %c0_100] : memref<8x128xf32, #tpu.memory_space<vmem>>, vector<8x128xf32>
      tpu.vector_store %arg11[%c0_99, %c0_100], %190 {strides = array<i32>} : memref<8x128xf32, #tpu.memory_space<vmem>>, vector<8x128xf32>,
      %192 = vector.broadcast %0 : vector<8x1xf32> to vector<8x128xf32>
      %193 = arith.addf %192, %100 : vector<8x128xf32>
      %c0_101 = arith.constant 0 : index
      %c0_102 = arith.constant 0 : index
      %194 = vector.load %arg10[%c0_101, %c0_102] : memref<8x128xf32, #tpu.memory_space<vmem>>, vector<8x128xf32>
      tpu.vector_store %arg10[%c0_101, %c0_102], %193 {strides = array<i32>} : memref<8x128xf32, #tpu.memory_space<vmem>>, vector<8x128xf32>,
    } else {
    }
    %c0_i32_59 = arith.constant 0 : i32
    %114 = arith.cmpi sgt, %97, %c0_i32_59 : i32
    %115 = arith.extui %114 : i1 to i32
    %c0_i32_60 = arith.constant 0 : i32
    %116 = arith.cmpi ne, %115, %c0_i32_60 : i32
    scf.if %116 {
      %c0_99 = arith.constant 0 : index
      %c0_100 = arith.constant 0 : index
      %187 = vector.load %arg12[%c0_99, %c0_100] : memref<8x128xf32, #tpu.memory_space<vmem>>, vector<8x128xf32>
      %cst = arith.constant dense<0.000000e+00> : vector<8x128xf32>
      %188 = tpu.matmul %2, %187, %cst {dimension_numbers = #tpu.dot_dimension_numbers<[1], [0], [0], [1], [0, 0, 1, 1], [], []>, precision = #tpu.contract_precision<fp32>} : vector<8x8xf32>, vector<8x128xf32>, vector<8x128xf32> -> vector<8x128xf32>
      %189 = arith.addf %100, %188 : vector<8x128xf32>
      %190 = arith.addf %189, %6 : vector<8x128xf32>
      %191 = arith.mulf %110, %190 : vector<8x128xf32>
      %192 = arith.mulf %187, %6 : vector<8x128xf32>
      %193 = arith.subf %191, %192 : vector<8x128xf32>
      %c0_101 = arith.constant 0 : index
      %c0_102 = arith.constant 0 : index
      %194 = vector.load %arg11[%c0_101, %c0_102] : memref<8x128xf32, #tpu.memory_space<vmem>>, vector<8x128xf32>
      %195 = vector.broadcast %106 : vector<1x128xf32> to vector<8x128xf32>
      %196 = arith.mulf %195, %193 : vector<8x128xf32>
      %197 = arith.addf %194, %196 : vector<8x128xf32>
      %c0_103 = arith.constant 0 : index
      %c0_104 = arith.constant 0 : index
      %198 = vector.load %arg11[%c0_103, %c0_104] : memref<8x128xf32, #tpu.memory_space<vmem>>, vector<8x128xf32>
      tpu.vector_store %arg11[%c0_103, %c0_104], %197 {strides = array<i32>} : memref<8x128xf32, #tpu.memory_space<vmem>>, vector<8x128xf32>,
      %c0_105 = arith.constant 0 : index
      %c0_106 = arith.constant 0 : index
      %199 = vector.load %arg10[%c0_105, %c0_106] : memref<8x128xf32, #tpu.memory_space<vmem>>, vector<8x128xf32>
      %cst_107 = arith.constant dense<0xFF800000> : vector<128xf32>
      %200 = vector.multi_reduction <maximumf>, %199, %cst_107 [0] : vector<8x128xf32> to vector<128xf32>
      %201 = vector.shape_cast %200 : vector<128xf32> to vector<1x128xf32>
      %202 = vector.broadcast %201 : vector<1x128xf32> to vector<8x128xf32>
      %203 = arith.subf %199, %202 : vector<8x128xf32>
      %204 = math.exp %203 : vector<8x128xf32>
      %cst_108 = arith.constant dense<0.000000e+00> : vector<8x128xf32>
      %205 = tpu.matmul %3, %204, %cst_108 {dimension_numbers = #tpu.dot_dimension_numbers<[1], [0], [0], [1], [0, 0, 1, 1], [], []>, precision = #tpu.contract_precision<fp32>} : vector<8x8xf32>, vector<8x128xf32>, vector<8x128xf32> -> vector<8x128xf32>
      %206 = vector.broadcast %201 : vector<1x128xf32> to vector<8x128xf32>
      %207 = vector.broadcast %4 : vector<8x1xf32> to vector<8x128xf32>
      %208 = arith.addf %206, %207 : vector<8x128xf32>
      %209 = math.log %205 : vector<8x128xf32>
      %210 = arith.addf %208, %209 : vector<8x128xf32>
      %211 = arith.addf %210, %100 : vector<8x128xf32>
      %cst_109 = arith.constant 5.000000e-01 : f32
      %212 = vector.broadcast %cst_109 : f32 to vector<1x128xf32>
      %213 = arith.cmpf ogt, %106, %212 : vector<1x128xf32>
      %214 = vector.shape_cast %213 : vector<1x128xi1> to vector<1x128xi1>
      %215 = vector.broadcast %214 : vector<1x128xi1> to vector<8x128xi1>
      %216 = arith.select %215, %211, %199 : vector<8x128xi1>, vector<8x128xf32>
      %c0_110 = arith.constant 0 : index
      %c0_111 = arith.constant 0 : index
      %217 = vector.load %arg10[%c0_110, %c0_111] : memref<8x128xf32, #tpu.memory_space<vmem>>, vector<8x128xf32>
      tpu.vector_store %arg10[%c0_110, %c0_111], %216 {strides = array<i32>} : memref<8x128xf32, #tpu.memory_space<vmem>>, vector<8x128xf32>,
    } else {
    }
    %c0_61 = arith.constant 0 : index
    %c0_62 = arith.constant 0 : index
    %117 = vector.load %arg12[%c0_61, %c0_62] : memref<8x128xf32, #tpu.memory_space<vmem>>, vector<8x128xf32>
    tpu.vector_store %arg12[%c0_61, %c0_62], %110 {strides = array<i32>} : memref<8x128xf32, #tpu.memory_space<vmem>>, vector<8x128xf32>,
    %c5_i32 = arith.constant 5 : i32
    %c8_i32_63 = arith.constant 8 : i32
    %118 = arith.muli %arg1, %c8_i32_63 : i32
    %119 = arith.addi %118, %c5_i32 : i32
    %120 = arith.index_cast %c5_i32 : i32 to index
    %c0_64 = arith.constant 0 : index
    %c0_65 = arith.constant 0 : index
    %121 = vector.load %arg2[%120, %c0_64, %c0_65] : memref<8x8x128xf32, #tpu.memory_space<vmem>>, vector<1x8x128xf32>
    %122 = vector.shape_cast %121 : vector<1x8x128xf32> to vector<8x128xf32>
    %123 = arith.index_cast %c5_i32 : i32 to index
    %c0_66 = arith.constant 0 : index
    %c0_67 = arith.constant 0 : index
    %124 = vector.load %arg3[%123, %c0_66, %c0_67] : memref<8x2x128xi32, #tpu.memory_space<vmem>>, vector<1x2x128xi32>
    %125 = vector.shape_cast %124 : vector<1x2x128xi32> to vector<2x128xi32>
    %126 = vector.extract_strided_slice %125 {offsets = [0, 0], sizes = [1, 128], strides = [1, 1]} : vector<2x128xi32> to vector<1x128xi32>
    %127 = vector.extract_strided_slice %125 {offsets = [1, 0], sizes = [1, 128], strides = [1, 1]} : vector<2x128xi32> to vector<1x128xi32>
    %128 = arith.sitofp %127 : vector<1x128xi32> to vector<1x128xf32>
    %129 = vector.broadcast %126 : vector<1x128xi32> to vector<8x128xi32>
    %130 = arith.cmpi eq, %7, %129 : vector<8x128xi32>
    %131 = arith.extui %130 : vector<8x128xi1> to vector<8x128xi32>
    %132 = arith.sitofp %131 : vector<8x128xi32> to vector<8x128xf32>
    %c0_i32_68 = arith.constant 0 : i32
    %133 = arith.cmpi eq, %119, %c0_i32_68 : i32
    %134 = arith.extui %133 : i1 to i32
    %c0_i32_69 = arith.constant 0 : i32
    %135 = arith.cmpi ne, %134, %c0_i32_69 : i32
    scf.if %135 {
      %187 = vector.broadcast %0 : vector<8x1xf32> to vector<8x128xf32>
      %188 = arith.addf %187, %122 : vector<8x128xf32>
      %189 = arith.addf %188, %6 : vector<8x128xf32>
      %190 = arith.mulf %132, %189 : vector<8x128xf32>
      %c0_99 = arith.constant 0 : index
      %c0_100 = arith.constant 0 : index
      %191 = vector.load %arg11[%c0_99, %c0_100] : memref<8x128xf32, #tpu.memory_space<vmem>>, vector<8x128xf32>
      tpu.vector_store %arg11[%c0_99, %c0_100], %190 {strides = array<i32>} : memref<8x128xf32, #tpu.memory_space<vmem>>, vector<8x128xf32>,
      %192 = vector.broadcast %0 : vector<8x1xf32> to vector<8x128xf32>
      %193 = arith.addf %192, %122 : vector<8x128xf32>
      %c0_101 = arith.constant 0 : index
      %c0_102 = arith.constant 0 : index
      %194 = vector.load %arg10[%c0_101, %c0_102] : memref<8x128xf32, #tpu.memory_space<vmem>>, vector<8x128xf32>
      tpu.vector_store %arg10[%c0_101, %c0_102], %193 {strides = array<i32>} : memref<8x128xf32, #tpu.memory_space<vmem>>, vector<8x128xf32>,
    } else {
    }
    %c0_i32_70 = arith.constant 0 : i32
    %136 = arith.cmpi sgt, %119, %c0_i32_70 : i32
    %137 = arith.extui %136 : i1 to i32
    %c0_i32_71 = arith.constant 0 : i32
    %138 = arith.cmpi ne, %137, %c0_i32_71 : i32
    scf.if %138 {
      %c0_99 = arith.constant 0 : index
      %c0_100 = arith.constant 0 : index
      %187 = vector.load %arg12[%c0_99, %c0_100] : memref<8x128xf32, #tpu.memory_space<vmem>>, vector<8x128xf32>
      %cst = arith.constant dense<0.000000e+00> : vector<8x128xf32>
      %188 = tpu.matmul %2, %187, %cst {dimension_numbers = #tpu.dot_dimension_numbers<[1], [0], [0], [1], [0, 0, 1, 1], [], []>, precision = #tpu.contract_precision<fp32>} : vector<8x8xf32>, vector<8x128xf32>, vector<8x128xf32> -> vector<8x128xf32>
      %189 = arith.addf %122, %188 : vector<8x128xf32>
      %190 = arith.addf %189, %6 : vector<8x128xf32>
      %191 = arith.mulf %132, %190 : vector<8x128xf32>
      %192 = arith.mulf %187, %6 : vector<8x128xf32>
      %193 = arith.subf %191, %192 : vector<8x128xf32>
      %c0_101 = arith.constant 0 : index
      %c0_102 = arith.constant 0 : index
      %194 = vector.load %arg11[%c0_101, %c0_102] : memref<8x128xf32, #tpu.memory_space<vmem>>, vector<8x128xf32>
      %195 = vector.broadcast %128 : vector<1x128xf32> to vector<8x128xf32>
      %196 = arith.mulf %195, %193 : vector<8x128xf32>
      %197 = arith.addf %194, %196 : vector<8x128xf32>
      %c0_103 = arith.constant 0 : index
      %c0_104 = arith.constant 0 : index
      %198 = vector.load %arg11[%c0_103, %c0_104] : memref<8x128xf32, #tpu.memory_space<vmem>>, vector<8x128xf32>
      tpu.vector_store %arg11[%c0_103, %c0_104], %197 {strides = array<i32>} : memref<8x128xf32, #tpu.memory_space<vmem>>, vector<8x128xf32>,
      %c0_105 = arith.constant 0 : index
      %c0_106 = arith.constant 0 : index
      %199 = vector.load %arg10[%c0_105, %c0_106] : memref<8x128xf32, #tpu.memory_space<vmem>>, vector<8x128xf32>
      %cst_107 = arith.constant dense<0xFF800000> : vector<128xf32>
      %200 = vector.multi_reduction <maximumf>, %199, %cst_107 [0] : vector<8x128xf32> to vector<128xf32>
      %201 = vector.shape_cast %200 : vector<128xf32> to vector<1x128xf32>
      %202 = vector.broadcast %201 : vector<1x128xf32> to vector<8x128xf32>
      %203 = arith.subf %199, %202 : vector<8x128xf32>
      %204 = math.exp %203 : vector<8x128xf32>
      %cst_108 = arith.constant dense<0.000000e+00> : vector<8x128xf32>
      %205 = tpu.matmul %3, %204, %cst_108 {dimension_numbers = #tpu.dot_dimension_numbers<[1], [0], [0], [1], [0, 0, 1, 1], [], []>, precision = #tpu.contract_precision<fp32>} : vector<8x8xf32>, vector<8x128xf32>, vector<8x128xf32> -> vector<8x128xf32>
      %206 = vector.broadcast %201 : vector<1x128xf32> to vector<8x128xf32>
      %207 = vector.broadcast %4 : vector<8x1xf32> to vector<8x128xf32>
      %208 = arith.addf %206, %207 : vector<8x128xf32>
      %209 = math.log %205 : vector<8x128xf32>
      %210 = arith.addf %208, %209 : vector<8x128xf32>
      %211 = arith.addf %210, %122 : vector<8x128xf32>
      %cst_109 = arith.constant 5.000000e-01 : f32
      %212 = vector.broadcast %cst_109 : f32 to vector<1x128xf32>
      %213 = arith.cmpf ogt, %128, %212 : vector<1x128xf32>
      %214 = vector.shape_cast %213 : vector<1x128xi1> to vector<1x128xi1>
      %215 = vector.broadcast %214 : vector<1x128xi1> to vector<8x128xi1>
      %216 = arith.select %215, %211, %199 : vector<8x128xi1>, vector<8x128xf32>
      %c0_110 = arith.constant 0 : index
      %c0_111 = arith.constant 0 : index
      %217 = vector.load %arg10[%c0_110, %c0_111] : memref<8x128xf32, #tpu.memory_space<vmem>>, vector<8x128xf32>
      tpu.vector_store %arg10[%c0_110, %c0_111], %216 {strides = array<i32>} : memref<8x128xf32, #tpu.memory_space<vmem>>, vector<8x128xf32>,
    } else {
    }
    %c0_72 = arith.constant 0 : index
    %c0_73 = arith.constant 0 : index
    %139 = vector.load %arg12[%c0_72, %c0_73] : memref<8x128xf32, #tpu.memory_space<vmem>>, vector<8x128xf32>
    tpu.vector_store %arg12[%c0_72, %c0_73], %132 {strides = array<i32>} : memref<8x128xf32, #tpu.memory_space<vmem>>, vector<8x128xf32>,
    %c6_i32 = arith.constant 6 : i32
    %c8_i32_74 = arith.constant 8 : i32
    %140 = arith.muli %arg1, %c8_i32_74 : i32
    %141 = arith.addi %140, %c6_i32 : i32
    %142 = arith.index_cast %c6_i32 : i32 to index
    %c0_75 = arith.constant 0 : index
    %c0_76 = arith.constant 0 : index
    %143 = vector.load %arg2[%142, %c0_75, %c0_76] : memref<8x8x128xf32, #tpu.memory_space<vmem>>, vector<1x8x128xf32>
    %144 = vector.shape_cast %143 : vector<1x8x128xf32> to vector<8x128xf32>
    %145 = arith.index_cast %c6_i32 : i32 to index
    %c0_77 = arith.constant 0 : index
    %c0_78 = arith.constant 0 : index
    %146 = vector.load %arg3[%145, %c0_77, %c0_78] : memref<8x2x128xi32, #tpu.memory_space<vmem>>, vector<1x2x128xi32>
    %147 = vector.shape_cast %146 : vector<1x2x128xi32> to vector<2x128xi32>
    %148 = vector.extract_strided_slice %147 {offsets = [0, 0], sizes = [1, 128], strides = [1, 1]} : vector<2x128xi32> to vector<1x128xi32>
    %149 = vector.extract_strided_slice %147 {offsets = [1, 0], sizes = [1, 128], strides = [1, 1]} : vector<2x128xi32> to vector<1x128xi32>
    %150 = arith.sitofp %149 : vector<1x128xi32> to vector<1x128xf32>
    %151 = vector.broadcast %148 : vector<1x128xi32> to vector<8x128xi32>
    %152 = arith.cmpi eq, %7, %151 : vector<8x128xi32>
    %153 = arith.extui %152 : vector<8x128xi1> to vector<8x128xi32>
    %154 = arith.sitofp %153 : vector<8x128xi32> to vector<8x128xf32>
    %c0_i32_79 = arith.constant 0 : i32
    %155 = arith.cmpi eq, %141, %c0_i32_79 : i32
    %156 = arith.extui %155 : i1 to i32
    %c0_i32_80 = arith.constant 0 : i32
    %157 = arith.cmpi ne, %156, %c0_i32_80 : i32
    scf.if %157 {
      %187 = vector.broadcast %0 : vector<8x1xf32> to vector<8x128xf32>
      %188 = arith.addf %187, %144 : vector<8x128xf32>
      %189 = arith.addf %188, %6 : vector<8x128xf32>
      %190 = arith.mulf %154, %189 : vector<8x128xf32>
      %c0_99 = arith.constant 0 : index
      %c0_100 = arith.constant 0 : index
      %191 = vector.load %arg11[%c0_99, %c0_100] : memref<8x128xf32, #tpu.memory_space<vmem>>, vector<8x128xf32>
      tpu.vector_store %arg11[%c0_99, %c0_100], %190 {strides = array<i32>} : memref<8x128xf32, #tpu.memory_space<vmem>>, vector<8x128xf32>,
      %192 = vector.broadcast %0 : vector<8x1xf32> to vector<8x128xf32>
      %193 = arith.addf %192, %144 : vector<8x128xf32>
      %c0_101 = arith.constant 0 : index
      %c0_102 = arith.constant 0 : index
      %194 = vector.load %arg10[%c0_101, %c0_102] : memref<8x128xf32, #tpu.memory_space<vmem>>, vector<8x128xf32>
      tpu.vector_store %arg10[%c0_101, %c0_102], %193 {strides = array<i32>} : memref<8x128xf32, #tpu.memory_space<vmem>>, vector<8x128xf32>,
    } else {
    }
    %c0_i32_81 = arith.constant 0 : i32
    %158 = arith.cmpi sgt, %141, %c0_i32_81 : i32
    %159 = arith.extui %158 : i1 to i32
    %c0_i32_82 = arith.constant 0 : i32
    %160 = arith.cmpi ne, %159, %c0_i32_82 : i32
    scf.if %160 {
      %c0_99 = arith.constant 0 : index
      %c0_100 = arith.constant 0 : index
      %187 = vector.load %arg12[%c0_99, %c0_100] : memref<8x128xf32, #tpu.memory_space<vmem>>, vector<8x128xf32>
      %cst = arith.constant dense<0.000000e+00> : vector<8x128xf32>
      %188 = tpu.matmul %2, %187, %cst {dimension_numbers = #tpu.dot_dimension_numbers<[1], [0], [0], [1], [0, 0, 1, 1], [], []>, precision = #tpu.contract_precision<fp32>} : vector<8x8xf32>, vector<8x128xf32>, vector<8x128xf32> -> vector<8x128xf32>
      %189 = arith.addf %144, %188 : vector<8x128xf32>
      %190 = arith.addf %189, %6 : vector<8x128xf32>
      %191 = arith.mulf %154, %190 : vector<8x128xf32>
      %192 = arith.mulf %187, %6 : vector<8x128xf32>
      %193 = arith.subf %191, %192 : vector<8x128xf32>
      %c0_101 = arith.constant 0 : index
      %c0_102 = arith.constant 0 : index
      %194 = vector.load %arg11[%c0_101, %c0_102] : memref<8x128xf32, #tpu.memory_space<vmem>>, vector<8x128xf32>
      %195 = vector.broadcast %150 : vector<1x128xf32> to vector<8x128xf32>
      %196 = arith.mulf %195, %193 : vector<8x128xf32>
      %197 = arith.addf %194, %196 : vector<8x128xf32>
      %c0_103 = arith.constant 0 : index
      %c0_104 = arith.constant 0 : index
      %198 = vector.load %arg11[%c0_103, %c0_104] : memref<8x128xf32, #tpu.memory_space<vmem>>, vector<8x128xf32>
      tpu.vector_store %arg11[%c0_103, %c0_104], %197 {strides = array<i32>} : memref<8x128xf32, #tpu.memory_space<vmem>>, vector<8x128xf32>,
      %c0_105 = arith.constant 0 : index
      %c0_106 = arith.constant 0 : index
      %199 = vector.load %arg10[%c0_105, %c0_106] : memref<8x128xf32, #tpu.memory_space<vmem>>, vector<8x128xf32>
      %cst_107 = arith.constant dense<0xFF800000> : vector<128xf32>
      %200 = vector.multi_reduction <maximumf>, %199, %cst_107 [0] : vector<8x128xf32> to vector<128xf32>
      %201 = vector.shape_cast %200 : vector<128xf32> to vector<1x128xf32>
      %202 = vector.broadcast %201 : vector<1x128xf32> to vector<8x128xf32>
      %203 = arith.subf %199, %202 : vector<8x128xf32>
      %204 = math.exp %203 : vector<8x128xf32>
      %cst_108 = arith.constant dense<0.000000e+00> : vector<8x128xf32>
      %205 = tpu.matmul %3, %204, %cst_108 {dimension_numbers = #tpu.dot_dimension_numbers<[1], [0], [0], [1], [0, 0, 1, 1], [], []>, precision = #tpu.contract_precision<fp32>} : vector<8x8xf32>, vector<8x128xf32>, vector<8x128xf32> -> vector<8x128xf32>
      %206 = vector.broadcast %201 : vector<1x128xf32> to vector<8x128xf32>
      %207 = vector.broadcast %4 : vector<8x1xf32> to vector<8x128xf32>
      %208 = arith.addf %206, %207 : vector<8x128xf32>
      %209 = math.log %205 : vector<8x128xf32>
      %210 = arith.addf %208, %209 : vector<8x128xf32>
      %211 = arith.addf %210, %144 : vector<8x128xf32>
      %cst_109 = arith.constant 5.000000e-01 : f32
      %212 = vector.broadcast %cst_109 : f32 to vector<1x128xf32>
      %213 = arith.cmpf ogt, %150, %212 : vector<1x128xf32>
      %214 = vector.shape_cast %213 : vector<1x128xi1> to vector<1x128xi1>
      %215 = vector.broadcast %214 : vector<1x128xi1> to vector<8x128xi1>
      %216 = arith.select %215, %211, %199 : vector<8x128xi1>, vector<8x128xf32>
      %c0_110 = arith.constant 0 : index
      %c0_111 = arith.constant 0 : index
      %217 = vector.load %arg10[%c0_110, %c0_111] : memref<8x128xf32, #tpu.memory_space<vmem>>, vector<8x128xf32>
      tpu.vector_store %arg10[%c0_110, %c0_111], %216 {strides = array<i32>} : memref<8x128xf32, #tpu.memory_space<vmem>>, vector<8x128xf32>,
    } else {
    }
    %c0_83 = arith.constant 0 : index
    %c0_84 = arith.constant 0 : index
    %161 = vector.load %arg12[%c0_83, %c0_84] : memref<8x128xf32, #tpu.memory_space<vmem>>, vector<8x128xf32>
    tpu.vector_store %arg12[%c0_83, %c0_84], %154 {strides = array<i32>} : memref<8x128xf32, #tpu.memory_space<vmem>>, vector<8x128xf32>,
    %c7_i32 = arith.constant 7 : i32
    %c8_i32_85 = arith.constant 8 : i32
    %162 = arith.muli %arg1, %c8_i32_85 : i32
    %163 = arith.addi %162, %c7_i32 : i32
    %164 = arith.index_cast %c7_i32 : i32 to index
    %c0_86 = arith.constant 0 : index
    %c0_87 = arith.constant 0 : index
    %165 = vector.load %arg2[%164, %c0_86, %c0_87] : memref<8x8x128xf32, #tpu.memory_space<vmem>>, vector<1x8x128xf32>
    %166 = vector.shape_cast %165 : vector<1x8x128xf32> to vector<8x128xf32>
    %167 = arith.index_cast %c7_i32 : i32 to index
    %c0_88 = arith.constant 0 : index
    %c0_89 = arith.constant 0 : index
    %168 = vector.load %arg3[%167, %c0_88, %c0_89] : memref<8x2x128xi32, #tpu.memory_space<vmem>>, vector<1x2x128xi32>
    %169 = vector.shape_cast %168 : vector<1x2x128xi32> to vector<2x128xi32>
    %170 = vector.extract_strided_slice %169 {offsets = [0, 0], sizes = [1, 128], strides = [1, 1]} : vector<2x128xi32> to vector<1x128xi32>
    %171 = vector.extract_strided_slice %169 {offsets = [1, 0], sizes = [1, 128], strides = [1, 1]} : vector<2x128xi32> to vector<1x128xi32>
    %172 = arith.sitofp %171 : vector<1x128xi32> to vector<1x128xf32>
    %173 = vector.broadcast %170 : vector<1x128xi32> to vector<8x128xi32>
    %174 = arith.cmpi eq, %7, %173 : vector<8x128xi32>
    %175 = arith.extui %174 : vector<8x128xi1> to vector<8x128xi32>
    %176 = arith.sitofp %175 : vector<8x128xi32> to vector<8x128xf32>
    %c0_i32_90 = arith.constant 0 : i32
    %177 = arith.cmpi eq, %163, %c0_i32_90 : i32
    %178 = arith.extui %177 : i1 to i32
    %c0_i32_91 = arith.constant 0 : i32
    %179 = arith.cmpi ne, %178, %c0_i32_91 : i32
    scf.if %179 {
      %187 = vector.broadcast %0 : vector<8x1xf32> to vector<8x128xf32>
      %188 = arith.addf %187, %166 : vector<8x128xf32>
      %189 = arith.addf %188, %6 : vector<8x128xf32>
      %190 = arith.mulf %176, %189 : vector<8x128xf32>
      %c0_99 = arith.constant 0 : index
      %c0_100 = arith.constant 0 : index
      %191 = vector.load %arg11[%c0_99, %c0_100] : memref<8x128xf32, #tpu.memory_space<vmem>>, vector<8x128xf32>
      tpu.vector_store %arg11[%c0_99, %c0_100], %190 {strides = array<i32>} : memref<8x128xf32, #tpu.memory_space<vmem>>, vector<8x128xf32>,
      %192 = vector.broadcast %0 : vector<8x1xf32> to vector<8x128xf32>
      %193 = arith.addf %192, %166 : vector<8x128xf32>
      %c0_101 = arith.constant 0 : index
      %c0_102 = arith.constant 0 : index
      %194 = vector.load %arg10[%c0_101, %c0_102] : memref<8x128xf32, #tpu.memory_space<vmem>>, vector<8x128xf32>
      tpu.vector_store %arg10[%c0_101, %c0_102], %193 {strides = array<i32>} : memref<8x128xf32, #tpu.memory_space<vmem>>, vector<8x128xf32>,
    } else {
    }
    %c0_i32_92 = arith.constant 0 : i32
    %180 = arith.cmpi sgt, %163, %c0_i32_92 : i32
    %181 = arith.extui %180 : i1 to i32
    %c0_i32_93 = arith.constant 0 : i32
    %182 = arith.cmpi ne, %181, %c0_i32_93 : i32
    scf.if %182 {
      %c0_99 = arith.constant 0 : index
      %c0_100 = arith.constant 0 : index
      %187 = vector.load %arg12[%c0_99, %c0_100] : memref<8x128xf32, #tpu.memory_space<vmem>>, vector<8x128xf32>
      %cst = arith.constant dense<0.000000e+00> : vector<8x128xf32>
      %188 = tpu.matmul %2, %187, %cst {dimension_numbers = #tpu.dot_dimension_numbers<[1], [0], [0], [1], [0, 0, 1, 1], [], []>, precision = #tpu.contract_precision<fp32>} : vector<8x8xf32>, vector<8x128xf32>, vector<8x128xf32> -> vector<8x128xf32>
      %189 = arith.addf %166, %188 : vector<8x128xf32>
      %190 = arith.addf %189, %6 : vector<8x128xf32>
      %191 = arith.mulf %176, %190 : vector<8x128xf32>
      %192 = arith.mulf %187, %6 : vector<8x128xf32>
      %193 = arith.subf %191, %192 : vector<8x128xf32>
      %c0_101 = arith.constant 0 : index
      %c0_102 = arith.constant 0 : index
      %194 = vector.load %arg11[%c0_101, %c0_102] : memref<8x128xf32, #tpu.memory_space<vmem>>, vector<8x128xf32>
      %195 = vector.broadcast %172 : vector<1x128xf32> to vector<8x128xf32>
      %196 = arith.mulf %195, %193 : vector<8x128xf32>
      %197 = arith.addf %194, %196 : vector<8x128xf32>
      %c0_103 = arith.constant 0 : index
      %c0_104 = arith.constant 0 : index
      %198 = vector.load %arg11[%c0_103, %c0_104] : memref<8x128xf32, #tpu.memory_space<vmem>>, vector<8x128xf32>
      tpu.vector_store %arg11[%c0_103, %c0_104], %197 {strides = array<i32>} : memref<8x128xf32, #tpu.memory_space<vmem>>, vector<8x128xf32>,
      %c0_105 = arith.constant 0 : index
      %c0_106 = arith.constant 0 : index
      %199 = vector.load %arg10[%c0_105, %c0_106] : memref<8x128xf32, #tpu.memory_space<vmem>>, vector<8x128xf32>
      %cst_107 = arith.constant dense<0xFF800000> : vector<128xf32>
      %200 = vector.multi_reduction <maximumf>, %199, %cst_107 [0] : vector<8x128xf32> to vector<128xf32>
      %201 = vector.shape_cast %200 : vector<128xf32> to vector<1x128xf32>
      %202 = vector.broadcast %201 : vector<1x128xf32> to vector<8x128xf32>
      %203 = arith.subf %199, %202 : vector<8x128xf32>
      %204 = math.exp %203 : vector<8x128xf32>
      %cst_108 = arith.constant dense<0.000000e+00> : vector<8x128xf32>
      %205 = tpu.matmul %3, %204, %cst_108 {dimension_numbers = #tpu.dot_dimension_numbers<[1], [0], [0], [1], [0, 0, 1, 1], [], []>, precision = #tpu.contract_precision<fp32>} : vector<8x8xf32>, vector<8x128xf32>, vector<8x128xf32> -> vector<8x128xf32>
      %206 = vector.broadcast %201 : vector<1x128xf32> to vector<8x128xf32>
      %207 = vector.broadcast %4 : vector<8x1xf32> to vector<8x128xf32>
      %208 = arith.addf %206, %207 : vector<8x128xf32>
      %209 = math.log %205 : vector<8x128xf32>
      %210 = arith.addf %208, %209 : vector<8x128xf32>
      %211 = arith.addf %210, %166 : vector<8x128xf32>
      %cst_109 = arith.constant 5.000000e-01 : f32
      %212 = vector.broadcast %cst_109 : f32 to vector<1x128xf32>
      %213 = arith.cmpf ogt, %172, %212 : vector<1x128xf32>
      %214 = vector.shape_cast %213 : vector<1x128xi1> to vector<1x128xi1>
      %215 = vector.broadcast %214 : vector<1x128xi1> to vector<8x128xi1>
      %216 = arith.select %215, %211, %199 : vector<8x128xi1>, vector<8x128xf32>
      %c0_110 = arith.constant 0 : index
      %c0_111 = arith.constant 0 : index
      %217 = vector.load %arg10[%c0_110, %c0_111] : memref<8x128xf32, #tpu.memory_space<vmem>>, vector<8x128xf32>
      tpu.vector_store %arg10[%c0_110, %c0_111], %216 {strides = array<i32>} : memref<8x128xf32, #tpu.memory_space<vmem>>, vector<8x128xf32>,
    } else {
    }
    %c0_94 = arith.constant 0 : index
    %c0_95 = arith.constant 0 : index
    %183 = vector.load %arg12[%c0_94, %c0_95] : memref<8x128xf32, #tpu.memory_space<vmem>>, vector<8x128xf32>
    tpu.vector_store %arg12[%c0_94, %c0_95], %176 {strides = array<i32>} : memref<8x128xf32, #tpu.memory_space<vmem>>, vector<8x128xf32>,
    %c8_i32_96 = arith.constant 8 : i32
    %c2_i32_97 = arith.constant 2 : i32
    %184 = arith.cmpi eq, %arg1, %c2_i32_97 : i32
    %185 = arith.extui %184 : i1 to i32
    %c0_i32_98 = arith.constant 0 : i32
    %186 = arith.cmpi ne, %185, %c0_i32_98 : i32
    scf.if %186 {
      %c0_99 = arith.constant 0 : index
      %c0_100 = arith.constant 0 : index
      %187 = vector.load %arg10[%c0_99, %c0_100] : memref<8x128xf32, #tpu.memory_space<vmem>>, vector<8x128xf32>
      %188 = vector.broadcast %1 : vector<8x1xf32> to vector<8x128xf32>
      %189 = arith.addf %187, %188 : vector<8x128xf32>
      %cst = arith.constant dense<0xFF800000> : vector<128xf32>
      %190 = vector.multi_reduction <maximumf>, %189, %cst [0] : vector<8x128xf32> to vector<128xf32>
      %191 = vector.shape_cast %190 : vector<128xf32> to vector<1x128xf32>
      %192 = vector.broadcast %191 : vector<1x128xf32> to vector<8x128xf32>
      %193 = arith.subf %189, %192 : vector<8x128xf32>
      %194 = math.exp %193 : vector<8x128xf32>
      %cst_101 = arith.constant dense<0.000000e+00> : vector<128xf32>
      %195 = vector.multi_reduction <add>, %194, %cst_101 [0] : vector<8x128xf32> to vector<128xf32>
      %196 = vector.shape_cast %195 : vector<128xf32> to vector<1x128xf32>
      %197 = math.log %196 : vector<1x128xf32>
      %198 = arith.addf %191, %197 : vector<1x128xf32>
      %c0_102 = arith.constant 0 : index
      %c0_103 = arith.constant 0 : index
      %199 = vector.load %arg11[%c0_102, %c0_103] : memref<8x128xf32, #tpu.memory_space<vmem>>, vector<8x128xf32>
      %cst_104 = arith.constant dense<0.000000e+00> : vector<128xf32>
      %200 = vector.multi_reduction <add>, %199, %cst_104 [0] : vector<8x128xf32> to vector<128xf32>
      %201 = vector.shape_cast %200 : vector<128xf32> to vector<1x128xf32>
      %202 = arith.subf %201, %198 : vector<1x128xf32>
      %c0_105 = arith.constant 0 : index
      %c0_106 = arith.constant 0 : index
      %203 = vector.load %arg9[%c0_105, %c0_106] : memref<1x128xf32, #tpu.memory_space<vmem>>, vector<1x128xf32>
      tpu.vector_store %arg9[%c0_105, %c0_106], %202 {strides = array<i32>} : memref<1x128xf32, #tpu.memory_space<vmem>>, vector<1x128xf32>,
    } else {
    }
    return
  }
  func.func @transform_0(%arg0: i32, %arg1: i32) -> (i32, i32, i32) {
    %c0_i32 = arith.constant 0 : i32
    %c0_i32_0 = arith.constant 0 : i32
    return %arg1, %c0_i32, %arg0 : i32, i32, i32
  }
  func.func @transform_1(%arg0: i32, %arg1: i32) -> (i32, i32, i32) {
    %c0_i32 = arith.constant 0 : i32
    %c0_i32_0 = arith.constant 0 : i32
    return %arg1, %c0_i32, %arg0 : i32, i32, i32
  }
  func.func @transform_2(%arg0: i32, %arg1: i32) -> (i32, i32) {
    %c0_i32 = arith.constant 0 : i32
    %c0_i32_0 = arith.constant 0 : i32
    %c0_i32_1 = arith.constant 0 : i32
    return %c0_i32, %c0_i32_0 : i32, i32
  }
  func.func @transform_3(%arg0: i32, %arg1: i32) -> (i32, i32) {
    %c0_i32 = arith.constant 0 : i32
    %c0_i32_0 = arith.constant 0 : i32
    %c0_i32_1 = arith.constant 0 : i32
    return %c0_i32, %c0_i32_0 : i32, i32
  }
  func.func @transform_4(%arg0: i32, %arg1: i32) -> (i32, i32) {
    %c0_i32 = arith.constant 0 : i32
    %c0_i32_0 = arith.constant 0 : i32
    %c0_i32_1 = arith.constant 0 : i32
    return %c0_i32, %c0_i32_0 : i32, i32
  }
  func.func @transform_5(%arg0: i32, %arg1: i32) -> (i32, i32) {
    %c0_i32 = arith.constant 0 : i32
    %c0_i32_0 = arith.constant 0 : i32
    %c0_i32_1 = arith.constant 0 : i32
    return %c0_i32, %c0_i32_0 : i32, i32
  }
  func.func @transform_6(%arg0: i32, %arg1: i32) -> (i32, i32) {
    %c0_i32 = arith.constant 0 : i32
    %c0_i32_0 = arith.constant 0 : i32
    %c0_i32_1 = arith.constant 0 : i32
    return %c0_i32, %c0_i32_0 : i32, i32
  }
  func.func @transform_7(%arg0: i32, %arg1: i32) -> (i32, i32) {
    %c0_i32 = arith.constant 0 : i32
    %c0_i32_0 = arith.constant 0 : i32
    return %c0_i32, %arg0 : i32, i32
  }
}

</mosaic_0001>

<llo_original>
// kernel: tpu_custom_call.1
$region0: #{tpu_custom_call.1}
  #allocation0 [shape = 'u32[]', space=smem, size = 0x4, offset = 0x4, fixed_abs, tag = 'smem constant byte address 0x4 - core index']
  #allocation1 [shape = 'u32[144,128]{1,0:T(1,128)}', space=vmem, size = 0x12000, scoped, tag = 'internal scratch']
  #allocation2 [shape = 'f32[8,128]{1,0:T(8,128)}', space=vmem, size = 0x1000, scoped, tag = 'scratch operand']
  #allocation3 [shape = 'f32[8,128]{1,0:T(8,128)}', space=vmem, size = 0x1000, scoped, tag = 'scratch operand']
  #allocation4 [shape = 'f32[8,128]{1,0:T(8,128)}', space=vmem, size = 0x1000, scoped, tag = 'scratch operand']
  %s0 = inlined_call_operand.hbm [shape: f32[24,8,128], index: 0, kind: input, shape index: {}]
  %s1 = inlined_call_operand.hbm [shape: s32[24,2,128], index: 1, kind: input, shape index: {}]
  %s2 = inlined_call_operand.vmem [shape: f32[8,1], index: 2, kind: input, shape index: {}]
  %s3 = inlined_call_operand.vmem [shape: f32[8,1], index: 3, kind: input, shape index: {}]
  %s4 = inlined_call_operand.vmem [shape: f32[8,8], index: 4, kind: input, shape index: {}]
  %s5 = inlined_call_operand.vmem [shape: f32[8,8], index: 5, kind: input, shape index: {}]
  %s6 = inlined_call_operand.vmem [shape: f32[8,1], index: 6, kind: input, shape index: {}]
  %s7 = inlined_call_operand.hbm [shape: f32[1,128], index: 7, kind: output, shape index: {}]
  %s8 = sld [smem:[#allocation0]]
  $region137: #{tpu_custom_call.1} parent=0
    _
  %s10 = ssub.s32 1, %s8
  %s11 = scalar_select 0, %s10, %s8
  $region1: #{tpu_custom_call.1} parent=0
    #allocation5 [shape = 'u8[65536]{0}', space=vmem, size = 0x10000, scoped, tag = 'input window, operand 0']
    #allocation6 [shape = 's32[2]{0}', space=sflag, size = 0x8, scoped, tag = 'scoped memory for tpu_custom_call.1']
    #allocation7 [shape = 's32[2]{0}', space=sflag, size = 0x8, scoped, tag = 'scoped memory for tpu_custom_call.1']
    #allocation8 [shape = 'u8[16384]{0}', space=vmem, size = 0x4000, scoped, tag = 'input window, operand 1']
    #allocation9 [shape = 's32[2]{0}', space=sflag, size = 0x8, scoped, tag = 'scoped memory for tpu_custom_call.1']
    #allocation10 [shape = 'u8[512]{0}', space=vmem, size = 0x400, scoped, tag = 'output window, operand 0, single buffered']
    %12 = vsyncpa [#allocation6], 0
    %s13 = scalar_lea.sflag [#allocation6], 1
    %14 = vsyncpa %s13, 0
    %15 = vsyncpa [#allocation9], 0
    %s16 = scalar_lea.sflag [#allocation9], 1
    %17 = vsyncpa %s16, 0
    %18 = vsyncpa [#allocation7], 0
    loop: start=0, step=1, limit=5
    $region2: #{tpu_custom_call.1} parent=1 // loop_pre_header
      _
    $region3: #{tpu_custom_call.1} parent=1 // loop_header
      %s20 = sphi 0, %s24
      %p21 = scmp.ge.s32.totalorder %s20, 5
      %s27 = sphi 0, %s39
      %s28 = sphi 0, %s35
      %s29 = sphi 0, %s27
      %s30 = sphi 0, %s28
      %s31 = sphi 0, %s29
      %s32 = sphi 0, %s30
      %s44 = sphi 0, %s46
      %s47 = sphi 0, %s44
      %s48 = sphi 0, %s47
      %s64 = sphi 0, %s48
      %s72 = sphi 0, %s74
      %s75 = sphi 0, %s72
      %s76 = sphi 0, %s75
      %s92 = sphi 0, %s76
      %s96 = sphi 0, %s96
      %s98 = sphi 0, %s96
      %s99 = sphi 0, %s98
      %s113 = sphi 0, %s99
      %s117 = sphi 0, %s117
      %s119 = sphi 0, %s117
      %s120 = sphi 0, %s119
      %s134 = sphi 0, %s120
      %s138 = sphi 0, %s138
      %s140 = sphi 0, %s138
      %s141 = sphi 0, %s140
      %s155 = sphi 0, %s141
      %s159 = sphi 0, %s159
      %s161 = sphi 0, %s159
      %s162 = sphi 0, %s161
      %s176 = sphi 0, %s162
      %s180 = sphi 0, %s180
      %s182 = sphi 0, %s180
      %s183 = sphi 0, %s182
      %s197 = sphi 0, %s183
      %s203 = sphi 0, %s205
      %s206 = sphi 0, %s203
      %s207 = sphi 0, %s206
      %s223 = sphi 0, %s207
    $region4: #{tpu_custom_call.1} parent=1 // loop_header_branch
      %23 = sbr.rel (%p21) target = $region8
    $region5: #{tpu_custom_call.1} parent=1 // loop_body
      %s25 = ssub.s32 %s20, 1
      %s26 = ssub.s32 %s20, 2
      %s33 = sadd.s32 1, %s28
      %p34 = scmp.ge.s32.totalorder %s33, 3
      %s35 = scalar_select %p34, 0, %s33
      %s36 = sadd.s32 1, %s27
      %s37 = scalar_select %p34, %s36, %s27
      %p38 = scmp.ge.s32.totalorder %s37, 1
      %s39 = scalar_select %p38, 0, %s37
      %s40 = ssub.s32 %s28, %s35
      %s41 = ssub.s32 %s27, %s39
      %s42 = sor.u32 %s40, %s41
      %p43 = scmp.eq.s32.totalorder %s42, 0
      %s45 = sadd.s32 %s44, 1
      %s46 = scalar_select %p43, %s44, %s45
      %p49 = pneg %p43
      %p50 = scmp.eq.s32.totalorder %s20, 2
      %p51 = por %p49, %p50
      %p52 = scmp.ne.s32.totalorder %s44, %s47
      %p53 = scmp.eq.s32.totalorder %s20, 0
      %p54 = por %p52, %p53
      %p55 = scmp.ne.s32.totalorder %s44, %s47
      %p56 = scmp.eq.s32.totalorder %s25, 2
      %p57 = por %p55, %p56
      %p58 = scmp.ne.s32.totalorder %s47, %s48
      %p59 = scmp.eq.s32.totalorder %s25, 0
      %p60 = por %p58, %p59
      %p61 = scmp.ne.s32.totalorder %s47, %s48
      %p62 = scmp.eq.s32.totalorder %s26, 2
      %p63 = por %p61, %p62
      %p65 = scmp.ne.s32.totalorder %s48, %s64
      %p66 = scmp.eq.s32.totalorder %s26, 0
      %p67 = por %p65, %p66
      %s68 = ssub.s32 %s28, %s35
      %s69 = ssub.s32 %s27, %s39
      %s70 = sor.u32 %s68, %s69
      %p71 = scmp.eq.s32.totalorder %s70, 0
      %s73 = sadd.s32 %s72, 1
      %s74 = scalar_select %p71, %s72, %s73
      %p77 = pneg %p71
      %p78 = scmp.eq.s32.totalorder %s20, 2
      %p79 = por %p77, %p78
      %p80 = scmp.ne.s32.totalorder %s72, %s75
      %p81 = scmp.eq.s32.totalorder %s20, 0
      %p82 = por %p80, %p81
      %p83 = scmp.ne.s32.totalorder %s72, %s75
      %p84 = scmp.eq.s32.totalorder %s25, 2
      %p85 = por %p83, %p84
      %p86 = scmp.ne.s32.totalorder %s75, %s76
      %p87 = scmp.eq.s32.totalorder %s25, 0
      %p88 = por %p86, %p87
      %p89 = scmp.ne.s32.totalorder %s75, %s76
      %p90 = scmp.eq.s32.totalorder %s26, 2
      %p91 = por %p89, %p90
      %p93 = scmp.ne.s32.totalorder %s76, %s92
      %p94 = scmp.eq.s32.totalorder %s26, 0
      %p95 = por %p93, %p94
      %s97 = sadd.s32 %s96, 1
      %p100 = scmp.eq.s32.totalorder %s20, 2
      %p101 = scmp.ne.s32.totalorder %s96, %s98
      %p102 = scmp.eq.s32.totalorder %s20, 0
      %p103 = por %p101, %p102
      %p104 = scmp.ne.s32.totalorder %s96, %s98
      %p105 = scmp.eq.s32.totalorder %s25, 2
      %p106 = por %p104, %p105
      %p107 = scmp.ne.s32.totalorder %s98, %s99
      %p108 = scmp.eq.s32.totalorder %s25, 0
      %p109 = por %p107, %p108
      %p110 = scmp.ne.s32.totalorder %s98, %s99
      %p111 = scmp.eq.s32.totalorder %s26, 2
      %p112 = por %p110, %p111
      %p114 = scmp.ne.s32.totalorder %s99, %s113
      %p115 = scmp.eq.s32.totalorder %s26, 0
      %p116 = por %p114, %p115
      %s118 = sadd.s32 %s117, 1
      %p121 = scmp.eq.s32.totalorder %s20, 2
      %p122 = scmp.ne.s32.totalorder %s117, %s119
      %p123 = scmp.eq.s32.totalorder %s20, 0
      %p124 = por %p122, %p123
      %p125 = scmp.ne.s32.totalorder %s117, %s119
      %p126 = scmp.eq.s32.totalorder %s25, 2
      %p127 = por %p125, %p126
      %p128 = scmp.ne.s32.totalorder %s119, %s120
      %p129 = scmp.eq.s32.totalorder %s25, 0
      %p130 = por %p128, %p129
      %p131 = scmp.ne.s32.totalorder %s119, %s120
      %p132 = scmp.eq.s32.totalorder %s26, 2
      %p133 = por %p131, %p132
      %p135 = scmp.ne.s32.totalorder %s120, %s134
      %p136 = scmp.eq.s32.totalorder %s26, 0
      %p137 = por %p135, %p136
      %s139 = sadd.s32 %s138, 1
      %p142 = scmp.eq.s32.totalorder %s20, 2
      %p143 = scmp.ne.s32.totalorder %s138, %s140
      %p144 = scmp.eq.s32.totalorder %s20, 0
      %p145 = por %p143, %p144
      %p146 = scmp.ne.s32.totalorder %s138, %s140
      %p147 = scmp.eq.s32.totalorder %s25, 2
      %p148 = por %p146, %p147
      %p149 = scmp.ne.s32.totalorder %s140, %s141
      %p150 = scmp.eq.s32.totalorder %s25, 0
      %p151 = por %p149, %p150
      %p152 = scmp.ne.s32.totalorder %s140, %s141
      %p153 = scmp.eq.s32.totalorder %s26, 2
      %p154 = por %p152, %p153
      %p156 = scmp.ne.s32.totalorder %s141, %s155
      %p157 = scmp.eq.s32.totalorder %s26, 0
      %p158 = por %p156, %p157
      %s160 = sadd.s32 %s159, 1
      %p163 = scmp.eq.s32.totalorder %s20, 2
      %p164 = scmp.ne.s32.totalorder %s159, %s161
      %p165 = scmp.eq.s32.totalorder %s20, 0
      %p166 = por %p164, %p165
      %p167 = scmp.ne.s32.totalorder %s159, %s161
      %p168 = scmp.eq.s32.totalorder %s25, 2
      %p169 = por %p167, %p168
      %p170 = scmp.ne.s32.totalorder %s161, %s162
      %p171 = scmp.eq.s32.totalorder %s25, 0
      %p172 = por %p170, %p171
      %p173 = scmp.ne.s32.totalorder %s161, %s162
      %p174 = scmp.eq.s32.totalorder %s26, 2
      %p175 = por %p173, %p174
      %p177 = scmp.ne.s32.totalorder %s162, %s176
      %p178 = scmp.eq.s32.totalorder %s26, 0
      %p179 = por %p177, %p178
      %s181 = sadd.s32 %s180, 1
      %p184 = scmp.eq.s32.totalorder %s20, 2
      %p185 = scmp.ne.s32.totalorder %s180, %s182
      %p186 = scmp.eq.s32.totalorder %s20, 0
      %p187 = por %p185, %p186
      %p188 = scmp.ne.s32.totalorder %s180, %s182
      %p189 = scmp.eq.s32.totalorder %s25, 2
      %p190 = por %p188, %p189
      %p191 = scmp.ne.s32.totalorder %s182, %s183
      %p192 = scmp.eq.s32.totalorder %s25, 0
      %p193 = por %p191, %p192
      %p194 = scmp.ne.s32.totalorder %s182, %s183
      %p195 = scmp.eq.s32.totalorder %s26, 2
      %p196 = por %p194, %p195
      %p198 = scmp.ne.s32.totalorder %s183, %s197
      %p199 = scmp.eq.s32.totalorder %s26, 0
      %p200 = por %p198, %p199
      %s201 = ssub.s32 %s27, %s39
      %p202 = scmp.eq.s32.totalorder %s201, 0
      %s204 = sadd.s32 %s203, 1
      %s205 = scalar_select %p202, %s203, %s204
      %p208 = pneg %p202
      %p209 = scmp.eq.s32.totalorder %s20, 2
      %p210 = por %p208, %p209
      %p211 = scmp.ne.s32.totalorder %s203, %s206
      %p212 = scmp.eq.s32.totalorder %s20, 0
      %p213 = por %p211, %p212
      %p214 = scmp.ne.s32.totalorder %s203, %s206
      %p215 = scmp.eq.s32.totalorder %s25, 2
      %p216 = por %p214, %p215
      %p217 = scmp.ne.s32.totalorder %s206, %s207
      %p218 = scmp.eq.s32.totalorder %s25, 0
      %p219 = por %p217, %p218
      %p220 = scmp.ne.s32.totalorder %s206, %s207
      %p221 = scmp.eq.s32.totalorder %s26, 2
      %p222 = por %p220, %p221
      %p224 = scmp.ne.s32.totalorder %s207, %s223
      %p225 = scmp.eq.s32.totalorder %s26, 0
      %p226 = por %p224, %p225
      %p227 = scmp.le.s32.totalorder 1, %s20
      %p228 = scmp.lt.s32.totalorder %s20, 4
      %p229 = pnand %p227, %p228
      %p230 = pneg %p229
      // Predicated region
      $region9: #{tpu_custom_call.1} parent=5 // pred_check
        _
      $region10: #{tpu_custom_call.1} parent=5 // pred_check_branch
        %232 = sbr.rel (%p229) target = $region12
      $region11: #{tpu_custom_call.1} parent=5 // pred_region
        %s233 = ssub.s32 %s20, 1
        // Predicated region
        $region13: #{tpu_custom_call.1} parent=11 // pred_check
          %p234 = pneg %p109
        $region14: #{tpu_custom_call.1} parent=11 // pred_check_branch
          %236 = sbr.rel (%p234) target = $region16
        $region15: #{tpu_custom_call.1} parent=11 // pred_region
          _
        $region16: #{tpu_custom_call.1} parent=11 // pred_fallthru
          _
        // Predicated region
        $region17: #{tpu_custom_call.1} parent=11 // pred_check
          %p237 = pneg %p130
        $region18: #{tpu_custom_call.1} parent=11 // pred_check_branch
          %239 = sbr.rel (%p237) target = $region20
        $region19: #{tpu_custom_call.1} parent=11 // pred_region
          _
        $region20: #{tpu_custom_call.1} parent=11 // pred_fallthru
          _
        // Predicated region
        $region21: #{tpu_custom_call.1} parent=11 // pred_check
          %p240 = pneg %p151
        $region22: #{tpu_custom_call.1} parent=11 // pred_check_branch
          %242 = sbr.rel (%p240) target = $region24
        $region23: #{tpu_custom_call.1} parent=11 // pred_region
          _
        $region24: #{tpu_custom_call.1} parent=11 // pred_fallthru
          _
        // Predicated region
        $region25: #{tpu_custom_call.1} parent=11 // pred_check
          %p243 = pneg %p172
        $region26: #{tpu_custom_call.1} parent=11 // pred_check_branch
          %245 = sbr.rel (%p243) target = $region28
        $region27: #{tpu_custom_call.1} parent=11 // pred_region
          _
        $region28: #{tpu_custom_call.1} parent=11 // pred_fallthru
          _
        // Predicated region
        $region29: #{tpu_custom_call.1} parent=11 // pred_check
          %p246 = pneg %p193
        $region30: #{tpu_custom_call.1} parent=11 // pred_check_branch
          %248 = sbr.rel (%p246) target = $region32
        $region31: #{tpu_custom_call.1} parent=11 // pred_region
          _
        $region32: #{tpu_custom_call.1} parent=11 // pred_fallthru
          _
      $region12: #{tpu_custom_call.1} parent=5 // pred_fallthru
        _
      %p249 = scmp.lt.s32.totalorder %s20, 3
      // Predicated region
      $region33: #{tpu_custom_call.1} parent=5 // pred_check
        %p250 = pneg %p249
      $region34: #{tpu_custom_call.1} parent=5 // pred_check_branch
        %252 = sbr.rel (%p250) target = $region36
      $region35: #{tpu_custom_call.1} parent=5 // pred_region
        // Predicated region
        $region37: #{tpu_custom_call.1} parent=35 // pred_check
          %p253 = pneg %p54
        $region38: #{tpu_custom_call.1} parent=35 // pred_check_branch
          %255 = sbr.rel (%p253) target = $region40
        $region39: #{tpu_custom_call.1} parent=35 // pred_region
          %s256 = sand.u32 %s44, 1
          %s257 = scalar_lea.sflag [#allocation6], %s256
          %s258 = sand.u32 %s44, 1
          %s259 = smul.addr %s258, 64
          %s260 = scalar_lea.vmem [#allocation5], %s259
          %s261 = smul.u32 8, %s28
          %s263 = ssub.s32 1024, 1024
          %264 = vsyncadd %s257, %s263
          %s265 = sadd.s32 %s27, %s261
          %s266 = smul.addr %s265, 128
          %s267 = scalar_lea.hbm %s0, %s266
          %s268 = sshll.u32 %s260, 4
          %s269 = int_to_ptr.vmem [resolvable:$true] %s268
          %274 = dma.hbm_to_vmem [thread:$0]  %s267, 1024, %s269, %s257, 128, 128, 8
        $region40: #{tpu_custom_call.1} parent=35 // pred_fallthru
          _
        // Predicated region
        $region41: #{tpu_custom_call.1} parent=35 // pred_check
          %p275 = pneg %p82
        $region42: #{tpu_custom_call.1} parent=35 // pred_check_branch
          %277 = sbr.rel (%p275) target = $region44
        $region43: #{tpu_custom_call.1} parent=35 // pred_region
          %s278 = sand.u32 %s72, 1
          %s279 = scalar_lea.sflag [#allocation9], %s278
          %s280 = sand.u32 %s72, 1
          %s281 = smul.addr %s280, 16
          %s282 = scalar_lea.vmem [#allocation8], %s281
          %s283 = smul.u32 8, %s28
          %s285 = ssub.s32 256, 256
          %286 = vsyncadd %s279, %s285
          %s287 = sadd.s32 %s27, %s283
          %s288 = smul.addr %s287, 32
          %s289 = scalar_lea.hbm %s1, %s288
          %s290 = sshll.u32 %s282, 4
          %s291 = int_to_ptr.vmem [resolvable:$true] %s290
          %296 = dma.hbm_to_vmem [thread:$0]  %s289, 256, %s291, %s279, 32, 32, 2
        $region44: #{tpu_custom_call.1} parent=35 // pred_fallthru
          _
      $region36: #{tpu_custom_call.1} parent=5 // pred_fallthru
        _
      %p297 = scmp.le.s32.totalorder 1, %s20
      %p298 = scmp.lt.s32.totalorder %s20, 4
      %p299 = pnand %p297, %p298
      %p300 = pneg %p299
      // Predicated region
      $region45: #{tpu_custom_call.1} parent=5 // pred_check
        _
      $region46: #{tpu_custom_call.1} parent=5 // pred_check_branch
        %302 = sbr.rel (%p299) target = $region48
      $region47: #{tpu_custom_call.1} parent=5 // pred_region
        %s303 = ssub.s32 %s20, 1
        %s304 = sand.u32 %s47, 1
        %s305 = scalar_lea.sflag [#allocation6], %s304
        %s306 = sand.u32 %s47, 1
        %s307 = smul.addr %s306, 64
        %s308 = scalar_lea.vmem [#allocation5], %s307
        // Predicated region
        $region49: #{tpu_custom_call.1} parent=47 // pred_check
          %p309 = pneg %p60
        $region50: #{tpu_custom_call.1} parent=47 // pred_check_branch
          %311 = sbr.rel (%p309) target = $region52
        $region51: #{tpu_custom_call.1} parent=47 // pred_region
          %312 = dma.done %s305, 1024
        $region52: #{tpu_custom_call.1} parent=47 // pred_fallthru
          _
        %s313 = sand.u32 %s75, 1
        %s314 = scalar_lea.sflag [#allocation9], %s313
        %s315 = sand.u32 %s75, 1
        %s316 = smul.addr %s315, 16
        %s317 = scalar_lea.vmem [#allocation8], %s316
        // Predicated region
        $region53: #{tpu_custom_call.1} parent=47 // pred_check
          %p318 = pneg %p88
        $region54: #{tpu_custom_call.1} parent=47 // pred_check_branch
          %320 = sbr.rel (%p318) target = $region56
        $region55: #{tpu_custom_call.1} parent=47 // pred_region
          %321 = dma.done %s314, 256
        $region56: #{tpu_custom_call.1} parent=47 // pred_fallthru
          _
        %s322 = sand.u32 %s47, 1
        %s323 = scalar_lea.sflag [#allocation6], %s322
        %s324 = sand.u32 %s47, 1
        %s325 = smul.addr %s324, 64
        %s326 = scalar_lea.vmem [#allocation5], %s325
        %p327 = pneg %p60
        %p328 = pneg %p57
        %s329 = sand.u32 %s75, 1
        %s330 = scalar_lea.sflag [#allocation9], %s329
        %s331 = sand.u32 %s75, 1
        %s332 = smul.addr %s331, 16
        %s333 = scalar_lea.vmem [#allocation8], %s332
        %p334 = pneg %p88
        %p335 = pneg %p85
        %p336 = pneg %p109
        %p337 = pneg %p106
        %p338 = pneg %p130
        %p339 = pneg %p127
        %p340 = pneg %p151
        %p341 = pneg %p148
        %p342 = pneg %p172
        %p343 = pneg %p169
        %p344 = pneg %p193
        %p345 = pneg %p190
        %p346 = pneg %p219
        %p347 = pneg %p216
        %s348 = smul.u32 8, %s30
        %s349 = smul.u32 8, %s30
        %v350 = vld [vmem:[%s2] sm:$0xff]
        %v351 = vld [vmem:[%s3] sm:$0xff]
        %v352 = vld [vmem:[%s4] sm:$0xff]
        %v353 = vld [vmem:[%s5] sm:$0xff]
        %v354 = vld [vmem:[%s6] sm:$0xff]
        %356 = vset.pattern.permute.xlu0 0
        %357 = vperm.xlu0 %356, %v351
        %v358 = vpop.permute.xlu0 %357
        %v360 = vlaneseq
        %v361 = vshrl.u32 %v360, 7
        %s362 = smul.u32 %s30, 8
        %v363 = vld [vmem:[%s308] sm:$0xff]
        %v364 = vld [vmem:[%s317] sm:$0x3]
        %v365 = vcvt.s32.f32 %v364
        %v366 = vlaneseq
        %v367 = vshrl.u32 %v366, 7
        %v368 = vsub.s32 0, %v367
        %v369 = vrot.slane %v364, %v368
        %vm370 = vcmp.eq.s32.totalorder %v361, %v369
        %v371 = vsel %vm370, 1, 0
        %v372 = vcvt.s32.f32 %v371
        %p373 = scmp.eq.s32.totalorder %s362, 0
        // Predicated region
        $region57: #{tpu_custom_call.1} parent=47 // pred_check
          %p374 = pneg %p373
        $region58: #{tpu_custom_call.1} parent=47 // pred_check_branch
          %376 = sbr.rel (%p374) target = $region60
        $region59: #{tpu_custom_call.1} parent=47 // pred_region
          %378 = vset.pattern.permute.xlu0 0
          %379 = vperm.xlu0 %378, %v350
          %v380 = vpop.permute.xlu0 %379
          %v382 = vadd.f32 %v380, %v363
          %v383 = vadd.f32 %v382, %v358
          %v384 = vmul.f32 %v372, %v383
          %385 = vst [vmem:[#allocation3] sm:$0xff] %v384
          %386 = vst [vmem:[#allocation2] sm:$0xff] %v382
        $region60: #{tpu_custom_call.1} parent=47 // pred_fallthru
          _
        %p387 = scmp.gt.s32.totalorder %s362, 0
        // Predicated region
        $region61: #{tpu_custom_call.1} parent=47 // pred_check
          %p388 = pneg %p387
        $region62: #{tpu_custom_call.1} parent=47 // pred_check_branch
          %390 = sbr.rel (%p388) target = $region64
        $region63: #{tpu_custom_call.1} parent=47 // pred_region
          %v391 = vld [vmem:[#allocation4] sm:$0xff]
          %vm392 = vcmask 64512
          %v394 = vsel %vm392, %v352, 0
          %396 = vmatprep.subr.mxu0 0.0
          %397 = vmatpush1.msra.mxu0 0.0
          %398 = vmatprep.subr.mxu0 0.0
          %399 = vmatpush1.msra.mxu0 0.0
          %400 = vmatprep.subr.mxu0 0.0
          %401 = vmatpush1.msra.mxu0 0.0
          %402 = vmatprep.subr.mxu0 0.0
          %403 = vmatpush1.msra.mxu0 0.0
          %404 = vmatprep.subr.mxu0 0.0
          %405 = vmatpush1.msra.mxu0 0.0
          %406 = vmatprep.subr.mxu0 0.0
          %407 = vmatpush1.msra.mxu0 0.0
          %408 = vmatprep.subr.mxu0 0.0
          %409 = vmatpush1.msra.mxu0 0.0
          %410 = vmatprep.subr.mxu0 0.0
          %411 = vmatpush1.msra.mxu0 0.0
          %412 = vmatprep.subr.mxu0 0.0
          %413 = vmatpush1.msra.mxu0 0.0
          %414 = vmatprep.subr.mxu0 0.0
          %415 = vmatpush1.msra.mxu0 0.0
          %416 = vmatprep.subr.mxu0 0.0
          %417 = vmatpush1.msra.mxu0 0.0
          %418 = vmatprep.subr.mxu0 0.0
          %419 = vmatpush1.msra.mxu0 0.0
          %420 = vmatprep.subr.mxu0 0.0
          %421 = vmatpush1.msra.mxu0 0.0
          %422 = vmatprep.subr.mxu0 0.0
          %423 = vmatpush1.msra.mxu0 0.0
          %424 = vmatprep.subr.mxu0 0.0
          %425 = vmatpush1.msra.mxu0 0.0
          %426 = vmatprep.subr.mxu0 0.0
          %v427 = vand.u32 %v391, 4294901760
          %428 = vmatpush1.msra.mxu0 %v427
          %429 = vmatprep.subr.mxu0 0.0
          %430 = vmatpush2.msra.mxu0 0.0
          %431 = vmatprep.subr.mxu0 0.0
          %432 = vmatpush2.msra.mxu0 0.0
          %433 = vmatprep.subr.mxu0 0.0
          %434 = vmatpush2.msra.mxu0 0.0
          %435 = vmatprep.subr.mxu0 0.0
          %436 = vmatpush2.msra.mxu0 0.0
          %437 = vmatprep.subr.mxu0 0.0
          %438 = vmatpush2.msra.mxu0 0.0
          %439 = vmatprep.subr.mxu0 0.0
          %440 = vmatpush2.msra.mxu0 0.0
          %441 = vmatprep.subr.mxu0 0.0
          %442 = vmatpush2.msra.mxu0 0.0
          %443 = vmatprep.subr.mxu0 0.0
          %444 = vmatpush2.msra.mxu0 0.0
          %445 = vmatprep.subr.mxu0 0.0
          %446 = vmatpush2.msra.mxu0 0.0
          %447 = vmatprep.subr.mxu0 0.0
          %448 = vmatpush2.msra.mxu0 0.0
          %449 = vmatprep.subr.mxu0 0.0
          %450 = vmatpush2.msra.mxu0 0.0
          %451 = vmatprep.subr.mxu0 0.0
          %452 = vmatpush2.msra.mxu0 0.0
          %453 = vmatprep.subr.mxu0 0.0
          %454 = vmatpush2.msra.mxu0 0.0
          %455 = vmatprep.subr.mxu0 0.0
          %456 = vmatpush2.msra.mxu0 0.0
          %457 = vmatprep.subr.mxu0 0.0
          %458 = vmatpush2.msra.mxu0 0.0
          %459 = vmatprep.subr.mxu0 0.0
          %460 = vmatpush2.msra.mxu0 0.0
          %461 = vmatprep.mubr.f32.mxu0 0.0
          %v462 = vand.u32 %v394, 4294901760
          %v463 = vsub.f32 %v394, %v462
          %v464 = vand.u32 %v463, 4294901760
          %v465 = vsub.f32 %v463, %v464
          %v466 = vand.u32 %v465, 4294901760
          %467 = vmatmul.mubr.f32.gmra.mxu0 %v466
          %v468 = vpop.f32.mrf.mxu0
          %v469 = vadd.f32 0.0, %v468
          %v470 = vpop.f32.mrf.mxu0
          %471 = vdwg.mxu0
          %472 = vmatprep.subr.mxu0 0.0
          %473 = vmatpush1.msra.mxu0 0.0
          %474 = vmatprep.subr.mxu0 0.0
          %475 = vmatpush1.msra.mxu0 0.0
          %476 = vmatprep.subr.mxu0 0.0
          %477 = vmatpush1.msra.mxu0 0.0
          %478 = vmatprep.subr.mxu0 0.0
          %479 = vmatpush1.msra.mxu0 0.0
          %480 = vmatprep.subr.mxu0 0.0
          %481 = vmatpush1.msra.mxu0 0.0
          %482 = vmatprep.subr.mxu0 0.0
          %483 = vmatpush1.msra.mxu0 0.0
          %484 = vmatprep.subr.mxu0 0.0
          %485 = vmatpush1.msra.mxu0 0.0
          %486 = vmatprep.subr.mxu0 0.0
          %487 = vmatpush1.msra.mxu0 0.0
          %488 = vmatprep.subr.mxu0 0.0
          %489 = vmatpush1.msra.mxu0 0.0
          %490 = vmatprep.subr.mxu0 0.0
          %491 = vmatpush1.msra.mxu0 0.0
          %492 = vmatprep.subr.mxu0 0.0
          %493 = vmatpush1.msra.mxu0 0.0
          %494 = vmatprep.subr.mxu0 0.0
          %495 = vmatpush1.msra.mxu0 0.0
          %496 = vmatprep.subr.mxu0 0.0
          %497 = vmatpush1.msra.mxu0 0.0
          %498 = vmatprep.subr.mxu0 0.0
          %499 = vmatpush1.msra.mxu0 0.0
          %500 = vmatprep.subr.mxu0 0.0
          %501 = vmatpush1.msra.mxu0 0.0
          %502 = vmatprep.subr.mxu0 0.0
          %v503 = vand.u32 %v391, 4294901760
          %v504 = vsub.f32 %v391, %v503
          %v505 = vand.u32 %v504, 4294901760
          %v506 = vsub.f32 %v504, %v505
          %v507 = vand.u32 %v506, 4294901760
          %508 = vmatpush1.msra.mxu0 %v507
          %509 = vmatprep.subr.mxu0 0.0
          %510 = vmatpush2.msra.mxu0 0.0
          %511 = vmatprep.subr.mxu0 0.0
          %512 = vmatpush2.msra.mxu0 0.0
          %513 = vmatprep.subr.mxu0 0.0
          %514 = vmatpush2.msra.mxu0 0.0
          %515 = vmatprep.subr.mxu0 0.0
          %516 = vmatpush2.msra.mxu0 0.0
          %517 = vmatprep.subr.mxu0 0.0
          %518 = vmatpush2.msra.mxu0 0.0
          %519 = vmatprep.subr.mxu0 0.0
          %520 = vmatpush2.msra.mxu0 0.0
          %521 = vmatprep.subr.mxu0 0.0
          %522 = vmatpush2.msra.mxu0 0.0
          %523 = vmatprep.subr.mxu0 0.0
          %524 = vmatpush2.msra.mxu0 0.0
          %525 = vmatprep.subr.mxu0 0.0
          %526 = vmatpush2.msra.mxu0 0.0
          %527 = vmatprep.subr.mxu0 0.0
          %528 = vmatpush2.msra.mxu0 0.0
          %529 = vmatprep.subr.mxu0 0.0
          %530 = vmatpush2.msra.mxu0 0.0
          %531 = vmatprep.subr.mxu0 0.0
          %532 = vmatpush2.msra.mxu0 0.0
          %533 = vmatprep.subr.mxu0 0.0
          %534 = vmatpush2.msra.mxu0 0.0
          %535 = vmatprep.subr.mxu0 0.0
          %536 = vmatpush2.msra.mxu0 0.0
          %537 = vmatprep.subr.mxu0 0.0
          %538 = vmatpush2.msra.mxu0 0.0
          %539 = vmatprep.subr.mxu0 0.0
          %540 = vmatpush2.msra.mxu0 0.0
          %541 = vmatprep.mubr.f32.mxu0 0.0
          %v542 = vand.u32 %v394, 4294901760
          %543 = vmatmul.mubr.f32.gmra.mxu0 %v542
          %v544 = vpop.f32.mrf.mxu0
          %v545 = vadd.f32 %v469, %v544
          %v546 = vpop.f32.mrf.mxu0
          %547 = vdwg.mxu0
          %548 = vmatprep.subr.mxu0 0.0
          %549 = vmatpush1.msra.mxu0 0.0
          %550 = vmatprep.subr.mxu0 0.0
          %551 = vmatpush1.msra.mxu0 0.0
          %552 = vmatprep.subr.mxu0 0.0
          %553 = vmatpush1.msra.mxu0 0.0
          %554 = vmatprep.subr.mxu0 0.0
          %555 = vmatpush1.msra.mxu0 0.0
          %556 = vmatprep.subr.mxu0 0.0
          %557 = vmatpush1.msra.mxu0 0.0
          %558 = vmatprep.subr.mxu0 0.0
          %559 = vmatpush1.msra.mxu0 0.0
          %560 = vmatprep.subr.mxu0 0.0
          %561 = vmatpush1.msra.mxu0 0.0
          %562 = vmatprep.subr.mxu0 0.0
          %563 = vmatpush1.msra.mxu0 0.0
          %564 = vmatprep.subr.mxu0 0.0
          %565 = vmatpush1.msra.mxu0 0.0
          %566 = vmatprep.subr.mxu0 0.0
          %567 = vmatpush1.msra.mxu0 0.0
          %568 = vmatprep.subr.mxu0 0.0
          %569 = vmatpush1.msra.mxu0 0.0
          %570 = vmatprep.subr.mxu0 0.0
          %571 = vmatpush1.msra.mxu0 0.0
          %572 = vmatprep.subr.mxu0 0.0
          %573 = vmatpush1.msra.mxu0 0.0
          %574 = vmatprep.subr.mxu0 0.0
          %575 = vmatpush1.msra.mxu0 0.0
          %576 = vmatprep.subr.mxu0 0.0
          %577 = vmatpush1.msra.mxu0 0.0
          %578 = vmatprep.subr.mxu0 0.0
          %v579 = vand.u32 %v391, 4294901760
          %v580 = vsub.f32 %v391, %v579
          %581 = vmatpush1.msra.mxu0 %v580
          %582 = vmatprep.subr.mxu0 0.0
          %583 = vmatpush2.msra.mxu0 0.0
          %584 = vmatprep.subr.mxu0 0.0
          %585 = vmatpush2.msra.mxu0 0.0
          %586 = vmatprep.subr.mxu0 0.0
          %587 = vmatpush2.msra.mxu0 0.0
          %588 = vmatprep.subr.mxu0 0.0
          %589 = vmatpush2.msra.mxu0 0.0
          %590 = vmatprep.subr.mxu0 0.0
          %591 = vmatpush2.msra.mxu0 0.0
          %592 = vmatprep.subr.mxu0 0.0
          %593 = vmatpush2.msra.mxu0 0.0
          %594 = vmatprep.subr.mxu0 0.0
          %595 = vmatpush2.msra.mxu0 0.0
          %596 = vmatprep.subr.mxu0 0.0
          %597 = vmatpush2.msra.mxu0 0.0
          %598 = vmatprep.subr.mxu0 0.0
          %599 = vmatpush2.msra.mxu0 0.0
          %600 = vmatprep.subr.mxu0 0.0
          %601 = vmatpush2.msra.mxu0 0.0
          %602 = vmatprep.subr.mxu0 0.0
          %603 = vmatpush2.msra.mxu0 0.0
          %604 = vmatprep.subr.mxu0 0.0
          %605 = vmatpush2.msra.mxu0 0.0
          %606 = vmatprep.subr.mxu0 0.0
          %607 = vmatpush2.msra.mxu0 0.0
          %608 = vmatprep.subr.mxu0 0.0
          %609 = vmatpush2.msra.mxu0 0.0
          %610 = vmatprep.subr.mxu0 0.0
          %611 = vmatpush2.msra.mxu0 0.0
          %612 = vmatprep.subr.mxu0 0.0
          %613 = vmatpush2.msra.mxu0 0.0
          %614 = vmatprep.mubr.f32.mxu0 0.0
          %v615 = vand.u32 %v394, 4294901760
          %v616 = vsub.f32 %v394, %v615
          %617 = vmatmul.mubr.f32.gmra.mxu0 %v616
          %v618 = vpop.f32.mrf.mxu0
          %v619 = vadd.f32 %v545, %v618
          %v620 = vpop.f32.mrf.mxu0
          %621 = vdwg.mxu0
          %622 = vmatprep.subr.mxu0 0.0
          %623 = vmatpush1.msra.mxu0 0.0
          %624 = vmatprep.subr.mxu0 0.0
          %625 = vmatpush1.msra.mxu0 0.0
          %626 = vmatprep.subr.mxu0 0.0
          %627 = vmatpush1.msra.mxu0 0.0
          %628 = vmatprep.subr.mxu0 0.0
          %629 = vmatpush1.msra.mxu0 0.0
          %630 = vmatprep.subr.mxu0 0.0
          %631 = vmatpush1.msra.mxu0 0.0
          %632 = vmatprep.subr.mxu0 0.0
          %633 = vmatpush1.msra.mxu0 0.0
          %634 = vmatprep.subr.mxu0 0.0
          %635 = vmatpush1.msra.mxu0 0.0
          %636 = vmatprep.subr.mxu0 0.0
          %637 = vmatpush1.msra.mxu0 0.0
          %638 = vmatprep.subr.mxu0 0.0
          %639 = vmatpush1.msra.mxu0 0.0
          %640 = vmatprep.subr.mxu0 0.0
          %641 = vmatpush1.msra.mxu0 0.0
          %642 = vmatprep.subr.mxu0 0.0
          %643 = vmatpush1.msra.mxu0 0.0
          %644 = vmatprep.subr.mxu0 0.0
          %645 = vmatpush1.msra.mxu0 0.0
          %646 = vmatprep.subr.mxu0 0.0
          %647 = vmatpush1.msra.mxu0 0.0
          %648 = vmatprep.subr.mxu0 0.0
          %649 = vmatpush1.msra.mxu0 0.0
          %650 = vmatprep.subr.mxu0 0.0
          %651 = vmatpush1.msra.mxu0 0.0
          %652 = vmatprep.subr.mxu0 0.0
          %v653 = vand.u32 %v391, 4294901760
          %654 = vmatpush1.msra.mxu0 %v653
          %655 = vmatprep.subr.mxu0 0.0
          %656 = vmatpush2.msra.mxu0 0.0
          %657 = vmatprep.subr.mxu0 0.0
          %658 = vmatpush2.msra.mxu0 0.0
          %659 = vmatprep.subr.mxu0 0.0
          %660 = vmatpush2.msra.mxu0 0.0
          %661 = vmatprep.subr.mxu0 0.0
          %662 = vmatpush2.msra.mxu0 0.0
          %663 = vmatprep.subr.mxu0 0.0
          %664 = vmatpush2.msra.mxu0 0.0
          %665 = vmatprep.subr.mxu0 0.0
          %666 = vmatpush2.msra.mxu0 0.0
          %667 = vmatprep.subr.mxu0 0.0
          %668 = vmatpush2.msra.mxu0 0.0
          %669 = vmatprep.subr.mxu0 0.0
          %670 = vmatpush2.msra.mxu0 0.0
          %671 = vmatprep.subr.mxu0 0.0
          %672 = vmatpush2.msra.mxu0 0.0
          %673 = vmatprep.subr.mxu0 0.0
          %674 = vmatpush2.msra.mxu0 0.0
          %675 = vmatprep.subr.mxu0 0.0
          %676 = vmatpush2.msra.mxu0 0.0
          %677 = vmatprep.subr.mxu0 0.0
          %678 = vmatpush2.msra.mxu0 0.0
          %679 = vmatprep.subr.mxu0 0.0
          %680 = vmatpush2.msra.mxu0 0.0
          %681 = vmatprep.subr.mxu0 0.0
          %682 = vmatpush2.msra.mxu0 0.0
          %683 = vmatprep.subr.mxu0 0.0
          %684 = vmatpush2.msra.mxu0 0.0
          %685 = vmatprep.subr.mxu0 0.0
          %686 = vmatpush2.msra.mxu0 0.0
          %687 = vmatprep.mubr.f32.mxu0 0.0
          %v688 = vand.u32 %v394, 4294901760
          %v689 = vsub.f32 %v394, %v688
          %v690 = vand.u32 %v689, 4294901760
          %691 = vmatmul.mubr.f32.gmra.mxu0 %v690
          %v692 = vpop.f32.mrf.mxu0
          %v693 = vadd.f32 %v619, %v692
          %v694 = vpop.f32.mrf.mxu0
          %695 = vdwg.mxu0
          %696 = vmatprep.subr.mxu0 0.0
          %697 = vmatpush1.msra.mxu0 0.0
          %698 = vmatprep.subr.mxu0 0.0
          %699 = vmatpush1.msra.mxu0 0.0
          %700 = vmatprep.subr.mxu0 0.0
          %701 = vmatpush1.msra.mxu0 0.0
          %702 = vmatprep.subr.mxu0 0.0
          %703 = vmatpush1.msra.mxu0 0.0
          %704 = vmatprep.subr.mxu0 0.0
          %705 = vmatpush1.msra.mxu0 0.0
          %706 = vmatprep.subr.mxu0 0.0
          %707 = vmatpush1.msra.mxu0 0.0
          %708 = vmatprep.subr.mxu0 0.0
          %709 = vmatpush1.msra.mxu0 0.0
          %710 = vmatprep.subr.mxu0 0.0
          %711 = vmatpush1.msra.mxu0 0.0
          %712 = vmatprep.subr.mxu0 0.0
          %713 = vmatpush1.msra.mxu0 0.0
          %714 = vmatprep.subr.mxu0 0.0
          %715 = vmatpush1.msra.mxu0 0.0
          %716 = vmatprep.subr.mxu0 0.0
          %717 = vmatpush1.msra.mxu0 0.0
          %718 = vmatprep.subr.mxu0 0.0
          %719 = vmatpush1.msra.mxu0 0.0
          %720 = vmatprep.subr.mxu0 0.0
          %721 = vmatpush1.msra.mxu0 0.0
          %722 = vmatprep.subr.mxu0 0.0
          %723 = vmatpush1.msra.mxu0 0.0
          %724 = vmatprep.subr.mxu0 0.0
          %725 = vmatpush1.msra.mxu0 0.0
          %726 = vmatprep.subr.mxu0 0.0
          %v727 = vand.u32 %v391, 4294901760
          %v728 = vsub.f32 %v391, %v727
          %v729 = vand.u32 %v728, 4294901760
          %730 = vmatpush1.msra.mxu0 %v729
          %731 = vmatprep.subr.mxu0 0.0
          %732 = vmatpush2.msra.mxu0 0.0
          %733 = vmatprep.subr.mxu0 0.0
          %734 = vmatpush2.msra.mxu0 0.0
          %735 = vmatprep.subr.mxu0 0.0
          %736 = vmatpush2.msra.mxu0 0.0
          %737 = vmatprep.subr.mxu0 0.0
          %738 = vmatpush2.msra.mxu0 0.0
          %739 = vmatprep.subr.mxu0 0.0
          %740 = vmatpush2.msra.mxu0 0.0
          %741 = vmatprep.subr.mxu0 0.0
          %742 = vmatpush2.msra.mxu0 0.0
          %743 = vmatprep.subr.mxu0 0.0
          %744 = vmatpush2.msra.mxu0 0.0
          %745 = vmatprep.subr.mxu0 0.0
          %746 = vmatpush2.msra.mxu0 0.0
          %747 = vmatprep.subr.mxu0 0.0
          %748 = vmatpush2.msra.mxu0 0.0
          %749 = vmatprep.subr.mxu0 0.0
          %750 = vmatpush2.msra.mxu0 0.0
          %751 = vmatprep.subr.mxu0 0.0
          %752 = vmatpush2.msra.mxu0 0.0
          %753 = vmatprep.subr.mxu0 0.0
          %754 = vmatpush2.msra.mxu0 0.0
          %755 = vmatprep.subr.mxu0 0.0
          %756 = vmatpush2.msra.mxu0 0.0
          %757 = vmatprep.subr.mxu0 0.0
          %758 = vmatpush2.msra.mxu0 0.0
          %759 = vmatprep.subr.mxu0 0.0
          %760 = vmatpush2.msra.mxu0 0.0
          %761 = vmatprep.subr.mxu0 0.0
          %762 = vmatpush2.msra.mxu0 0.0
          %763 = vmatprep.mubr.f32.mxu0 0.0
          %v764 = vand.u32 %v394, 4294901760
          %765 = vmatmul.mubr.f32.gmra.mxu0 %v764
          %v766 = vpop.f32.mrf.mxu0
          %v767 = vadd.f32 %v693, %v766
          %v768 = vpop.f32.mrf.mxu0
          %769 = vdwg.mxu0
          %770 = vmatprep.subr.mxu0 0.0
          %771 = vmatpush1.msra.mxu0 0.0
          %772 = vmatprep.subr.mxu0 0.0
          %773 = vmatpush1.msra.mxu0 0.0
          %774 = vmatprep.subr.mxu0 0.0
          %775 = vmatpush1.msra.mxu0 0.0
          %776 = vmatprep.subr.mxu0 0.0
          %777 = vmatpush1.msra.mxu0 0.0
          %778 = vmatprep.subr.mxu0 0.0
          %779 = vmatpush1.msra.mxu0 0.0
          %780 = vmatprep.subr.mxu0 0.0
          %781 = vmatpush1.msra.mxu0 0.0
          %782 = vmatprep.subr.mxu0 0.0
          %783 = vmatpush1.msra.mxu0 0.0
          %784 = vmatprep.subr.mxu0 0.0
          %785 = vmatpush1.msra.mxu0 0.0
          %786 = vmatprep.subr.mxu0 0.0
          %787 = vmatpush1.msra.mxu0 0.0
          %788 = vmatprep.subr.mxu0 0.0
          %789 = vmatpush1.msra.mxu0 0.0
          %790 = vmatprep.subr.mxu0 0.0
          %791 = vmatpush1.msra.mxu0 0.0
          %792 = vmatprep.subr.mxu0 0.0
          %793 = vmatpush1.msra.mxu0 0.0
          %794 = vmatprep.subr.mxu0 0.0
          %795 = vmatpush1.msra.mxu0 0.0
          %796 = vmatprep.subr.mxu0 0.0
          %797 = vmatpush1.msra.mxu0 0.0
          %798 = vmatprep.subr.mxu0 0.0
          %799 = vmatpush1.msra.mxu0 0.0
          %800 = vmatprep.subr.mxu0 0.0
          %v801 = vand.u32 %v391, 4294901760
          %802 = vmatpush1.msra.mxu0 %v801
          %803 = vmatprep.subr.mxu0 0.0
          %804 = vmatpush2.msra.mxu0 0.0
          %805 = vmatprep.subr.mxu0 0.0
          %806 = vmatpush2.msra.mxu0 0.0
          %807 = vmatprep.subr.mxu0 0.0
          %808 = vmatpush2.msra.mxu0 0.0
          %809 = vmatprep.subr.mxu0 0.0
          %810 = vmatpush2.msra.mxu0 0.0
          %811 = vmatprep.subr.mxu0 0.0
          %812 = vmatpush2.msra.mxu0 0.0
          %813 = vmatprep.subr.mxu0 0.0
          %814 = vmatpush2.msra.mxu0 0.0
          %815 = vmatprep.subr.mxu0 0.0
          %816 = vmatpush2.msra.mxu0 0.0
          %817 = vmatprep.subr.mxu0 0.0
          %818 = vmatpush2.msra.mxu0 0.0
          %819 = vmatprep.subr.mxu0 0.0
          %820 = vmatpush2.msra.mxu0 0.0
          %821 = vmatprep.subr.mxu0 0.0
          %822 = vmatpush2.msra.mxu0 0.0
          %823 = vmatprep.subr.mxu0 0.0
          %824 = vmatpush2.msra.mxu0 0.0
          %825 = vmatprep.subr.mxu0 0.0
          %826 = vmatpush2.msra.mxu0 0.0
          %827 = vmatprep.subr.mxu0 0.0
          %828 = vmatpush2.msra.mxu0 0.0
          %829 = vmatprep.subr.mxu0 0.0
          %830 = vmatpush2.msra.mxu0 0.0
          %831 = vmatprep.subr.mxu0 0.0
          %832 = vmatpush2.msra.mxu0 0.0
          %833 = vmatprep.subr.mxu0 0.0
          %834 = vmatpush2.msra.mxu0 0.0
          %835 = vmatprep.mubr.f32.mxu0 0.0
          %v836 = vand.u32 %v394, 4294901760
          %837 = vmatmul.mubr.f32.gmra.mxu0 %v836
          %v838 = vpop.f32.mrf.mxu0
          %v839 = vadd.f32 %v767, %v838
          %v840 = vpop.f32.mrf.mxu0
          %841 = vdwg.mxu0
          %v842 = vadd.f32 %v363, %v839
          %v843 = vadd.f32 %v842, %v358
          %v844 = vmul.f32 %v372, %v843
          %v845 = vmul.f32 %v391, %v358
          %v846 = vsub.f32 %v844, %v845
          %v847 = vld [vmem:[#allocation3] sm:$0xff]
          %v848 = vlaneseq
          %v849 = vshrl.u32 %v848, 7
          %v850 = vsub.s32 1, %v849
          %v851 = vrot.slane %v365, %v850
          %v852 = vmul.f32 %v851, %v846
          %v853 = vadd.f32 %v847, %v852
          %854 = vst [vmem:[#allocation3] sm:$0xff] %v853
          %v855 = vld [vmem:[#allocation2] sm:$0xff]
          %v856 = vrot.slane %v855, 4
          %v857 = vmax.f32 %v855, %v856
          %v858 = vrot.slane %v857, 2
          %v859 = vmax.f32 %v857, %v858
          %v860 = vrot.slane %v859, 1
          %v861 = vmax.f32 %v859, %v860
          %v862 = vsub.f32 %v855, %v861
          %v863 = vmul.f32 %v862, 1.442695
          %v864 = vpow.pop %v863
          %v866 = vsel %vm392, %v353, 0
          %868 = vmatprep.subr.mxu0 0.0
          %869 = vmatpush1.msra.mxu0 0.0
          %870 = vmatprep.subr.mxu0 0.0
          %871 = vmatpush1.msra.mxu0 0.0
          %872 = vmatprep.subr.mxu0 0.0
          %873 = vmatpush1.msra.mxu0 0.0
          %874 = vmatprep.subr.mxu0 0.0
          %875 = vmatpush1.msra.mxu0 0.0
          %876 = vmatprep.subr.mxu0 0.0
          %877 = vmatpush1.msra.mxu0 0.0
          %878 = vmatprep.subr.mxu0 0.0
          %879 = vmatpush1.msra.mxu0 0.0
          %880 = vmatprep.subr.mxu0 0.0
          %881 = vmatpush1.msra.mxu0 0.0
          %882 = vmatprep.subr.mxu0 0.0
          %883 = vmatpush1.msra.mxu0 0.0
          %884 = vmatprep.subr.mxu0 0.0
          %885 = vmatpush1.msra.mxu0 0.0
          %886 = vmatprep.subr.mxu0 0.0
          %887 = vmatpush1.msra.mxu0 0.0
          %888 = vmatprep.subr.mxu0 0.0
          %889 = vmatpush1.msra.mxu0 0.0
          %890 = vmatprep.subr.mxu0 0.0
          %891 = vmatpush1.msra.mxu0 0.0
          %892 = vmatprep.subr.mxu0 0.0
          %893 = vmatpush1.msra.mxu0 0.0
          %894 = vmatprep.subr.mxu0 0.0
          %895 = vmatpush1.msra.mxu0 0.0
          %896 = vmatprep.subr.mxu0 0.0
          %897 = vmatpush1.msra.mxu0 0.0
          %898 = vmatprep.subr.mxu0 0.0
          %v899 = vand.u32 %v864, 4294901760
          %900 = vmatpush1.msra.mxu0 %v899
          %901 = vmatprep.subr.mxu0 0.0
          %902 = vmatpush2.msra.mxu0 0.0
          %903 = vmatprep.subr.mxu0 0.0
          %904 = vmatpush2.msra.mxu0 0.0
          %905 = vmatprep.subr.mxu0 0.0
          %906 = vmatpush2.msra.mxu0 0.0
          %907 = vmatprep.subr.mxu0 0.0
          %908 = vmatpush2.msra.mxu0 0.0
          %909 = vmatprep.subr.mxu0 0.0
          %910 = vmatpush2.msra.mxu0 0.0
          %911 = vmatprep.subr.mxu0 0.0
          %912 = vmatpush2.msra.mxu0 0.0
          %913 = vmatprep.subr.mxu0 0.0
          %914 = vmatpush2.msra.mxu0 0.0
          %915 = vmatprep.subr.mxu0 0.0
          %916 = vmatpush2.msra.mxu0 0.0
          %917 = vmatprep.subr.mxu0 0.0
          %918 = vmatpush2.msra.mxu0 0.0
          %919 = vmatprep.subr.mxu0 0.0
          %920 = vmatpush2.msra.mxu0 0.0
          %921 = vmatprep.subr.mxu0 0.0
          %922 = vmatpush2.msra.mxu0 0.0
          %923 = vmatprep.subr.mxu0 0.0
          %924 = vmatpush2.msra.mxu0 0.0
          %925 = vmatprep.subr.mxu0 0.0
          %926 = vmatpush2.msra.mxu0 0.0
          %927 = vmatprep.subr.mxu0 0.0
          %928 = vmatpush2.msra.mxu0 0.0
          %929 = vmatprep.subr.mxu0 0.0
          %930 = vmatpush2.msra.mxu0 0.0
          %931 = vmatprep.subr.mxu0 0.0
          %932 = vmatpush2.msra.mxu0 0.0
          %933 = vmatprep.mubr.f32.mxu0 0.0
          %v934 = vand.u32 %v866, 4294901760
          %v935 = vsub.f32 %v866, %v934
          %v936 = vand.u32 %v935, 4294901760
          %v937 = vsub.f32 %v935, %v936
          %v938 = vand.u32 %v937, 4294901760
          %939 = vmatmul.mubr.f32.gmra.mxu0 %v938
          %v940 = vpop.f32.mrf.mxu0
          %v941 = vadd.f32 0.0, %v940
          %v942 = vpop.f32.mrf.mxu0
          %943 = vdwg.mxu0
          %944 = vmatprep.subr.mxu0 0.0
          %945 = vmatpush1.msra.mxu0 0.0
          %946 = vmatprep.subr.mxu0 0.0
          %947 = vmatpush1.msra.mxu0 0.0
          %948 = vmatprep.subr.mxu0 0.0
          %949 = vmatpush1.msra.mxu0 0.0
          %950 = vmatprep.subr.mxu0 0.0
          %951 = vmatpush1.msra.mxu0 0.0
          %952 = vmatprep.subr.mxu0 0.0
          %953 = vmatpush1.msra.mxu0 0.0
          %954 = vmatprep.subr.mxu0 0.0
          %955 = vmatpush1.msra.mxu0 0.0
          %956 = vmatprep.subr.mxu0 0.0
          %957 = vmatpush1.msra.mxu0 0.0
          %958 = vmatprep.subr.mxu0 0.0
          %959 = vmatpush1.msra.mxu0 0.0
          %960 = vmatprep.subr.mxu0 0.0
          %961 = vmatpush1.msra.mxu0 0.0
          %962 = vmatprep.subr.mxu0 0.0
          %963 = vmatpush1.msra.mxu0 0.0
          %964 = vmatprep.subr.mxu0 0.0
          %965 = vmatpush1.msra.mxu0 0.0
          %966 = vmatprep.subr.mxu0 0.0
          %967 = vmatpush1.msra.mxu0 0.0
          %968 = vmatprep.subr.mxu0 0.0
          %969 = vmatpush1.msra.mxu0 0.0
          %970 = vmatprep.subr.mxu0 0.0
          %971 = vmatpush1.msra.mxu0 0.0
          %972 = vmatprep.subr.mxu0 0.0
          %973 = vmatpush1.msra.mxu0 0.0
          %974 = vmatprep.subr.mxu0 0.0
          %v975 = vand.u32 %v864, 4294901760
          %v976 = vsub.f32 %v864, %v975
          %v977 = vand.u32 %v976, 4294901760
          %v978 = vsub.f32 %v976, %v977
          %v979 = vand.u32 %v978, 4294901760
          %980 = vmatpush1.msra.mxu0 %v979
          %981 = vmatprep.subr.mxu0 0.0
          %982 = vmatpush2.msra.mxu0 0.0
          %983 = vmatprep.subr.mxu0 0.0
          %984 = vmatpush2.msra.mxu0 0.0
          %985 = vmatprep.subr.mxu0 0.0
          %986 = vmatpush2.msra.mxu0 0.0
          %987 = vmatprep.subr.mxu0 0.0
          %988 = vmatpush2.msra.mxu0 0.0
          %989 = vmatprep.subr.mxu0 0.0
          %990 = vmatpush2.msra.mxu0 0.0
          %991 = vmatprep.subr.mxu0 0.0
          %992 = vmatpush2.msra.mxu0 0.0
          %993 = vmatprep.subr.mxu0 0.0
          %994 = vmatpush2.msra.mxu0 0.0
          %995 = vmatprep.subr.mxu0 0.0
          %996 = vmatpush2.msra.mxu0 0.0
          %997 = vmatprep.subr.mxu0 0.0
          %998 = vmatpush2.msra.mxu0 0.0
          %999 = vmatprep.subr.mxu0 0.0
          %1000 = vmatpush2.msra.mxu0 0.0
          %1001 = vmatprep.subr.mxu0 0.0
          %1002 = vmatpush2.msra.mxu0 0.0
          %1003 = vmatprep.subr.mxu0 0.0
          %1004 = vmatpush2.msra.mxu0 0.0
          %1005 = vmatprep.subr.mxu0 0.0
          %1006 = vmatpush2.msra.mxu0 0.0
          %1007 = vmatprep.subr.mxu0 0.0
          %1008 = vmatpush2.msra.mxu0 0.0
          %1009 = vmatprep.subr.mxu0 0.0
          %1010 = vmatpush2.msra.mxu0 0.0
          %1011 = vmatprep.subr.mxu0 0.0
          %1012 = vmatpush2.msra.mxu0 0.0
          %1013 = vmatprep.mubr.f32.mxu0 0.0
          %v1014 = vand.u32 %v866, 4294901760
          %1015 = vmatmul.mubr.f32.gmra.mxu0 %v1014
          %v1016 = vpop.f32.mrf.mxu0
          %v1017 = vadd.f32 %v941, %v1016
          %v1018 = vpop.f32.mrf.mxu0
          %1019 = vdwg.mxu0
          %1020 = vmatprep.subr.mxu0 0.0
          %1021 = vmatpush1.msra.mxu0 0.0
          %1022 = vmatprep.subr.mxu0 0.0
          %1023 = vmatpush1.msra.mxu0 0.0
          %1024 = vmatprep.subr.mxu0 0.0
          %1025 = vmatpush1.msra.mxu0 0.0
          %1026 = vmatprep.subr.mxu0 0.0
          %1027 = vmatpush1.msra.mxu0 0.0
          %1028 = vmatprep.subr.mxu0 0.0
          %1029 = vmatpush1.msra.mxu0 0.0
          %1030 = vmatprep.subr.mxu0 0.0
          %1031 = vmatpush1.msra.mxu0 0.0
          %1032 = vmatprep.subr.mxu0 0.0
          %1033 = vmatpush1.msra.mxu0 0.0
          %1034 = vmatprep.subr.mxu0 0.0
          %1035 = vmatpush1.msra.mxu0 0.0
          %1036 = vmatprep.subr.mxu0 0.0
          %1037 = vmatpush1.msra.mxu0 0.0
          %1038 = vmatprep.subr.mxu0 0.0
          %1039 = vmatpush1.msra.mxu0 0.0
          %1040 = vmatprep.subr.mxu0 0.0
          %1041 = vmatpush1.msra.mxu0 0.0
          %1042 = vmatprep.subr.mxu0 0.0
          %1043 = vmatpush1.msra.mxu0 0.0
          %1044 = vmatprep.subr.mxu0 0.0
          %1045 = vmatpush1.msra.mxu0 0.0
          %1046 = vmatprep.subr.mxu0 0.0
          %1047 = vmatpush1.msra.mxu0 0.0
          %1048 = vmatprep.subr.mxu0 0.0
          %1049 = vmatpush1.msra.mxu0 0.0
          %1050 = vmatprep.subr.mxu0 0.0
          %v1051 = vand.u32 %v864, 4294901760
          %v1052 = vsub.f32 %v864, %v1051
          %1053 = vmatpush1.msra.mxu0 %v1052
          %1054 = vmatprep.subr.mxu0 0.0
          %1055 = vmatpush2.msra.mxu0 0.0
          %1056 = vmatprep.subr.mxu0 0.0
          %1057 = vmatpush2.msra.mxu0 0.0
          %1058 = vmatprep.subr.mxu0 0.0
          %1059 = vmatpush2.msra.mxu0 0.0
          %1060 = vmatprep.subr.mxu0 0.0
          %1061 = vmatpush2.msra.mxu0 0.0
          %1062 = vmatprep.subr.mxu0 0.0
          %1063 = vmatpush2.msra.mxu0 0.0
          %1064 = vmatprep.subr.mxu0 0.0
          %1065 = vmatpush2.msra.mxu0 0.0
          %1066 = vmatprep.subr.mxu0 0.0
          %1067 = vmatpush2.msra.mxu0 0.0
          %1068 = vmatprep.subr.mxu0 0.0
          %1069 = vmatpush2.msra.mxu0 0.0
          %1070 = vmatprep.subr.mxu0 0.0
          %1071 = vmatpush2.msra.mxu0 0.0
          %1072 = vmatprep.subr.mxu0 0.0
          %1073 = vmatpush2.msra.mxu0 0.0
          %1074 = vmatprep.subr.mxu0 0.0
          %1075 = vmatpush2.msra.mxu0 0.0
          %1076 = vmatprep.subr.mxu0 0.0
          %1077 = vmatpush2.msra.mxu0 0.0
          %1078 = vmatprep.subr.mxu0 0.0
          %1079 = vmatpush2.msra.mxu0 0.0
          %1080 = vmatprep.subr.mxu0 0.0
          %1081 = vmatpush2.msra.mxu0 0.0
          %1082 = vmatprep.subr.mxu0 0.0
          %1083 = vmatpush2.msra.mxu0 0.0
          %1084 = vmatprep.subr.mxu0 0.0
          %1085 = vmatpush2.msra.mxu0 0.0
          %1086 = vmatprep.mubr.f32.mxu0 0.0
          %v1087 = vand.u32 %v866, 4294901760
          %v1088 = vsub.f32 %v866, %v1087
          %1089 = vmatmul.mubr.f32.gmra.mxu0 %v1088
          %v1090 = vpop.f32.mrf.mxu0
          %v1091 = vadd.f32 %v1017, %v1090
          %v1092 = vpop.f32.mrf.mxu0
          %1093 = vdwg.mxu0
          %1094 = vmatprep.subr.mxu0 0.0
          %1095 = vmatpush1.msra.mxu0 0.0
          %1096 = vmatprep.subr.mxu0 0.0
          %1097 = vmatpush1.msra.mxu0 0.0
          %1098 = vmatprep.subr.mxu0 0.0
          %1099 = vmatpush1.msra.mxu0 0.0
          %1100 = vmatprep.subr.mxu0 0.0
          %1101 = vmatpush1.msra.mxu0 0.0
          %1102 = vmatprep.subr.mxu0 0.0
          %1103 = vmatpush1.msra.mxu0 0.0
          %1104 = vmatprep.subr.mxu0 0.0
          %1105 = vmatpush1.msra.mxu0 0.0
          %1106 = vmatprep.subr.mxu0 0.0
          %1107 = vmatpush1.msra.mxu0 0.0
          %1108 = vmatprep.subr.mxu0 0.0
          %1109 = vmatpush1.msra.mxu0 0.0
          %1110 = vmatprep.subr.mxu0 0.0
          %1111 = vmatpush1.msra.mxu0 0.0
          %1112 = vmatprep.subr.mxu0 0.0
          %1113 = vmatpush1.msra.mxu0 0.0
          %1114 = vmatprep.subr.mxu0 0.0
          %1115 = vmatpush1.msra.mxu0 0.0
          %1116 = vmatprep.subr.mxu0 0.0
          %1117 = vmatpush1.msra.mxu0 0.0
          %1118 = vmatprep.subr.mxu0 0.0
          %1119 = vmatpush1.msra.mxu0 0.0
          %1120 = vmatprep.subr.mxu0 0.0
          %1121 = vmatpush1.msra.mxu0 0.0
          %1122 = vmatprep.subr.mxu0 0.0
          %1123 = vmatpush1.msra.mxu0 0.0
          %1124 = vmatprep.subr.mxu0 0.0
          %v1125 = vand.u32 %v864, 4294901760
          %1126 = vmatpush1.msra.mxu0 %v1125
          %1127 = vmatprep.subr.mxu0 0.0
          %1128 = vmatpush2.msra.mxu0 0.0
          %1129 = vmatprep.subr.mxu0 0.0
          %1130 = vmatpush2.msra.mxu0 0.0
          %1131 = vmatprep.subr.mxu0 0.0
          %1132 = vmatpush2.msra.mxu0 0.0
          %1133 = vmatprep.subr.mxu0 0.0
          %1134 = vmatpush2.msra.mxu0 0.0
          %1135 = vmatprep.subr.mxu0 0.0
          %1136 = vmatpush2.msra.mxu0 0.0
          %1137 = vmatprep.subr.mxu0 0.0
          %1138 = vmatpush2.msra.mxu0 0.0
          %1139 = vmatprep.subr.mxu0 0.0
          %1140 = vmatpush2.msra.mxu0 0.0
          %1141 = vmatprep.subr.mxu0 0.0
          %1142 = vmatpush2.msra.mxu0 0.0
          %1143 = vmatprep.subr.mxu0 0.0
          %1144 = vmatpush2.msra.mxu0 0.0
          %1145 = vmatprep.subr.mxu0 0.0
          %1146 = vmatpush2.msra.mxu0 0.0
          %1147 = vmatprep.subr.mxu0 0.0
          %1148 = vmatpush2.msra.mxu0 0.0
          %1149 = vmatprep.subr.mxu0 0.0
          %1150 = vmatpush2.msra.mxu0 0.0
          %1151 = vmatprep.subr.mxu0 0.0
          %1152 = vmatpush2.msra.mxu0 0.0
          %1153 = vmatprep.subr.mxu0 0.0
          %1154 = vmatpush2.msra.mxu0 0.0
          %1155 = vmatprep.subr.mxu0 0.0
          %1156 = vmatpush2.msra.mxu0 0.0
          %1157 = vmatprep.subr.mxu0 0.0
          %1158 = vmatpush2.msra.mxu0 0.0
          %1159 = vmatprep.mubr.f32.mxu0 0.0
          %v1160 = vand.u32 %v866, 4294901760
          %v1161 = vsub.f32 %v866, %v1160
          %v1162 = vand.u32 %v1161, 4294901760
          %1163 = vmatmul.mubr.f32.gmra.mxu0 %v1162
          %v1164 = vpop.f32.mrf.mxu0
          %v1165 = vadd.f32 %v1091, %v1164
          %v1166 = vpop.f32.mrf.mxu0
          %1167 = vdwg.mxu0
          %1168 = vmatprep.subr.mxu0 0.0
          %1169 = vmatpush1.msra.mxu0 0.0
          %1170 = vmatprep.subr.mxu0 0.0
          %1171 = vmatpush1.msra.mxu0 0.0
          %1172 = vmatprep.subr.mxu0 0.0
          %1173 = vmatpush1.msra.mxu0 0.0
          %1174 = vmatprep.subr.mxu0 0.0
          %1175 = vmatpush1.msra.mxu0 0.0
          %1176 = vmatprep.subr.mxu0 0.0
          %1177 = vmatpush1.msra.mxu0 0.0
          %1178 = vmatprep.subr.mxu0 0.0
          %1179 = vmatpush1.msra.mxu0 0.0
          %1180 = vmatprep.subr.mxu0 0.0
          %1181 = vmatpush1.msra.mxu0 0.0
          %1182 = vmatprep.subr.mxu0 0.0
          %1183 = vmatpush1.msra.mxu0 0.0
          %1184 = vmatprep.subr.mxu0 0.0
          %1185 = vmatpush1.msra.mxu0 0.0
          %1186 = vmatprep.subr.mxu0 0.0
          %1187 = vmatpush1.msra.mxu0 0.0
          %1188 = vmatprep.subr.mxu0 0.0
          %1189 = vmatpush1.msra.mxu0 0.0
          %1190 = vmatprep.subr.mxu0 0.0
          %1191 = vmatpush1.msra.mxu0 0.0
          %1192 = vmatprep.subr.mxu0 0.0
          %1193 = vmatpush1.msra.mxu0 0.0
          %1194 = vmatprep.subr.mxu0 0.0
          %1195 = vmatpush1.msra.mxu0 0.0
          %1196 = vmatprep.subr.mxu0 0.0
          %1197 = vmatpush1.msra.mxu0 0.0
          %1198 = vmatprep.subr.mxu0 0.0
          %v1199 = vand.u32 %v864, 4294901760
          %v1200 = vsub.f32 %v864, %v1199
          %v1201 = vand.u32 %v1200, 4294901760
          %1202 = vmatpush1.msra.mxu0 %v1201
          %1203 = vmatprep.subr.mxu0 0.0
          %1204 = vmatpush2.msra.mxu0 0.0
          %1205 = vmatprep.subr.mxu0 0.0
          %1206 = vmatpush2.msra.mxu0 0.0
          %1207 = vmatprep.subr.mxu0 0.0
          %1208 = vmatpush2.msra.mxu0 0.0
          %1209 = vmatprep.subr.mxu0 0.0
          %1210 = vmatpush2.msra.mxu0 0.0
          %1211 = vmatprep.subr.mxu0 0.0
          %1212 = vmatpush2.msra.mxu0 0.0
          %1213 = vmatprep.subr.mxu0 0.0
          %1214 = vmatpush2.msra.mxu0 0.0
          %1215 = vmatprep.subr.mxu0 0.0
          %1216 = vmatpush2.msra.mxu0 0.0
          %1217 = vmatprep.subr.mxu0 0.0
          %1218 = vmatpush2.msra.mxu0 0.0
          %1219 = vmatprep.subr.mxu0 0.0
          %1220 = vmatpush2.msra.mxu0 0.0
          %1221 = vmatprep.subr.mxu0 0.0
          %1222 = vmatpush2.msra.mxu0 0.0
          %1223 = vmatprep.subr.mxu0 0.0
          %1224 = vmatpush2.msra.mxu0 0.0
          %1225 = vmatprep.subr.mxu0 0.0
          %1226 = vmatpush2.msra.mxu0 0.0
          %1227 = vmatprep.subr.mxu0 0.0
          %1228 = vmatpush2.msra.mxu0 0.0
          %1229 = vmatprep.subr.mxu0 0.0
          %1230 = vmatpush2.msra.mxu0 0.0
          %1231 = vmatprep.subr.mxu0 0.0
          %1232 = vmatpush2.msra.mxu0 0.0
          %1233 = vmatprep.subr.mxu0 0.0
          %1234 = vmatpush2.msra.mxu0 0.0
          %1235 = vmatprep.mubr.f32.mxu0 0.0
          %v1236 = vand.u32 %v866, 4294901760
          %1237 = vmatmul.mubr.f32.gmra.mxu0 %v1236
          %v1238 = vpop.f32.mrf.mxu0
          %v1239 = vadd.f32 %v1165, %v1238
          %v1240 = vpop.f32.mrf.mxu0
          %1241 = vdwg.mxu0
          %1242 = vmatprep.subr.mxu0 0.0
          %1243 = vmatpush1.msra.mxu0 0.0
          %1244 = vmatprep.subr.mxu0 0.0
          %1245 = vmatpush1.msra.mxu0 0.0
          %1246 = vmatprep.subr.mxu0 0.0
          %1247 = vmatpush1.msra.mxu0 0.0
          %1248 = vmatprep.subr.mxu0 0.0
          %1249 = vmatpush1.msra.mxu0 0.0
          %1250 = vmatprep.subr.mxu0 0.0
          %1251 = vmatpush1.msra.mxu0 0.0
          %1252 = vmatprep.subr.mxu0 0.0
          %1253 = vmatpush1.msra.mxu0 0.0
          %1254 = vmatprep.subr.mxu0 0.0
          %1255 = vmatpush1.msra.mxu0 0.0
          %1256 = vmatprep.subr.mxu0 0.0
          %1257 = vmatpush1.msra.mxu0 0.0
          %1258 = vmatprep.subr.mxu0 0.0
          %1259 = vmatpush1.msra.mxu0 0.0
          %1260 = vmatprep.subr.mxu0 0.0
          %1261 = vmatpush1.msra.mxu0 0.0
          %1262 = vmatprep.subr.mxu0 0.0
          %1263 = vmatpush1.msra.mxu0 0.0
          %1264 = vmatprep.subr.mxu0 0.0
          %1265 = vmatpush1.msra.mxu0 0.0
          %1266 = vmatprep.subr.mxu0 0.0
          %1267 = vmatpush1.msra.mxu0 0.0
          %1268 = vmatprep.subr.mxu0 0.0
          %1269 = vmatpush1.msra.mxu0 0.0
          %1270 = vmatprep.subr.mxu0 0.0
          %1271 = vmatpush1.msra.mxu0 0.0
          %1272 = vmatprep.subr.mxu0 0.0
          %v1273 = vand.u32 %v864, 4294901760
          %1274 = vmatpush1.msra.mxu0 %v1273
          %1275 = vmatprep.subr.mxu0 0.0
          %1276 = vmatpush2.msra.mxu0 0.0
          %1277 = vmatprep.subr.mxu0 0.0
          %1278 = vmatpush2.msra.mxu0 0.0
          %1279 = vmatprep.subr.mxu0 0.0
          %1280 = vmatpush2.msra.mxu0 0.0
          %1281 = vmatprep.subr.mxu0 0.0
          %1282 = vmatpush2.msra.mxu0 0.0
          %1283 = vmatprep.subr.mxu0 0.0
          %1284 = vmatpush2.msra.mxu0 0.0
          %1285 = vmatprep.subr.mxu0 0.0
          %1286 = vmatpush2.msra.mxu0 0.0
          %1287 = vmatprep.subr.mxu0 0.0
          %1288 = vmatpush2.msra.mxu0 0.0
          %1289 = vmatprep.subr.mxu0 0.0
          %1290 = vmatpush2.msra.mxu0 0.0
          %1291 = vmatprep.subr.mxu0 0.0
          %1292 = vmatpush2.msra.mxu0 0.0
          %1293 = vmatprep.subr.mxu0 0.0
          %1294 = vmatpush2.msra.mxu0 0.0
          %1295 = vmatprep.subr.mxu0 0.0
          %1296 = vmatpush2.msra.mxu0 0.0
          %1297 = vmatprep.subr.mxu0 0.0
          %1298 = vmatpush2.msra.mxu0 0.0
          %1299 = vmatprep.subr.mxu0 0.0
          %1300 = vmatpush2.msra.mxu0 0.0
          %1301 = vmatprep.subr.mxu0 0.0
          %1302 = vmatpush2.msra.mxu0 0.0
          %1303 = vmatprep.subr.mxu0 0.0
          %1304 = vmatpush2.msra.mxu0 0.0
          %1305 = vmatprep.subr.mxu0 0.0
          %1306 = vmatpush2.msra.mxu0 0.0
          %1307 = vmatprep.mubr.f32.mxu0 0.0
          %v1308 = vand.u32 %v866, 4294901760
          %1309 = vmatmul.mubr.f32.gmra.mxu0 %v1308
          %v1310 = vpop.f32.mrf.mxu0
          %v1311 = vadd.f32 %v1239, %v1310
          %v1312 = vpop.f32.mrf.mxu0
          %1313 = vdwg.mxu0
          %1315 = vset.pattern.permute.xlu0 0
          %1316 = vperm.xlu0 %1315, %v354
          %v1317 = vpop.permute.xlu0 %1316
          %v1319 = vadd.f32 %v861, %v1317
          %v1320 = vlog2.pop %v1311
          %v1321 = vmul.f32 %v1320, 0.6931472
          %v1322 = vadd.f32 %v1319, %v1321
          %v1323 = vadd.f32 %v1322, %v363
          %vm1324 = vcmp.gt.f32.partialorder %v365, 0.5
          %v1325 = vsel %vm1324, 1, 0
          %v1326 = vlaneseq
          %v1327 = vshrl.u32 %v1326, 7
          %v1328 = vsub.s32 1, %v1327
          %v1329 = vrot.slane %v1325, %v1328
          %vm1330 = vcmp.eq.s32.totalorder %v1329, 1
          %v1331 = vsel %vm1330, %v1323, %v855
          %1332 = vst [vmem:[#allocation2] sm:$0xff] %v1331
        $region64: #{tpu_custom_call.1} parent=47 // pred_fallthru
          _
        %1333 = vst [vmem:[#allocation4] sm:$0xff] %v372
        %s1334 = sadd.s32 %s362, 1
        %s1335 = scalar_lea.vmem %s308, 8 [#allocation5]
        %v1336 = vld [vmem:[%s1335] sm:$0xff]
        %s1337 = scalar_lea.vmem %s317, 2 [#allocation8]
        %v1338 = vld [vmem:[%s1337] sm:$0x3]
        %v1339 = vcvt.s32.f32 %v1338
        %v1340 = vlaneseq
        %v1341 = vshrl.u32 %v1340, 7
        %v1342 = vsub.s32 0, %v1341
        %v1343 = vrot.slane %v1338, %v1342
        %vm1344 = vcmp.eq.s32.totalorder %v361, %v1343
        %v1345 = vsel %vm1344, 1, 0
        %v1346 = vcvt.s32.f32 %v1345
        %p1347 = scmp.eq.s32.totalorder %s1334, 0
        // Predicated region
        $region65: #{tpu_custom_call.1} parent=47 // pred_check
          %p1348 = pneg %p1347
        $region66: #{tpu_custom_call.1} parent=47 // pred_check_branch
          %1350 = sbr.rel (%p1348) target = $region68
        $region67: #{tpu_custom_call.1} parent=47 // pred_region
          %1352 = vset.pattern.permute.xlu0 0
          %1353 = vperm.xlu0 %1352, %v350
          %v1354 = vpop.permute.xlu0 %1353
          %v1356 = vadd.f32 %v1354, %v1336
          %v1357 = vadd.f32 %v1356, %v358
          %v1358 = vmul.f32 %v1346, %v1357
          %1359 = vst [vmem:[#allocation3] sm:$0xff] %v1358
          %1360 = vst [vmem:[#allocation2] sm:$0xff] %v1356
        $region68: #{tpu_custom_call.1} parent=47 // pred_fallthru
          _
        %p1361 = scmp.gt.s32.totalorder %s1334, 0
        // Predicated region
        $region69: #{tpu_custom_call.1} parent=47 // pred_check
          %p1362 = pneg %p1361
        $region70: #{tpu_custom_call.1} parent=47 // pred_check_branch
          %1364 = sbr.rel (%p1362) target = $region72
        $region71: #{tpu_custom_call.1} parent=47 // pred_region
          %v1365 = vld [vmem:[#allocation4] sm:$0xff]
          %vm1366 = vcmask 64512
          %v1368 = vsel %vm1366, %v352, 0
          %1370 = vmatprep.subr.mxu0 0.0
          %1371 = vmatpush1.msra.mxu0 0.0
          %1372 = vmatprep.subr.mxu0 0.0
          %1373 = vmatpush1.msra.mxu0 0.0
          %1374 = vmatprep.subr.mxu0 0.0
          %1375 = vmatpush1.msra.mxu0 0.0
          %1376 = vmatprep.subr.mxu0 0.0
          %1377 = vmatpush1.msra.mxu0 0.0
          %1378 = vmatprep.subr.mxu0 0.0
          %1379 = vmatpush1.msra.mxu0 0.0
          %1380 = vmatprep.subr.mxu0 0.0
          %1381 = vmatpush1.msra.mxu0 0.0
          %1382 = vmatprep.subr.mxu0 0.0
          %1383 = vmatpush1.msra.mxu0 0.0
          %1384 = vmatprep.subr.mxu0 0.0
          %1385 = vmatpush1.msra.mxu0 0.0
          %1386 = vmatprep.subr.mxu0 0.0
          %1387 = vmatpush1.msra.mxu0 0.0
          %1388 = vmatprep.subr.mxu0 0.0
          %1389 = vmatpush1.msra.mxu0 0.0
          %1390 = vmatprep.subr.mxu0 0.0
          %1391 = vmatpush1.msra.mxu0 0.0
          %1392 = vmatprep.subr.mxu0 0.0
          %1393 = vmatpush1.msra.mxu0 0.0
          %1394 = vmatprep.subr.mxu0 0.0
          %1395 = vmatpush1.msra.mxu0 0.0
          %1396 = vmatprep.subr.mxu0 0.0
          %1397 = vmatpush1.msra.mxu0 0.0
          %1398 = vmatprep.subr.mxu0 0.0
          %1399 = vmatpush1.msra.mxu0 0.0
          %1400 = vmatprep.subr.mxu0 0.0
          %v1401 = vand.u32 %v1365, 4294901760
          %1402 = vmatpush1.msra.mxu0 %v1401
          %1403 = vmatprep.subr.mxu0 0.0
          %1404 = vmatpush2.msra.mxu0 0.0
          %1405 = vmatprep.subr.mxu0 0.0
          %1406 = vmatpush2.msra.mxu0 0.0
          %1407 = vmatprep.subr.mxu0 0.0
          %1408 = vmatpush2.msra.mxu0 0.0
          %1409 = vmatprep.subr.mxu0 0.0
          %1410 = vmatpush2.msra.mxu0 0.0
          %1411 = vmatprep.subr.mxu0 0.0
          %1412 = vmatpush2.msra.mxu0 0.0
          %1413 = vmatprep.subr.mxu0 0.0
          %1414 = vmatpush2.msra.mxu0 0.0
          %1415 = vmatprep.subr.mxu0 0.0
          %1416 = vmatpush2.msra.mxu0 0.0
          %1417 = vmatprep.subr.mxu0 0.0
          %1418 = vmatpush2.msra.mxu0 0.0
          %1419 = vmatprep.subr.mxu0 0.0
          %1420 = vmatpush2.msra.mxu0 0.0
          %1421 = vmatprep.subr.mxu0 0.0
          %1422 = vmatpush2.msra.mxu0 0.0
          %1423 = vmatprep.subr.mxu0 0.0
          %1424 = vmatpush2.msra.mxu0 0.0
          %1425 = vmatprep.subr.mxu0 0.0
          %1426 = vmatpush2.msra.mxu0 0.0
          %1427 = vmatprep.subr.mxu0 0.0
          %1428 = vmatpush2.msra.mxu0 0.0
          %1429 = vmatprep.subr.mxu0 0.0
          %1430 = vmatpush2.msra.mxu0 0.0
          %1431 = vmatprep.subr.mxu0 0.0
          %1432 = vmatpush2.msra.mxu0 0.0
          %1433 = vmatprep.subr.mxu0 0.0
          %1434 = vmatpush2.msra.mxu0 0.0
          %1435 = vmatprep.mubr.f32.mxu0 0.0
          %v1436 = vand.u32 %v1368, 4294901760
          %v1437 = vsub.f32 %v1368, %v1436
          %v1438 = vand.u32 %v1437, 4294901760
          %v1439 = vsub.f32 %v1437, %v1438
          %v1440 = vand.u32 %v1439, 4294901760
          %1441 = vmatmul.mubr.f32.gmra.mxu0 %v1440
          %v1442 = vpop.f32.mrf.mxu0
          %v1443 = vadd.f32 0.0, %v1442
          %v1444 = vpop.f32.mrf.mxu0
          %1445 = vdwg.mxu0
          %1446 = vmatprep.subr.mxu0 0.0
          %1447 = vmatpush1.msra.mxu0 0.0
          %1448 = vmatprep.subr.mxu0 0.0
          %1449 = vmatpush1.msra.mxu0 0.0
          %1450 = vmatprep.subr.mxu0 0.0
          %1451 = vmatpush1.msra.mxu0 0.0
          %1452 = vmatprep.subr.mxu0 0.0
          %1453 = vmatpush1.msra.mxu0 0.0
          %1454 = vmatprep.subr.mxu0 0.0
          %1455 = vmatpush1.msra.mxu0 0.0
          %1456 = vmatprep.subr.mxu0 0.0
          %1457 = vmatpush1.msra.mxu0 0.0
          %1458 = vmatprep.subr.mxu0 0.0
          %1459 = vmatpush1.msra.mxu0 0.0
          %1460 = vmatprep.subr.mxu0 0.0
          %1461 = vmatpush1.msra.mxu0 0.0
          %1462 = vmatprep.subr.mxu0 0.0
          %1463 = vmatpush1.msra.mxu0 0.0
          %1464 = vmatprep.subr.mxu0 0.0
          %1465 = vmatpush1.msra.mxu0 0.0
          %1466 = vmatprep.subr.mxu0 0.0
          %1467 = vmatpush1.msra.mxu0 0.0
          %1468 = vmatprep.subr.mxu0 0.0
          %1469 = vmatpush1.msra.mxu0 0.0
          %1470 = vmatprep.subr.mxu0 0.0
          %1471 = vmatpush1.msra.mxu0 0.0
          %1472 = vmatprep.subr.mxu0 0.0
          %1473 = vmatpush1.msra.mxu0 0.0
          %1474 = vmatprep.subr.mxu0 0.0
          %1475 = vmatpush1.msra.mxu0 0.0
          %1476 = vmatprep.subr.mxu0 0.0
          %v1477 = vand.u32 %v1365, 4294901760
          %v1478 = vsub.f32 %v1365, %v1477
          %v1479 = vand.u32 %v1478, 4294901760
          %v1480 = vsub.f32 %v1478, %v1479
          %v1481 = vand.u32 %v1480, 4294901760
          %1482 = vmatpush1.msra.mxu0 %v1481
          %1483 = vmatprep.subr.mxu0 0.0
          %1484 = vmatpush2.msra.mxu0 0.0
          %1485 = vmatprep.subr.mxu0 0.0
          %1486 = vmatpush2.msra.mxu0 0.0
          %1487 = vmatprep.subr.mxu0 0.0
          %1488 = vmatpush2.msra.mxu0 0.0
          %1489 = vmatprep.subr.mxu0 0.0
          %1490 = vmatpush2.msra.mxu0 0.0
          %1491 = vmatprep.subr.mxu0 0.0
          %1492 = vmatpush2.msra.mxu0 0.0
          %1493 = vmatprep.subr.mxu0 0.0
          %1494 = vmatpush2.msra.mxu0 0.0
          %1495 = vmatprep.subr.mxu0 0.0
          %1496 = vmatpush2.msra.mxu0 0.0
          %1497 = vmatprep.subr.mxu0 0.0
          %1498 = vmatpush2.msra.mxu0 0.0
          %1499 = vmatprep.subr.mxu0 0.0
          %1500 = vmatpush2.msra.mxu0 0.0
          %1501 = vmatprep.subr.mxu0 0.0
          %1502 = vmatpush2.msra.mxu0 0.0
          %1503 = vmatprep.subr.mxu0 0.0
          %1504 = vmatpush2.msra.mxu0 0.0
          %1505 = vmatprep.subr.mxu0 0.0
          %1506 = vmatpush2.msra.mxu0 0.0
          %1507 = vmatprep.subr.mxu0 0.0
          %1508 = vmatpush2.msra.mxu0 0.0
          %1509 = vmatprep.subr.mxu0 0.0
          %1510 = vmatpush2.msra.mxu0 0.0
          %1511 = vmatprep.subr.mxu0 0.0
          %1512 = vmatpush2.msra.mxu0 0.0
          %1513 = vmatprep.subr.mxu0 0.0
          %1514 = vmatpush2.msra.mxu0 0.0
          %1515 = vmatprep.mubr.f32.mxu0 0.0
          %v1516 = vand.u32 %v1368, 4294901760
          %1517 = vmatmul.mubr.f32.gmra.mxu0 %v1516
          %v1518 = vpop.f32.mrf.mxu0
          %v1519 = vadd.f32 %v1443, %v1518
          %v1520 = vpop.f32.mrf.mxu0
          %1521 = vdwg.mxu0
          %1522 = vmatprep.subr.mxu0 0.0
          %1523 = vmatpush1.msra.mxu0 0.0
          %1524 = vmatprep.subr.mxu0 0.0
          %1525 = vmatpush1.msra.mxu0 0.0
          %1526 = vmatprep.subr.mxu0 0.0
          %1527 = vmatpush1.msra.mxu0 0.0
          %1528 = vmatprep.subr.mxu0 0.0
          %1529 = vmatpush1.msra.mxu0 0.0
          %1530 = vmatprep.subr.mxu0 0.0
          %1531 = vmatpush1.msra.mxu0 0.0
          %1532 = vmatprep.subr.mxu0 0.0
          %1533 = vmatpush1.msra.mxu0 0.0
          %1534 = vmatprep.subr.mxu0 0.0
          %1535 = vmatpush1.msra.mxu0 0.0
          %1536 = vmatprep.subr.mxu0 0.0
          %1537 = vmatpush1.msra.mxu0 0.0
          %1538 = vmatprep.subr.mxu0 0.0
          %1539 = vmatpush1.msra.mxu0 0.0
          %1540 = vmatprep.subr.mxu0 0.0
          %1541 = vmatpush1.msra.mxu0 0.0
          %1542 = vmatprep.subr.mxu0 0.0
          %1543 = vmatpush1.msra.mxu0 0.0
          %1544 = vmatprep.subr.mxu0 0.0
          %1545 = vmatpush1.msra.mxu0 0.0
          %1546 = vmatprep.subr.mxu0 0.0
          %1547 = vmatpush1.msra.mxu0 0.0
          %1548 = vmatprep.subr.mxu0 0.0
          %1549 = vmatpush1.msra.mxu0 0.0
          %1550 = vmatprep.subr.mxu0 0.0
          %1551 = vmatpush1.msra.mxu0 0.0
          %1552 = vmatprep.subr.mxu0 0.0
          %v1553 = vand.u32 %v1365, 4294901760
          %v1554 = vsub.f32 %v1365, %v1553
          %1555 = vmatpush1.msra.mxu0 %v1554
          %1556 = vmatprep.subr.mxu0 0.0
          %1557 = vmatpush2.msra.mxu0 0.0
          %1558 = vmatprep.subr.mxu0 0.0
          %1559 = vmatpush2.msra.mxu0 0.0
          %1560 = vmatprep.subr.mxu0 0.0
          %1561 = vmatpush2.msra.mxu0 0.0
          %1562 = vmatprep.subr.mxu0 0.0
          %1563 = vmatpush2.msra.mxu0 0.0
          %1564 = vmatprep.subr.mxu0 0.0
          %1565 = vmatpush2.msra.mxu0 0.0
          %1566 = vmatprep.subr.mxu0 0.0
          %1567 = vmatpush2.msra.mxu0 0.0
          %1568 = vmatprep.subr.mxu0 0.0
          %1569 = vmatpush2.msra.mxu0 0.0
          %1570 = vmatprep.subr.mxu0 0.0
          %1571 = vmatpush2.msra.mxu0 0.0
          %1572 = vmatprep.subr.mxu0 0.0
          %1573 = vmatpush2.msra.mxu0 0.0
          %1574 = vmatprep.subr.mxu0 0.0
          %1575 = vmatpush2.msra.mxu0 0.0
          %1576 = vmatprep.subr.mxu0 0.0
          %1577 = vmatpush2.msra.mxu0 0.0
          %1578 = vmatprep.subr.mxu0 0.0
          %1579 = vmatpush2.msra.mxu0 0.0
          %1580 = vmatprep.subr.mxu0 0.0
          %1581 = vmatpush2.msra.mxu0 0.0
          %1582 = vmatprep.subr.mxu0 0.0
          %1583 = vmatpush2.msra.mxu0 0.0
          %1584 = vmatprep.subr.mxu0 0.0
          %1585 = vmatpush2.msra.mxu0 0.0
          %1586 = vmatprep.subr.mxu0 0.0
          %1587 = vmatpush2.msra.mxu0 0.0
          %1588 = vmatprep.mubr.f32.mxu0 0.0
          %v1589 = vand.u32 %v1368, 4294901760
          %v1590 = vsub.f32 %v1368, %v1589
          %1591 = vmatmul.mubr.f32.gmra.mxu0 %v1590
          %v1592 = vpop.f32.mrf.mxu0
          %v1593 = vadd.f32 %v1519, %v1592
          %v1594 = vpop.f32.mrf.mxu0
          %1595 = vdwg.mxu0
          %1596 = vmatprep.subr.mxu0 0.0
          %1597 = vmatpush1.msra.mxu0 0.0
          %1598 = vmatprep.subr.mxu0 0.0
          %1599 = vmatpush1.msra.mxu0 0.0
          %1600 = vmatprep.subr.mxu0 0.0
          %1601 = vmatpush1.msra.mxu0 0.0
          %1602 = vmatprep.subr.mxu0 0.0
          %1603 = vmatpush1.msra.mxu0 0.0
          %1604 = vmatprep.subr.mxu0 0.0
          %1605 = vmatpush1.msra.mxu0 0.0
          %1606 = vmatprep.subr.mxu0 0.0
          %1607 = vmatpush1.msra.mxu0 0.0
          %1608 = vmatprep.subr.mxu0 0.0
          %1609 = vmatpush1.msra.mxu0 0.0
          %1610 = vmatprep.subr.mxu0 0.0
          %1611 = vmatpush1.msra.mxu0 0.0
          %1612 = vmatprep.subr.mxu0 0.0
          %1613 = vmatpush1.msra.mxu0 0.0
          %1614 = vmatprep.subr.mxu0 0.0
          %1615 = vmatpush1.msra.mxu0 0.0
          %1616 = vmatprep.subr.mxu0 0.0
          %1617 = vmatpush1.msra.mxu0 0.0
          %1618 = vmatprep.subr.mxu0 0.0
          %1619 = vmatpush1.msra.mxu0 0.0
          %1620 = vmatprep.subr.mxu0 0.0
          %1621 = vmatpush1.msra.mxu0 0.0
          %1622 = vmatprep.subr.mxu0 0.0
          %1623 = vmatpush1.msra.mxu0 0.0
          %1624 = vmatprep.subr.mxu0 0.0
          %1625 = vmatpush1.msra.mxu0 0.0
          %1626 = vmatprep.subr.mxu0 0.0
          %v1627 = vand.u32 %v1365, 4294901760
          %1628 = vmatpush1.msra.mxu0 %v1627
          %1629 = vmatprep.subr.mxu0 0.0
          %1630 = vmatpush2.msra.mxu0 0.0
          %1631 = vmatprep.subr.mxu0 0.0
          %1632 = vmatpush2.msra.mxu0 0.0
          %1633 = vmatprep.subr.mxu0 0.0
          %1634 = vmatpush2.msra.mxu0 0.0
          %1635 = vmatprep.subr.mxu0 0.0
          %1636 = vmatpush2.msra.mxu0 0.0
          %1637 = vmatprep.subr.mxu0 0.0
          %1638 = vmatpush2.msra.mxu0 0.0
          %1639 = vmatprep.subr.mxu0 0.0
          %1640 = vmatpush2.msra.mxu0 0.0
          %1641 = vmatprep.subr.mxu0 0.0
          %1642 = vmatpush2.msra.mxu0 0.0
          %1643 = vmatprep.subr.mxu0 0.0
          %1644 = vmatpush2.msra.mxu0 0.0
          %1645 = vmatprep.subr.mxu0 0.0
          %1646 = vmatpush2.msra.mxu0 0.0
          %1647 = vmatprep.subr.mxu0 0.0
          %1648 = vmatpush2.msra.mxu0 0.0
          %1649 = vmatprep.subr.mxu0 0.0
          %1650 = vmatpush2.msra.mxu0 0.0
          %1651 = vmatprep.subr.mxu0 0.0
          %1652 = vmatpush2.msra.mxu0 0.0
          %1653 = vmatprep.subr.mxu0 0.0
          %1654 = vmatpush2.msra.mxu0 0.0
          %1655 = vmatprep.subr.mxu0 0.0
          %1656 = vmatpush2.msra.mxu0 0.0
          %1657 = vmatprep.subr.mxu0 0.0
          %1658 = vmatpush2.msra.mxu0 0.0
          %1659 = vmatprep.subr.mxu0 0.0
          %1660 = vmatpush2.msra.mxu0 0.0
          %1661 = vmatprep.mubr.f32.mxu0 0.0
          %v1662 = vand.u32 %v1368, 4294901760
          %v1663 = vsub.f32 %v1368, %v1662
          %v1664 = vand.u32 %v1663, 4294901760
          %1665 = vmatmul.mubr.f32.gmra.mxu0 %v1664
          %v1666 = vpop.f32.mrf.mxu0
          %v1667 = vadd.f32 %v1593, %v1666
          %v1668 = vpop.f32.mrf.mxu0
          %1669 = vdwg.mxu0
          %1670 = vmatprep.subr.mxu0 0.0
          %1671 = vmatpush1.msra.mxu0 0.0
          %1672 = vmatprep.subr.mxu0 0.0
          %1673 = vmatpush1.msra.mxu0 0.0
          %1674 = vmatprep.subr.mxu0 0.0
          %1675 = vmatpush1.msra.mxu0 0.0
          %1676 = vmatprep.subr.mxu0 0.0
          %1677 = vmatpush1.msra.mxu0 0.0
          %1678 = vmatprep.subr.mxu0 0.0
          %1679 = vmatpush1.msra.mxu0 0.0
          %1680 = vmatprep.subr.mxu0 0.0
          %1681 = vmatpush1.msra.mxu0 0.0
          %1682 = vmatprep.subr.mxu0 0.0
          %1683 = vmatpush1.msra.mxu0 0.0
          %1684 = vmatprep.subr.mxu0 0.0
          %1685 = vmatpush1.msra.mxu0 0.0
          %1686 = vmatprep.subr.mxu0 0.0
          %1687 = vmatpush1.msra.mxu0 0.0
          %1688 = vmatprep.subr.mxu0 0.0
          %1689 = vmatpush1.msra.mxu0 0.0
          %1690 = vmatprep.subr.mxu0 0.0
          %1691 = vmatpush1.msra.mxu0 0.0
          %1692 = vmatprep.subr.mxu0 0.0
          %1693 = vmatpush1.msra.mxu0 0.0
          %1694 = vmatprep.subr.mxu0 0.0
          %1695 = vmatpush1.msra.mxu0 0.0
          %1696 = vmatprep.subr.mxu0 0.0
          %1697 = vmatpush1.msra.mxu0 0.0
          %1698 = vmatprep.subr.mxu0 0.0
          %1699 = vmatpush1.msra.mxu0 0.0
          %1700 = vmatprep.subr.mxu0 0.0
          %v1701 = vand.u32 %v1365, 4294901760
          %v1702 = vsub.f32 %v1365, %v1701
          %v1703 = vand.u32 %v1702, 4294901760
          %1704 = vmatpush1.msra.mxu0 %v1703
          %1705 = vmatprep.subr.mxu0 0.0
          %1706 = vmatpush2.msra.mxu0 0.0
          %1707 = vmatprep.subr.mxu0 0.0
          %1708 = vmatpush2.msra.mxu0 0.0
          %1709 = vmatprep.subr.mxu0 0.0
          %1710 = vmatpush2.msra.mxu0 0.0
          %1711 = vmatprep.subr.mxu0 0.0
          %1712 = vmatpush2.msra.mxu0 0.0
          %1713 = vmatprep.subr.mxu0 0.0
          %1714 = vmatpush2.msra.mxu0 0.0
          %1715 = vmatprep.subr.mxu0 0.0
          %1716 = vmatpush2.msra.mxu0 0.0
          %1717 = vmatprep.subr.mxu0 0.0
          %1718 = vmatpush2.msra.mxu0 0.0
          %1719 = vmatprep.subr.mxu0 0.0
          %1720 = vmatpush2.msra.mxu0 0.0
          %1721 = vmatprep.subr.mxu0 0.0
          %1722 = vmatpush2.msra.mxu0 0.0
          %1723 = vmatprep.subr.mxu0 0.0
          %1724 = vmatpush2.msra.mxu0 0.0
          %1725 = vmatprep.subr.mxu0 0.0
          %1726 = vmatpush2.msra.mxu0 0.0
          %1727 = vmatprep.subr.mxu0 0.0
          %1728 = vmatpush2.msra.mxu0 0.0
          %1729 = vmatprep.subr.mxu0 0.0
          %1730 = vmatpush2.msra.mxu0 0.0
          %1731 = vmatprep.subr.mxu0 0.0
          %1732 = vmatpush2.msra.mxu0 0.0
          %1733 = vmatprep.subr.mxu0 0.0
          %1734 = vmatpush2.msra.mxu0 0.0
          %1735 = vmatprep.subr.mxu0 0.0
          %1736 = vmatpush2.msra.mxu0 0.0
          %1737 = vmatprep.mubr.f32.mxu0 0.0
          %v1738 = vand.u32 %v1368, 4294901760
          %1739 = vmatmul.mubr.f32.gmra.mxu0 %v1738
          %v1740 = vpop.f32.mrf.mxu0
          %v1741 = vadd.f32 %v1667, %v1740
          %v1742 = vpop.f32.mrf.mxu0
          %1743 = vdwg.mxu0
          %1744 = vmatprep.subr.mxu0 0.0
          %1745 = vmatpush1.msra.mxu0 0.0
          %1746 = vmatprep.subr.mxu0 0.0
          %1747 = vmatpush1.msra.mxu0 0.0
          %1748 = vmatprep.subr.mxu0 0.0
          %1749 = vmatpush1.msra.mxu0 0.0
          %1750 = vmatprep.subr.mxu0 0.0
          %1751 = vmatpush1.msra.mxu0 0.0
          %1752 = vmatprep.subr.mxu0 0.0
          %1753 = vmatpush1.msra.mxu0 0.0
          %1754 = vmatprep.subr.mxu0 0.0
          %1755 = vmatpush1.msra.mxu0 0.0
          %1756 = vmatprep.subr.mxu0 0.0
          %1757 = vmatpush1.msra.mxu0 0.0
          %1758 = vmatprep.subr.mxu0 0.0
          %1759 = vmatpush1.msra.mxu0 0.0
          %1760 = vmatprep.subr.mxu0 0.0
          %1761 = vmatpush1.msra.mxu0 0.0
          %1762 = vmatprep.subr.mxu0 0.0
          %1763 = vmatpush1.msra.mxu0 0.0
          %1764 = vmatprep.subr.mxu0 0.0
          %1765 = vmatpush1.msra.mxu0 0.0
          %1766 = vmatprep.subr.mxu0 0.0
          %1767 = vmatpush1.msra.mxu0 0.0
          %1768 = vmatprep.subr.mxu0 0.0
          %1769 = vmatpush1.msra.mxu0 0.0
          %1770 = vmatprep.subr.mxu0 0.0
          %1771 = vmatpush1.msra.mxu0 0.0
          %1772 = vmatprep.subr.mxu0 0.0
          %1773 = vmatpush1.msra.mxu0 0.0
          %1774 = vmatprep.subr.mxu0 0.0
          %v1775 = vand.u32 %v1365, 4294901760
          %1776 = vmatpush1.msra.mxu0 %v1775
          %1777 = vmatprep.subr.mxu0 0.0
          %1778 = vmatpush2.msra.mxu0 0.0
          %1779 = vmatprep.subr.mxu0 0.0
          %1780 = vmatpush2.msra.mxu0 0.0
          %1781 = vmatprep.subr.mxu0 0.0
          %1782 = vmatpush2.msra.mxu0 0.0
          %1783 = vmatprep.subr.mxu0 0.0
          %1784 = vmatpush2.msra.mxu0 0.0
          %1785 = vmatprep.subr.mxu0 0.0
          %1786 = vmatpush2.msra.mxu0 0.0
          %1787 = vmatprep.subr.mxu0 0.0
          %1788 = vmatpush2.msra.mxu0 0.0
          %1789 = vmatprep.subr.mxu0 0.0
          %1790 = vmatpush2.msra.mxu0 0.0
          %1791 = vmatprep.subr.mxu0 0.0
          %1792 = vmatpush2.msra.mxu0 0.0
          %1793 = vmatprep.subr.mxu0 0.0
          %1794 = vmatpush2.msra.mxu0 0.0
          %1795 = vmatprep.subr.mxu0 0.0
          %1796 = vmatpush2.msra.mxu0 0.0
          %1797 = vmatprep.subr.mxu0 0.0
          %1798 = vmatpush2.msra.mxu0 0.0
          %1799 = vmatprep.subr.mxu0 0.0
          %1800 = vmatpush2.msra.mxu0 0.0
          %1801 = vmatprep.subr.mxu0 0.0
          %1802 = vmatpush2.msra.mxu0 0.0
          %1803 = vmatprep.subr.mxu0 0.0
          %1804 = vmatpush2.msra.mxu0 0.0
          %1805 = vmatprep.subr.mxu0 0.0
          %1806 = vmatpush2.msra.mxu0 0.0
          %1807 = vmatprep.subr.mxu0 0.0
          %1808 = vmatpush2.msra.mxu0 0.0
          %1809 = vmatprep.mubr.f32.mxu0 0.0
          %v1810 = vand.u32 %v1368, 4294901760
          %1811 = vmatmul.mubr.f32.gmra.mxu0 %v1810
          %v1812 = vpop.f32.mrf.mxu0
          %v1813 = vadd.f32 %v1741, %v1812
          %v1814 = vpop.f32.mrf.mxu0
          %1815 = vdwg.mxu0
          %v1816 = vadd.f32 %v1336, %v1813
          %v1817 = vadd.f32 %v1816, %v358
          %v1818 = vmul.f32 %v1346, %v1817
          %v1819 = vmul.f32 %v1365, %v358
          %v1820 = vsub.f32 %v1818, %v1819
          %v1821 = vld [vmem:[#allocation3] sm:$0xff]
          %v1822 = vlaneseq
          %v1823 = vshrl.u32 %v1822, 7
          %v1824 = vsub.s32 1, %v1823
          %v1825 = vrot.slane %v1339, %v1824
          %v1826 = vmul.f32 %v1825, %v1820
          %v1827 = vadd.f32 %v1821, %v1826
          %1828 = vst [vmem:[#allocation3] sm:$0xff] %v1827
          %v1829 = vld [vmem:[#allocation2] sm:$0xff]
          %v1830 = vrot.slane %v1829, 4
          %v1831 = vmax.f32 %v1829, %v1830
          %v1832 = vrot.slane %v1831, 2
          %v1833 = vmax.f32 %v1831, %v1832
          %v1834 = vrot.slane %v1833, 1
          %v1835 = vmax.f32 %v1833, %v1834
          %v1836 = vsub.f32 %v1829, %v1835
          %v1837 = vmul.f32 %v1836, 1.442695
          %v1838 = vpow.pop %v1837
          %v1840 = vsel %vm1366, %v353, 0
          %1842 = vmatprep.subr.mxu0 0.0
          %1843 = vmatpush1.msra.mxu0 0.0
          %1844 = vmatprep.subr.mxu0 0.0
          %1845 = vmatpush1.msra.mxu0 0.0
          %1846 = vmatprep.subr.mxu0 0.0
          %1847 = vmatpush1.msra.mxu0 0.0
          %1848 = vmatprep.subr.mxu0 0.0
          %1849 = vmatpush1.msra.mxu0 0.0
          %1850 = vmatprep.subr.mxu0 0.0
          %1851 = vmatpush1.msra.mxu0 0.0
          %1852 = vmatprep.subr.mxu0 0.0
          %1853 = vmatpush1.msra.mxu0 0.0
          %1854 = vmatprep.subr.mxu0 0.0
          %1855 = vmatpush1.msra.mxu0 0.0
          %1856 = vmatprep.subr.mxu0 0.0
          %1857 = vmatpush1.msra.mxu0 0.0
          %1858 = vmatprep.subr.mxu0 0.0
          %1859 = vmatpush1.msra.mxu0 0.0
          %1860 = vmatprep.subr.mxu0 0.0
          %1861 = vmatpush1.msra.mxu0 0.0
          %1862 = vmatprep.subr.mxu0 0.0
          %1863 = vmatpush1.msra.mxu0 0.0
          %1864 = vmatprep.subr.mxu0 0.0
          %1865 = vmatpush1.msra.mxu0 0.0
          %1866 = vmatprep.subr.mxu0 0.0
          %1867 = vmatpush1.msra.mxu0 0.0
          %1868 = vmatprep.subr.mxu0 0.0
          %1869 = vmatpush1.msra.mxu0 0.0
          %1870 = vmatprep.subr.mxu0 0.0
          %1871 = vmatpush1.msra.mxu0 0.0
          %1872 = vmatprep.subr.mxu0 0.0
          %v1873 = vand.u32 %v1838, 4294901760
          %1874 = vmatpush1.msra.mxu0 %v1873
          %1875 = vmatprep.subr.mxu0 0.0
          %1876 = vmatpush2.msra.mxu0 0.0
          %1877 = vmatprep.subr.mxu0 0.0
          %1878 = vmatpush2.msra.mxu0 0.0
          %1879 = vmatprep.subr.mxu0 0.0
          %1880 = vmatpush2.msra.mxu0 0.0
          %1881 = vmatprep.subr.mxu0 0.0
          %1882 = vmatpush2.msra.mxu0 0.0
          %1883 = vmatprep.subr.mxu0 0.0
          %1884 = vmatpush2.msra.mxu0 0.0
          %1885 = vmatprep.subr.mxu0 0.0
          %1886 = vmatpush2.msra.mxu0 0.0
          %1887 = vmatprep.subr.mxu0 0.0
          %1888 = vmatpush2.msra.mxu0 0.0
          %1889 = vmatprep.subr.mxu0 0.0
          %1890 = vmatpush2.msra.mxu0 0.0
          %1891 = vmatprep.subr.mxu0 0.0
          %1892 = vmatpush2.msra.mxu0 0.0
          %1893 = vmatprep.subr.mxu0 0.0
          %1894 = vmatpush2.msra.mxu0 0.0
          %1895 = vmatprep.subr.mxu0 0.0
          %1896 = vmatpush2.msra.mxu0 0.0
          %1897 = vmatprep.subr.mxu0 0.0
          %1898 = vmatpush2.msra.mxu0 0.0
          %1899 = vmatprep.subr.mxu0 0.0
          %1900 = vmatpush2.msra.mxu0 0.0
          %1901 = vmatprep.subr.mxu0 0.0
          %1902 = vmatpush2.msra.mxu0 0.0
          %1903 = vmatprep.subr.mxu0 0.0
          %1904 = vmatpush2.msra.mxu0 0.0
          %1905 = vmatprep.subr.mxu0 0.0
          %1906 = vmatpush2.msra.mxu0 0.0
          %1907 = vmatprep.mubr.f32.mxu0 0.0
          %v1908 = vand.u32 %v1840, 4294901760
          %v1909 = vsub.f32 %v1840, %v1908
          %v1910 = vand.u32 %v1909, 4294901760
          %v1911 = vsub.f32 %v1909, %v1910
          %v1912 = vand.u32 %v1911, 4294901760
          %1913 = vmatmul.mubr.f32.gmra.mxu0 %v1912
          %v1914 = vpop.f32.mrf.mxu0
          %v1915 = vadd.f32 0.0, %v1914
          %v1916 = vpop.f32.mrf.mxu0
          %1917 = vdwg.mxu0
          %1918 = vmatprep.subr.mxu0 0.0
          %1919 = vmatpush1.msra.mxu0 0.0
          %1920 = vmatprep.subr.mxu0 0.0
          %1921 = vmatpush1.msra.mxu0 0.0
          %1922 = vmatprep.subr.mxu0 0.0
          %1923 = vmatpush1.msra.mxu0 0.0
          %1924 = vmatprep.subr.mxu0 0.0
          %1925 = vmatpush1.msra.mxu0 0.0
          %1926 = vmatprep.subr.mxu0 0.0
          %1927 = vmatpush1.msra.mxu0 0.0
          %1928 = vmatprep.subr.mxu0 0.0
          %1929 = vmatpush1.msra.mxu0 0.0
          %1930 = vmatprep.subr.mxu0 0.0
          %1931 = vmatpush1.msra.mxu0 0.0
          %1932 = vmatprep.subr.mxu0 0.0
          %1933 = vmatpush1.msra.mxu0 0.0
          %1934 = vmatprep.subr.mxu0 0.0
          %1935 = vmatpush1.msra.mxu0 0.0
          %1936 = vmatprep.subr.mxu0 0.0
          %1937 = vmatpush1.msra.mxu0 0.0
          %1938 = vmatprep.subr.mxu0 0.0
          %1939 = vmatpush1.msra.mxu0 0.0
          %1940 = vmatprep.subr.mxu0 0.0
          %1941 = vmatpush1.msra.mxu0 0.0
          %1942 = vmatprep.subr.mxu0 0.0
          %1943 = vmatpush1.msra.mxu0 0.0
          %1944 = vmatprep.subr.mxu0 0.0
          %1945 = vmatpush1.msra.mxu0 0.0
          %1946 = vmatprep.subr.mxu0 0.0
          %1947 = vmatpush1.msra.mxu0 0.0
          %1948 = vmatprep.subr.mxu0 0.0
          %v1949 = vand.u32 %v1838, 4294901760
          %v1950 = vsub.f32 %v1838, %v1949
          %v1951 = vand.u32 %v1950, 4294901760
          %v1952 = vsub.f32 %v1950, %v1951
          %v1953 = vand.u32 %v1952, 4294901760
          %1954 = vmatpush1.msra.mxu0 %v1953
          %1955 = vmatprep.subr.mxu0 0.0
          %1956 = vmatpush2.msra.mxu0 0.0
          %1957 = vmatprep.subr.mxu0 0.0
          %1958 = vmatpush2.msra.mxu0 0.0
          %1959 = vmatprep.subr.mxu0 0.0
          %1960 = vmatpush2.msra.mxu0 0.0
          %1961 = vmatprep.subr.mxu0 0.0
          %1962 = vmatpush2.msra.mxu0 0.0
          %1963 = vmatprep.subr.mxu0 0.0
          %1964 = vmatpush2.msra.mxu0 0.0
          %1965 = vmatprep.subr.mxu0 0.0
          %1966 = vmatpush2.msra.mxu0 0.0
          %1967 = vmatprep.subr.mxu0 0.0
          %1968 = vmatpush2.msra.mxu0 0.0
          %1969 = vmatprep.subr.mxu0 0.0
          %1970 = vmatpush2.msra.mxu0 0.0
          %1971 = vmatprep.subr.mxu0 0.0
          %1972 = vmatpush2.msra.mxu0 0.0
          %1973 = vmatprep.subr.mxu0 0.0
          %1974 = vmatpush2.msra.mxu0 0.0
          %1975 = vmatprep.subr.mxu0 0.0
          %1976 = vmatpush2.msra.mxu0 0.0
          %1977 = vmatprep.subr.mxu0 0.0
          %1978 = vmatpush2.msra.mxu0 0.0
          %1979 = vmatprep.subr.mxu0 0.0
          %1980 = vmatpush2.msra.mxu0 0.0
          %1981 = vmatprep.subr.mxu0 0.0
          %1982 = vmatpush2.msra.mxu0 0.0
          %1983 = vmatprep.subr.mxu0 0.0
          %1984 = vmatpush2.msra.mxu0 0.0
          %1985 = vmatprep.subr.mxu0 0.0
          %1986 = vmatpush2.msra.mxu0 0.0
          %1987 = vmatprep.mubr.f32.mxu0 0.0
          %v1988 = vand.u32 %v1840, 4294901760
          %1989 = vmatmul.mubr.f32.gmra.mxu0 %v1988
          %v1990 = vpop.f32.mrf.mxu0
          %v1991 = vadd.f32 %v1915, %v1990
          %v1992 = vpop.f32.mrf.mxu0
          %1993 = vdwg.mxu0
          %1994 = vmatprep.subr.mxu0 0.0
          %1995 = vmatpush1.msra.mxu0 0.0
          %1996 = vmatprep.subr.mxu0 0.0
          %1997 = vmatpush1.msra.mxu0 0.0
          %1998 = vmatprep.subr.mxu0 0.0
          %1999 = vmatpush1.msra.mxu0 0.0
          %2000 = vmatprep.subr.mxu0 0.0
          %2001 = vmatpush1.msra.mxu0 0.0
          %2002 = vmatprep.subr.mxu0 0.0
          %2003 = vmatpush1.msra.mxu0 0.0
          %2004 = vmatprep.subr.mxu0 0.0
          %2005 = vmatpush1.msra.mxu0 0.0
          %2006 = vmatprep.subr.mxu0 0.0
          %2007 = vmatpush1.msra.mxu0 0.0
          %2008 = vmatprep.subr.mxu0 0.0
          %2009 = vmatpush1.msra.mxu0 0.0
          %2010 = vmatprep.subr.mxu0 0.0
          %2011 = vmatpush1.msra.mxu0 0.0
          %2012 = vmatprep.subr.mxu0 0.0
          %2013 = vmatpush1.msra.mxu0 0.0
          %2014 = vmatprep.subr.mxu0 0.0
          %2015 = vmatpush1.msra.mxu0 0.0
          %2016 = vmatprep.subr.mxu0 0.0
          %2017 = vmatpush1.msra.mxu0 0.0
          %2018 = vmatprep.subr.mxu0 0.0
          %2019 = vmatpush1.msra.mxu0 0.0
          %2020 = vmatprep.subr.mxu0 0.0
          %2021 = vmatpush1.msra.mxu0 0.0
          %2022 = vmatprep.subr.mxu0 0.0
          %2023 = vmatpush1.msra.mxu0 0.0
          %2024 = vmatprep.subr.mxu0 0.0
          %v2025 = vand.u32 %v1838, 4294901760
          %v2026 = vsub.f32 %v1838, %v2025
          %2027 = vmatpush1.msra.mxu0 %v2026
          %2028 = vmatprep.subr.mxu0 0.0
          %2029 = vmatpush2.msra.mxu0 0.0
          %2030 = vmatprep.subr.mxu0 0.0
          %2031 = vmatpush2.msra.mxu0 0.0
          %2032 = vmatprep.subr.mxu0 0.0
          %2033 = vmatpush2.msra.mxu0 0.0
          %2034 = vmatprep.subr.mxu0 0.0
          %2035 = vmatpush2.msra.mxu0 0.0
          %2036 = vmatprep.subr.mxu0 0.0
          %2037 = vmatpush2.msra.mxu0 0.0
          %2038 = vmatprep.subr.mxu0 0.0
          %2039 = vmatpush2.msra.mxu0 0.0
          %2040 = vmatprep.subr.mxu0 0.0
          %2041 = vmatpush2.msra.mxu0 0.0
          %2042 = vmatprep.subr.mxu0 0.0
          %2043 = vmatpush2.msra.mxu0 0.0
          %2044 = vmatprep.subr.mxu0 0.0
          %2045 = vmatpush2.msra.mxu0 0.0
          %2046 = vmatprep.subr.mxu0 0.0
          %2047 = vmatpush2.msra.mxu0 0.0
          %2048 = vmatprep.subr.mxu0 0.0
          %2049 = vmatpush2.msra.mxu0 0.0
          %2050 = vmatprep.subr.mxu0 0.0
          %2051 = vmatpush2.msra.mxu0 0.0
          %2052 = vmatprep.subr.mxu0 0.0
          %2053 = vmatpush2.msra.mxu0 0.0
          %2054 = vmatprep.subr.mxu0 0.0
          %2055 = vmatpush2.msra.mxu0 0.0
          %2056 = vmatprep.subr.mxu0 0.0
          %2057 = vmatpush2.msra.mxu0 0.0
          %2058 = vmatprep.subr.mxu0 0.0
          %2059 = vmatpush2.msra.mxu0 0.0
          %2060 = vmatprep.mubr.f32.mxu0 0.0
          %v2061 = vand.u32 %v1840, 4294901760
          %v2062 = vsub.f32 %v1840, %v2061
          %2063 = vmatmul.mubr.f32.gmra.mxu0 %v2062
          %v2064 = vpop.f32.mrf.mxu0
          %v2065 = vadd.f32 %v1991, %v2064
          %v2066 = vpop.f32.mrf.mxu0
          %2067 = vdwg.mxu0
          %2068 = vmatprep.subr.mxu0 0.0
          %2069 = vmatpush1.msra.mxu0 0.0
          %2070 = vmatprep.subr.mxu0 0.0
          %2071 = vmatpush1.msra.mxu0 0.0
          %2072 = vmatprep.subr.mxu0 0.0
          %2073 = vmatpush1.msra.mxu0 0.0
          %2074 = vmatprep.subr.mxu0 0.0
          %2075 = vmatpush1.msra.mxu0 0.0
          %2076 = vmatprep.subr.mxu0 0.0
          %2077 = vmatpush1.msra.mxu0 0.0
          %2078 = vmatprep.subr.mxu0 0.0
          %2079 = vmatpush1.msra.mxu0 0.0
          %2080 = vmatprep.subr.mxu0 0.0
          %2081 = vmatpush1.msra.mxu0 0.0
          %2082 = vmatprep.subr.mxu0 0.0
          %2083 = vmatpush1.msra.mxu0 0.0
          %2084 = vmatprep.subr.mxu0 0.0
          %2085 = vmatpush1.msra.mxu0 0.0
          %2086 = vmatprep.subr.mxu0 0.0
          %2087 = vmatpush1.msra.mxu0 0.0
          %2088 = vmatprep.subr.mxu0 0.0
          %2089 = vmatpush1.msra.mxu0 0.0
          %2090 = vmatprep.subr.mxu0 0.0
          %2091 = vmatpush1.msra.mxu0 0.0
          %2092 = vmatprep.subr.mxu0 0.0
          %2093 = vmatpush1.msra.mxu0 0.0
          %2094 = vmatprep.subr.mxu0 0.0
          %2095 = vmatpush1.msra.mxu0 0.0
          %2096 = vmatprep.subr.mxu0 0.0
          %2097 = vmatpush1.msra.mxu0 0.0
          %2098 = vmatprep.subr.mxu0 0.0
          %v2099 = vand.u32 %v1838, 4294901760
          %2100 = vmatpush1.msra.mxu0 %v2099
          %2101 = vmatprep.subr.mxu0 0.0
          %2102 = vmatpush2.msra.mxu0 0.0
          %2103 = vmatprep.subr.mxu0 0.0
          %2104 = vmatpush2.msra.mxu0 0.0
          %2105 = vmatprep.subr.mxu0 0.0
          %2106 = vmatpush2.msra.mxu0 0.0
          %2107 = vmatprep.subr.mxu0 0.0
          %2108 = vmatpush2.msra.mxu0 0.0
          %2109 = vmatprep.subr.mxu0 0.0
          %2110 = vmatpush2.msra.mxu0 0.0
          %2111 = vmatprep.subr.mxu0 0.0
          %2112 = vmatpush2.msra.mxu0 0.0
          %2113 = vmatprep.subr.mxu0 0.0
          %2114 = vmatpush2.msra.mxu0 0.0
          %2115 = vmatprep.subr.mxu0 0.0
          %2116 = vmatpush2.msra.mxu0 0.0
          %2117 = vmatprep.subr.mxu0 0.0
          %2118 = vmatpush2.msra.mxu0 0.0
          %2119 = vmatprep.subr.mxu0 0.0
          %2120 = vmatpush2.msra.mxu0 0.0
          %2121 = vmatprep.subr.mxu0 0.0
          %2122 = vmatpush2.msra.mxu0 0.0
          %2123 = vmatprep.subr.mxu0 0.0
          %2124 = vmatpush2.msra.mxu0 0.0
          %2125 = vmatprep.subr.mxu0 0.0
          %2126 = vmatpush2.msra.mxu0 0.0
          %2127 = vmatprep.subr.mxu0 0.0
          %2128 = vmatpush2.msra.mxu0 0.0
          %2129 = vmatprep.subr.mxu0 0.0
          %2130 = vmatpush2.msra.mxu0 0.0
          %2131 = vmatprep.subr.mxu0 0.0
          %2132 = vmatpush2.msra.mxu0 0.0
          %2133 = vmatprep.mubr.f32.mxu0 0.0
          %v2134 = vand.u32 %v1840, 4294901760
          %v2135 = vsub.f32 %v1840, %v2134
          %v2136 = vand.u32 %v2135, 4294901760
          %2137 = vmatmul.mubr.f32.gmra.mxu0 %v2136
          %v2138 = vpop.f32.mrf.mxu0
          %v2139 = vadd.f32 %v2065, %v2138
          %v2140 = vpop.f32.mrf.mxu0
          %2141 = vdwg.mxu0
          %2142 = vmatprep.subr.mxu0 0.0
          %2143 = vmatpush1.msra.mxu0 0.0
          %2144 = vmatprep.subr.mxu0 0.0
          %2145 = vmatpush1.msra.mxu0 0.0
          %2146 = vmatprep.subr.mxu0 0.0
          %2147 = vmatpush1.msra.mxu0 0.0
          %2148 = vmatprep.subr.mxu0 0.0
          %2149 = vmatpush1.msra.mxu0 0.0
          %2150 = vmatprep.subr.mxu0 0.0
          %2151 = vmatpush1.msra.mxu0 0.0
          %2152 = vmatprep.subr.mxu0 0.0
          %2153 = vmatpush1.msra.mxu0 0.0
          %2154 = vmatprep.subr.mxu0 0.0
          %2155 = vmatpush1.msra.mxu0 0.0
          %2156 = vmatprep.subr.mxu0 0.0
          %2157 = vmatpush1.msra.mxu0 0.0
          %2158 = vmatprep.subr.mxu0 0.0
          %2159 = vmatpush1.msra.mxu0 0.0
          %2160 = vmatprep.subr.mxu0 0.0
          %2161 = vmatpush1.msra.mxu0 0.0
          %2162 = vmatprep.subr.mxu0 0.0
          %2163 = vmatpush1.msra.mxu0 0.0
          %2164 = vmatprep.subr.mxu0 0.0
          %2165 = vmatpush1.msra.mxu0 0.0
          %2166 = vmatprep.subr.mxu0 0.0
          %2167 = vmatpush1.msra.mxu0 0.0
          %2168 = vmatprep.subr.mxu0 0.0
          %2169 = vmatpush1.msra.mxu0 0.0
          %2170 = vmatprep.subr.mxu0 0.0
          %2171 = vmatpush1.msra.mxu0 0.0
          %2172 = vmatprep.subr.mxu0 0.0
          %v2173 = vand.u32 %v1838, 4294901760
          %v2174 = vsub.f32 %v1838, %v2173
          %v2175 = vand.u32 %v2174, 4294901760
          %2176 = vmatpush1.msra.mxu0 %v2175
          %2177 = vmatprep.subr.mxu0 0.0
          %2178 = vmatpush2.msra.mxu0 0.0
          %2179 = vmatprep.subr.mxu0 0.0
          %2180 = vmatpush2.msra.mxu0 0.0
          %2181 = vmatprep.subr.mxu0 0.0
          %2182 = vmatpush2.msra.mxu0 0.0
          %2183 = vmatprep.subr.mxu0 0.0
          %2184 = vmatpush2.msra.mxu0 0.0
          %2185 = vmatprep.subr.mxu0 0.0
          %2186 = vmatpush2.msra.mxu0 0.0
          %2187 = vmatprep.subr.mxu0 0.0
          %2188 = vmatpush2.msra.mxu0 0.0
          %2189 = vmatprep.subr.mxu0 0.0
          %2190 = vmatpush2.msra.mxu0 0.0
          %2191 = vmatprep.subr.mxu0 0.0
          %2192 = vmatpush2.msra.mxu0 0.0
          %2193 = vmatprep.subr.mxu0 0.0
          %2194 = vmatpush2.msra.mxu0 0.0
          %2195 = vmatprep.subr.mxu0 0.0
          %2196 = vmatpush2.msra.mxu0 0.0
          %2197 = vmatprep.subr.mxu0 0.0
          %2198 = vmatpush2.msra.mxu0 0.0
          %2199 = vmatprep.subr.mxu0 0.0
          %2200 = vmatpush2.msra.mxu0 0.0
          %2201 = vmatprep.subr.mxu0 0.0
          %2202 = vmatpush2.msra.mxu0 0.0
          %2203 = vmatprep.subr.mxu0 0.0
          %2204 = vmatpush2.msra.mxu0 0.0
          %2205 = vmatprep.subr.mxu0 0.0
          %2206 = vmatpush2.msra.mxu0 0.0
          %2207 = vmatprep.subr.mxu0 0.0
          %2208 = vmatpush2.msra.mxu0 0.0
          %2209 = vmatprep.mubr.f32.mxu0 0.0
          %v2210 = vand.u32 %v1840, 4294901760
          %2211 = vmatmul.mubr.f32.gmra.mxu0 %v2210
          %v2212 = vpop.f32.mrf.mxu0
          %v2213 = vadd.f32 %v2139, %v2212
          %v2214 = vpop.f32.mrf.mxu0
          %2215 = vdwg.mxu0
          %2216 = vmatprep.subr.mxu0 0.0
          %2217 = vmatpush1.msra.mxu0 0.0
          %2218 = vmatprep.subr.mxu0 0.0
          %2219 = vmatpush1.msra.mxu0 0.0
          %2220 = vmatprep.subr.mxu0 0.0
          %2221 = vmatpush1.msra.mxu0 0.0
          %2222 = vmatprep.subr.mxu0 0.0
          %2223 = vmatpush1.msra.mxu0 0.0
          %2224 = vmatprep.subr.mxu0 0.0
          %2225 = vmatpush1.msra.mxu0 0.0
          %2226 = vmatprep.subr.mxu0 0.0
          %2227 = vmatpush1.msra.mxu0 0.0
          %2228 = vmatprep.subr.mxu0 0.0
          %2229 = vmatpush1.msra.mxu0 0.0
          %2230 = vmatprep.subr.mxu0 0.0
          %2231 = vmatpush1.msra.mxu0 0.0
          %2232 = vmatprep.subr.mxu0 0.0
          %2233 = vmatpush1.msra.mxu0 0.0
          %2234 = vmatprep.subr.mxu0 0.0
          %2235 = vmatpush1.msra.mxu0 0.0
          %2236 = vmatprep.subr.mxu0 0.0
          %2237 = vmatpush1.msra.mxu0 0.0
          %2238 = vmatprep.subr.mxu0 0.0
          %2239 = vmatpush1.msra.mxu0 0.0
          %2240 = vmatprep.subr.mxu0 0.0
          %2241 = vmatpush1.msra.mxu0 0.0
          %2242 = vmatprep.subr.mxu0 0.0
          %2243 = vmatpush1.msra.mxu0 0.0
          %2244 = vmatprep.subr.mxu0 0.0
          %2245 = vmatpush1.msra.mxu0 0.0
          %2246 = vmatprep.subr.mxu0 0.0
          %v2247 = vand.u32 %v1838, 4294901760
          %2248 = vmatpush1.msra.mxu0 %v2247
          %2249 = vmatprep.subr.mxu0 0.0
          %2250 = vmatpush2.msra.mxu0 0.0
          %2251 = vmatprep.subr.mxu0 0.0
          %2252 = vmatpush2.msra.mxu0 0.0
          %2253 = vmatprep.subr.mxu0 0.0
          %2254 = vmatpush2.msra.mxu0 0.0
          %2255 = vmatprep.subr.mxu0 0.0
          %2256 = vmatpush2.msra.mxu0 0.0
          %2257 = vmatprep.subr.mxu0 0.0
          %2258 = vmatpush2.msra.mxu0 0.0
          %2259 = vmatprep.subr.mxu0 0.0
          %2260 = vmatpush2.msra.mxu0 0.0
          %2261 = vmatprep.subr.mxu0 0.0
          %2262 = vmatpush2.msra.mxu0 0.0
          %2263 = vmatprep.subr.mxu0 0.0
          %2264 = vmatpush2.msra.mxu0 0.0
          %2265 = vmatprep.subr.mxu0 0.0
          %2266 = vmatpush2.msra.mxu0 0.0
          %2267 = vmatprep.subr.mxu0 0.0
          %2268 = vmatpush2.msra.mxu0 0.0
          %2269 = vmatprep.subr.mxu0 0.0
          %2270 = vmatpush2.msra.mxu0 0.0
          %2271 = vmatprep.subr.mxu0 0.0
          %2272 = vmatpush2.msra.mxu0 0.0
          %2273 = vmatprep.subr.mxu0 0.0
          %2274 = vmatpush2.msra.mxu0 0.0
          %2275 = vmatprep.subr.mxu0 0.0
          %2276 = vmatpush2.msra.mxu0 0.0
          %2277 = vmatprep.subr.mxu0 0.0
          %2278 = vmatpush2.msra.mxu0 0.0
          %2279 = vmatprep.subr.mxu0 0.0
          %2280 = vmatpush2.msra.mxu0 0.0
          %2281 = vmatprep.mubr.f32.mxu0 0.0
          %v2282 = vand.u32 %v1840, 4294901760
          %2283 = vmatmul.mubr.f32.gmra.mxu0 %v2282
          %v2284 = vpop.f32.mrf.mxu0
          %v2285 = vadd.f32 %v2213, %v2284
          %v2286 = vpop.f32.mrf.mxu0
          %2287 = vdwg.mxu0
          %2289 = vset.pattern.permute.xlu0 0
          %2290 = vperm.xlu0 %2289, %v354
          %v2291 = vpop.permute.xlu0 %2290
          %v2293 = vadd.f32 %v1835, %v2291
          %v2294 = vlog2.pop %v2285
          %v2295 = vmul.f32 %v2294, 0.6931472
          %v2296 = vadd.f32 %v2293, %v2295
          %v2297 = vadd.f32 %v2296, %v1336
          %vm2298 = vcmp.gt.f32.partialorder %v1339, 0.5
          %v2299 = vsel %vm2298, 1, 0
          %v2300 = vlaneseq
          %v2301 = vshrl.u32 %v2300, 7
          %v2302 = vsub.s32 1, %v2301
          %v2303 = vrot.slane %v2299, %v2302
          %vm2304 = vcmp.eq.s32.totalorder %v2303, 1
          %v2305 = vsel %vm2304, %v2297, %v1829
          %2306 = vst [vmem:[#allocation2] sm:$0xff] %v2305
        $region72: #{tpu_custom_call.1} parent=47 // pred_fallthru
          _
        %2307 = vst [vmem:[#allocation4] sm:$0xff] %v1346
        %s2308 = sadd.s32 %s362, 2
        %s2309 = scalar_lea.vmem %s308, 16 [#allocation5]
        %v2310 = vld [vmem:[%s2309] sm:$0xff]
        %s2311 = scalar_lea.vmem %s317, 4 [#allocation8]
        %v2312 = vld [vmem:[%s2311] sm:$0x3]
        %v2313 = vcvt.s32.f32 %v2312
        %v2314 = vlaneseq
        %v2315 = vshrl.u32 %v2314, 7
        %v2316 = vsub.s32 0, %v2315
        %v2317 = vrot.slane %v2312, %v2316
        %vm2318 = vcmp.eq.s32.totalorder %v361, %v2317
        %v2319 = vsel %vm2318, 1, 0
        %v2320 = vcvt.s32.f32 %v2319
        %p2321 = scmp.eq.s32.totalorder %s2308, 0
        // Predicated region
        $region73: #{tpu_custom_call.1} parent=47 // pred_check
          %p2322 = pneg %p2321
        $region74: #{tpu_custom_call.1} parent=47 // pred_check_branch
          %2324 = sbr.rel (%p2322) target = $region76
        $region75: #{tpu_custom_call.1} parent=47 // pred_region
          %2326 = vset.pattern.permute.xlu0 0
          %2327 = vperm.xlu0 %2326, %v350
          %v2328 = vpop.permute.xlu0 %2327
          %v2330 = vadd.f32 %v2328, %v2310
          %v2331 = vadd.f32 %v2330, %v358
          %v2332 = vmul.f32 %v2320, %v2331
          %2333 = vst [vmem:[#allocation3] sm:$0xff] %v2332
          %2334 = vst [vmem:[#allocation2] sm:$0xff] %v2330
        $region76: #{tpu_custom_call.1} parent=47 // pred_fallthru
          _
        %p2335 = scmp.gt.s32.totalorder %s2308, 0
        // Predicated region
        $region77: #{tpu_custom_call.1} parent=47 // pred_check
          %p2336 = pneg %p2335
        $region78: #{tpu_custom_call.1} parent=47 // pred_check_branch
          %2338 = sbr.rel (%p2336) target = $region80
        $region79: #{tpu_custom_call.1} parent=47 // pred_region
          %v2339 = vld [vmem:[#allocation4] sm:$0xff]
          %vm2340 = vcmask 64512
          %v2342 = vsel %vm2340, %v352, 0
          %2344 = vmatprep.subr.mxu0 0.0
          %2345 = vmatpush1.msra.mxu0 0.0
          %2346 = vmatprep.subr.mxu0 0.0
          %2347 = vmatpush1.msra.mxu0 0.0
          %2348 = vmatprep.subr.mxu0 0.0
          %2349 = vmatpush1.msra.mxu0 0.0
          %2350 = vmatprep.subr.mxu0 0.0
          %2351 = vmatpush1.msra.mxu0 0.0
          %2352 = vmatprep.subr.mxu0 0.0
          %2353 = vmatpush1.msra.mxu0 0.0
          %2354 = vmatprep.subr.mxu0 0.0
          %2355 = vmatpush1.msra.mxu0 0.0
          %2356 = vmatprep.subr.mxu0 0.0
          %2357 = vmatpush1.msra.mxu0 0.0
          %2358 = vmatprep.subr.mxu0 0.0
          %2359 = vmatpush1.msra.mxu0 0.0
          %2360 = vmatprep.subr.mxu0 0.0
          %2361 = vmatpush1.msra.mxu0 0.0
          %2362 = vmatprep.subr.mxu0 0.0
          %2363 = vmatpush1.msra.mxu0 0.0
          %2364 = vmatprep.subr.mxu0 0.0
          %2365 = vmatpush1.msra.mxu0 0.0
          %2366 = vmatprep.subr.mxu0 0.0
          %2367 = vmatpush1.msra.mxu0 0.0
          %2368 = vmatprep.subr.mxu0 0.0
          %2369 = vmatpush1.msra.mxu0 0.0
          %2370 = vmatprep.subr.mxu0 0.0
          %2371 = vmatpush1.msra.mxu0 0.0
          %2372 = vmatprep.subr.mxu0 0.0
          %2373 = vmatpush1.msra.mxu0 0.0
          %2374 = vmatprep.subr.mxu0 0.0
          %v2375 = vand.u32 %v2339, 4294901760
          %2376 = vmatpush1.msra.mxu0 %v2375
          %2377 = vmatprep.subr.mxu0 0.0
          %2378 = vmatpush2.msra.mxu0 0.0
          %2379 = vmatprep.subr.mxu0 0.0
          %2380 = vmatpush2.msra.mxu0 0.0
          %2381 = vmatprep.subr.mxu0 0.0
          %2382 = vmatpush2.msra.mxu0 0.0
          %2383 = vmatprep.subr.mxu0 0.0
          %2384 = vmatpush2.msra.mxu0 0.0
          %2385 = vmatprep.subr.mxu0 0.0
          %2386 = vmatpush2.msra.mxu0 0.0
          %2387 = vmatprep.subr.mxu0 0.0
          %2388 = vmatpush2.msra.mxu0 0.0
          %2389 = vmatprep.subr.mxu0 0.0
          %2390 = vmatpush2.msra.mxu0 0.0
          %2391 = vmatprep.subr.mxu0 0.0
          %2392 = vmatpush2.msra.mxu0 0.0
          %2393 = vmatprep.subr.mxu0 0.0
          %2394 = vmatpush2.msra.mxu0 0.0
          %2395 = vmatprep.subr.mxu0 0.0
          %2396 = vmatpush2.msra.mxu0 0.0
          %2397 = vmatprep.subr.mxu0 0.0
          %2398 = vmatpush2.msra.mxu0 0.0
          %2399 = vmatprep.subr.mxu0 0.0
          %2400 = vmatpush2.msra.mxu0 0.0
          %2401 = vmatprep.subr.mxu0 0.0
          %2402 = vmatpush2.msra.mxu0 0.0
          %2403 = vmatprep.subr.mxu0 0.0
          %2404 = vmatpush2.msra.mxu0 0.0
          %2405 = vmatprep.subr.mxu0 0.0
          %2406 = vmatpush2.msra.mxu0 0.0
          %2407 = vmatprep.subr.mxu0 0.0
          %2408 = vmatpush2.msra.mxu0 0.0
          %2409 = vmatprep.mubr.f32.mxu0 0.0
          %v2410 = vand.u32 %v2342, 4294901760
          %v2411 = vsub.f32 %v2342, %v2410
          %v2412 = vand.u32 %v2411, 4294901760
          %v2413 = vsub.f32 %v2411, %v2412
          %v2414 = vand.u32 %v2413, 4294901760
          %2415 = vmatmul.mubr.f32.gmra.mxu0 %v2414
          %v2416 = vpop.f32.mrf.mxu0
          %v2417 = vadd.f32 0.0, %v2416
          %v2418 = vpop.f32.mrf.mxu0
          %2419 = vdwg.mxu0
          %2420 = vmatprep.subr.mxu0 0.0
          %2421 = vmatpush1.msra.mxu0 0.0
          %2422 = vmatprep.subr.mxu0 0.0
          %2423 = vmatpush1.msra.mxu0 0.0
          %2424 = vmatprep.subr.mxu0 0.0
          %2425 = vmatpush1.msra.mxu0 0.0
          %2426 = vmatprep.subr.mxu0 0.0
          %2427 = vmatpush1.msra.mxu0 0.0
          %2428 = vmatprep.subr.mxu0 0.0
          %2429 = vmatpush1.msra.mxu0 0.0
          %2430 = vmatprep.subr.mxu0 0.0
          %2431 = vmatpush1.msra.mxu0 0.0
          %2432 = vmatprep.subr.mxu0 0.0
          %2433 = vmatpush1.msra.mxu0 0.0
          %2434 = vmatprep.subr.mxu0 0.0
          %2435 = vmatpush1.msra.mxu0 0.0
          %2436 = vmatprep.subr.mxu0 0.0
          %2437 = vmatpush1.msra.mxu0 0.0
          %2438 = vmatprep.subr.mxu0 0.0
          %2439 = vmatpush1.msra.mxu0 0.0
          %2440 = vmatprep.subr.mxu0 0.0
          %2441 = vmatpush1.msra.mxu0 0.0
          %2442 = vmatprep.subr.mxu0 0.0
          %2443 = vmatpush1.msra.mxu0 0.0
          %2444 = vmatprep.subr.mxu0 0.0
          %2445 = vmatpush1.msra.mxu0 0.0
          %2446 = vmatprep.subr.mxu0 0.0
          %2447 = vmatpush1.msra.mxu0 0.0
          %2448 = vmatprep.subr.mxu0 0.0
          %2449 = vmatpush1.msra.mxu0 0.0
          %2450 = vmatprep.subr.mxu0 0.0
          %v2451 = vand.u32 %v2339, 4294901760
          %v2452 = vsub.f32 %v2339, %v2451
          %v2453 = vand.u32 %v2452, 4294901760
          %v2454 = vsub.f32 %v2452, %v2453
          %v2455 = vand.u32 %v2454, 4294901760
          %2456 = vmatpush1.msra.mxu0 %v2455
          %2457 = vmatprep.subr.mxu0 0.0
          %2458 = vmatpush2.msra.mxu0 0.0
          %2459 = vmatprep.subr.mxu0 0.0
          %2460 = vmatpush2.msra.mxu0 0.0
          %2461 = vmatprep.subr.mxu0 0.0
          %2462 = vmatpush2.msra.mxu0 0.0
          %2463 = vmatprep.subr.mxu0 0.0
          %2464 = vmatpush2.msra.mxu0 0.0
          %2465 = vmatprep.subr.mxu0 0.0
          %2466 = vmatpush2.msra.mxu0 0.0
          %2467 = vmatprep.subr.mxu0 0.0
          %2468 = vmatpush2.msra.mxu0 0.0
          %2469 = vmatprep.subr.mxu0 0.0
          %2470 = vmatpush2.msra.mxu0 0.0
          %2471 = vmatprep.subr.mxu0 0.0
          %2472 = vmatpush2.msra.mxu0 0.0
          %2473 = vmatprep.subr.mxu0 0.0
          %2474 = vmatpush2.msra.mxu0 0.0
          %2475 = vmatprep.subr.mxu0 0.0
          %2476 = vmatpush2.msra.mxu0 0.0
          %2477 = vmatprep.subr.mxu0 0.0
          %2478 = vmatpush2.msra.mxu0 0.0
          %2479 = vmatprep.subr.mxu0 0.0
          %2480 = vmatpush2.msra.mxu0 0.0
          %2481 = vmatprep.subr.mxu0 0.0
          %2482 = vmatpush2.msra.mxu0 0.0
          %2483 = vmatprep.subr.mxu0 0.0
          %2484 = vmatpush2.msra.mxu0 0.0
          %2485 = vmatprep.subr.mxu0 0.0
          %2486 = vmatpush2.msra.mxu0 0.0
          %2487 = vmatprep.subr.mxu0 0.0
          %2488 = vmatpush2.msra.mxu0 0.0
          %2489 = vmatprep.mubr.f32.mxu0 0.0
          %v2490 = vand.u32 %v2342, 4294901760
          %2491 = vmatmul.mubr.f32.gmra.mxu0 %v2490
          %v2492 = vpop.f32.mrf.mxu0
          %v2493 = vadd.f32 %v2417, %v2492
          %v2494 = vpop.f32.mrf.mxu0
          %2495 = vdwg.mxu0
          %2496 = vmatprep.subr.mxu0 0.0
          %2497 = vmatpush1.msra.mxu0 0.0
          %2498 = vmatprep.subr.mxu0 0.0
          %2499 = vmatpush1.msra.mxu0 0.0
          %2500 = vmatprep.subr.mxu0 0.0
          %2501 = vmatpush1.msra.mxu0 0.0
          %2502 = vmatprep.subr.mxu0 0.0
          %2503 = vmatpush1.msra.mxu0 0.0
          %2504 = vmatprep.subr.mxu0 0.0
          %2505 = vmatpush1.msra.mxu0 0.0
          %2506 = vmatprep.subr.mxu0 0.0
          %2507 = vmatpush1.msra.mxu0 0.0
          %2508 = vmatprep.subr.mxu0 0.0
          %2509 = vmatpush1.msra.mxu0 0.0
          %2510 = vmatprep.subr.mxu0 0.0
          %2511 = vmatpush1.msra.mxu0 0.0
          %2512 = vmatprep.subr.mxu0 0.0
          %2513 = vmatpush1.msra.mxu0 0.0
          %2514 = vmatprep.subr.mxu0 0.0
          %2515 = vmatpush1.msra.mxu0 0.0
          %2516 = vmatprep.subr.mxu0 0.0
          %2517 = vmatpush1.msra.mxu0 0.0
          %2518 = vmatprep.subr.mxu0 0.0
          %2519 = vmatpush1.msra.mxu0 0.0
          %2520 = vmatprep.subr.mxu0 0.0
          %2521 = vmatpush1.msra.mxu0 0.0
          %2522 = vmatprep.subr.mxu0 0.0
          %2523 = vmatpush1.msra.mxu0 0.0
          %2524 = vmatprep.subr.mxu0 0.0
          %2525 = vmatpush1.msra.mxu0 0.0
          %2526 = vmatprep.subr.mxu0 0.0
          %v2527 = vand.u32 %v2339, 4294901760
          %v2528 = vsub.f32 %v2339, %v2527
          %2529 = vmatpush1.msra.mxu0 %v2528
          %2530 = vmatprep.subr.mxu0 0.0
          %2531 = vmatpush2.msra.mxu0 0.0
          %2532 = vmatprep.subr.mxu0 0.0
          %2533 = vmatpush2.msra.mxu0 0.0
          %2534 = vmatprep.subr.mxu0 0.0
          %2535 = vmatpush2.msra.mxu0 0.0
          %2536 = vmatprep.subr.mxu0 0.0
          %2537 = vmatpush2.msra.mxu0 0.0
          %2538 = vmatprep.subr.mxu0 0.0
          %2539 = vmatpush2.msra.mxu0 0.0
          %2540 = vmatprep.subr.mxu0 0.0
          %2541 = vmatpush2.msra.mxu0 0.0
          %2542 = vmatprep.subr.mxu0 0.0
          %2543 = vmatpush2.msra.mxu0 0.0
          %2544 = vmatprep.subr.mxu0 0.0
          %2545 = vmatpush2.msra.mxu0 0.0
          %2546 = vmatprep.subr.mxu0 0.0
          %2547 = vmatpush2.msra.mxu0 0.0
          %2548 = vmatprep.subr.mxu0 0.0
          %2549 = vmatpush2.msra.mxu0 0.0
          %2550 = vmatprep.subr.mxu0 0.0
          %2551 = vmatpush2.msra.mxu0 0.0
          %2552 = vmatprep.subr.mxu0 0.0
          %2553 = vmatpush2.msra.mxu0 0.0
          %2554 = vmatprep.subr.mxu0 0.0
          %2555 = vmatpush2.msra.mxu0 0.0
          %2556 = vmatprep.subr.mxu0 0.0
          %2557 = vmatpush2.msra.mxu0 0.0
          %2558 = vmatprep.subr.mxu0 0.0
          %2559 = vmatpush2.msra.mxu0 0.0
          %2560 = vmatprep.subr.mxu0 0.0
          %2561 = vmatpush2.msra.mxu0 0.0
          %2562 = vmatprep.mubr.f32.mxu0 0.0
          %v2563 = vand.u32 %v2342, 4294901760
          %v2564 = vsub.f32 %v2342, %v2563
          %2565 = vmatmul.mubr.f32.gmra.mxu0 %v2564
          %v2566 = vpop.f32.mrf.mxu0
          %v2567 = vadd.f32 %v2493, %v2566
          %v2568 = vpop.f32.mrf.mxu0
          %2569 = vdwg.mxu0
          %2570 = vmatprep.subr.mxu0 0.0
          %2571 = vmatpush1.msra.mxu0 0.0
          %2572 = vmatprep.subr.mxu0 0.0
          %2573 = vmatpush1.msra.mxu0 0.0
          %2574 = vmatprep.subr.mxu0 0.0
          %2575 = vmatpush1.msra.mxu0 0.0
          %2576 = vmatprep.subr.mxu0 0.0
          %2577 = vmatpush1.msra.mxu0 0.0
          %2578 = vmatprep.subr.mxu0 0.0
          %2579 = vmatpush1.msra.mxu0 0.0
          %2580 = vmatprep.subr.mxu0 0.0
          %2581 = vmatpush1.msra.mxu0 0.0
          %2582 = vmatprep.subr.mxu0 0.0
          %2583 = vmatpush1.msra.mxu0 0.0
          %2584 = vmatprep.subr.mxu0 0.0
          %2585 = vmatpush1.msra.mxu0 0.0
          %2586 = vmatprep.subr.mxu0 0.0
          %2587 = vmatpush1.msra.mxu0 0.0
          %2588 = vmatprep.subr.mxu0 0.0
          %2589 = vmatpush1.msra.mxu0 0.0
          %2590 = vmatprep.subr.mxu0 0.0
          %2591 = vmatpush1.msra.mxu0 0.0
          %2592 = vmatprep.subr.mxu0 0.0
          %2593 = vmatpush1.msra.mxu0 0.0
          %2594 = vmatprep.subr.mxu0 0.0
          %2595 = vmatpush1.msra.mxu0 0.0
          %2596 = vmatprep.subr.mxu0 0.0
          %2597 = vmatpush1.msra.mxu0 0.0
          %2598 = vmatprep.subr.mxu0 0.0
          %2599 = vmatpush1.msra.mxu0 0.0
          %2600 = vmatprep.subr.mxu0 0.0
          %v2601 = vand.u32 %v2339, 4294901760
          %2602 = vmatpush1.msra.mxu0 %v2601
          %2603 = vmatprep.subr.mxu0 0.0
          %2604 = vmatpush2.msra.mxu0 0.0
          %2605 = vmatprep.subr.mxu0 0.0
          %2606 = vmatpush2.msra.mxu0 0.0
          %2607 = vmatprep.subr.mxu0 0.0
          %2608 = vmatpush2.msra.mxu0 0.0
          %2609 = vmatprep.subr.mxu0 0.0
          %2610 = vmatpush2.msra.mxu0 0.0
          %2611 = vmatprep.subr.mxu0 0.0
          %2612 = vmatpush2.msra.mxu0 0.0
          %2613 = vmatprep.subr.mxu0 0.0
          %2614 = vmatpush2.msra.mxu0 0.0
          %2615 = vmatprep.subr.mxu0 0.0
          %2616 = vmatpush2.msra.mxu0 0.0
          %2617 = vmatprep.subr.mxu0 0.0
          %2618 = vmatpush2.msra.mxu0 0.0
          %2619 = vmatprep.subr.mxu0 0.0
          %2620 = vmatpush2.msra.mxu0 0.0
          %2621 = vmatprep.subr.mxu0 0.0
          %2622 = vmatpush2.msra.mxu0 0.0
          %2623 = vmatprep.subr.mxu0 0.0
          %2624 = vmatpush2.msra.mxu0 0.0
          %2625 = vmatprep.subr.mxu0 0.0
          %2626 = vmatpush2.msra.mxu0 0.0
          %2627 = vmatprep.subr.mxu0 0.0
          %2628 = vmatpush2.msra.mxu0 0.0
          %2629 = vmatprep.subr.mxu0 0.0
          %2630 = vmatpush2.msra.mxu0 0.0
          %2631 = vmatprep.subr.mxu0 0.0
          %2632 = vmatpush2.msra.mxu0 0.0
          %2633 = vmatprep.subr.mxu0 0.0
          %2634 = vmatpush2.msra.mxu0 0.0
          %2635 = vmatprep.mubr.f32.mxu0 0.0
          %v2636 = vand.u32 %v2342, 4294901760
          %v2637 = vsub.f32 %v2342, %v2636
          %v2638 = vand.u32 %v2637, 4294901760
          %2639 = vmatmul.mubr.f32.gmra.mxu0 %v2638
          %v2640 = vpop.f32.mrf.mxu0
          %v2641 = vadd.f32 %v2567, %v2640
          %v2642 = vpop.f32.mrf.mxu0
          %2643 = vdwg.mxu0
          %2644 = vmatprep.subr.mxu0 0.0
          %2645 = vmatpush1.msra.mxu0 0.0
          %2646 = vmatprep.subr.mxu0 0.0
          %2647 = vmatpush1.msra.mxu0 0.0
          %2648 = vmatprep.subr.mxu0 0.0
          %2649 = vmatpush1.msra.mxu0 0.0
          %2650 = vmatprep.subr.mxu0 0.0
          %2651 = vmatpush1.msra.mxu0 0.0
          %2652 = vmatprep.subr.mxu0 0.0
          %2653 = vmatpush1.msra.mxu0 0.0
          %2654 = vmatprep.subr.mxu0 0.0
          %2655 = vmatpush1.msra.mxu0 0.0
          %2656 = vmatprep.subr.mxu0 0.0
          %2657 = vmatpush1.msra.mxu0 0.0
          %2658 = vmatprep.subr.mxu0 0.0
          %2659 = vmatpush1.msra.mxu0 0.0
          %2660 = vmatprep.subr.mxu0 0.0
          %2661 = vmatpush1.msra.mxu0 0.0
          %2662 = vmatprep.subr.mxu0 0.0
          %2663 = vmatpush1.msra.mxu0 0.0
          %2664 = vmatprep.subr.mxu0 0.0
          %2665 = vmatpush1.msra.mxu0 0.0
          %2666 = vmatprep.subr.mxu0 0.0
          %2667 = vmatpush1.msra.mxu0 0.0
          %2668 = vmatprep.subr.mxu0 0.0
          %2669 = vmatpush1.msra.mxu0 0.0
          %2670 = vmatprep.subr.mxu0 0.0
          %2671 = vmatpush1.msra.mxu0 0.0
          %2672 = vmatprep.subr.mxu0 0.0
          %2673 = vmatpush1.msra.mxu0 0.0
          %2674 = vmatprep.subr.mxu0 0.0
          %v2675 = vand.u32 %v2339, 4294901760
          %v2676 = vsub.f32 %v2339, %v2675
          %v2677 = vand.u32 %v2676, 4294901760
          %2678 = vmatpush1.msra.mxu0 %v2677
          %2679 = vmatprep.subr.mxu0 0.0
          %2680 = vmatpush2.msra.mxu0 0.0
          %2681 = vmatprep.subr.mxu0 0.0
          %2682 = vmatpush2.msra.mxu0 0.0
          %2683 = vmatprep.subr.mxu0 0.0
          %2684 = vmatpush2.msra.mxu0 0.0
          %2685 = vmatprep.subr.mxu0 0.0
          %2686 = vmatpush2.msra.mxu0 0.0
          %2687 = vmatprep.subr.mxu0 0.0
          %2688 = vmatpush2.msra.mxu0 0.0
          %2689 = vmatprep.subr.mxu0 0.0
          %2690 = vmatpush2.msra.mxu0 0.0
          %2691 = vmatprep.subr.mxu0 0.0
          %2692 = vmatpush2.msra.mxu0 0.0
          %2693 = vmatprep.subr.mxu0 0.0
          %2694 = vmatpush2.msra.mxu0 0.0
          %2695 = vmatprep.subr.mxu0 0.0
          %2696 = vmatpush2.msra.mxu0 0.0
          %2697 = vmatprep.subr.mxu0 0.0
          %2698 = vmatpush2.msra.mxu0 0.0
          %2699 = vmatprep.subr.mxu0 0.0
          %2700 = vmatpush2.msra.mxu0 0.0
          %2701 = vmatprep.subr.mxu0 0.0
          %2702 = vmatpush2.msra.mxu0 0.0
          %2703 = vmatprep.subr.mxu0 0.0
          %2704 = vmatpush2.msra.mxu0 0.0
          %2705 = vmatprep.subr.mxu0 0.0
          %2706 = vmatpush2.msra.mxu0 0.0
          %2707 = vmatprep.subr.mxu0 0.0
          %2708 = vmatpush2.msra.mxu0 0.0
          %2709 = vmatprep.subr.mxu0 0.0
          %2710 = vmatpush2.msra.mxu0 0.0
          %2711 = vmatprep.mubr.f32.mxu0 0.0
          %v2712 = vand.u32 %v2342, 4294901760
          %2713 = vmatmul.mubr.f32.gmra.mxu0 %v2712
          %v2714 = vpop.f32.mrf.mxu0
          %v2715 = vadd.f32 %v2641, %v2714
          %v2716 = vpop.f32.mrf.mxu0
          %2717 = vdwg.mxu0
          %2718 = vmatprep.subr.mxu0 0.0
          %2719 = vmatpush1.msra.mxu0 0.0
          %2720 = vmatprep.subr.mxu0 0.0
          %2721 = vmatpush1.msra.mxu0 0.0
          %2722 = vmatprep.subr.mxu0 0.0
          %2723 = vmatpush1.msra.mxu0 0.0
          %2724 = vmatprep.subr.mxu0 0.0
          %2725 = vmatpush1.msra.mxu0 0.0
          %2726 = vmatprep.subr.mxu0 0.0
          %2727 = vmatpush1.msra.mxu0 0.0
          %2728 = vmatprep.subr.mxu0 0.0
          %2729 = vmatpush1.msra.mxu0 0.0
          %2730 = vmatprep.subr.mxu0 0.0
          %2731 = vmatpush1.msra.mxu0 0.0
          %2732 = vmatprep.subr.mxu0 0.0
          %2733 = vmatpush1.msra.mxu0 0.0
          %2734 = vmatprep.subr.mxu0 0.0
          %2735 = vmatpush1.msra.mxu0 0.0
          %2736 = vmatprep.subr.mxu0 0.0
          %2737 = vmatpush1.msra.mxu0 0.0
          %2738 = vmatprep.subr.mxu0 0.0
          %2739 = vmatpush1.msra.mxu0 0.0
          %2740 = vmatprep.subr.mxu0 0.0
          %2741 = vmatpush1.msra.mxu0 0.0
          %2742 = vmatprep.subr.mxu0 0.0
          %2743 = vmatpush1.msra.mxu0 0.0
          %2744 = vmatprep.subr.mxu0 0.0
          %2745 = vmatpush1.msra.mxu0 0.0
          %2746 = vmatprep.subr.mxu0 0.0
          %2747 = vmatpush1.msra.mxu0 0.0
          %2748 = vmatprep.subr.mxu0 0.0
          %v2749 = vand.u32 %v2339, 4294901760
          %2750 = vmatpush1.msra.mxu0 %v2749
          %2751 = vmatprep.subr.mxu0 0.0
          %2752 = vmatpush2.msra.mxu0 0.0
          %2753 = vmatprep.subr.mxu0 0.0
          %2754 = vmatpush2.msra.mxu0 0.0
          %2755 = vmatprep.subr.mxu0 0.0
          %2756 = vmatpush2.msra.mxu0 0.0
          %2757 = vmatprep.subr.mxu0 0.0
          %2758 = vmatpush2.msra.mxu0 0.0
          %2759 = vmatprep.subr.mxu0 0.0
          %2760 = vmatpush2.msra.mxu0 0.0
          %2761 = vmatprep.subr.mxu0 0.0
          %2762 = vmatpush2.msra.mxu0 0.0
          %2763 = vmatprep.subr.mxu0 0.0
          %2764 = vmatpush2.msra.mxu0 0.0
          %2765 = vmatprep.subr.mxu0 0.0
          %2766 = vmatpush2.msra.mxu0 0.0
          %2767 = vmatprep.subr.mxu0 0.0
          %2768 = vmatpush2.msra.mxu0 0.0
          %2769 = vmatprep.subr.mxu0 0.0
          %2770 = vmatpush2.msra.mxu0 0.0
          %2771 = vmatprep.subr.mxu0 0.0
          %2772 = vmatpush2.msra.mxu0 0.0
          %2773 = vmatprep.subr.mxu0 0.0
          %2774 = vmatpush2.msra.mxu0 0.0
          %2775 = vmatprep.subr.mxu0 0.0
          %2776 = vmatpush2.msra.mxu0 0.0
          %2777 = vmatprep.subr.mxu0 0.0
          %2778 = vmatpush2.msra.mxu0 0.0
          %2779 = vmatprep.subr.mxu0 0.0
          %2780 = vmatpush2.msra.mxu0 0.0
          %2781 = vmatprep.subr.mxu0 0.0
          %2782 = vmatpush2.msra.mxu0 0.0
          %2783 = vmatprep.mubr.f32.mxu0 0.0
          %v2784 = vand.u32 %v2342, 4294901760
          %2785 = vmatmul.mubr.f32.gmra.mxu0 %v2784
          %v2786 = vpop.f32.mrf.mxu0
          %v2787 = vadd.f32 %v2715, %v2786
          %v2788 = vpop.f32.mrf.mxu0
          %2789 = vdwg.mxu0
          %v2790 = vadd.f32 %v2310, %v2787
          %v2791 = vadd.f32 %v2790, %v358
          %v2792 = vmul.f32 %v2320, %v2791
          %v2793 = vmul.f32 %v2339, %v358
          %v2794 = vsub.f32 %v2792, %v2793
          %v2795 = vld [vmem:[#allocation3] sm:$0xff]
          %v2796 = vlaneseq
          %v2797 = vshrl.u32 %v2796, 7
          %v2798 = vsub.s32 1, %v2797
          %v2799 = vrot.slane %v2313, %v2798
          %v2800 = vmul.f32 %v2799, %v2794
          %v2801 = vadd.f32 %v2795, %v2800
          %2802 = vst [vmem:[#allocation3] sm:$0xff] %v2801
          %v2803 = vld [vmem:[#allocation2] sm:$0xff]
          %v2804 = vrot.slane %v2803, 4
          %v2805 = vmax.f32 %v2803, %v2804
          %v2806 = vrot.slane %v2805, 2
          %v2807 = vmax.f32 %v2805, %v2806
          %v2808 = vrot.slane %v2807, 1
          %v2809 = vmax.f32 %v2807, %v2808
          %v2810 = vsub.f32 %v2803, %v2809
          %v2811 = vmul.f32 %v2810, 1.442695
          %v2812 = vpow.pop %v2811
          %v2814 = vsel %vm2340, %v353, 0
          %2816 = vmatprep.subr.mxu0 0.0
          %2817 = vmatpush1.msra.mxu0 0.0
          %2818 = vmatprep.subr.mxu0 0.0
          %2819 = vmatpush1.msra.mxu0 0.0
          %2820 = vmatprep.subr.mxu0 0.0
          %2821 = vmatpush1.msra.mxu0 0.0
          %2822 = vmatprep.subr.mxu0 0.0
          %2823 = vmatpush1.msra.mxu0 0.0
          %2824 = vmatprep.subr.mxu0 0.0
          %2825 = vmatpush1.msra.mxu0 0.0
          %2826 = vmatprep.subr.mxu0 0.0
          %2827 = vmatpush1.msra.mxu0 0.0
          %2828 = vmatprep.subr.mxu0 0.0
          %2829 = vmatpush1.msra.mxu0 0.0
          %2830 = vmatprep.subr.mxu0 0.0
          %2831 = vmatpush1.msra.mxu0 0.0
          %2832 = vmatprep.subr.mxu0 0.0
          %2833 = vmatpush1.msra.mxu0 0.0
          %2834 = vmatprep.subr.mxu0 0.0
          %2835 = vmatpush1.msra.mxu0 0.0
          %2836 = vmatprep.subr.mxu0 0.0
          %2837 = vmatpush1.msra.mxu0 0.0
          %2838 = vmatprep.subr.mxu0 0.0
          %2839 = vmatpush1.msra.mxu0 0.0
          %2840 = vmatprep.subr.mxu0 0.0
          %2841 = vmatpush1.msra.mxu0 0.0
          %2842 = vmatprep.subr.mxu0 0.0
          %2843 = vmatpush1.msra.mxu0 0.0
          %2844 = vmatprep.subr.mxu0 0.0
          %2845 = vmatpush1.msra.mxu0 0.0
          %2846 = vmatprep.subr.mxu0 0.0
          %v2847 = vand.u32 %v2812, 4294901760
          %2848 = vmatpush1.msra.mxu0 %v2847
          %2849 = vmatprep.subr.mxu0 0.0
          %2850 = vmatpush2.msra.mxu0 0.0
          %2851 = vmatprep.subr.mxu0 0.0
          %2852 = vmatpush2.msra.mxu0 0.0
          %2853 = vmatprep.subr.mxu0 0.0
          %2854 = vmatpush2.msra.mxu0 0.0
          %2855 = vmatprep.subr.mxu0 0.0
          %2856 = vmatpush2.msra.mxu0 0.0
          %2857 = vmatprep.subr.mxu0 0.0
          %2858 = vmatpush2.msra.mxu0 0.0
          %2859 = vmatprep.subr.mxu0 0.0
          %2860 = vmatpush2.msra.mxu0 0.0
          %2861 = vmatprep.subr.mxu0 0.0
          %2862 = vmatpush2.msra.mxu0 0.0
          %2863 = vmatprep.subr.mxu0 0.0
          %2864 = vmatpush2.msra.mxu0 0.0
          %2865 = vmatprep.subr.mxu0 0.0
          %2866 = vmatpush2.msra.mxu0 0.0
          %2867 = vmatprep.subr.mxu0 0.0
          %2868 = vmatpush2.msra.mxu0 0.0
          %2869 = vmatprep.subr.mxu0 0.0
          %2870 = vmatpush2.msra.mxu0 0.0
          %2871 = vmatprep.subr.mxu0 0.0
          %2872 = vmatpush2.msra.mxu0 0.0
          %2873 = vmatprep.subr.mxu0 0.0
          %2874 = vmatpush2.msra.mxu0 0.0
          %2875 = vmatprep.subr.mxu0 0.0
          %2876 = vmatpush2.msra.mxu0 0.0
          %2877 = vmatprep.subr.mxu0 0.0
          %2878 = vmatpush2.msra.mxu0 0.0
          %2879 = vmatprep.subr.mxu0 0.0
          %2880 = vmatpush2.msra.mxu0 0.0
          %2881 = vmatprep.mubr.f32.mxu0 0.0
          %v2882 = vand.u32 %v2814, 4294901760
          %v2883 = vsub.f32 %v2814, %v2882
          %v2884 = vand.u32 %v2883, 4294901760
          %v2885 = vsub.f32 %v2883, %v2884
          %v2886 = vand.u32 %v2885, 4294901760
          %2887 = vmatmul.mubr.f32.gmra.mxu0 %v2886
          %v2888 = vpop.f32.mrf.mxu0
          %v2889 = vadd.f32 0.0, %v2888
          %v2890 = vpop.f32.mrf.mxu0
          %2891 = vdwg.mxu0
          %2892 = vmatprep.subr.mxu0 0.0
          %2893 = vmatpush1.msra.mxu0 0.0
          %2894 = vmatprep.subr.mxu0 0.0
          %2895 = vmatpush1.msra.mxu0 0.0
          %2896 = vmatprep.subr.mxu0 0.0
          %2897 = vmatpush1.msra.mxu0 0.0
          %2898 = vmatprep.subr.mxu0 0.0
          %2899 = vmatpush1.msra.mxu0 0.0
          %2900 = vmatprep.subr.mxu0 0.0
          %2901 = vmatpush1.msra.mxu0 0.0
          %2902 = vmatprep.subr.mxu0 0.0
          %2903 = vmatpush1.msra.mxu0 0.0
          %2904 = vmatprep.subr.mxu0 0.0
          %2905 = vmatpush1.msra.mxu0 0.0
          %2906 = vmatprep.subr.mxu0 0.0
          %2907 = vmatpush1.msra.mxu0 0.0
          %2908 = vmatprep.subr.mxu0 0.0
          %2909 = vmatpush1.msra.mxu0 0.0
          %2910 = vmatprep.subr.mxu0 0.0
          %2911 = vmatpush1.msra.mxu0 0.0
          %2912 = vmatprep.subr.mxu0 0.0
          %2913 = vmatpush1.msra.mxu0 0.0
          %2914 = vmatprep.subr.mxu0 0.0
          %2915 = vmatpush1.msra.mxu0 0.0
          %2916 = vmatprep.subr.mxu0 0.0
          %2917 = vmatpush1.msra.mxu0 0.0
          %2918 = vmatprep.subr.mxu0 0.0
          %2919 = vmatpush1.msra.mxu0 0.0
          %2920 = vmatprep.subr.mxu0 0.0
          %2921 = vmatpush1.msra.mxu0 0.0
          %2922 = vmatprep.subr.mxu0 0.0
          %v2923 = vand.u32 %v2812, 4294901760
          %v2924 = vsub.f32 %v2812, %v2923
          %v2925 = vand.u32 %v2924, 4294901760
          %v2926 = vsub.f32 %v2924, %v2925
          %v2927 = vand.u32 %v2926, 4294901760
          %2928 = vmatpush1.msra.mxu0 %v2927
          %2929 = vmatprep.subr.mxu0 0.0
          %2930 = vmatpush2.msra.mxu0 0.0
          %2931 = vmatprep.subr.mxu0 0.0
          %2932 = vmatpush2.msra.mxu0 0.0
          %2933 = vmatprep.subr.mxu0 0.0
          %2934 = vmatpush2.msra.mxu0 0.0
          %2935 = vmatprep.subr.mxu0 0.0
          %2936 = vmatpush2.msra.mxu0 0.0
          %2937 = vmatprep.subr.mxu0 0.0
          %2938 = vmatpush2.msra.mxu0 0.0
          %2939 = vmatprep.subr.mxu0 0.0
          %2940 = vmatpush2.msra.mxu0 0.0
          %2941 = vmatprep.subr.mxu0 0.0
          %2942 = vmatpush2.msra.mxu0 0.0
          %2943 = vmatprep.subr.mxu0 0.0
          %2944 = vmatpush2.msra.mxu0 0.0
          %2945 = vmatprep.subr.mxu0 0.0
          %2946 = vmatpush2.msra.mxu0 0.0
          %2947 = vmatprep.subr.mxu0 0.0
          %2948 = vmatpush2.msra.mxu0 0.0
          %2949 = vmatprep.subr.mxu0 0.0
          %2950 = vmatpush2.msra.mxu0 0.0
          %2951 = vmatprep.subr.mxu0 0.0
          %2952 = vmatpush2.msra.mxu0 0.0
          %2953 = vmatprep.subr.mxu0 0.0
          %2954 = vmatpush2.msra.mxu0 0.0
          %2955 = vmatprep.subr.mxu0 0.0
          %2956 = vmatpush2.msra.mxu0 0.0
          %2957 = vmatprep.subr.mxu0 0.0
          %2958 = vmatpush2.msra.mxu0 0.0
          %2959 = vmatprep.subr.mxu0 0.0
          %2960 = vmatpush2.msra.mxu0 0.0
          %2961 = vmatprep.mubr.f32.mxu0 0.0
          %v2962 = vand.u32 %v2814, 4294901760
          %2963 = vmatmul.mubr.f32.gmra.mxu0 %v2962
          %v2964 = vpop.f32.mrf.mxu0
          %v2965 = vadd.f32 %v2889, %v2964
          %v2966 = vpop.f32.mrf.mxu0
          %2967 = vdwg.mxu0
          %2968 = vmatprep.subr.mxu0 0.0
          %2969 = vmatpush1.msra.mxu0 0.0
          %2970 = vmatprep.subr.mxu0 0.0
          %2971 = vmatpush1.msra.mxu0 0.0
          %2972 = vmatprep.subr.mxu0 0.0
          %2973 = vmatpush1.msra.mxu0 0.0
          %2974 = vmatprep.subr.mxu0 0.0
          %2975 = vmatpush1.msra.mxu0 0.0
          %2976 = vmatprep.subr.mxu0 0.0
          %2977 = vmatpush1.msra.mxu0 0.0
          %2978 = vmatprep.subr.mxu0 0.0
          %2979 = vmatpush1.msra.mxu0 0.0
          %2980 = vmatprep.subr.mxu0 0.0
          %2981 = vmatpush1.msra.mxu0 0.0
          %2982 = vmatprep.subr.mxu0 0.0
          %2983 = vmatpush1.msra.mxu0 0.0
          %2984 = vmatprep.subr.mxu0 0.0
          %2985 = vmatpush1.msra.mxu0 0.0
          %2986 = vmatprep.subr.mxu0 0.0
          %2987 = vmatpush1.msra.mxu0 0.0
          %2988 = vmatprep.subr.mxu0 0.0
          %2989 = vmatpush1.msra.mxu0 0.0
          %2990 = vmatprep.subr.mxu0 0.0
          %2991 = vmatpush1.msra.mxu0 0.0
          %2992 = vmatprep.subr.mxu0 0.0
          %2993 = vmatpush1.msra.mxu0 0.0
          %2994 = vmatprep.subr.mxu0 0.0
          %2995 = vmatpush1.msra.mxu0 0.0
          %2996 = vmatprep.subr.mxu0 0.0
          %2997 = vmatpush1.msra.mxu0 0.0
          %2998 = vmatprep.subr.mxu0 0.0
          %v2999 = vand.u32 %v2812, 4294901760
          %v3000 = vsub.f32 %v2812, %v2999
          %3001 = vmatpush1.msra.mxu0 %v3000
          %3002 = vmatprep.subr.mxu0 0.0
          %3003 = vmatpush2.msra.mxu0 0.0
          %3004 = vmatprep.subr.mxu0 0.0
          %3005 = vmatpush2.msra.mxu0 0.0
          %3006 = vmatprep.subr.mxu0 0.0
          %3007 = vmatpush2.msra.mxu0 0.0
          %3008 = vmatprep.subr.mxu0 0.0
          %3009 = vmatpush2.msra.mxu0 0.0
          %3010 = vmatprep.subr.mxu0 0.0
          %3011 = vmatpush2.msra.mxu0 0.0
          %3012 = vmatprep.subr.mxu0 0.0
          %3013 = vmatpush2.msra.mxu0 0.0
          %3014 = vmatprep.subr.mxu0 0.0
          %3015 = vmatpush2.msra.mxu0 0.0
          %3016 = vmatprep.subr.mxu0 0.0
          %3017 = vmatpush2.msra.mxu0 0.0
          %3018 = vmatprep.subr.mxu0 0.0
          %3019 = vmatpush2.msra.mxu0 0.0
          %3020 = vmatprep.subr.mxu0 0.0
          %3021 = vmatpush2.msra.mxu0 0.0
          %3022 = vmatprep.subr.mxu0 0.0
          %3023 = vmatpush2.msra.mxu0 0.0
          %3024 = vmatprep.subr.mxu0 0.0
          %3025 = vmatpush2.msra.mxu0 0.0
          %3026 = vmatprep.subr.mxu0 0.0
          %3027 = vmatpush2.msra.mxu0 0.0
          %3028 = vmatprep.subr.mxu0 0.0
          %3029 = vmatpush2.msra.mxu0 0.0
          %3030 = vmatprep.subr.mxu0 0.0
          %3031 = vmatpush2.msra.mxu0 0.0
          %3032 = vmatprep.subr.mxu0 0.0
          %3033 = vmatpush2.msra.mxu0 0.0
          %3034 = vmatprep.mubr.f32.mxu0 0.0
          %v3035 = vand.u32 %v2814, 4294901760
          %v3036 = vsub.f32 %v2814, %v3035
          %3037 = vmatmul.mubr.f32.gmra.mxu0 %v3036
          %v3038 = vpop.f32.mrf.mxu0
          %v3039 = vadd.f32 %v2965, %v3038
          %v3040 = vpop.f32.mrf.mxu0
          %3041 = vdwg.mxu0
          %3042 = vmatprep.subr.mxu0 0.0
          %3043 = vmatpush1.msra.mxu0 0.0
          %3044 = vmatprep.subr.mxu0 0.0
          %3045 = vmatpush1.msra.mxu0 0.0
          %3046 = vmatprep.subr.mxu0 0.0
          %3047 = vmatpush1.msra.mxu0 0.0
          %3048 = vmatprep.subr.mxu0 0.0
          %3049 = vmatpush1.msra.mxu0 0.0
          %3050 = vmatprep.subr.mxu0 0.0
          %3051 = vmatpush1.msra.mxu0 0.0
          %3052 = vmatprep.subr.mxu0 0.0
          %3053 = vmatpush1.msra.mxu0 0.0
          %3054 = vmatprep.subr.mxu0 0.0
          %3055 = vmatpush1.msra.mxu0 0.0
          %3056 = vmatprep.subr.mxu0 0.0
          %3057 = vmatpush1.msra.mxu0 0.0
          %3058 = vmatprep.subr.mxu0 0.0
          %3059 = vmatpush1.msra.mxu0 0.0
          %3060 = vmatprep.subr.mxu0 0.0
          %3061 = vmatpush1.msra.mxu0 0.0
          %3062 = vmatprep.subr.mxu0 0.0
          %3063 = vmatpush1.msra.mxu0 0.0
          %3064 = vmatprep.subr.mxu0 0.0
          %3065 = vmatpush1.msra.mxu0 0.0
          %3066 = vmatprep.subr.mxu0 0.0
          %3067 = vmatpush1.msra.mxu0 0.0
          %3068 = vmatprep.subr.mxu0 0.0
          %3069 = vmatpush1.msra.mxu0 0.0
          %3070 = vmatprep.subr.mxu0 0.0
          %3071 = vmatpush1.msra.mxu0 0.0
          %3072 = vmatprep.subr.mxu0 0.0
          %v3073 = vand.u32 %v2812, 4294901760
          %3074 = vmatpush1.msra.mxu0 %v3073
          %3075 = vmatprep.subr.mxu0 0.0
          %3076 = vmatpush2.msra.mxu0 0.0
          %3077 = vmatprep.subr.mxu0 0.0
          %3078 = vmatpush2.msra.mxu0 0.0
          %3079 = vmatprep.subr.mxu0 0.0
          %3080 = vmatpush2.msra.mxu0 0.0
          %3081 = vmatprep.subr.mxu0 0.0
          %3082 = vmatpush2.msra.mxu0 0.0
          %3083 = vmatprep.subr.mxu0 0.0
          %3084 = vmatpush2.msra.mxu0 0.0
          %3085 = vmatprep.subr.mxu0 0.0
          %3086 = vmatpush2.msra.mxu0 0.0
          %3087 = vmatprep.subr.mxu0 0.0
          %3088 = vmatpush2.msra.mxu0 0.0
          %3089 = vmatprep.subr.mxu0 0.0
          %3090 = vmatpush2.msra.mxu0 0.0
          %3091 = vmatprep.subr.mxu0 0.0
          %3092 = vmatpush2.msra.mxu0 0.0
          %3093 = vmatprep.subr.mxu0 0.0
          %3094 = vmatpush2.msra.mxu0 0.0
          %3095 = vmatprep.subr.mxu0 0.0
          %3096 = vmatpush2.msra.mxu0 0.0
          %3097 = vmatprep.subr.mxu0 0.0
          %3098 = vmatpush2.msra.mxu0 0.0
          %3099 = vmatprep.subr.mxu0 0.0
          %3100 = vmatpush2.msra.mxu0 0.0
          %3101 = vmatprep.subr.mxu0 0.0
          %3102 = vmatpush2.msra.mxu0 0.0
          %3103 = vmatprep.subr.mxu0 0.0
          %3104 = vmatpush2.msra.mxu0 0.0
          %3105 = vmatprep.subr.mxu0 0.0
          %3106 = vmatpush2.msra.mxu0 0.0
          %3107 = vmatprep.mubr.f32.mxu0 0.0
          %v3108 = vand.u32 %v2814, 4294901760
          %v3109 = vsub.f32 %v2814, %v3108
          %v3110 = vand.u32 %v3109, 4294901760
          %3111 = vmatmul.mubr.f32.gmra.mxu0 %v3110
          %v3112 = vpop.f32.mrf.mxu0
          %v3113 = vadd.f32 %v3039, %v3112
          %v3114 = vpop.f32.mrf.mxu0
          %3115 = vdwg.mxu0
          %3116 = vmatprep.subr.mxu0 0.0
          %3117 = vmatpush1.msra.mxu0 0.0
          %3118 = vmatprep.subr.mxu0 0.0
          %3119 = vmatpush1.msra.mxu0 0.0
          %3120 = vmatprep.subr.mxu0 0.0
          %3121 = vmatpush1.msra.mxu0 0.0
          %3122 = vmatprep.subr.mxu0 0.0
          %3123 = vmatpush1.msra.mxu0 0.0
          %3124 = vmatprep.subr.mxu0 0.0
          %3125 = vmatpush1.msra.mxu0 0.0
          %3126 = vmatprep.subr.mxu0 0.0
          %3127 = vmatpush1.msra.mxu0 0.0
          %3128 = vmatprep.subr.mxu0 0.0
          %3129 = vmatpush1.msra.mxu0 0.0
          %3130 = vmatprep.subr.mxu0 0.0
          %3131 = vmatpush1.msra.mxu0 0.0
          %3132 = vmatprep.subr.mxu0 0.0
          %3133 = vmatpush1.msra.mxu0 0.0
          %3134 = vmatprep.subr.mxu0 0.0
          %3135 = vmatpush1.msra.mxu0 0.0
          %3136 = vmatprep.subr.mxu0 0.0
          %3137 = vmatpush1.msra.mxu0 0.0
          %3138 = vmatprep.subr.mxu0 0.0
          %3139 = vmatpush1.msra.mxu0 0.0
          %3140 = vmatprep.subr.mxu0 0.0
          %3141 = vmatpush1.msra.mxu0 0.0
          %3142 = vmatprep.subr.mxu0 0.0
          %3143 = vmatpush1.msra.mxu0 0.0
          %3144 = vmatprep.subr.mxu0 0.0
          %3145 = vmatpush1.msra.mxu0 0.0
          %3146 = vmatprep.subr.mxu0 0.0
          %v3147 = vand.u32 %v2812, 4294901760
          %v3148 = vsub.f32 %v2812, %v3147
          %v3149 = vand.u32 %v3148, 4294901760
          %3150 = vmatpush1.msra.mxu0 %v3149
          %3151 = vmatprep.subr.mxu0 0.0
          %3152 = vmatpush2.msra.mxu0 0.0
          %3153 = vmatprep.subr.mxu0 0.0
          %3154 = vmatpush2.msra.mxu0 0.0
          %3155 = vmatprep.subr.mxu0 0.0
          %3156 = vmatpush2.msra.mxu0 0.0
          %3157 = vmatprep.subr.mxu0 0.0
          %3158 = vmatpush2.msra.mxu0 0.0
          %3159 = vmatprep.subr.mxu0 0.0
          %3160 = vmatpush2.msra.mxu0 0.0
          %3161 = vmatprep.subr.mxu0 0.0
          %3162 = vmatpush2.msra.mxu0 0.0
          %3163 = vmatprep.subr.mxu0 0.0
          %3164 = vmatpush2.msra.mxu0 0.0
          %3165 = vmatprep.subr.mxu0 0.0
          %3166 = vmatpush2.msra.mxu0 0.0
          %3167 = vmatprep.subr.mxu0 0.0
          %3168 = vmatpush2.msra.mxu0 0.0
          %3169 = vmatprep.subr.mxu0 0.0
          %3170 = vmatpush2.msra.mxu0 0.0
          %3171 = vmatprep.subr.mxu0 0.0
          %3172 = vmatpush2.msra.mxu0 0.0
          %3173 = vmatprep.subr.mxu0 0.0
          %3174 = vmatpush2.msra.mxu0 0.0
          %3175 = vmatprep.subr.mxu0 0.0
          %3176 = vmatpush2.msra.mxu0 0.0
          %3177 = vmatprep.subr.mxu0 0.0
          %3178 = vmatpush2.msra.mxu0 0.0
          %3179 = vmatprep.subr.mxu0 0.0
          %3180 = vmatpush2.msra.mxu0 0.0
          %3181 = vmatprep.subr.mxu0 0.0
          %3182 = vmatpush2.msra.mxu0 0.0
          %3183 = vmatprep.mubr.f32.mxu0 0.0
          %v3184 = vand.u32 %v2814, 4294901760
          %3185 = vmatmul.mubr.f32.gmra.mxu0 %v3184
          %v3186 = vpop.f32.mrf.mxu0
          %v3187 = vadd.f32 %v3113, %v3186
          %v3188 = vpop.f32.mrf.mxu0
          %3189 = vdwg.mxu0
          %3190 = vmatprep.subr.mxu0 0.0
          %3191 = vmatpush1.msra.mxu0 0.0
          %3192 = vmatprep.subr.mxu0 0.0
          %3193 = vmatpush1.msra.mxu0 0.0
          %3194 = vmatprep.subr.mxu0 0.0
          %3195 = vmatpush1.msra.mxu0 0.0
          %3196 = vmatprep.subr.mxu0 0.0
          %3197 = vmatpush1.msra.mxu0 0.0
          %3198 = vmatprep.subr.mxu0 0.0
          %3199 = vmatpush1.msra.mxu0 0.0
          %3200 = vmatprep.subr.mxu0 0.0
          %3201 = vmatpush1.msra.mxu0 0.0
          %3202 = vmatprep.subr.mxu0 0.0
          %3203 = vmatpush1.msra.mxu0 0.0
          %3204 = vmatprep.subr.mxu0 0.0
          %3205 = vmatpush1.msra.mxu0 0.0
          %3206 = vmatprep.subr.mxu0 0.0
          %3207 = vmatpush1.msra.mxu0 0.0
          %3208 = vmatprep.subr.mxu0 0.0
          %3209 = vmatpush1.msra.mxu0 0.0
          %3210 = vmatprep.subr.mxu0 0.0
          %3211 = vmatpush1.msra.mxu0 0.0
          %3212 = vmatprep.subr.mxu0 0.0
          %3213 = vmatpush1.msra.mxu0 0.0
          %3214 = vmatprep.subr.mxu0 0.0
          %3215 = vmatpush1.msra.mxu0 0.0
          %3216 = vmatprep.subr.mxu0 0.0
          %3217 = vmatpush1.msra.mxu0 0.0
          %3218 = vmatprep.subr.mxu0 0.0
          %3219 = vmatpush1.msra.mxu0 0.0
          %3220 = vmatprep.subr.mxu0 0.0
          %v3221 = vand.u32 %v2812, 4294901760
          %3222 = vmatpush1.msra.mxu0 %v3221
          %3223 = vmatprep.subr.mxu0 0.0
          %3224 = vmatpush2.msra.mxu0 0.0
          %3225 = vmatprep.subr.mxu0 0.0
          %3226 = vmatpush2.msra.mxu0 0.0
          %3227 = vmatprep.subr.mxu0 0.0
          %3228 = vmatpush2.msra.mxu0 0.0
          %3229 = vmatprep.subr.mxu0 0.0
          %3230 = vmatpush2.msra.mxu0 0.0
          %3231 = vmatprep.subr.mxu0 0.0
          %3232 = vmatpush2.msra.mxu0 0.0
          %3233 = vmatprep.subr.mxu0 0.0
          %3234 = vmatpush2.msra.mxu0 0.0
          %3235 = vmatprep.subr.mxu0 0.0
          %3236 = vmatpush2.msra.mxu0 0.0
          %3237 = vmatprep.subr.mxu0 0.0
          %3238 = vmatpush2.msra.mxu0 0.0
          %3239 = vmatprep.subr.mxu0 0.0
          %3240 = vmatpush2.msra.mxu0 0.0
          %3241 = vmatprep.subr.mxu0 0.0
          %3242 = vmatpush2.msra.mxu0 0.0
          %3243 = vmatprep.subr.mxu0 0.0
          %3244 = vmatpush2.msra.mxu0 0.0
          %3245 = vmatprep.subr.mxu0 0.0
          %3246 = vmatpush2.msra.mxu0 0.0
          %3247 = vmatprep.subr.mxu0 0.0
          %3248 = vmatpush2.msra.mxu0 0.0
          %3249 = vmatprep.subr.mxu0 0.0
          %3250 = vmatpush2.msra.mxu0 0.0
          %3251 = vmatprep.subr.mxu0 0.0
          %3252 = vmatpush2.msra.mxu0 0.0
          %3253 = vmatprep.subr.mxu0 0.0
          %3254 = vmatpush2.msra.mxu0 0.0
          %3255 = vmatprep.mubr.f32.mxu0 0.0
          %v3256 = vand.u32 %v2814, 4294901760
          %3257 = vmatmul.mubr.f32.gmra.mxu0 %v3256
          %v3258 = vpop.f32.mrf.mxu0
          %v3259 = vadd.f32 %v3187, %v3258
          %v3260 = vpop.f32.mrf.mxu0
          %3261 = vdwg.mxu0
          %3263 = vset.pattern.permute.xlu0 0
          %3264 = vperm.xlu0 %3263, %v354
          %v3265 = vpop.permute.xlu0 %3264
          %v3267 = vadd.f32 %v2809, %v3265
          %v3268 = vlog2.pop %v3259
          %v3269 = vmul.f32 %v3268, 0.6931472
          %v3270 = vadd.f32 %v3267, %v3269
          %v3271 = vadd.f32 %v3270, %v2310
          %vm3272 = vcmp.gt.f32.partialorder %v2313, 0.5
          %v3273 = vsel %vm3272, 1, 0
          %v3274 = vlaneseq
          %v3275 = vshrl.u32 %v3274, 7
          %v3276 = vsub.s32 1, %v3275
          %v3277 = vrot.slane %v3273, %v3276
          %vm3278 = vcmp.eq.s32.totalorder %v3277, 1
          %v3279 = vsel %vm3278, %v3271, %v2803
          %3280 = vst [vmem:[#allocation2] sm:$0xff] %v3279
        $region80: #{tpu_custom_call.1} parent=47 // pred_fallthru
          _
        %3281 = vst [vmem:[#allocation4] sm:$0xff] %v2320
        %s3282 = sadd.s32 %s362, 3
        %s3283 = scalar_lea.vmem %s308, 24 [#allocation5]
        %v3284 = vld [vmem:[%s3283] sm:$0xff]
        %s3285 = scalar_lea.vmem %s317, 6 [#allocation8]
        %v3286 = vld [vmem:[%s3285] sm:$0x3]
        %v3287 = vcvt.s32.f32 %v3286
        %v3288 = vlaneseq
        %v3289 = vshrl.u32 %v3288, 7
        %v3290 = vsub.s32 0, %v3289
        %v3291 = vrot.slane %v3286, %v3290
        %vm3292 = vcmp.eq.s32.totalorder %v361, %v3291
        %v3293 = vsel %vm3292, 1, 0
        %v3294 = vcvt.s32.f32 %v3293
        %p3295 = scmp.eq.s32.totalorder %s3282, 0
        // Predicated region
        $region81: #{tpu_custom_call.1} parent=47 // pred_check
          %p3296 = pneg %p3295
        $region82: #{tpu_custom_call.1} parent=47 // pred_check_branch
          %3298 = sbr.rel (%p3296) target = $region84
        $region83: #{tpu_custom_call.1} parent=47 // pred_region
          %3300 = vset.pattern.permute.xlu0 0
          %3301 = vperm.xlu0 %3300, %v350
          %v3302 = vpop.permute.xlu0 %3301
          %v3304 = vadd.f32 %v3302, %v3284
          %v3305 = vadd.f32 %v3304, %v358
          %v3306 = vmul.f32 %v3294, %v3305
          %3307 = vst [vmem:[#allocation3] sm:$0xff] %v3306
          %3308 = vst [vmem:[#allocation2] sm:$0xff] %v3304
        $region84: #{tpu_custom_call.1} parent=47 // pred_fallthru
          _
        %p3309 = scmp.gt.s32.totalorder %s3282, 0
        // Predicated region
        $region85: #{tpu_custom_call.1} parent=47 // pred_check
          %p3310 = pneg %p3309
        $region86: #{tpu_custom_call.1} parent=47 // pred_check_branch
          %3312 = sbr.rel (%p3310) target = $region88
        $region87: #{tpu_custom_call.1} parent=47 // pred_region
          %v3313 = vld [vmem:[#allocation4] sm:$0xff]
          %vm3314 = vcmask 64512
          %v3316 = vsel %vm3314, %v352, 0
          %3318 = vmatprep.subr.mxu0 0.0
          %3319 = vmatpush1.msra.mxu0 0.0
          %3320 = vmatprep.subr.mxu0 0.0
          %3321 = vmatpush1.msra.mxu0 0.0
          %3322 = vmatprep.subr.mxu0 0.0
          %3323 = vmatpush1.msra.mxu0 0.0
          %3324 = vmatprep.subr.mxu0 0.0
          %3325 = vmatpush1.msra.mxu0 0.0
          %3326 = vmatprep.subr.mxu0 0.0
          %3327 = vmatpush1.msra.mxu0 0.0
          %3328 = vmatprep.subr.mxu0 0.0
          %3329 = vmatpush1.msra.mxu0 0.0
          %3330 = vmatprep.subr.mxu0 0.0
          %3331 = vmatpush1.msra.mxu0 0.0
          %3332 = vmatprep.subr.mxu0 0.0
          %3333 = vmatpush1.msra.mxu0 0.0
          %3334 = vmatprep.subr.mxu0 0.0
          %3335 = vmatpush1.msra.mxu0 0.0
          %3336 = vmatprep.subr.mxu0 0.0
          %3337 = vmatpush1.msra.mxu0 0.0
          %3338 = vmatprep.subr.mxu0 0.0
          %3339 = vmatpush1.msra.mxu0 0.0
          %3340 = vmatprep.subr.mxu0 0.0
          %3341 = vmatpush1.msra.mxu0 0.0
          %3342 = vmatprep.subr.mxu0 0.0
          %3343 = vmatpush1.msra.mxu0 0.0
          %3344 = vmatprep.subr.mxu0 0.0
          %3345 = vmatpush1.msra.mxu0 0.0
          %3346 = vmatprep.subr.mxu0 0.0
          %3347 = vmatpush1.msra.mxu0 0.0
          %3348 = vmatprep.subr.mxu0 0.0
          %v3349 = vand.u32 %v3313, 4294901760
          %3350 = vmatpush1.msra.mxu0 %v3349
          %3351 = vmatprep.subr.mxu0 0.0
          %3352 = vmatpush2.msra.mxu0 0.0
          %3353 = vmatprep.subr.mxu0 0.0
          %3354 = vmatpush2.msra.mxu0 0.0
          %3355 = vmatprep.subr.mxu0 0.0
          %3356 = vmatpush2.msra.mxu0 0.0
          %3357 = vmatprep.subr.mxu0 0.0
          %3358 = vmatpush2.msra.mxu0 0.0
          %3359 = vmatprep.subr.mxu0 0.0
          %3360 = vmatpush2.msra.mxu0 0.0
          %3361 = vmatprep.subr.mxu0 0.0
          %3362 = vmatpush2.msra.mxu0 0.0
          %3363 = vmatprep.subr.mxu0 0.0
          %3364 = vmatpush2.msra.mxu0 0.0
          %3365 = vmatprep.subr.mxu0 0.0
          %3366 = vmatpush2.msra.mxu0 0.0
          %3367 = vmatprep.subr.mxu0 0.0
          %3368 = vmatpush2.msra.mxu0 0.0
          %3369 = vmatprep.subr.mxu0 0.0
          %3370 = vmatpush2.msra.mxu0 0.0
          %3371 = vmatprep.subr.mxu0 0.0
          %3372 = vmatpush2.msra.mxu0 0.0
          %3373 = vmatprep.subr.mxu0 0.0
          %3374 = vmatpush2.msra.mxu0 0.0
          %3375 = vmatprep.subr.mxu0 0.0
          %3376 = vmatpush2.msra.mxu0 0.0
          %3377 = vmatprep.subr.mxu0 0.0
          %3378 = vmatpush2.msra.mxu0 0.0
          %3379 = vmatprep.subr.mxu0 0.0
          %3380 = vmatpush2.msra.mxu0 0.0
          %3381 = vmatprep.subr.mxu0 0.0
          %3382 = vmatpush2.msra.mxu0 0.0
          %3383 = vmatprep.mubr.f32.mxu0 0.0
          %v3384 = vand.u32 %v3316, 4294901760
          %v3385 = vsub.f32 %v3316, %v3384
          %v3386 = vand.u32 %v3385, 4294901760
          %v3387 = vsub.f32 %v3385, %v3386
          %v3388 = vand.u32 %v3387, 4294901760
          %3389 = vmatmul.mubr.f32.gmra.mxu0 %v3388
          %v3390 = vpop.f32.mrf.mxu0
          %v3391 = vadd.f32 0.0, %v3390
          %v3392 = vpop.f32.mrf.mxu0
          %3393 = vdwg.mxu0
          %3394 = vmatprep.subr.mxu0 0.0
          %3395 = vmatpush1.msra.mxu0 0.0
          %3396 = vmatprep.subr.mxu0 0.0
          %3397 = vmatpush1.msra.mxu0 0.0
          %3398 = vmatprep.subr.mxu0 0.0
          %3399 = vmatpush1.msra.mxu0 0.0
          %3400 = vmatprep.subr.mxu0 0.0
          %3401 = vmatpush1.msra.mxu0 0.0
          %3402 = vmatprep.subr.mxu0 0.0
          %3403 = vmatpush1.msra.mxu0 0.0
          %3404 = vmatprep.subr.mxu0 0.0
          %3405 = vmatpush1.msra.mxu0 0.0
          %3406 = vmatprep.subr.mxu0 0.0
          %3407 = vmatpush1.msra.mxu0 0.0
          %3408 = vmatprep.subr.mxu0 0.0
          %3409 = vmatpush1.msra.mxu0 0.0
          %3410 = vmatprep.subr.mxu0 0.0
          %3411 = vmatpush1.msra.mxu0 0.0
          %3412 = vmatprep.subr.mxu0 0.0
          %3413 = vmatpush1.msra.mxu0 0.0
          %3414 = vmatprep.subr.mxu0 0.0
          %3415 = vmatpush1.msra.mxu0 0.0
          %3416 = vmatprep.subr.mxu0 0.0
          %3417 = vmatpush1.msra.mxu0 0.0
          %3418 = vmatprep.subr.mxu0 0.0
          %3419 = vmatpush1.msra.mxu0 0.0
          %3420 = vmatprep.subr.mxu0 0.0
          %3421 = vmatpush1.msra.mxu0 0.0
          %3422 = vmatprep.subr.mxu0 0.0
          %3423 = vmatpush1.msra.mxu0 0.0
          %3424 = vmatprep.subr.mxu0 0.0
          %v3425 = vand.u32 %v3313, 4294901760
          %v3426 = vsub.f32 %v3313, %v3425
          %v3427 = vand.u32 %v3426, 4294901760
          %v3428 = vsub.f32 %v3426, %v3427
          %v3429 = vand.u32 %v3428, 4294901760
          %3430 = vmatpush1.msra.mxu0 %v3429
          %3431 = vmatprep.subr.mxu0 0.0
          %3432 = vmatpush2.msra.mxu0 0.0
          %3433 = vmatprep.subr.mxu0 0.0
          %3434 = vmatpush2.msra.mxu0 0.0
          %3435 = vmatprep.subr.mxu0 0.0
          %3436 = vmatpush2.msra.mxu0 0.0
          %3437 = vmatprep.subr.mxu0 0.0
          %3438 = vmatpush2.msra.mxu0 0.0
          %3439 = vmatprep.subr.mxu0 0.0
          %3440 = vmatpush2.msra.mxu0 0.0
          %3441 = vmatprep.subr.mxu0 0.0
          %3442 = vmatpush2.msra.mxu0 0.0
          %3443 = vmatprep.subr.mxu0 0.0
          %3444 = vmatpush2.msra.mxu0 0.0
          %3445 = vmatprep.subr.mxu0 0.0
          %3446 = vmatpush2.msra.mxu0 0.0
          %3447 = vmatprep.subr.mxu0 0.0
          %3448 = vmatpush2.msra.mxu0 0.0
          %3449 = vmatprep.subr.mxu0 0.0
          %3450 = vmatpush2.msra.mxu0 0.0
          %3451 = vmatprep.subr.mxu0 0.0
          %3452 = vmatpush2.msra.mxu0 0.0
          %3453 = vmatprep.subr.mxu0 0.0
          %3454 = vmatpush2.msra.mxu0 0.0
          %3455 = vmatprep.subr.mxu0 0.0
          %3456 = vmatpush2.msra.mxu0 0.0
          %3457 = vmatprep.subr.mxu0 0.0
          %3458 = vmatpush2.msra.mxu0 0.0
          %3459 = vmatprep.subr.mxu0 0.0
          %3460 = vmatpush2.msra.mxu0 0.0
          %3461 = vmatprep.subr.mxu0 0.0
          %3462 = vmatpush2.msra.mxu0 0.0
          %3463 = vmatprep.mubr.f32.mxu0 0.0
          %v3464 = vand.u32 %v3316, 4294901760
          %3465 = vmatmul.mubr.f32.gmra.mxu0 %v3464
          %v3466 = vpop.f32.mrf.mxu0
          %v3467 = vadd.f32 %v3391, %v3466
          %v3468 = vpop.f32.mrf.mxu0
          %3469 = vdwg.mxu0
          %3470 = vmatprep.subr.mxu0 0.0
          %3471 = vmatpush1.msra.mxu0 0.0
          %3472 = vmatprep.subr.mxu0 0.0
          %3473 = vmatpush1.msra.mxu0 0.0
          %3474 = vmatprep.subr.mxu0 0.0
          %3475 = vmatpush1.msra.mxu0 0.0
          %3476 = vmatprep.subr.mxu0 0.0
          %3477 = vmatpush1.msra.mxu0 0.0
          %3478 = vmatprep.subr.mxu0 0.0
          %3479 = vmatpush1.msra.mxu0 0.0
          %3480 = vmatprep.subr.mxu0 0.0
          %3481 = vmatpush1.msra.mxu0 0.0
          %3482 = vmatprep.subr.mxu0 0.0
          %3483 = vmatpush1.msra.mxu0 0.0
          %3484 = vmatprep.subr.mxu0 0.0
          %3485 = vmatpush1.msra.mxu0 0.0
          %3486 = vmatprep.subr.mxu0 0.0
          %3487 = vmatpush1.msra.mxu0 0.0
          %3488 = vmatprep.subr.mxu0 0.0
          %3489 = vmatpush1.msra.mxu0 0.0
          %3490 = vmatprep.subr.mxu0 0.0
          %3491 = vmatpush1.msra.mxu0 0.0
          %3492 = vmatprep.subr.mxu0 0.0
          %3493 = vmatpush1.msra.mxu0 0.0
          %3494 = vmatprep.subr.mxu0 0.0
          %3495 = vmatpush1.msra.mxu0 0.0
          %3496 = vmatprep.subr.mxu0 0.0
          %3497 = vmatpush1.msra.mxu0 0.0
          %3498 = vmatprep.subr.mxu0 0.0
          %3499 = vmatpush1.msra.mxu0 0.0
          %3500 = vmatprep.subr.mxu0 0.0
          %v3501 = vand.u32 %v3313, 4294901760
          %v3502 = vsub.f32 %v3313, %v3501
          %3503 = vmatpush1.msra.mxu0 %v3502
          %3504 = vmatprep.subr.mxu0 0.0
          %3505 = vmatpush2.msra.mxu0 0.0
          %3506 = vmatprep.subr.mxu0 0.0
          %3507 = vmatpush2.msra.mxu0 0.0
          %3508 = vmatprep.subr.mxu0 0.0
          %3509 = vmatpush2.msra.mxu0 0.0
          %3510 = vmatprep.subr.mxu0 0.0
          %3511 = vmatpush2.msra.mxu0 0.0
          %3512 = vmatprep.subr.mxu0 0.0
          %3513 = vmatpush2.msra.mxu0 0.0
          %3514 = vmatprep.subr.mxu0 0.0
          %3515 = vmatpush2.msra.mxu0 0.0
          %3516 = vmatprep.subr.mxu0 0.0
          %3517 = vmatpush2.msra.mxu0 0.0
          %3518 = vmatprep.subr.mxu0 0.0
          %3519 = vmatpush2.msra.mxu0 0.0
          %3520 = vmatprep.subr.mxu0 0.0
          %3521 = vmatpush2.msra.mxu0 0.0
          %3522 = vmatprep.subr.mxu0 0.0
          %3523 = vmatpush2.msra.mxu0 0.0
          %3524 = vmatprep.subr.mxu0 0.0
          %3525 = vmatpush2.msra.mxu0 0.0
          %3526 = vmatprep.subr.mxu0 0.0
          %3527 = vmatpush2.msra.mxu0 0.0
          %3528 = vmatprep.subr.mxu0 0.0
          %3529 = vmatpush2.msra.mxu0 0.0
          %3530 = vmatprep.subr.mxu0 0.0
          %3531 = vmatpush2.msra.mxu0 0.0
          %3532 = vmatprep.subr.mxu0 0.0
          %3533 = vmatpush2.msra.mxu0 0.0
          %3534 = vmatprep.subr.mxu0 0.0
          %3535 = vmatpush2.msra.mxu0 0.0
          %3536 = vmatprep.mubr.f32.mxu0 0.0
          %v3537 = vand.u32 %v3316, 4294901760
          %v3538 = vsub.f32 %v3316, %v3537
          %3539 = vmatmul.mubr.f32.gmra.mxu0 %v3538
          %v3540 = vpop.f32.mrf.mxu0
          %v3541 = vadd.f32 %v3467, %v3540
          %v3542 = vpop.f32.mrf.mxu0
          %3543 = vdwg.mxu0
          %3544 = vmatprep.subr.mxu0 0.0
          %3545 = vmatpush1.msra.mxu0 0.0
          %3546 = vmatprep.subr.mxu0 0.0
          %3547 = vmatpush1.msra.mxu0 0.0
          %3548 = vmatprep.subr.mxu0 0.0
          %3549 = vmatpush1.msra.mxu0 0.0
          %3550 = vmatprep.subr.mxu0 0.0
          %3551 = vmatpush1.msra.mxu0 0.0
          %3552 = vmatprep.subr.mxu0 0.0
          %3553 = vmatpush1.msra.mxu0 0.0
          %3554 = vmatprep.subr.mxu0 0.0
          %3555 = vmatpush1.msra.mxu0 0.0
          %3556 = vmatprep.subr.mxu0 0.0
          %3557 = vmatpush1.msra.mxu0 0.0
          %3558 = vmatprep.subr.mxu0 0.0
          %3559 = vmatpush1.msra.mxu0 0.0
          %3560 = vmatprep.subr.mxu0 0.0
          %3561 = vmatpush1.msra.mxu0 0.0
          %3562 = vmatprep.subr.mxu0 0.0
          %3563 = vmatpush1.msra.mxu0 0.0
          %3564 = vmatprep.subr.mxu0 0.0
          %3565 = vmatpush1.msra.mxu0 0.0
          %3566 = vmatprep.subr.mxu0 0.0
          %3567 = vmatpush1.msra.mxu0 0.0
          %3568 = vmatprep.subr.mxu0 0.0
          %3569 = vmatpush1.msra.mxu0 0.0
          %3570 = vmatprep.subr.mxu0 0.0
          %3571 = vmatpush1.msra.mxu0 0.0
          %3572 = vmatprep.subr.mxu0 0.0
          %3573 = vmatpush1.msra.mxu0 0.0
          %3574 = vmatprep.subr.mxu0 0.0
          %v3575 = vand.u32 %v3313, 4294901760
          %3576 = vmatpush1.msra.mxu0 %v3575
          %3577 = vmatprep.subr.mxu0 0.0
          %3578 = vmatpush2.msra.mxu0 0.0
          %3579 = vmatprep.subr.mxu0 0.0
          %3580 = vmatpush2.msra.mxu0 0.0
          %3581 = vmatprep.subr.mxu0 0.0
          %3582 = vmatpush2.msra.mxu0 0.0
          %3583 = vmatprep.subr.mxu0 0.0
          %3584 = vmatpush2.msra.mxu0 0.0
          %3585 = vmatprep.subr.mxu0 0.0
          %3586 = vmatpush2.msra.mxu0 0.0
          %3587 = vmatprep.subr.mxu0 0.0
          %3588 = vmatpush2.msra.mxu0 0.0
          %3589 = vmatprep.subr.mxu0 0.0
          %3590 = vmatpush2.msra.mxu0 0.0
          %3591 = vmatprep.subr.mxu0 0.0
          %3592 = vmatpush2.msra.mxu0 0.0
          %3593 = vmatprep.subr.mxu0 0.0
          %3594 = vmatpush2.msra.mxu0 0.0
          %3595 = vmatprep.subr.mxu0 0.0
          %3596 = vmatpush2.msra.mxu0 0.0
          %3597 = vmatprep.subr.mxu0 0.0
          %3598 = vmatpush2.msra.mxu0 0.0
          %3599 = vmatprep.subr.mxu0 0.0
          %3600 = vmatpush2.msra.mxu0 0.0
          %3601 = vmatprep.subr.mxu0 0.0
          %3602 = vmatpush2.msra.mxu0 0.0
          %3603 = vmatprep.subr.mxu0 0.0
          %3604 = vmatpush2.msra.mxu0 0.0
          %3605 = vmatprep.subr.mxu0 0.0
          %3606 = vmatpush2.msra.mxu0 0.0
          %3607 = vmatprep.subr.mxu0 0.0
          %3608 = vmatpush2.msra.mxu0 0.0
          %3609 = vmatprep.mubr.f32.mxu0 0.0
          %v3610 = vand.u32 %v3316, 4294901760
          %v3611 = vsub.f32 %v3316, %v3610
          %v3612 = vand.u32 %v3611, 4294901760
          %3613 = vmatmul.mubr.f32.gmra.mxu0 %v3612
          %v3614 = vpop.f32.mrf.mxu0
          %v3615 = vadd.f32 %v3541, %v3614
          %v3616 = vpop.f32.mrf.mxu0
          %3617 = vdwg.mxu0
          %3618 = vmatprep.subr.mxu0 0.0
          %3619 = vmatpush1.msra.mxu0 0.0
          %3620 = vmatprep.subr.mxu0 0.0
          %3621 = vmatpush1.msra.mxu0 0.0
          %3622 = vmatprep.subr.mxu0 0.0
          %3623 = vmatpush1.msra.mxu0 0.0
          %3624 = vmatprep.subr.mxu0 0.0
          %3625 = vmatpush1.msra.mxu0 0.0
          %3626 = vmatprep.subr.mxu0 0.0
          %3627 = vmatpush1.msra.mxu0 0.0
          %3628 = vmatprep.subr.mxu0 0.0
          %3629 = vmatpush1.msra.mxu0 0.0
          %3630 = vmatprep.subr.mxu0 0.0
          %3631 = vmatpush1.msra.mxu0 0.0
          %3632 = vmatprep.subr.mxu0 0.0
          %3633 = vmatpush1.msra.mxu0 0.0
          %3634 = vmatprep.subr.mxu0 0.0
          %3635 = vmatpush1.msra.mxu0 0.0
          %3636 = vmatprep.subr.mxu0 0.0
          %3637 = vmatpush1.msra.mxu0 0.0
          %3638 = vmatprep.subr.mxu0 0.0
          %3639 = vmatpush1.msra.mxu0 0.0
          %3640 = vmatprep.subr.mxu0 0.0
          %3641 = vmatpush1.msra.mxu0 0.0
          %3642 = vmatprep.subr.mxu0 0.0
          %3643 = vmatpush1.msra.mxu0 0.0
          %3644 = vmatprep.subr.mxu0 0.0
          %3645 = vmatpush1.msra.mxu0 0.0
          %3646 = vmatprep.subr.mxu0 0.0
          %3647 = vmatpush1.msra.mxu0 0.0
          %3648 = vmatprep.subr.mxu0 0.0
          %v3649 = vand.u32 %v3313, 4294901760
          %v3650 = vsub.f32 %v3313, %v3649
          %v3651 = vand.u32 %v3650, 4294901760
          %3652 = vmatpush1.msra.mxu0 %v3651
          %3653 = vmatprep.subr.mxu0 0.0
          %3654 = vmatpush2.msra.mxu0 0.0
          %3655 = vmatprep.subr.mxu0 0.0
          %3656 = vmatpush2.msra.mxu0 0.0
          %3657 = vmatprep.subr.mxu0 0.0
          %3658 = vmatpush2.msra.mxu0 0.0
          %3659 = vmatprep.subr.mxu0 0.0
          %3660 = vmatpush2.msra.mxu0 0.0
          %3661 = vmatprep.subr.mxu0 0.0
          %3662 = vmatpush2.msra.mxu0 0.0
          %3663 = vmatprep.subr.mxu0 0.0
          %3664 = vmatpush2.msra.mxu0 0.0
          %3665 = vmatprep.subr.mxu0 0.0
          %3666 = vmatpush2.msra.mxu0 0.0
          %3667 = vmatprep.subr.mxu0 0.0
          %3668 = vmatpush2.msra.mxu0 0.0
          %3669 = vmatprep.subr.mxu0 0.0
          %3670 = vmatpush2.msra.mxu0 0.0
          %3671 = vmatprep.subr.mxu0 0.0
          %3672 = vmatpush2.msra.mxu0 0.0
          %3673 = vmatprep.subr.mxu0 0.0
          %3674 = vmatpush2.msra.mxu0 0.0
          %3675 = vmatprep.subr.mxu0 0.0
          %3676 = vmatpush2.msra.mxu0 0.0
          %3677 = vmatprep.subr.mxu0 0.0
          %3678 = vmatpush2.msra.mxu0 0.0
          %3679 = vmatprep.subr.mxu0 0.0
          %3680 = vmatpush2.msra.mxu0 0.0
          %3681 = vmatprep.subr.mxu0 0.0
          %3682 = vmatpush2.msra.mxu0 0.0
          %3683 = vmatprep.subr.mxu0 0.0
          %3684 = vmatpush2.msra.mxu0 0.0
          %3685 = vmatprep.mubr.f32.mxu0 0.0
          %v3686 = vand.u32 %v3316, 4294901760
          %3687 = vmatmul.mubr.f32.gmra.mxu0 %v3686
          %v3688 = vpop.f32.mrf.mxu0
          %v3689 = vadd.f32 %v3615, %v3688
          %v3690 = vpop.f32.mrf.mxu0
          %3691 = vdwg.mxu0
          %3692 = vmatprep.subr.mxu0 0.0
          %3693 = vmatpush1.msra.mxu0 0.0
          %3694 = vmatprep.subr.mxu0 0.0
          %3695 = vmatpush1.msra.mxu0 0.0
          %3696 = vmatprep.subr.mxu0 0.0
          %3697 = vmatpush1.msra.mxu0 0.0
          %3698 = vmatprep.subr.mxu0 0.0
          %3699 = vmatpush1.msra.mxu0 0.0
          %3700 = vmatprep.subr.mxu0 0.0
          %3701 = vmatpush1.msra.mxu0 0.0
          %3702 = vmatprep.subr.mxu0 0.0
          %3703 = vmatpush1.msra.mxu0 0.0
          %3704 = vmatprep.subr.mxu0 0.0
          %3705 = vmatpush1.msra.mxu0 0.0
          %3706 = vmatprep.subr.mxu0 0.0
          %3707 = vmatpush1.msra.mxu0 0.0
          %3708 = vmatprep.subr.mxu0 0.0
          %3709 = vmatpush1.msra.mxu0 0.0
          %3710 = vmatprep.subr.mxu0 0.0
          %3711 = vmatpush1.msra.mxu0 0.0
          %3712 = vmatprep.subr.mxu0 0.0
          %3713 = vmatpush1.msra.mxu0 0.0
          %3714 = vmatprep.subr.mxu0 0.0
          %3715 = vmatpush1.msra.mxu0 0.0
          %3716 = vmatprep.subr.mxu0 0.0
          %3717 = vmatpush1.msra.mxu0 0.0
          %3718 = vmatprep.subr.mxu0 0.0
          %3719 = vmatpush1.msra.mxu0 0.0
          %3720 = vmatprep.subr.mxu0 0.0
          %3721 = vmatpush1.msra.mxu0 0.0
          %3722 = vmatprep.subr.mxu0 0.0
          %v3723 = vand.u32 %v3313, 4294901760
          %3724 = vmatpush1.msra.mxu0 %v3723
          %3725 = vmatprep.subr.mxu0 0.0
          %3726 = vmatpush2.msra.mxu0 0.0
          %3727 = vmatprep.subr.mxu0 0.0
          %3728 = vmatpush2.msra.mxu0 0.0
          %3729 = vmatprep.subr.mxu0 0.0
          %3730 = vmatpush2.msra.mxu0 0.0
          %3731 = vmatprep.subr.mxu0 0.0
          %3732 = vmatpush2.msra.mxu0 0.0
          %3733 = vmatprep.subr.mxu0 0.0
          %3734 = vmatpush2.msra.mxu0 0.0
          %3735 = vmatprep.subr.mxu0 0.0
          %3736 = vmatpush2.msra.mxu0 0.0
          %3737 = vmatprep.subr.mxu0 0.0
          %3738 = vmatpush2.msra.mxu0 0.0
          %3739 = vmatprep.subr.mxu0 0.0
          %3740 = vmatpush2.msra.mxu0 0.0
          %3741 = vmatprep.subr.mxu0 0.0
          %3742 = vmatpush2.msra.mxu0 0.0
          %3743 = vmatprep.subr.mxu0 0.0
          %3744 = vmatpush2.msra.mxu0 0.0
          %3745 = vmatprep.subr.mxu0 0.0
          %3746 = vmatpush2.msra.mxu0 0.0
          %3747 = vmatprep.subr.mxu0 0.0
          %3748 = vmatpush2.msra.mxu0 0.0
          %3749 = vmatprep.subr.mxu0 0.0
          %3750 = vmatpush2.msra.mxu0 0.0
          %3751 = vmatprep.subr.mxu0 0.0
          %3752 = vmatpush2.msra.mxu0 0.0
          %3753 = vmatprep.subr.mxu0 0.0
          %3754 = vmatpush2.msra.mxu0 0.0
          %3755 = vmatprep.subr.mxu0 0.0
          %3756 = vmatpush2.msra.mxu0 0.0
          %3757 = vmatprep.mubr.f32.mxu0 0.0
          %v3758 = vand.u32 %v3316, 4294901760
          %3759 = vmatmul.mubr.f32.gmra.mxu0 %v3758
          %v3760 = vpop.f32.mrf.mxu0
          %v3761 = vadd.f32 %v3689, %v3760
          %v3762 = vpop.f32.mrf.mxu0
          %3763 = vdwg.mxu0
          %v3764 = vadd.f32 %v3284, %v3761
          %v3765 = vadd.f32 %v3764, %v358
          %v3766 = vmul.f32 %v3294, %v3765
          %v3767 = vmul.f32 %v3313, %v358
          %v3768 = vsub.f32 %v3766, %v3767
          %v3769 = vld [vmem:[#allocation3] sm:$0xff]
          %v3770 = vlaneseq
          %v3771 = vshrl.u32 %v3770, 7
          %v3772 = vsub.s32 1, %v3771
          %v3773 = vrot.slane %v3287, %v3772
          %v3774 = vmul.f32 %v3773, %v3768
          %v3775 = vadd.f32 %v3769, %v3774
          %3776 = vst [vmem:[#allocation3] sm:$0xff] %v3775
          %v3777 = vld [vmem:[#allocation2] sm:$0xff]
          %v3778 = vrot.slane %v3777, 4
          %v3779 = vmax.f32 %v3777, %v3778
          %v3780 = vrot.slane %v3779, 2
          %v3781 = vmax.f32 %v3779, %v3780
          %v3782 = vrot.slane %v3781, 1
          %v3783 = vmax.f32 %v3781, %v3782
          %v3784 = vsub.f32 %v3777, %v3783
          %v3785 = vmul.f32 %v3784, 1.442695
          %v3786 = vpow.pop %v3785
          %v3788 = vsel %vm3314, %v353, 0
          %3790 = vmatprep.subr.mxu0 0.0
          %3791 = vmatpush1.msra.mxu0 0.0
          %3792 = vmatprep.subr.mxu0 0.0
          %3793 = vmatpush1.msra.mxu0 0.0
          %3794 = vmatprep.subr.mxu0 0.0
          %3795 = vmatpush1.msra.mxu0 0.0
          %3796 = vmatprep.subr.mxu0 0.0
          %3797 = vmatpush1.msra.mxu0 0.0
          %3798 = vmatprep.subr.mxu0 0.0
          %3799 = vmatpush1.msra.mxu0 0.0
          %3800 = vmatprep.subr.mxu0 0.0
          %3801 = vmatpush1.msra.mxu0 0.0
          %3802 = vmatprep.subr.mxu0 0.0
          %3803 = vmatpush1.msra.mxu0 0.0
          %3804 = vmatprep.subr.mxu0 0.0
          %3805 = vmatpush1.msra.mxu0 0.0
          %3806 = vmatprep.subr.mxu0 0.0
          %3807 = vmatpush1.msra.mxu0 0.0
          %3808 = vmatprep.subr.mxu0 0.0
          %3809 = vmatpush1.msra.mxu0 0.0
          %3810 = vmatprep.subr.mxu0 0.0
          %3811 = vmatpush1.msra.mxu0 0.0
          %3812 = vmatprep.subr.mxu0 0.0
          %3813 = vmatpush1.msra.mxu0 0.0
          %3814 = vmatprep.subr.mxu0 0.0
          %3815 = vmatpush1.msra.mxu0 0.0
          %3816 = vmatprep.subr.mxu0 0.0
          %3817 = vmatpush1.msra.mxu0 0.0
          %3818 = vmatprep.subr.mxu0 0.0
          %3819 = vmatpush1.msra.mxu0 0.0
          %3820 = vmatprep.subr.mxu0 0.0
          %v3821 = vand.u32 %v3786, 4294901760
          %3822 = vmatpush1.msra.mxu0 %v3821
          %3823 = vmatprep.subr.mxu0 0.0
          %3824 = vmatpush2.msra.mxu0 0.0
          %3825 = vmatprep.subr.mxu0 0.0
          %3826 = vmatpush2.msra.mxu0 0.0
          %3827 = vmatprep.subr.mxu0 0.0
          %3828 = vmatpush2.msra.mxu0 0.0
          %3829 = vmatprep.subr.mxu0 0.0
          %3830 = vmatpush2.msra.mxu0 0.0
          %3831 = vmatprep.subr.mxu0 0.0
          %3832 = vmatpush2.msra.mxu0 0.0
          %3833 = vmatprep.subr.mxu0 0.0
          %3834 = vmatpush2.msra.mxu0 0.0
          %3835 = vmatprep.subr.mxu0 0.0
          %3836 = vmatpush2.msra.mxu0 0.0
          %3837 = vmatprep.subr.mxu0 0.0
          %3838 = vmatpush2.msra.mxu0 0.0
          %3839 = vmatprep.subr.mxu0 0.0
          %3840 = vmatpush2.msra.mxu0 0.0
          %3841 = vmatprep.subr.mxu0 0.0
          %3842 = vmatpush2.msra.mxu0 0.0
          %3843 = vmatprep.subr.mxu0 0.0
          %3844 = vmatpush2.msra.mxu0 0.0
          %3845 = vmatprep.subr.mxu0 0.0
          %3846 = vmatpush2.msra.mxu0 0.0
          %3847 = vmatprep.subr.mxu0 0.0
          %3848 = vmatpush2.msra.mxu0 0.0
          %3849 = vmatprep.subr.mxu0 0.0
          %3850 = vmatpush2.msra.mxu0 0.0
          %3851 = vmatprep.subr.mxu0 0.0
          %3852 = vmatpush2.msra.mxu0 0.0
          %3853 = vmatprep.subr.mxu0 0.0
          %3854 = vmatpush2.msra.mxu0 0.0
          %3855 = vmatprep.mubr.f32.mxu0 0.0
          %v3856 = vand.u32 %v3788, 4294901760
          %v3857 = vsub.f32 %v3788, %v3856
          %v3858 = vand.u32 %v3857, 4294901760
          %v3859 = vsub.f32 %v3857, %v3858
          %v3860 = vand.u32 %v3859, 4294901760
          %3861 = vmatmul.mubr.f32.gmra.mxu0 %v3860
          %v3862 = vpop.f32.mrf.mxu0
          %v3863 = vadd.f32 0.0, %v3862
          %v3864 = vpop.f32.mrf.mxu0
          %3865 = vdwg.mxu0
          %3866 = vmatprep.subr.mxu0 0.0
          %3867 = vmatpush1.msra.mxu0 0.0
          %3868 = vmatprep.subr.mxu0 0.0
          %3869 = vmatpush1.msra.mxu0 0.0
          %3870 = vmatprep.subr.mxu0 0.0
          %3871 = vmatpush1.msra.mxu0 0.0
          %3872 = vmatprep.subr.mxu0 0.0
          %3873 = vmatpush1.msra.mxu0 0.0
          %3874 = vmatprep.subr.mxu0 0.0
          %3875 = vmatpush1.msra.mxu0 0.0
          %3876 = vmatprep.subr.mxu0 0.0
          %3877 = vmatpush1.msra.mxu0 0.0
          %3878 = vmatprep.subr.mxu0 0.0
          %3879 = vmatpush1.msra.mxu0 0.0
          %3880 = vmatprep.subr.mxu0 0.0
          %3881 = vmatpush1.msra.mxu0 0.0
          %3882 = vmatprep.subr.mxu0 0.0
          %3883 = vmatpush1.msra.mxu0 0.0
          %3884 = vmatprep.subr.mxu0 0.0
          %3885 = vmatpush1.msra.mxu0 0.0
          %3886 = vmatprep.subr.mxu0 0.0
          %3887 = vmatpush1.msra.mxu0 0.0
          %3888 = vmatprep.subr.mxu0 0.0
          %3889 = vmatpush1.msra.mxu0 0.0
          %3890 = vmatprep.subr.mxu0 0.0
          %3891 = vmatpush1.msra.mxu0 0.0
          %3892 = vmatprep.subr.mxu0 0.0
          %3893 = vmatpush1.msra.mxu0 0.0
          %3894 = vmatprep.subr.mxu0 0.0
          %3895 = vmatpush1.msra.mxu0 0.0
          %3896 = vmatprep.subr.mxu0 0.0
          %v3897 = vand.u32 %v3786, 4294901760
          %v3898 = vsub.f32 %v3786, %v3897
          %v3899 = vand.u32 %v3898, 4294901760
          %v3900 = vsub.f32 %v3898, %v3899
          %v3901 = vand.u32 %v3900, 4294901760
          %3902 = vmatpush1.msra.mxu0 %v3901
          %3903 = vmatprep.subr.mxu0 0.0
          %3904 = vmatpush2.msra.mxu0 0.0
          %3905 = vmatprep.subr.mxu0 0.0
          %3906 = vmatpush2.msra.mxu0 0.0
          %3907 = vmatprep.subr.mxu0 0.0
          %3908 = vmatpush2.msra.mxu0 0.0
          %3909 = vmatprep.subr.mxu0 0.0
          %3910 = vmatpush2.msra.mxu0 0.0
          %3911 = vmatprep.subr.mxu0 0.0
          %3912 = vmatpush2.msra.mxu0 0.0
          %3913 = vmatprep.subr.mxu0 0.0
          %3914 = vmatpush2.msra.mxu0 0.0
          %3915 = vmatprep.subr.mxu0 0.0
          %3916 = vmatpush2.msra.mxu0 0.0
          %3917 = vmatprep.subr.mxu0 0.0
          %3918 = vmatpush2.msra.mxu0 0.0
          %3919 = vmatprep.subr.mxu0 0.0
          %3920 = vmatpush2.msra.mxu0 0.0
          %3921 = vmatprep.subr.mxu0 0.0
          %3922 = vmatpush2.msra.mxu0 0.0
          %3923 = vmatprep.subr.mxu0 0.0
          %3924 = vmatpush2.msra.mxu0 0.0
          %3925 = vmatprep.subr.mxu0 0.0
          %3926 = vmatpush2.msra.mxu0 0.0
          %3927 = vmatprep.subr.mxu0 0.0
          %3928 = vmatpush2.msra.mxu0 0.0
          %3929 = vmatprep.subr.mxu0 0.0
          %3930 = vmatpush2.msra.mxu0 0.0
          %3931 = vmatprep.subr.mxu0 0.0
          %3932 = vmatpush2.msra.mxu0 0.0
          %3933 = vmatprep.subr.mxu0 0.0
          %3934 = vmatpush2.msra.mxu0 0.0
          %3935 = vmatprep.mubr.f32.mxu0 0.0
          %v3936 = vand.u32 %v3788, 4294901760
          %3937 = vmatmul.mubr.f32.gmra.mxu0 %v3936
          %v3938 = vpop.f32.mrf.mxu0
          %v3939 = vadd.f32 %v3863, %v3938
          %v3940 = vpop.f32.mrf.mxu0
          %3941 = vdwg.mxu0
          %3942 = vmatprep.subr.mxu0 0.0
          %3943 = vmatpush1.msra.mxu0 0.0
          %3944 = vmatprep.subr.mxu0 0.0
          %3945 = vmatpush1.msra.mxu0 0.0
          %3946 = vmatprep.subr.mxu0 0.0
          %3947 = vmatpush1.msra.mxu0 0.0
          %3948 = vmatprep.subr.mxu0 0.0
          %3949 = vmatpush1.msra.mxu0 0.0
          %3950 = vmatprep.subr.mxu0 0.0
          %3951 = vmatpush1.msra.mxu0 0.0
          %3952 = vmatprep.subr.mxu0 0.0
          %3953 = vmatpush1.msra.mxu0 0.0
          %3954 = vmatprep.subr.mxu0 0.0
          %3955 = vmatpush1.msra.mxu0 0.0
          %3956 = vmatprep.subr.mxu0 0.0
          %3957 = vmatpush1.msra.mxu0 0.0
          %3958 = vmatprep.subr.mxu0 0.0
          %3959 = vmatpush1.msra.mxu0 0.0
          %3960 = vmatprep.subr.mxu0 0.0
          %3961 = vmatpush1.msra.mxu0 0.0
          %3962 = vmatprep.subr.mxu0 0.0
          %3963 = vmatpush1.msra.mxu0 0.0
          %3964 = vmatprep.subr.mxu0 0.0
          %3965 = vmatpush1.msra.mxu0 0.0
          %3966 = vmatprep.subr.mxu0 0.0
          %3967 = vmatpush1.msra.mxu0 0.0
          %3968 = vmatprep.subr.mxu0 0.0
          %3969 = vmatpush1.msra.mxu0 0.0
          %3970 = vmatprep.subr.mxu0 0.0
          %3971 = vmatpush1.msra.mxu0 0.0
          %3972 = vmatprep.subr.mxu0 0.0
          %v3973 = vand.u32 %v3786, 4294901760
          %v3974 = vsub.f32 %v3786, %v3973
          %3975 = vmatpush1.msra.mxu0 %v3974
          %3976 = vmatprep.subr.mxu0 0.0
          %3977 = vmatpush2.msra.mxu0 0.0
          %3978 = vmatprep.subr.mxu0 0.0
          %3979 = vmatpush2.msra.mxu0 0.0
          %3980 = vmatprep.subr.mxu0 0.0
          %3981 = vmatpush2.msra.mxu0 0.0
          %3982 = vmatprep.subr.mxu0 0.0
          %3983 = vmatpush2.msra.mxu0 0.0
          %3984 = vmatprep.subr.mxu0 0.0
          %3985 = vmatpush2.msra.mxu0 0.0
          %3986 = vmatprep.subr.mxu0 0.0
          %3987 = vmatpush2.msra.mxu0 0.0
          %3988 = vmatprep.subr.mxu0 0.0
          %3989 = vmatpush2.msra.mxu0 0.0
          %3990 = vmatprep.subr.mxu0 0.0
          %3991 = vmatpush2.msra.mxu0 0.0
          %3992 = vmatprep.subr.mxu0 0.0
          %3993 = vmatpush2.msra.mxu0 0.0
          %3994 = vmatprep.subr.mxu0 0.0
          %3995 = vmatpush2.msra.mxu0 0.0
          %3996 = vmatprep.subr.mxu0 0.0
          %3997 = vmatpush2.msra.mxu0 0.0
          %3998 = vmatprep.subr.mxu0 0.0
          %3999 = vmatpush2.msra.mxu0 0.0
          %4000 = vmatprep.subr.mxu0 0.0
          %4001 = vmatpush2.msra.mxu0 0.0
          %4002 = vmatprep.subr.mxu0 0.0
          %4003 = vmatpush2.msra.mxu0 0.0
          %4004 = vmatprep.subr.mxu0 0.0
          %4005 = vmatpush2.msra.mxu0 0.0
          %4006 = vmatprep.subr.mxu0 0.0
          %4007 = vmatpush2.msra.mxu0 0.0
          %4008 = vmatprep.mubr.f32.mxu0 0.0
          %v4009 = vand.u32 %v3788, 4294901760
          %v4010 = vsub.f32 %v3788, %v4009
          %4011 = vmatmul.mubr.f32.gmra.mxu0 %v4010
          %v4012 = vpop.f32.mrf.mxu0
          %v4013 = vadd.f32 %v3939, %v4012
          %v4014 = vpop.f32.mrf.mxu0
          %4015 = vdwg.mxu0
          %4016 = vmatprep.subr.mxu0 0.0
          %4017 = vmatpush1.msra.mxu0 0.0
          %4018 = vmatprep.subr.mxu0 0.0
          %4019 = vmatpush1.msra.mxu0 0.0
          %4020 = vmatprep.subr.mxu0 0.0
          %4021 = vmatpush1.msra.mxu0 0.0
          %4022 = vmatprep.subr.mxu0 0.0
          %4023 = vmatpush1.msra.mxu0 0.0
          %4024 = vmatprep.subr.mxu0 0.0
          %4025 = vmatpush1.msra.mxu0 0.0
          %4026 = vmatprep.subr.mxu0 0.0
          %4027 = vmatpush1.msra.mxu0 0.0
          %4028 = vmatprep.subr.mxu0 0.0
          %4029 = vmatpush1.msra.mxu0 0.0
          %4030 = vmatprep.subr.mxu0 0.0
          %4031 = vmatpush1.msra.mxu0 0.0
          %4032 = vmatprep.subr.mxu0 0.0
          %4033 = vmatpush1.msra.mxu0 0.0
          %4034 = vmatprep.subr.mxu0 0.0
          %4035 = vmatpush1.msra.mxu0 0.0
          %4036 = vmatprep.subr.mxu0 0.0
          %4037 = vmatpush1.msra.mxu0 0.0
          %4038 = vmatprep.subr.mxu0 0.0
          %4039 = vmatpush1.msra.mxu0 0.0
          %4040 = vmatprep.subr.mxu0 0.0
          %4041 = vmatpush1.msra.mxu0 0.0
          %4042 = vmatprep.subr.mxu0 0.0
          %4043 = vmatpush1.msra.mxu0 0.0
          %4044 = vmatprep.subr.mxu0 0.0
          %4045 = vmatpush1.msra.mxu0 0.0
          %4046 = vmatprep.subr.mxu0 0.0
          %v4047 = vand.u32 %v3786, 4294901760
          %4048 = vmatpush1.msra.mxu0 %v4047
          %4049 = vmatprep.subr.mxu0 0.0
          %4050 = vmatpush2.msra.mxu0 0.0
          %4051 = vmatprep.subr.mxu0 0.0
          %4052 = vmatpush2.msra.mxu0 0.0
          %4053 = vmatprep.subr.mxu0 0.0
          %4054 = vmatpush2.msra.mxu0 0.0
          %4055 = vmatprep.subr.mxu0 0.0
          %4056 = vmatpush2.msra.mxu0 0.0
          %4057 = vmatprep.subr.mxu0 0.0
          %4058 = vmatpush2.msra.mxu0 0.0
          %4059 = vmatprep.subr.mxu0 0.0
          %4060 = vmatpush2.msra.mxu0 0.0
          %4061 = vmatprep.subr.mxu0 0.0
          %4062 = vmatpush2.msra.mxu0 0.0
          %4063 = vmatprep.subr.mxu0 0.0
          %4064 = vmatpush2.msra.mxu0 0.0
          %4065 = vmatprep.subr.mxu0 0.0
          %4066 = vmatpush2.msra.mxu0 0.0
          %4067 = vmatprep.subr.mxu0 0.0
          %4068 = vmatpush2.msra.mxu0 0.0
          %4069 = vmatprep.subr.mxu0 0.0
          %4070 = vmatpush2.msra.mxu0 0.0
          %4071 = vmatprep.subr.mxu0 0.0
          %4072 = vmatpush2.msra.mxu0 0.0
          %4073 = vmatprep.subr.mxu0 0.0
          %4074 = vmatpush2.msra.mxu0 0.0
          %4075 = vmatprep.subr.mxu0 0.0
          %4076 = vmatpush2.msra.mxu0 0.0
          %4077 = vmatprep.subr.mxu0 0.0
          %4078 = vmatpush2.msra.mxu0 0.0
          %4079 = vmatprep.subr.mxu0 0.0
          %4080 = vmatpush2.msra.mxu0 0.0
          %4081 = vmatprep.mubr.f32.mxu0 0.0
          %v4082 = vand.u32 %v3788, 4294901760
          %v4083 = vsub.f32 %v3788, %v4082
          %v4084 = vand.u32 %v4083, 4294901760
          %4085 = vmatmul.mubr.f32.gmra.mxu0 %v4084
          %v4086 = vpop.f32.mrf.mxu0
          %v4087 = vadd.f32 %v4013, %v4086
          %v4088 = vpop.f32.mrf.mxu0
          %4089 = vdwg.mxu0
          %4090 = vmatprep.subr.mxu0 0.0
          %4091 = vmatpush1.msra.mxu0 0.0
          %4092 = vmatprep.subr.mxu0 0.0
          %4093 = vmatpush1.msra.mxu0 0.0
          %4094 = vmatprep.subr.mxu0 0.0
          %4095 = vmatpush1.msra.mxu0 0.0
          %4096 = vmatprep.subr.mxu0 0.0
          %4097 = vmatpush1.msra.mxu0 0.0
          %4098 = vmatprep.subr.mxu0 0.0
          %4099 = vmatpush1.msra.mxu0 0.0
          %4100 = vmatprep.subr.mxu0 0.0
          %4101 = vmatpush1.msra.mxu0 0.0
          %4102 = vmatprep.subr.mxu0 0.0
          %4103 = vmatpush1.msra.mxu0 0.0
          %4104 = vmatprep.subr.mxu0 0.0
          %4105 = vmatpush1.msra.mxu0 0.0
          %4106 = vmatprep.subr.mxu0 0.0
          %4107 = vmatpush1.msra.mxu0 0.0
          %4108 = vmatprep.subr.mxu0 0.0
          %4109 = vmatpush1.msra.mxu0 0.0
          %4110 = vmatprep.subr.mxu0 0.0
          %4111 = vmatpush1.msra.mxu0 0.0
          %4112 = vmatprep.subr.mxu0 0.0
          %4113 = vmatpush1.msra.mxu0 0.0
          %4114 = vmatprep.subr.mxu0 0.0
          %4115 = vmatpush1.msra.mxu0 0.0
          %4116 = vmatprep.subr.mxu0 0.0
          %4117 = vmatpush1.msra.mxu0 0.0
          %4118 = vmatprep.subr.mxu0 0.0
          %4119 = vmatpush1.msra.mxu0 0.0
          %4120 = vmatprep.subr.mxu0 0.0
          %v4121 = vand.u32 %v3786, 4294901760
          %v4122 = vsub.f32 %v3786, %v4121
          %v4123 = vand.u32 %v4122, 4294901760
          %4124 = vmatpush1.msra.mxu0 %v4123
          %4125 = vmatprep.subr.mxu0 0.0
          %4126 = vmatpush2.msra.mxu0 0.0
          %4127 = vmatprep.subr.mxu0 0.0
          %4128 = vmatpush2.msra.mxu0 0.0
          %4129 = vmatprep.subr.mxu0 0.0
          %4130 = vmatpush2.msra.mxu0 0.0
          %4131 = vmatprep.subr.mxu0 0.0
          %4132 = vmatpush2.msra.mxu0 0.0
          %4133 = vmatprep.subr.mxu0 0.0
          %4134 = vmatpush2.msra.mxu0 0.0
          %4135 = vmatprep.subr.mxu0 0.0
          %4136 = vmatpush2.msra.mxu0 0.0
          %4137 = vmatprep.subr.mxu0 0.0
          %4138 = vmatpush2.msra.mxu0 0.0
          %4139 = vmatprep.subr.mxu0 0.0
          %4140 = vmatpush2.msra.mxu0 0.0
          %4141 = vmatprep.subr.mxu0 0.0
          %4142 = vmatpush2.msra.mxu0 0.0
          %4143 = vmatprep.subr.mxu0 0.0
          %4144 = vmatpush2.msra.mxu0 0.0
          %4145 = vmatprep.subr.mxu0 0.0
          %4146 = vmatpush2.msra.mxu0 0.0
          %4147 = vmatprep.subr.mxu0 0.0
          %4148 = vmatpush2.msra.mxu0 0.0
          %4149 = vmatprep.subr.mxu0 0.0
          %4150 = vmatpush2.msra.mxu0 0.0
          %4151 = vmatprep.subr.mxu0 0.0
          %4152 = vmatpush2.msra.mxu0 0.0
          %4153 = vmatprep.subr.mxu0 0.0
          %4154 = vmatpush2.msra.mxu0 0.0
          %4155 = vmatprep.subr.mxu0 0.0
          %4156 = vmatpush2.msra.mxu0 0.0
          %4157 = vmatprep.mubr.f32.mxu0 0.0
          %v4158 = vand.u32 %v3788, 4294901760
          %4159 = vmatmul.mubr.f32.gmra.mxu0 %v4158
          %v4160 = vpop.f32.mrf.mxu0
          %v4161 = vadd.f32 %v4087, %v4160
          %v4162 = vpop.f32.mrf.mxu0
          %4163 = vdwg.mxu0
          %4164 = vmatprep.subr.mxu0 0.0
          %4165 = vmatpush1.msra.mxu0 0.0
          %4166 = vmatprep.subr.mxu0 0.0
          %4167 = vmatpush1.msra.mxu0 0.0
          %4168 = vmatprep.subr.mxu0 0.0
          %4169 = vmatpush1.msra.mxu0 0.0
          %4170 = vmatprep.subr.mxu0 0.0
          %4171 = vmatpush1.msra.mxu0 0.0
          %4172 = vmatprep.subr.mxu0 0.0
          %4173 = vmatpush1.msra.mxu0 0.0
          %4174 = vmatprep.subr.mxu0 0.0
          %4175 = vmatpush1.msra.mxu0 0.0
          %4176 = vmatprep.subr.mxu0 0.0
          %4177 = vmatpush1.msra.mxu0 0.0
          %4178 = vmatprep.subr.mxu0 0.0
          %4179 = vmatpush1.msra.mxu0 0.0
          %4180 = vmatprep.subr.mxu0 0.0
          %4181 = vmatpush1.msra.mxu0 0.0
          %4182 = vmatprep.subr.mxu0 0.0
          %4183 = vmatpush1.msra.mxu0 0.0
          %4184 = vmatprep.subr.mxu0 0.0
          %4185 = vmatpush1.msra.mxu0 0.0
          %4186 = vmatprep.subr.mxu0 0.0
          %4187 = vmatpush1.msra.mxu0 0.0
          %4188 = vmatprep.subr.mxu0 0.0
          %4189 = vmatpush1.msra.mxu0 0.0
          %4190 = vmatprep.subr.mxu0 0.0
          %4191 = vmatpush1.msra.mxu0 0.0
          %4192 = vmatprep.subr.mxu0 0.0
          %4193 = vmatpush1.msra.mxu0 0.0
          %4194 = vmatprep.subr.mxu0 0.0
          %v4195 = vand.u32 %v3786, 4294901760
          %4196 = vmatpush1.msra.mxu0 %v4195
          %4197 = vmatprep.subr.mxu0 0.0
          %4198 = vmatpush2.msra.mxu0 0.0
          %4199 = vmatprep.subr.mxu0 0.0
          %4200 = vmatpush2.msra.mxu0 0.0
          %4201 = vmatprep.subr.mxu0 0.0
          %4202 = vmatpush2.msra.mxu0 0.0
          %4203 = vmatprep.subr.mxu0 0.0
          %4204 = vmatpush2.msra.mxu0 0.0
          %4205 = vmatprep.subr.mxu0 0.0
          %4206 = vmatpush2.msra.mxu0 0.0
          %4207 = vmatprep.subr.mxu0 0.0
          %4208 = vmatpush2.msra.mxu0 0.0
          %4209 = vmatprep.subr.mxu0 0.0
          %4210 = vmatpush2.msra.mxu0 0.0
          %4211 = vmatprep.subr.mxu0 0.0
          %4212 = vmatpush2.msra.mxu0 0.0
          %4213 = vmatprep.subr.mxu0 0.0
          %4214 = vmatpush2.msra.mxu0 0.0
          %4215 = vmatprep.subr.mxu0 0.0
          %4216 = vmatpush2.msra.mxu0 0.0
          %4217 = vmatprep.subr.mxu0 0.0
          %4218 = vmatpush2.msra.mxu0 0.0
          %4219 = vmatprep.subr.mxu0 0.0
          %4220 = vmatpush2.msra.mxu0 0.0
          %4221 = vmatprep.subr.mxu0 0.0
          %4222 = vmatpush2.msra.mxu0 0.0
          %4223 = vmatprep.subr.mxu0 0.0
          %4224 = vmatpush2.msra.mxu0 0.0
          %4225 = vmatprep.subr.mxu0 0.0
          %4226 = vmatpush2.msra.mxu0 0.0
          %4227 = vmatprep.subr.mxu0 0.0
          %4228 = vmatpush2.msra.mxu0 0.0
          %4229 = vmatprep.mubr.f32.mxu0 0.0
          %v4230 = vand.u32 %v3788, 4294901760
          %4231 = vmatmul.mubr.f32.gmra.mxu0 %v4230
          %v4232 = vpop.f32.mrf.mxu0
          %v4233 = vadd.f32 %v4161, %v4232
          %v4234 = vpop.f32.mrf.mxu0
          %4235 = vdwg.mxu0
          %4237 = vset.pattern.permute.xlu0 0
          %4238 = vperm.xlu0 %4237, %v354
          %v4239 = vpop.permute.xlu0 %4238
          %v4241 = vadd.f32 %v3783, %v4239
          %v4242 = vlog2.pop %v4233
          %v4243 = vmul.f32 %v4242, 0.6931472
          %v4244 = vadd.f32 %v4241, %v4243
          %v4245 = vadd.f32 %v4244, %v3284
          %vm4246 = vcmp.gt.f32.partialorder %v3287, 0.5
          %v4247 = vsel %vm4246, 1, 0
          %v4248 = vlaneseq
          %v4249 = vshrl.u32 %v4248, 7
          %v4250 = vsub.s32 1, %v4249
          %v4251 = vrot.slane %v4247, %v4250
          %vm4252 = vcmp.eq.s32.totalorder %v4251, 1
          %v4253 = vsel %vm4252, %v4245, %v3777
          %4254 = vst [vmem:[#allocation2] sm:$0xff] %v4253
        $region88: #{tpu_custom_call.1} parent=47 // pred_fallthru
          _
        %4255 = vst [vmem:[#allocation4] sm:$0xff] %v3294
        %s4256 = sadd.s32 %s362, 4
        %s4257 = scalar_lea.vmem %s308, 32 [#allocation5]
        %v4258 = vld [vmem:[%s4257] sm:$0xff]
        %s4259 = scalar_lea.vmem %s317, 8 [#allocation8]
        %v4260 = vld [vmem:[%s4259] sm:$0x3]
        %v4261 = vcvt.s32.f32 %v4260
        %v4262 = vlaneseq
        %v4263 = vshrl.u32 %v4262, 7
        %v4264 = vsub.s32 0, %v4263
        %v4265 = vrot.slane %v4260, %v4264
        %vm4266 = vcmp.eq.s32.totalorder %v361, %v4265
        %v4267 = vsel %vm4266, 1, 0
        %v4268 = vcvt.s32.f32 %v4267
        %p4269 = scmp.eq.s32.totalorder %s4256, 0
        // Predicated region
        $region89: #{tpu_custom_call.1} parent=47 // pred_check
          %p4270 = pneg %p4269
        $region90: #{tpu_custom_call.1} parent=47 // pred_check_branch
          %4272 = sbr.rel (%p4270) target = $region92
        $region91: #{tpu_custom_call.1} parent=47 // pred_region
          %4274 = vset.pattern.permute.xlu0 0
          %4275 = vperm.xlu0 %4274, %v350
          %v4276 = vpop.permute.xlu0 %4275
          %v4278 = vadd.f32 %v4276, %v4258
          %v4279 = vadd.f32 %v4278, %v358
          %v4280 = vmul.f32 %v4268, %v4279
          %4281 = vst [vmem:[#allocation3] sm:$0xff] %v4280
          %4282 = vst [vmem:[#allocation2] sm:$0xff] %v4278
        $region92: #{tpu_custom_call.1} parent=47 // pred_fallthru
          _
        %p4283 = scmp.gt.s32.totalorder %s4256, 0
        // Predicated region
        $region93: #{tpu_custom_call.1} parent=47 // pred_check
          %p4284 = pneg %p4283
        $region94: #{tpu_custom_call.1} parent=47 // pred_check_branch
          %4286 = sbr.rel (%p4284) target = $region96
        $region95: #{tpu_custom_call.1} parent=47 // pred_region
          %v4287 = vld [vmem:[#allocation4] sm:$0xff]
          %vm4288 = vcmask 64512
          %v4290 = vsel %vm4288, %v352, 0
          %4292 = vmatprep.subr.mxu0 0.0
          %4293 = vmatpush1.msra.mxu0 0.0
          %4294 = vmatprep.subr.mxu0 0.0
          %4295 = vmatpush1.msra.mxu0 0.0
          %4296 = vmatprep.subr.mxu0 0.0
          %4297 = vmatpush1.msra.mxu0 0.0
          %4298 = vmatprep.subr.mxu0 0.0
          %4299 = vmatpush1.msra.mxu0 0.0
          %4300 = vmatprep.subr.mxu0 0.0
          %4301 = vmatpush1.msra.mxu0 0.0
          %4302 = vmatprep.subr.mxu0 0.0
          %4303 = vmatpush1.msra.mxu0 0.0
          %4304 = vmatprep.subr.mxu0 0.0
          %4305 = vmatpush1.msra.mxu0 0.0
          %4306 = vmatprep.subr.mxu0 0.0
          %4307 = vmatpush1.msra.mxu0 0.0
          %4308 = vmatprep.subr.mxu0 0.0
          %4309 = vmatpush1.msra.mxu0 0.0
          %4310 = vmatprep.subr.mxu0 0.0
          %4311 = vmatpush1.msra.mxu0 0.0
          %4312 = vmatprep.subr.mxu0 0.0
          %4313 = vmatpush1.msra.mxu0 0.0
          %4314 = vmatprep.subr.mxu0 0.0
          %4315 = vmatpush1.msra.mxu0 0.0
          %4316 = vmatprep.subr.mxu0 0.0
          %4317 = vmatpush1.msra.mxu0 0.0
          %4318 = vmatprep.subr.mxu0 0.0
          %4319 = vmatpush1.msra.mxu0 0.0
          %4320 = vmatprep.subr.mxu0 0.0
          %4321 = vmatpush1.msra.mxu0 0.0
          %4322 = vmatprep.subr.mxu0 0.0
          %v4323 = vand.u32 %v4287, 4294901760
          %4324 = vmatpush1.msra.mxu0 %v4323
          %4325 = vmatprep.subr.mxu0 0.0
          %4326 = vmatpush2.msra.mxu0 0.0
          %4327 = vmatprep.subr.mxu0 0.0
          %4328 = vmatpush2.msra.mxu0 0.0
          %4329 = vmatprep.subr.mxu0 0.0
          %4330 = vmatpush2.msra.mxu0 0.0
          %4331 = vmatprep.subr.mxu0 0.0
          %4332 = vmatpush2.msra.mxu0 0.0
          %4333 = vmatprep.subr.mxu0 0.0
          %4334 = vmatpush2.msra.mxu0 0.0
          %4335 = vmatprep.subr.mxu0 0.0
          %4336 = vmatpush2.msra.mxu0 0.0
          %4337 = vmatprep.subr.mxu0 0.0
          %4338 = vmatpush2.msra.mxu0 0.0
          %4339 = vmatprep.subr.mxu0 0.0
          %4340 = vmatpush2.msra.mxu0 0.0
          %4341 = vmatprep.subr.mxu0 0.0
          %4342 = vmatpush2.msra.mxu0 0.0
          %4343 = vmatprep.subr.mxu0 0.0
          %4344 = vmatpush2.msra.mxu0 0.0
          %4345 = vmatprep.subr.mxu0 0.0
          %4346 = vmatpush2.msra.mxu0 0.0
          %4347 = vmatprep.subr.mxu0 0.0
          %4348 = vmatpush2.msra.mxu0 0.0
          %4349 = vmatprep.subr.mxu0 0.0
          %4350 = vmatpush2.msra.mxu0 0.0
          %4351 = vmatprep.subr.mxu0 0.0
          %4352 = vmatpush2.msra.mxu0 0.0
          %4353 = vmatprep.subr.mxu0 0.0
          %4354 = vmatpush2.msra.mxu0 0.0
          %4355 = vmatprep.subr.mxu0 0.0
          %4356 = vmatpush2.msra.mxu0 0.0
          %4357 = vmatprep.mubr.f32.mxu0 0.0
          %v4358 = vand.u32 %v4290, 4294901760
          %v4359 = vsub.f32 %v4290, %v4358
          %v4360 = vand.u32 %v4359, 4294901760
          %v4361 = vsub.f32 %v4359, %v4360
          %v4362 = vand.u32 %v4361, 4294901760
          %4363 = vmatmul.mubr.f32.gmra.mxu0 %v4362
          %v4364 = vpop.f32.mrf.mxu0
          %v4365 = vadd.f32 0.0, %v4364
          %v4366 = vpop.f32.mrf.mxu0
          %4367 = vdwg.mxu0
          %4368 = vmatprep.subr.mxu0 0.0
          %4369 = vmatpush1.msra.mxu0 0.0
          %4370 = vmatprep.subr.mxu0 0.0
          %4371 = vmatpush1.msra.mxu0 0.0
          %4372 = vmatprep.subr.mxu0 0.0
          %4373 = vmatpush1.msra.mxu0 0.0
          %4374 = vmatprep.subr.mxu0 0.0
          %4375 = vmatpush1.msra.mxu0 0.0
          %4376 = vmatprep.subr.mxu0 0.0
          %4377 = vmatpush1.msra.mxu0 0.0
          %4378 = vmatprep.subr.mxu0 0.0
          %4379 = vmatpush1.msra.mxu0 0.0
          %4380 = vmatprep.subr.mxu0 0.0
          %4381 = vmatpush1.msra.mxu0 0.0
          %4382 = vmatprep.subr.mxu0 0.0
          %4383 = vmatpush1.msra.mxu0 0.0
          %4384 = vmatprep.subr.mxu0 0.0
          %4385 = vmatpush1.msra.mxu0 0.0
          %4386 = vmatprep.subr.mxu0 0.0
          %4387 = vmatpush1.msra.mxu0 0.0
          %4388 = vmatprep.subr.mxu0 0.0
          %4389 = vmatpush1.msra.mxu0 0.0
          %4390 = vmatprep.subr.mxu0 0.0
          %4391 = vmatpush1.msra.mxu0 0.0
          %4392 = vmatprep.subr.mxu0 0.0
          %4393 = vmatpush1.msra.mxu0 0.0
          %4394 = vmatprep.subr.mxu0 0.0
          %4395 = vmatpush1.msra.mxu0 0.0
          %4396 = vmatprep.subr.mxu0 0.0
          %4397 = vmatpush1.msra.mxu0 0.0
          %4398 = vmatprep.subr.mxu0 0.0
          %v4399 = vand.u32 %v4287, 4294901760
          %v4400 = vsub.f32 %v4287, %v4399
          %v4401 = vand.u32 %v4400, 4294901760
          %v4402 = vsub.f32 %v4400, %v4401
          %v4403 = vand.u32 %v4402, 4294901760
          %4404 = vmatpush1.msra.mxu0 %v4403
          %4405 = vmatprep.subr.mxu0 0.0
          %4406 = vmatpush2.msra.mxu0 0.0
          %4407 = vmatprep.subr.mxu0 0.0
          %4408 = vmatpush2.msra.mxu0 0.0
          %4409 = vmatprep.subr.mxu0 0.0
          %4410 = vmatpush2.msra.mxu0 0.0
          %4411 = vmatprep.subr.mxu0 0.0
          %4412 = vmatpush2.msra.mxu0 0.0
          %4413 = vmatprep.subr.mxu0 0.0
          %4414 = vmatpush2.msra.mxu0 0.0
          %4415 = vmatprep.subr.mxu0 0.0
          %4416 = vmatpush2.msra.mxu0 0.0
          %4417 = vmatprep.subr.mxu0 0.0
          %4418 = vmatpush2.msra.mxu0 0.0
          %4419 = vmatprep.subr.mxu0 0.0
          %4420 = vmatpush2.msra.mxu0 0.0
          %4421 = vmatprep.subr.mxu0 0.0
          %4422 = vmatpush2.msra.mxu0 0.0
          %4423 = vmatprep.subr.mxu0 0.0
          %4424 = vmatpush2.msra.mxu0 0.0
          %4425 = vmatprep.subr.mxu0 0.0
          %4426 = vmatpush2.msra.mxu0 0.0
          %4427 = vmatprep.subr.mxu0 0.0
          %4428 = vmatpush2.msra.mxu0 0.0
          %4429 = vmatprep.subr.mxu0 0.0
          %4430 = vmatpush2.msra.mxu0 0.0
          %4431 = vmatprep.subr.mxu0 0.0
          %4432 = vmatpush2.msra.mxu0 0.0
          %4433 = vmatprep.subr.mxu0 0.0
          %4434 = vmatpush2.msra.mxu0 0.0
          %4435 = vmatprep.subr.mxu0 0.0
          %4436 = vmatpush2.msra.mxu0 0.0
          %4437 = vmatprep.mubr.f32.mxu0 0.0
          %v4438 = vand.u32 %v4290, 4294901760
          %4439 = vmatmul.mubr.f32.gmra.mxu0 %v4438
          %v4440 = vpop.f32.mrf.mxu0
          %v4441 = vadd.f32 %v4365, %v4440
          %v4442 = vpop.f32.mrf.mxu0
          %4443 = vdwg.mxu0
          %4444 = vmatprep.subr.mxu0 0.0
          %4445 = vmatpush1.msra.mxu0 0.0
          %4446 = vmatprep.subr.mxu0 0.0
          %4447 = vmatpush1.msra.mxu0 0.0
          %4448 = vmatprep.subr.mxu0 0.0
          %4449 = vmatpush1.msra.mxu0 0.0
          %4450 = vmatprep.subr.mxu0 0.0
          %4451 = vmatpush1.msra.mxu0 0.0
          %4452 = vmatprep.subr.mxu0 0.0
          %4453 = vmatpush1.msra.mxu0 0.0
          %4454 = vmatprep.subr.mxu0 0.0
          %4455 = vmatpush1.msra.mxu0 0.0
          %4456 = vmatprep.subr.mxu0 0.0
          %4457 = vmatpush1.msra.mxu0 0.0
          %4458 = vmatprep.subr.mxu0 0.0
          %4459 = vmatpush1.msra.mxu0 0.0
          %4460 = vmatprep.subr.mxu0 0.0
          %4461 = vmatpush1.msra.mxu0 0.0
          %4462 = vmatprep.subr.mxu0 0.0
          %4463 = vmatpush1.msra.mxu0 0.0
          %4464 = vmatprep.subr.mxu0 0.0
          %4465 = vmatpush1.msra.mxu0 0.0
          %4466 = vmatprep.subr.mxu0 0.0
          %4467 = vmatpush1.msra.mxu0 0.0
          %4468 = vmatprep.subr.mxu0 0.0
          %4469 = vmatpush1.msra.mxu0 0.0
          %4470 = vmatprep.subr.mxu0 0.0
          %4471 = vmatpush1.msra.mxu0 0.0
          %4472 = vmatprep.subr.mxu0 0.0
          %4473 = vmatpush1.msra.mxu0 0.0
          %4474 = vmatprep.subr.mxu0 0.0
          %v4475 = vand.u32 %v4287, 4294901760
          %v4476 = vsub.f32 %v4287, %v4475
          %4477 = vmatpush1.msra.mxu0 %v4476
          %4478 = vmatprep.subr.mxu0 0.0
          %4479 = vmatpush2.msra.mxu0 0.0
          %4480 = vmatprep.subr.mxu0 0.0
          %4481 = vmatpush2.msra.mxu0 0.0
          %4482 = vmatprep.subr.mxu0 0.0
          %4483 = vmatpush2.msra.mxu0 0.0
          %4484 = vmatprep.subr.mxu0 0.0
          %4485 = vmatpush2.msra.mxu0 0.0
          %4486 = vmatprep.subr.mxu0 0.0
          %4487 = vmatpush2.msra.mxu0 0.0
          %4488 = vmatprep.subr.mxu0 0.0
          %4489 = vmatpush2.msra.mxu0 0.0
          %4490 = vmatprep.subr.mxu0 0.0
          %4491 = vmatpush2.msra.mxu0 0.0
          %4492 = vmatprep.subr.mxu0 0.0
          %4493 = vmatpush2.msra.mxu0 0.0
          %4494 = vmatprep.subr.mxu0 0.0
          %4495 = vmatpush2.msra.mxu0 0.0
          %4496 = vmatprep.subr.mxu0 0.0
          %4497 = vmatpush2.msra.mxu0 0.0
          %4498 = vmatprep.subr.mxu0 0.0
          %4499 = vmatpush2.msra.mxu0 0.0
          %4500 = vmatprep.subr.mxu0 0.0
          %4501 = vmatpush2.msra.mxu0 0.0
          %4502 = vmatprep.subr.mxu0 0.0
          %4503 = vmatpush2.msra.mxu0 0.0
          %4504 = vmatprep.subr.mxu0 0.0
          %4505 = vmatpush2.msra.mxu0 0.0
          %4506 = vmatprep.subr.mxu0 0.0
          %4507 = vmatpush2.msra.mxu0 0.0
          %4508 = vmatprep.subr.mxu0 0.0
          %4509 = vmatpush2.msra.mxu0 0.0
          %4510 = vmatprep.mubr.f32.mxu0 0.0
          %v4511 = vand.u32 %v4290, 4294901760
          %v4512 = vsub.f32 %v4290, %v4511
          %4513 = vmatmul.mubr.f32.gmra.mxu0 %v4512
          %v4514 = vpop.f32.mrf.mxu0
          %v4515 = vadd.f32 %v4441, %v4514
          %v4516 = vpop.f32.mrf.mxu0
          %4517 = vdwg.mxu0
          %4518 = vmatprep.subr.mxu0 0.0
          %4519 = vmatpush1.msra.mxu0 0.0
          %4520 = vmatprep.subr.mxu0 0.0
          %4521 = vmatpush1.msra.mxu0 0.0
          %4522 = vmatprep.subr.mxu0 0.0
          %4523 = vmatpush1.msra.mxu0 0.0
          %4524 = vmatprep.subr.mxu0 0.0
          %4525 = vmatpush1.msra.mxu0 0.0
          %4526 = vmatprep.subr.mxu0 0.0
          %4527 = vmatpush1.msra.mxu0 0.0
          %4528 = vmatprep.subr.mxu0 0.0
          %4529 = vmatpush1.msra.mxu0 0.0
          %4530 = vmatprep.subr.mxu0 0.0
          %4531 = vmatpush1.msra.mxu0 0.0
          %4532 = vmatprep.subr.mxu0 0.0
          %4533 = vmatpush1.msra.mxu0 0.0
          %4534 = vmatprep.subr.mxu0 0.0
          %4535 = vmatpush1.msra.mxu0 0.0
          %4536 = vmatprep.subr.mxu0 0.0
          %4537 = vmatpush1.msra.mxu0 0.0
          %4538 = vmatprep.subr.mxu0 0.0
          %4539 = vmatpush1.msra.mxu0 0.0
          %4540 = vmatprep.subr.mxu0 0.0
          %4541 = vmatpush1.msra.mxu0 0.0
          %4542 = vmatprep.subr.mxu0 0.0
          %4543 = vmatpush1.msra.mxu0 0.0
          %4544 = vmatprep.subr.mxu0 0.0
          %4545 = vmatpush1.msra.mxu0 0.0
          %4546 = vmatprep.subr.mxu0 0.0
          %4547 = vmatpush1.msra.mxu0 0.0
          %4548 = vmatprep.subr.mxu0 0.0
          %v4549 = vand.u32 %v4287, 4294901760
          %4550 = vmatpush1.msra.mxu0 %v4549
          %4551 = vmatprep.subr.mxu0 0.0
          %4552 = vmatpush2.msra.mxu0 0.0
          %4553 = vmatprep.subr.mxu0 0.0
          %4554 = vmatpush2.msra.mxu0 0.0
          %4555 = vmatprep.subr.mxu0 0.0
          %4556 = vmatpush2.msra.mxu0 0.0
          %4557 = vmatprep.subr.mxu0 0.0
          %4558 = vmatpush2.msra.mxu0 0.0
          %4559 = vmatprep.subr.mxu0 0.0
          %4560 = vmatpush2.msra.mxu0 0.0
          %4561 = vmatprep.subr.mxu0 0.0
          %4562 = vmatpush2.msra.mxu0 0.0
          %4563 = vmatprep.subr.mxu0 0.0
          %4564 = vmatpush2.msra.mxu0 0.0
          %4565 = vmatprep.subr.mxu0 0.0
          %4566 = vmatpush2.msra.mxu0 0.0
          %4567 = vmatprep.subr.mxu0 0.0
          %4568 = vmatpush2.msra.mxu0 0.0
          %4569 = vmatprep.subr.mxu0 0.0
          %4570 = vmatpush2.msra.mxu0 0.0
          %4571 = vmatprep.subr.mxu0 0.0
          %4572 = vmatpush2.msra.mxu0 0.0
          %4573 = vmatprep.subr.mxu0 0.0
          %4574 = vmatpush2.msra.mxu0 0.0
          %4575 = vmatprep.subr.mxu0 0.0
          %4576 = vmatpush2.msra.mxu0 0.0
          %4577 = vmatprep.subr.mxu0 0.0
          %4578 = vmatpush2.msra.mxu0 0.0
          %4579 = vmatprep.subr.mxu0 0.0
          %4580 = vmatpush2.msra.mxu0 0.0
          %4581 = vmatprep.subr.mxu0 0.0
          %4582 = vmatpush2.msra.mxu0 0.0
          %4583 = vmatprep.mubr.f32.mxu0 0.0
          %v4584 = vand.u32 %v4290, 4294901760
          %v4585 = vsub.f32 %v4290, %v4584
          %v4586 = vand.u32 %v4585, 4294901760
          %4587 = vmatmul.mubr.f32.gmra.mxu0 %v4586
          %v4588 = vpop.f32.mrf.mxu0
          %v4589 = vadd.f32 %v4515, %v4588
          %v4590 = vpop.f32.mrf.mxu0
          %4591 = vdwg.mxu0
          %4592 = vmatprep.subr.mxu0 0.0
          %4593 = vmatpush1.msra.mxu0 0.0
          %4594 = vmatprep.subr.mxu0 0.0
          %4595 = vmatpush1.msra.mxu0 0.0
          %4596 = vmatprep.subr.mxu0 0.0
          %4597 = vmatpush1.msra.mxu0 0.0
          %4598 = vmatprep.subr.mxu0 0.0
          %4599 = vmatpush1.msra.mxu0 0.0
          %4600 = vmatprep.subr.mxu0 0.0
          %4601 = vmatpush1.msra.mxu0 0.0
          %4602 = vmatprep.subr.mxu0 0.0
          %4603 = vmatpush1.msra.mxu0 0.0
          %4604 = vmatprep.subr.mxu0 0.0
          %4605 = vmatpush1.msra.mxu0 0.0
          %4606 = vmatprep.subr.mxu0 0.0
          %4607 = vmatpush1.msra.mxu0 0.0
          %4608 = vmatprep.subr.mxu0 0.0
          %4609 = vmatpush1.msra.mxu0 0.0
          %4610 = vmatprep.subr.mxu0 0.0
          %4611 = vmatpush1.msra.mxu0 0.0
          %4612 = vmatprep.subr.mxu0 0.0
          %4613 = vmatpush1.msra.mxu0 0.0
          %4614 = vmatprep.subr.mxu0 0.0
          %4615 = vmatpush1.msra.mxu0 0.0
          %4616 = vmatprep.subr.mxu0 0.0
          %4617 = vmatpush1.msra.mxu0 0.0
          %4618 = vmatprep.subr.mxu0 0.0
          %4619 = vmatpush1.msra.mxu0 0.0
          %4620 = vmatprep.subr.mxu0 0.0
          %4621 = vmatpush1.msra.mxu0 0.0
          %4622 = vmatprep.subr.mxu0 0.0
          %v4623 = vand.u32 %v4287, 4294901760
          %v4624 = vsub.f32 %v4287, %v4623
          %v4625 = vand.u32 %v4624, 4294901760
          %4626 = vmatpush1.msra.mxu0 %v4625
          %4627 = vmatprep.subr.mxu0 0.0
          %4628 = vmatpush2.msra.mxu0 0.0
          %4629 = vmatprep.subr.mxu0 0.0
          %4630 = vmatpush2.msra.mxu0 0.0
          %4631 = vmatprep.subr.mxu0 0.0
          %4632 = vmatpush2.msra.mxu0 0.0
          %4633 = vmatprep.subr.mxu0 0.0
          %4634 = vmatpush2.msra.mxu0 0.0
          %4635 = vmatprep.subr.mxu0 0.0
          %4636 = vmatpush2.msra.mxu0 0.0
          %4637 = vmatprep.subr.mxu0 0.0
          %4638 = vmatpush2.msra.mxu0 0.0
          %4639 = vmatprep.subr.mxu0 0.0
          %4640 = vmatpush2.msra.mxu0 0.0
          %4641 = vmatprep.subr.mxu0 0.0
          %4642 = vmatpush2.msra.mxu0 0.0
          %4643 = vmatprep.subr.mxu0 0.0
          %4644 = vmatpush2.msra.mxu0 0.0
          %4645 = vmatprep.subr.mxu0 0.0
          %4646 = vmatpush2.msra.mxu0 0.0
          %4647 = vmatprep.subr.mxu0 0.0
          %4648 = vmatpush2.msra.mxu0 0.0
          %4649 = vmatprep.subr.mxu0 0.0
          %4650 = vmatpush2.msra.mxu0 0.0
          %4651 = vmatprep.subr.mxu0 0.0
          %4652 = vmatpush2.msra.mxu0 0.0
          %4653 = vmatprep.subr.mxu0 0.0
          %4654 = vmatpush2.msra.mxu0 0.0
          %4655 = vmatprep.subr.mxu0 0.0
          %4656 = vmatpush2.msra.mxu0 0.0
          %4657 = vmatprep.subr.mxu0 0.0
          %4658 = vmatpush2.msra.mxu0 0.0
          %4659 = vmatprep.mubr.f32.mxu0 0.0
          %v4660 = vand.u32 %v4290, 4294901760
          %4661 = vmatmul.mubr.f32.gmra.mxu0 %v4660
          %v4662 = vpop.f32.mrf.mxu0
          %v4663 = vadd.f32 %v4589, %v4662
          %v4664 = vpop.f32.mrf.mxu0
          %4665 = vdwg.mxu0
          %4666 = vmatprep.subr.mxu0 0.0
          %4667 = vmatpush1.msra.mxu0 0.0
          %4668 = vmatprep.subr.mxu0 0.0
          %4669 = vmatpush1.msra.mxu0 0.0
          %4670 = vmatprep.subr.mxu0 0.0
          %4671 = vmatpush1.msra.mxu0 0.0
          %4672 = vmatprep.subr.mxu0 0.0
          %4673 = vmatpush1.msra.mxu0 0.0
          %4674 = vmatprep.subr.mxu0 0.0
          %4675 = vmatpush1.msra.mxu0 0.0
          %4676 = vmatprep.subr.mxu0 0.0
          %4677 = vmatpush1.msra.mxu0 0.0
          %4678 = vmatprep.subr.mxu0 0.0
          %4679 = vmatpush1.msra.mxu0 0.0
          %4680 = vmatprep.subr.mxu0 0.0
          %4681 = vmatpush1.msra.mxu0 0.0
          %4682 = vmatprep.subr.mxu0 0.0
          %4683 = vmatpush1.msra.mxu0 0.0
          %4684 = vmatprep.subr.mxu0 0.0
          %4685 = vmatpush1.msra.mxu0 0.0
          %4686 = vmatprep.subr.mxu0 0.0
          %4687 = vmatpush1.msra.mxu0 0.0
          %4688 = vmatprep.subr.mxu0 0.0
          %4689 = vmatpush1.msra.mxu0 0.0
          %4690 = vmatprep.subr.mxu0 0.0
          %4691 = vmatpush1.msra.mxu0 0.0
          %4692 = vmatprep.subr.mxu0 0.0
          %4693 = vmatpush1.msra.mxu0 0.0
          %4694 = vmatprep.subr.mxu0 0.0
          %4695 = vmatpush1.msra.mxu0 0.0
          %4696 = vmatprep.subr.mxu0 0.0
          %v4697 = vand.u32 %v4287, 4294901760
          %4698 = vmatpush1.msra.mxu0 %v4697
          %4699 = vmatprep.subr.mxu0 0.0
          %4700 = vmatpush2.msra.mxu0 0.0
          %4701 = vmatprep.subr.mxu0 0.0
          %4702 = vmatpush2.msra.mxu0 0.0
          %4703 = vmatprep.subr.mxu0 0.0
          %4704 = vmatpush2.msra.mxu0 0.0
          %4705 = vmatprep.subr.mxu0 0.0
          %4706 = vmatpush2.msra.mxu0 0.0
          %4707 = vmatprep.subr.mxu0 0.0
          %4708 = vmatpush2.msra.mxu0 0.0
          %4709 = vmatprep.subr.mxu0 0.0
          %4710 = vmatpush2.msra.mxu0 0.0
          %4711 = vmatprep.subr.mxu0 0.0
          %4712 = vmatpush2.msra.mxu0 0.0
          %4713 = vmatprep.subr.mxu0 0.0
          %4714 = vmatpush2.msra.mxu0 0.0
          %4715 = vmatprep.subr.mxu0 0.0
          %4716 = vmatpush2.msra.mxu0 0.0
          %4717 = vmatprep.subr.mxu0 0.0
          %4718 = vmatpush2.msra.mxu0 0.0
          %4719 = vmatprep.subr.mxu0 0.0
          %4720 = vmatpush2.msra.mxu0 0.0
          %4721 = vmatprep.subr.mxu0 0.0
          %4722 = vmatpush2.msra.mxu0 0.0
          %4723 = vmatprep.subr.mxu0 0.0
          %4724 = vmatpush2.msra.mxu0 0.0
          %4725 = vmatprep.subr.mxu0 0.0
          %4726 = vmatpush2.msra.mxu0 0.0
          %4727 = vmatprep.subr.mxu0 0.0
          %4728 = vmatpush2.msra.mxu0 0.0
          %4729 = vmatprep.subr.mxu0 0.0
          %4730 = vmatpush2.msra.mxu0 0.0
          %4731 = vmatprep.mubr.f32.mxu0 0.0
          %v4732 = vand.u32 %v4290, 4294901760
          %4733 = vmatmul.mubr.f32.gmra.mxu0 %v4732
          %v4734 = vpop.f32.mrf.mxu0
          %v4735 = vadd.f32 %v4663, %v4734
          %v4736 = vpop.f32.mrf.mxu0
          %4737 = vdwg.mxu0
          %v4738 = vadd.f32 %v4258, %v4735
          %v4739 = vadd.f32 %v4738, %v358
          %v4740 = vmul.f32 %v4268, %v4739
          %v4741 = vmul.f32 %v4287, %v358
          %v4742 = vsub.f32 %v4740, %v4741
          %v4743 = vld [vmem:[#allocation3] sm:$0xff]
          %v4744 = vlaneseq
          %v4745 = vshrl.u32 %v4744, 7
          %v4746 = vsub.s32 1, %v4745
          %v4747 = vrot.slane %v4261, %v4746
          %v4748 = vmul.f32 %v4747, %v4742
          %v4749 = vadd.f32 %v4743, %v4748
          %4750 = vst [vmem:[#allocation3] sm:$0xff] %v4749
          %v4751 = vld [vmem:[#allocation2] sm:$0xff]
          %v4752 = vrot.slane %v4751, 4
          %v4753 = vmax.f32 %v4751, %v4752
          %v4754 = vrot.slane %v4753, 2
          %v4755 = vmax.f32 %v4753, %v4754
          %v4756 = vrot.slane %v4755, 1
          %v4757 = vmax.f32 %v4755, %v4756
          %v4758 = vsub.f32 %v4751, %v4757
          %v4759 = vmul.f32 %v4758, 1.442695
          %v4760 = vpow.pop %v4759
          %v4762 = vsel %vm4288, %v353, 0
          %4764 = vmatprep.subr.mxu0 0.0
          %4765 = vmatpush1.msra.mxu0 0.0
          %4766 = vmatprep.subr.mxu0 0.0
          %4767 = vmatpush1.msra.mxu0 0.0
          %4768 = vmatprep.subr.mxu0 0.0
          %4769 = vmatpush1.msra.mxu0 0.0
          %4770 = vmatprep.subr.mxu0 0.0
          %4771 = vmatpush1.msra.mxu0 0.0
          %4772 = vmatprep.subr.mxu0 0.0
          %4773 = vmatpush1.msra.mxu0 0.0
          %4774 = vmatprep.subr.mxu0 0.0
          %4775 = vmatpush1.msra.mxu0 0.0
          %4776 = vmatprep.subr.mxu0 0.0
          %4777 = vmatpush1.msra.mxu0 0.0
          %4778 = vmatprep.subr.mxu0 0.0
          %4779 = vmatpush1.msra.mxu0 0.0
          %4780 = vmatprep.subr.mxu0 0.0
          %4781 = vmatpush1.msra.mxu0 0.0
          %4782 = vmatprep.subr.mxu0 0.0
          %4783 = vmatpush1.msra.mxu0 0.0
          %4784 = vmatprep.subr.mxu0 0.0
          %4785 = vmatpush1.msra.mxu0 0.0
          %4786 = vmatprep.subr.mxu0 0.0
          %4787 = vmatpush1.msra.mxu0 0.0
          %4788 = vmatprep.subr.mxu0 0.0
          %4789 = vmatpush1.msra.mxu0 0.0
          %4790 = vmatprep.subr.mxu0 0.0
          %4791 = vmatpush1.msra.mxu0 0.0
          %4792 = vmatprep.subr.mxu0 0.0
          %4793 = vmatpush1.msra.mxu0 0.0
          %4794 = vmatprep.subr.mxu0 0.0
          %v4795 = vand.u32 %v4760, 4294901760
          %4796 = vmatpush1.msra.mxu0 %v4795
          %4797 = vmatprep.subr.mxu0 0.0
          %4798 = vmatpush2.msra.mxu0 0.0
          %4799 = vmatprep.subr.mxu0 0.0
          %4800 = vmatpush2.msra.mxu0 0.0
          %4801 = vmatprep.subr.mxu0 0.0
          %4802 = vmatpush2.msra.mxu0 0.0
          %4803 = vmatprep.subr.mxu0 0.0
          %4804 = vmatpush2.msra.mxu0 0.0
          %4805 = vmatprep.subr.mxu0 0.0
          %4806 = vmatpush2.msra.mxu0 0.0
          %4807 = vmatprep.subr.mxu0 0.0
          %4808 = vmatpush2.msra.mxu0 0.0
          %4809 = vmatprep.subr.mxu0 0.0
          %4810 = vmatpush2.msra.mxu0 0.0
          %4811 = vmatprep.subr.mxu0 0.0
          %4812 = vmatpush2.msra.mxu0 0.0
          %4813 = vmatprep.subr.mxu0 0.0
          %4814 = vmatpush2.msra.mxu0 0.0
          %4815 = vmatprep.subr.mxu0 0.0
          %4816 = vmatpush2.msra.mxu0 0.0
          %4817 = vmatprep.subr.mxu0 0.0
          %4818 = vmatpush2.msra.mxu0 0.0
          %4819 = vmatprep.subr.mxu0 0.0
          %4820 = vmatpush2.msra.mxu0 0.0
          %4821 = vmatprep.subr.mxu0 0.0
          %4822 = vmatpush2.msra.mxu0 0.0
          %4823 = vmatprep.subr.mxu0 0.0
          %4824 = vmatpush2.msra.mxu0 0.0
          %4825 = vmatprep.subr.mxu0 0.0
          %4826 = vmatpush2.msra.mxu0 0.0
          %4827 = vmatprep.subr.mxu0 0.0
          %4828 = vmatpush2.msra.mxu0 0.0
          %4829 = vmatprep.mubr.f32.mxu0 0.0
          %v4830 = vand.u32 %v4762, 4294901760
          %v4831 = vsub.f32 %v4762, %v4830
          %v4832 = vand.u32 %v4831, 4294901760
          %v4833 = vsub.f32 %v4831, %v4832
          %v4834 = vand.u32 %v4833, 4294901760
          %4835 = vmatmul.mubr.f32.gmra.mxu0 %v4834
          %v4836 = vpop.f32.mrf.mxu0
          %v4837 = vadd.f32 0.0, %v4836
          %v4838 = vpop.f32.mrf.mxu0
          %4839 = vdwg.mxu0
          %4840 = vmatprep.subr.mxu0 0.0
          %4841 = vmatpush1.msra.mxu0 0.0
          %4842 = vmatprep.subr.mxu0 0.0
          %4843 = vmatpush1.msra.mxu0 0.0
          %4844 = vmatprep.subr.mxu0 0.0
          %4845 = vmatpush1.msra.mxu0 0.0
          %4846 = vmatprep.subr.mxu0 0.0
          %4847 = vmatpush1.msra.mxu0 0.0
          %4848 = vmatprep.subr.mxu0 0.0
          %4849 = vmatpush1.msra.mxu0 0.0
          %4850 = vmatprep.subr.mxu0 0.0
          %4851 = vmatpush1.msra.mxu0 0.0
          %4852 = vmatprep.subr.mxu0 0.0
          %4853 = vmatpush1.msra.mxu0 0.0
          %4854 = vmatprep.subr.mxu0 0.0
          %4855 = vmatpush1.msra.mxu0 0.0
          %4856 = vmatprep.subr.mxu0 0.0
          %4857 = vmatpush1.msra.mxu0 0.0
          %4858 = vmatprep.subr.mxu0 0.0
          %4859 = vmatpush1.msra.mxu0 0.0
          %4860 = vmatprep.subr.mxu0 0.0
          %4861 = vmatpush1.msra.mxu0 0.0
          %4862 = vmatprep.subr.mxu0 0.0
          %4863 = vmatpush1.msra.mxu0 0.0
          %4864 = vmatprep.subr.mxu0 0.0
          %4865 = vmatpush1.msra.mxu0 0.0
          %4866 = vmatprep.subr.mxu0 0.0
          %4867 = vmatpush1.msra.mxu0 0.0
          %4868 = vmatprep.subr.mxu0 0.0
          %4869 = vmatpush1.msra.mxu0 0.0
          %4870 = vmatprep.subr.mxu0 0.0
          %v4871 = vand.u32 %v4760, 4294901760
          %v4872 = vsub.f32 %v4760, %v4871
          %v4873 = vand.u32 %v4872, 4294901760
          %v4874 = vsub.f32 %v4872, %v4873
          %v4875 = vand.u32 %v4874, 4294901760
          %4876 = vmatpush1.msra.mxu0 %v4875
          %4877 = vmatprep.subr.mxu0 0.0
          %4878 = vmatpush2.msra.mxu0 0.0
          %4879 = vmatprep.subr.mxu0 0.0
          %4880 = vmatpush2.msra.mxu0 0.0
          %4881 = vmatprep.subr.mxu0 0.0
          %4882 = vmatpush2.msra.mxu0 0.0
          %4883 = vmatprep.subr.mxu0 0.0
          %4884 = vmatpush2.msra.mxu0 0.0
          %4885 = vmatprep.subr.mxu0 0.0
          %4886 = vmatpush2.msra.mxu0 0.0
          %4887 = vmatprep.subr.mxu0 0.0
          %4888 = vmatpush2.msra.mxu0 0.0
          %4889 = vmatprep.subr.mxu0 0.0
          %4890 = vmatpush2.msra.mxu0 0.0
          %4891 = vmatprep.subr.mxu0 0.0
          %4892 = vmatpush2.msra.mxu0 0.0
          %4893 = vmatprep.subr.mxu0 0.0
          %4894 = vmatpush2.msra.mxu0 0.0
          %4895 = vmatprep.subr.mxu0 0.0
          %4896 = vmatpush2.msra.mxu0 0.0
          %4897 = vmatprep.subr.mxu0 0.0
          %4898 = vmatpush2.msra.mxu0 0.0
          %4899 = vmatprep.subr.mxu0 0.0
          %4900 = vmatpush2.msra.mxu0 0.0
          %4901 = vmatprep.subr.mxu0 0.0
          %4902 = vmatpush2.msra.mxu0 0.0
          %4903 = vmatprep.subr.mxu0 0.0
          %4904 = vmatpush2.msra.mxu0 0.0
          %4905 = vmatprep.subr.mxu0 0.0
          %4906 = vmatpush2.msra.mxu0 0.0
          %4907 = vmatprep.subr.mxu0 0.0
          %4908 = vmatpush2.msra.mxu0 0.0
          %4909 = vmatprep.mubr.f32.mxu0 0.0
          %v4910 = vand.u32 %v4762, 4294901760
          %4911 = vmatmul.mubr.f32.gmra.mxu0 %v4910
          %v4912 = vpop.f32.mrf.mxu0
          %v4913 = vadd.f32 %v4837, %v4912
          %v4914 = vpop.f32.mrf.mxu0
          %4915 = vdwg.mxu0
          %4916 = vmatprep.subr.mxu0 0.0
          %4917 = vmatpush1.msra.mxu0 0.0
          %4918 = vmatprep.subr.mxu0 0.0
          %4919 = vmatpush1.msra.mxu0 0.0
          %4920 = vmatprep.subr.mxu0 0.0
          %4921 = vmatpush1.msra.mxu0 0.0
          %4922 = vmatprep.subr.mxu0 0.0
          %4923 = vmatpush1.msra.mxu0 0.0
          %4924 = vmatprep.subr.mxu0 0.0
          %4925 = vmatpush1.msra.mxu0 0.0
          %4926 = vmatprep.subr.mxu0 0.0
          %4927 = vmatpush1.msra.mxu0 0.0
          %4928 = vmatprep.subr.mxu0 0.0
          %4929 = vmatpush1.msra.mxu0 0.0
          %4930 = vmatprep.subr.mxu0 0.0
          %4931 = vmatpush1.msra.mxu0 0.0
          %4932 = vmatprep.subr.mxu0 0.0
          %4933 = vmatpush1.msra.mxu0 0.0
          %4934 = vmatprep.subr.mxu0 0.0
          %4935 = vmatpush1.msra.mxu0 0.0
          %4936 = vmatprep.subr.mxu0 0.0
          %4937 = vmatpush1.msra.mxu0 0.0
          %4938 = vmatprep.subr.mxu0 0.0
          %4939 = vmatpush1.msra.mxu0 0.0
          %4940 = vmatprep.subr.mxu0 0.0
          %4941 = vmatpush1.msra.mxu0 0.0
          %4942 = vmatprep.subr.mxu0 0.0
          %4943 = vmatpush1.msra.mxu0 0.0
          %4944 = vmatprep.subr.mxu0 0.0
          %4945 = vmatpush1.msra.mxu0 0.0
          %4946 = vmatprep.subr.mxu0 0.0
          %v4947 = vand.u32 %v4760, 4294901760
          %v4948 = vsub.f32 %v4760, %v4947
          %4949 = vmatpush1.msra.mxu0 %v4948
          %4950 = vmatprep.subr.mxu0 0.0
          %4951 = vmatpush2.msra.mxu0 0.0
          %4952 = vmatprep.subr.mxu0 0.0
          %4953 = vmatpush2.msra.mxu0 0.0
          %4954 = vmatprep.subr.mxu0 0.0
          %4955 = vmatpush2.msra.mxu0 0.0
          %4956 = vmatprep.subr.mxu0 0.0
          %4957 = vmatpush2.msra.mxu0 0.0
          %4958 = vmatprep.subr.mxu0 0.0
          %4959 = vmatpush2.msra.mxu0 0.0
          %4960 = vmatprep.subr.mxu0 0.0
          %4961 = vmatpush2.msra.mxu0 0.0
          %4962 = vmatprep.subr.mxu0 0.0
          %4963 = vmatpush2.msra.mxu0 0.0
          %4964 = vmatprep.subr.mxu0 0.0
          %4965 = vmatpush2.msra.mxu0 0.0
          %4966 = vmatprep.subr.mxu0 0.0
          %4967 = vmatpush2.msra.mxu0 0.0
          %4968 = vmatprep.subr.mxu0 0.0
          %4969 = vmatpush2.msra.mxu0 0.0
          %4970 = vmatprep.subr.mxu0 0.0
          %4971 = vmatpush2.msra.mxu0 0.0
          %4972 = vmatprep.subr.mxu0 0.0
          %4973 = vmatpush2.msra.mxu0 0.0
          %4974 = vmatprep.subr.mxu0 0.0
          %4975 = vmatpush2.msra.mxu0 0.0
          %4976 = vmatprep.subr.mxu0 0.0
          %4977 = vmatpush2.msra.mxu0 0.0
          %4978 = vmatprep.subr.mxu0 0.0
          %4979 = vmatpush2.msra.mxu0 0.0
          %4980 = vmatprep.subr.mxu0 0.0
          %4981 = vmatpush2.msra.mxu0 0.0
          %4982 = vmatprep.mubr.f32.mxu0 0.0
          %v4983 = vand.u32 %v4762, 4294901760
          %v4984 = vsub.f32 %v4762, %v4983
          %4985 = vmatmul.mubr.f32.gmra.mxu0 %v4984
          %v4986 = vpop.f32.mrf.mxu0
          %v4987 = vadd.f32 %v4913, %v4986
          %v4988 = vpop.f32.mrf.mxu0
          %4989 = vdwg.mxu0
          %4990 = vmatprep.subr.mxu0 0.0
          %4991 = vmatpush1.msra.mxu0 0.0
          %4992 = vmatprep.subr.mxu0 0.0
          %4993 = vmatpush1.msra.mxu0 0.0
          %4994 = vmatprep.subr.mxu0 0.0
          %4995 = vmatpush1.msra.mxu0 0.0
          %4996 = vmatprep.subr.mxu0 0.0
          %4997 = vmatpush1.msra.mxu0 0.0
          %4998 = vmatprep.subr.mxu0 0.0
          %4999 = vmatpush1.msra.mxu0 0.0
          %5000 = vmatprep.subr.mxu0 0.0
          %5001 = vmatpush1.msra.mxu0 0.0
          %5002 = vmatprep.subr.mxu0 0.0
          %5003 = vmatpush1.msra.mxu0 0.0
          %5004 = vmatprep.subr.mxu0 0.0
          %5005 = vmatpush1.msra.mxu0 0.0
          %5006 = vmatprep.subr.mxu0 0.0
          %5007 = vmatpush1.msra.mxu0 0.0
          %5008 = vmatprep.subr.mxu0 0.0
          %5009 = vmatpush1.msra.mxu0 0.0
          %5010 = vmatprep.subr.mxu0 0.0
          %5011 = vmatpush1.msra.mxu0 0.0
          %5012 = vmatprep.subr.mxu0 0.0
          %5013 = vmatpush1.msra.mxu0 0.0
          %5014 = vmatprep.subr.mxu0 0.0
          %5015 = vmatpush1.msra.mxu0 0.0
          %5016 = vmatprep.subr.mxu0 0.0
          %5017 = vmatpush1.msra.mxu0 0.0
          %5018 = vmatprep.subr.mxu0 0.0
          %5019 = vmatpush1.msra.mxu0 0.0
          %5020 = vmatprep.subr.mxu0 0.0
          %v5021 = vand.u32 %v4760, 4294901760
          %5022 = vmatpush1.msra.mxu0 %v5021
          %5023 = vmatprep.subr.mxu0 0.0
          %5024 = vmatpush2.msra.mxu0 0.0
          %5025 = vmatprep.subr.mxu0 0.0
          %5026 = vmatpush2.msra.mxu0 0.0
          %5027 = vmatprep.subr.mxu0 0.0
          %5028 = vmatpush2.msra.mxu0 0.0
          %5029 = vmatprep.subr.mxu0 0.0
          %5030 = vmatpush2.msra.mxu0 0.0
          %5031 = vmatprep.subr.mxu0 0.0
          %5032 = vmatpush2.msra.mxu0 0.0
          %5033 = vmatprep.subr.mxu0 0.0
          %5034 = vmatpush2.msra.mxu0 0.0
          %5035 = vmatprep.subr.mxu0 0.0
          %5036 = vmatpush2.msra.mxu0 0.0
          %5037 = vmatprep.subr.mxu0 0.0
          %5038 = vmatpush2.msra.mxu0 0.0
          %5039 = vmatprep.subr.mxu0 0.0
          %5040 = vmatpush2.msra.mxu0 0.0
          %5041 = vmatprep.subr.mxu0 0.0
          %5042 = vmatpush2.msra.mxu0 0.0
          %5043 = vmatprep.subr.mxu0 0.0
          %5044 = vmatpush2.msra.mxu0 0.0
          %5045 = vmatprep.subr.mxu0 0.0
          %5046 = vmatpush2.msra.mxu0 0.0
          %5047 = vmatprep.subr.mxu0 0.0
          %5048 = vmatpush2.msra.mxu0 0.0
          %5049 = vmatprep.subr.mxu0 0.0
          %5050 = vmatpush2.msra.mxu0 0.0
          %5051 = vmatprep.subr.mxu0 0.0
          %5052 = vmatpush2.msra.mxu0 0.0
          %5053 = vmatprep.subr.mxu0 0.0
          %5054 = vmatpush2.msra.mxu0 0.0
          %5055 = vmatprep.mubr.f32.mxu0 0.0
          %v5056 = vand.u32 %v4762, 4294901760
          %v5057 = vsub.f32 %v4762, %v5056
          %v5058 = vand.u32 %v5057, 4294901760
          %5059 = vmatmul.mubr.f32.gmra.mxu0 %v5058
          %v5060 = vpop.f32.mrf.mxu0
          %v5061 = vadd.f32 %v4987, %v5060
          %v5062 = vpop.f32.mrf.mxu0
          %5063 = vdwg.mxu0
          %5064 = vmatprep.subr.mxu0 0.0
          %5065 = vmatpush1.msra.mxu0 0.0
          %5066 = vmatprep.subr.mxu0 0.0
          %5067 = vmatpush1.msra.mxu0 0.0
          %5068 = vmatprep.subr.mxu0 0.0
          %5069 = vmatpush1.msra.mxu0 0.0
          %5070 = vmatprep.subr.mxu0 0.0
          %5071 = vmatpush1.msra.mxu0 0.0
          %5072 = vmatprep.subr.mxu0 0.0
          %5073 = vmatpush1.msra.mxu0 0.0
          %5074 = vmatprep.subr.mxu0 0.0
          %5075 = vmatpush1.msra.mxu0 0.0
          %5076 = vmatprep.subr.mxu0 0.0
          %5077 = vmatpush1.msra.mxu0 0.0
          %5078 = vmatprep.subr.mxu0 0.0
          %5079 = vmatpush1.msra.mxu0 0.0
          %5080 = vmatprep.subr.mxu0 0.0
          %5081 = vmatpush1.msra.mxu0 0.0
          %5082 = vmatprep.subr.mxu0 0.0
          %5083 = vmatpush1.msra.mxu0 0.0
          %5084 = vmatprep.subr.mxu0 0.0
          %5085 = vmatpush1.msra.mxu0 0.0
          %5086 = vmatprep.subr.mxu0 0.0
          %5087 = vmatpush1.msra.mxu0 0.0
          %5088 = vmatprep.subr.mxu0 0.0
          %5089 = vmatpush1.msra.mxu0 0.0
          %5090 = vmatprep.subr.mxu0 0.0
          %5091 = vmatpush1.msra.mxu0 0.0
          %5092 = vmatprep.subr.mxu0 0.0
          %5093 = vmatpush1.msra.mxu0 0.0
          %5094 = vmatprep.subr.mxu0 0.0
          %v5095 = vand.u32 %v4760, 4294901760
          %v5096 = vsub.f32 %v4760, %v5095
          %v5097 = vand.u32 %v5096, 4294901760
          %5098 = vmatpush1.msra.mxu0 %v5097
          %5099 = vmatprep.subr.mxu0 0.0
          %5100 = vmatpush2.msra.mxu0 0.0
          %5101 = vmatprep.subr.mxu0 0.0
          %5102 = vmatpush2.msra.mxu0 0.0
          %5103 = vmatprep.subr.mxu0 0.0
          %5104 = vmatpush2.msra.mxu0 0.0
          %5105 = vmatprep.subr.mxu0 0.0
          %5106 = vmatpush2.msra.mxu0 0.0
          %5107 = vmatprep.subr.mxu0 0.0
          %5108 = vmatpush2.msra.mxu0 0.0
          %5109 = vmatprep.subr.mxu0 0.0
          %5110 = vmatpush2.msra.mxu0 0.0
          %5111 = vmatprep.subr.mxu0 0.0
          %5112 = vmatpush2.msra.mxu0 0.0
          %5113 = vmatprep.subr.mxu0 0.0
          %5114 = vmatpush2.msra.mxu0 0.0
          %5115 = vmatprep.subr.mxu0 0.0
          %5116 = vmatpush2.msra.mxu0 0.0
          %5117 = vmatprep.subr.mxu0 0.0
          %5118 = vmatpush2.msra.mxu0 0.0
          %5119 = vmatprep.subr.mxu0 0.0
          %5120 = vmatpush2.msra.mxu0 0.0
          %5121 = vmatprep.subr.mxu0 0.0
          %5122 = vmatpush2.msra.mxu0 0.0
          %5123 = vmatprep.subr.mxu0 0.0
          %5124 = vmatpush2.msra.mxu0 0.0
          %5125 = vmatprep.subr.mxu0 0.0
          %5126 = vmatpush2.msra.mxu0 0.0
          %5127 = vmatprep.subr.mxu0 0.0
          %5128 = vmatpush2.msra.mxu0 0.0
          %5129 = vmatprep.subr.mxu0 0.0
          %5130 = vmatpush2.msra.mxu0 0.0
          %5131 = vmatprep.mubr.f32.mxu0 0.0
          %v5132 = vand.u32 %v4762, 4294901760
          %5133 = vmatmul.mubr.f32.gmra.mxu0 %v5132
          %v5134 = vpop.f32.mrf.mxu0
          %v5135 = vadd.f32 %v5061, %v5134
          %v5136 = vpop.f32.mrf.mxu0
          %5137 = vdwg.mxu0
          %5138 = vmatprep.subr.mxu0 0.0
          %5139 = vmatpush1.msra.mxu0 0.0
          %5140 = vmatprep.subr.mxu0 0.0
          %5141 = vmatpush1.msra.mxu0 0.0
          %5142 = vmatprep.subr.mxu0 0.0
          %5143 = vmatpush1.msra.mxu0 0.0
          %5144 = vmatprep.subr.mxu0 0.0
          %5145 = vmatpush1.msra.mxu0 0.0
          %5146 = vmatprep.subr.mxu0 0.0
          %5147 = vmatpush1.msra.mxu0 0.0
          %5148 = vmatprep.subr.mxu0 0.0
          %5149 = vmatpush1.msra.mxu0 0.0
          %5150 = vmatprep.subr.mxu0 0.0
          %5151 = vmatpush1.msra.mxu0 0.0
          %5152 = vmatprep.subr.mxu0 0.0
          %5153 = vmatpush1.msra.mxu0 0.0
          %5154 = vmatprep.subr.mxu0 0.0
          %5155 = vmatpush1.msra.mxu0 0.0
          %5156 = vmatprep.subr.mxu0 0.0
          %5157 = vmatpush1.msra.mxu0 0.0
          %5158 = vmatprep.subr.mxu0 0.0
          %5159 = vmatpush1.msra.mxu0 0.0
          %5160 = vmatprep.subr.mxu0 0.0
          %5161 = vmatpush1.msra.mxu0 0.0
          %5162 = vmatprep.subr.mxu0 0.0
          %5163 = vmatpush1.msra.mxu0 0.0
          %5164 = vmatprep.subr.mxu0 0.0
          %5165 = vmatpush1.msra.mxu0 0.0
          %5166 = vmatprep.subr.mxu0 0.0
          %5167 = vmatpush1.msra.mxu0 0.0
          %5168 = vmatprep.subr.mxu0 0.0
          %v5169 = vand.u32 %v4760, 4294901760
          %5170 = vmatpush1.msra.mxu0 %v5169
          %5171 = vmatprep.subr.mxu0 0.0
          %5172 = vmatpush2.msra.mxu0 0.0
          %5173 = vmatprep.subr.mxu0 0.0
          %5174 = vmatpush2.msra.mxu0 0.0
          %5175 = vmatprep.subr.mxu0 0.0
          %5176 = vmatpush2.msra.mxu0 0.0
          %5177 = vmatprep.subr.mxu0 0.0
          %5178 = vmatpush2.msra.mxu0 0.0
          %5179 = vmatprep.subr.mxu0 0.0
          %5180 = vmatpush2.msra.mxu0 0.0
          %5181 = vmatprep.subr.mxu0 0.0
          %5182 = vmatpush2.msra.mxu0 0.0
          %5183 = vmatprep.subr.mxu0 0.0
          %5184 = vmatpush2.msra.mxu0 0.0
          %5185 = vmatprep.subr.mxu0 0.0
          %5186 = vmatpush2.msra.mxu0 0.0
          %5187 = vmatprep.subr.mxu0 0.0
          %5188 = vmatpush2.msra.mxu0 0.0
          %5189 = vmatprep.subr.mxu0 0.0
          %5190 = vmatpush2.msra.mxu0 0.0
          %5191 = vmatprep.subr.mxu0 0.0
          %5192 = vmatpush2.msra.mxu0 0.0
          %5193 = vmatprep.subr.mxu0 0.0
          %5194 = vmatpush2.msra.mxu0 0.0
          %5195 = vmatprep.subr.mxu0 0.0
          %5196 = vmatpush2.msra.mxu0 0.0
          %5197 = vmatprep.subr.mxu0 0.0
          %5198 = vmatpush2.msra.mxu0 0.0
          %5199 = vmatprep.subr.mxu0 0.0
          %5200 = vmatpush2.msra.mxu0 0.0
          %5201 = vmatprep.subr.mxu0 0.0
          %5202 = vmatpush2.msra.mxu0 0.0
          %5203 = vmatprep.mubr.f32.mxu0 0.0
          %v5204 = vand.u32 %v4762, 4294901760
          %5205 = vmatmul.mubr.f32.gmra.mxu0 %v5204
          %v5206 = vpop.f32.mrf.mxu0
          %v5207 = vadd.f32 %v5135, %v5206
          %v5208 = vpop.f32.mrf.mxu0
          %5209 = vdwg.mxu0
          %5211 = vset.pattern.permute.xlu0 0
          %5212 = vperm.xlu0 %5211, %v354
          %v5213 = vpop.permute.xlu0 %5212
          %v5215 = vadd.f32 %v4757, %v5213
          %v5216 = vlog2.pop %v5207
          %v5217 = vmul.f32 %v5216, 0.6931472
          %v5218 = vadd.f32 %v5215, %v5217
          %v5219 = vadd.f32 %v5218, %v4258
          %vm5220 = vcmp.gt.f32.partialorder %v4261, 0.5
          %v5221 = vsel %vm5220, 1, 0
          %v5222 = vlaneseq
          %v5223 = vshrl.u32 %v5222, 7
          %v5224 = vsub.s32 1, %v5223
          %v5225 = vrot.slane %v5221, %v5224
          %vm5226 = vcmp.eq.s32.totalorder %v5225, 1
          %v5227 = vsel %vm5226, %v5219, %v4751
          %5228 = vst [vmem:[#allocation2] sm:$0xff] %v5227
        $region96: #{tpu_custom_call.1} parent=47 // pred_fallthru
          _
        %5229 = vst [vmem:[#allocation4] sm:$0xff] %v4268
        %s5230 = sadd.s32 %s362, 5
        %s5231 = scalar_lea.vmem %s308, 40 [#allocation5]
        %v5232 = vld [vmem:[%s5231] sm:$0xff]
        %s5233 = scalar_lea.vmem %s317, 10 [#allocation8]
        %v5234 = vld [vmem:[%s5233] sm:$0x3]
        %v5235 = vcvt.s32.f32 %v5234
        %v5236 = vlaneseq
        %v5237 = vshrl.u32 %v5236, 7
        %v5238 = vsub.s32 0, %v5237
        %v5239 = vrot.slane %v5234, %v5238
        %vm5240 = vcmp.eq.s32.totalorder %v361, %v5239
        %v5241 = vsel %vm5240, 1, 0
        %v5242 = vcvt.s32.f32 %v5241
        %p5243 = scmp.eq.s32.totalorder %s5230, 0
        // Predicated region
        $region97: #{tpu_custom_call.1} parent=47 // pred_check
          %p5244 = pneg %p5243
        $region98: #{tpu_custom_call.1} parent=47 // pred_check_branch
          %5246 = sbr.rel (%p5244) target = $region100
        $region99: #{tpu_custom_call.1} parent=47 // pred_region
          %5248 = vset.pattern.permute.xlu0 0
          %5249 = vperm.xlu0 %5248, %v350
          %v5250 = vpop.permute.xlu0 %5249
          %v5252 = vadd.f32 %v5250, %v5232
          %v5253 = vadd.f32 %v5252, %v358
          %v5254 = vmul.f32 %v5242, %v5253
          %5255 = vst [vmem:[#allocation3] sm:$0xff] %v5254
          %5256 = vst [vmem:[#allocation2] sm:$0xff] %v5252
        $region100: #{tpu_custom_call.1} parent=47 // pred_fallthru
          _
        %p5257 = scmp.gt.s32.totalorder %s5230, 0
        // Predicated region
        $region101: #{tpu_custom_call.1} parent=47 // pred_check
          %p5258 = pneg %p5257
        $region102: #{tpu_custom_call.1} parent=47 // pred_check_branch
          %5260 = sbr.rel (%p5258) target = $region104
        $region103: #{tpu_custom_call.1} parent=47 // pred_region
          %v5261 = vld [vmem:[#allocation4] sm:$0xff]
          %vm5262 = vcmask 64512
          %v5264 = vsel %vm5262, %v352, 0
          %5266 = vmatprep.subr.mxu0 0.0
          %5267 = vmatpush1.msra.mxu0 0.0
          %5268 = vmatprep.subr.mxu0 0.0
          %5269 = vmatpush1.msra.mxu0 0.0
          %5270 = vmatprep.subr.mxu0 0.0
          %5271 = vmatpush1.msra.mxu0 0.0
          %5272 = vmatprep.subr.mxu0 0.0
          %5273 = vmatpush1.msra.mxu0 0.0
          %5274 = vmatprep.subr.mxu0 0.0
          %5275 = vmatpush1.msra.mxu0 0.0
          %5276 = vmatprep.subr.mxu0 0.0
          %5277 = vmatpush1.msra.mxu0 0.0
          %5278 = vmatprep.subr.mxu0 0.0
          %5279 = vmatpush1.msra.mxu0 0.0
          %5280 = vmatprep.subr.mxu0 0.0
          %5281 = vmatpush1.msra.mxu0 0.0
          %5282 = vmatprep.subr.mxu0 0.0
          %5283 = vmatpush1.msra.mxu0 0.0
          %5284 = vmatprep.subr.mxu0 0.0
          %5285 = vmatpush1.msra.mxu0 0.0
          %5286 = vmatprep.subr.mxu0 0.0
          %5287 = vmatpush1.msra.mxu0 0.0
          %5288 = vmatprep.subr.mxu0 0.0
          %5289 = vmatpush1.msra.mxu0 0.0
          %5290 = vmatprep.subr.mxu0 0.0
          %5291 = vmatpush1.msra.mxu0 0.0
          %5292 = vmatprep.subr.mxu0 0.0
          %5293 = vmatpush1.msra.mxu0 0.0
          %5294 = vmatprep.subr.mxu0 0.0
          %5295 = vmatpush1.msra.mxu0 0.0
          %5296 = vmatprep.subr.mxu0 0.0
          %v5297 = vand.u32 %v5261, 4294901760
          %5298 = vmatpush1.msra.mxu0 %v5297
          %5299 = vmatprep.subr.mxu0 0.0
          %5300 = vmatpush2.msra.mxu0 0.0
          %5301 = vmatprep.subr.mxu0 0.0
          %5302 = vmatpush2.msra.mxu0 0.0
          %5303 = vmatprep.subr.mxu0 0.0
          %5304 = vmatpush2.msra.mxu0 0.0
          %5305 = vmatprep.subr.mxu0 0.0
          %5306 = vmatpush2.msra.mxu0 0.0
          %5307 = vmatprep.subr.mxu0 0.0
          %5308 = vmatpush2.msra.mxu0 0.0
          %5309 = vmatprep.subr.mxu0 0.0
          %5310 = vmatpush2.msra.mxu0 0.0
          %5311 = vmatprep.subr.mxu0 0.0
          %5312 = vmatpush2.msra.mxu0 0.0
          %5313 = vmatprep.subr.mxu0 0.0
          %5314 = vmatpush2.msra.mxu0 0.0
          %5315 = vmatprep.subr.mxu0 0.0
          %5316 = vmatpush2.msra.mxu0 0.0
          %5317 = vmatprep.subr.mxu0 0.0
          %5318 = vmatpush2.msra.mxu0 0.0
          %5319 = vmatprep.subr.mxu0 0.0
          %5320 = vmatpush2.msra.mxu0 0.0
          %5321 = vmatprep.subr.mxu0 0.0
          %5322 = vmatpush2.msra.mxu0 0.0
          %5323 = vmatprep.subr.mxu0 0.0
          %5324 = vmatpush2.msra.mxu0 0.0
          %5325 = vmatprep.subr.mxu0 0.0
          %5326 = vmatpush2.msra.mxu0 0.0
          %5327 = vmatprep.subr.mxu0 0.0
          %5328 = vmatpush2.msra.mxu0 0.0
          %5329 = vmatprep.subr.mxu0 0.0
          %5330 = vmatpush2.msra.mxu0 0.0
          %5331 = vmatprep.mubr.f32.mxu0 0.0
          %v5332 = vand.u32 %v5264, 4294901760
          %v5333 = vsub.f32 %v5264, %v5332
          %v5334 = vand.u32 %v5333, 4294901760
          %v5335 = vsub.f32 %v5333, %v5334
          %v5336 = vand.u32 %v5335, 4294901760
          %5337 = vmatmul.mubr.f32.gmra.mxu0 %v5336
          %v5338 = vpop.f32.mrf.mxu0
          %v5339 = vadd.f32 0.0, %v5338
          %v5340 = vpop.f32.mrf.mxu0
          %5341 = vdwg.mxu0
          %5342 = vmatprep.subr.mxu0 0.0
          %5343 = vmatpush1.msra.mxu0 0.0
          %5344 = vmatprep.subr.mxu0 0.0
          %5345 = vmatpush1.msra.mxu0 0.0
          %5346 = vmatprep.subr.mxu0 0.0
          %5347 = vmatpush1.msra.mxu0 0.0
          %5348 = vmatprep.subr.mxu0 0.0
          %5349 = vmatpush1.msra.mxu0 0.0
          %5350 = vmatprep.subr.mxu0 0.0
          %5351 = vmatpush1.msra.mxu0 0.0
          %5352 = vmatprep.subr.mxu0 0.0
          %5353 = vmatpush1.msra.mxu0 0.0
          %5354 = vmatprep.subr.mxu0 0.0
          %5355 = vmatpush1.msra.mxu0 0.0
          %5356 = vmatprep.subr.mxu0 0.0
          %5357 = vmatpush1.msra.mxu0 0.0
          %5358 = vmatprep.subr.mxu0 0.0
          %5359 = vmatpush1.msra.mxu0 0.0
          %5360 = vmatprep.subr.mxu0 0.0
          %5361 = vmatpush1.msra.mxu0 0.0
          %5362 = vmatprep.subr.mxu0 0.0
          %5363 = vmatpush1.msra.mxu0 0.0
          %5364 = vmatprep.subr.mxu0 0.0
          %5365 = vmatpush1.msra.mxu0 0.0
          %5366 = vmatprep.subr.mxu0 0.0
          %5367 = vmatpush1.msra.mxu0 0.0
          %5368 = vmatprep.subr.mxu0 0.0
          %5369 = vmatpush1.msra.mxu0 0.0
          %5370 = vmatprep.subr.mxu0 0.0
          %5371 = vmatpush1.msra.mxu0 0.0
          %5372 = vmatprep.subr.mxu0 0.0
          %v5373 = vand.u32 %v5261, 4294901760
          %v5374 = vsub.f32 %v5261, %v5373
          %v5375 = vand.u32 %v5374, 4294901760
          %v5376 = vsub.f32 %v5374, %v5375
          %v5377 = vand.u32 %v5376, 4294901760
          %5378 = vmatpush1.msra.mxu0 %v5377
          %5379 = vmatprep.subr.mxu0 0.0
          %5380 = vmatpush2.msra.mxu0 0.0
          %5381 = vmatprep.subr.mxu0 0.0
          %5382 = vmatpush2.msra.mxu0 0.0
          %5383 = vmatprep.subr.mxu0 0.0
          %5384 = vmatpush2.msra.mxu0 0.0
          %5385 = vmatprep.subr.mxu0 0.0
          %5386 = vmatpush2.msra.mxu0 0.0
          %5387 = vmatprep.subr.mxu0 0.0
          %5388 = vmatpush2.msra.mxu0 0.0
          %5389 = vmatprep.subr.mxu0 0.0
          %5390 = vmatpush2.msra.mxu0 0.0
          %5391 = vmatprep.subr.mxu0 0.0
          %5392 = vmatpush2.msra.mxu0 0.0
          %5393 = vmatprep.subr.mxu0 0.0
          %5394 = vmatpush2.msra.mxu0 0.0
          %5395 = vmatprep.subr.mxu0 0.0
          %5396 = vmatpush2.msra.mxu0 0.0
          %5397 = vmatprep.subr.mxu0 0.0
          %5398 = vmatpush2.msra.mxu0 0.0
          %5399 = vmatprep.subr.mxu0 0.0
          %5400 = vmatpush2.msra.mxu0 0.0
          %5401 = vmatprep.subr.mxu0 0.0
          %5402 = vmatpush2.msra.mxu0 0.0
          %5403 = vmatprep.subr.mxu0 0.0
          %5404 = vmatpush2.msra.mxu0 0.0
          %5405 = vmatprep.subr.mxu0 0.0
          %5406 = vmatpush2.msra.mxu0 0.0
          %5407 = vmatprep.subr.mxu0 0.0
          %5408 = vmatpush2.msra.mxu0 0.0
          %5409 = vmatprep.subr.mxu0 0.0
          %5410 = vmatpush2.msra.mxu0 0.0
          %5411 = vmatprep.mubr.f32.mxu0 0.0
          %v5412 = vand.u32 %v5264, 4294901760
          %5413 = vmatmul.mubr.f32.gmra.mxu0 %v5412
          %v5414 = vpop.f32.mrf.mxu0
          %v5415 = vadd.f32 %v5339, %v5414
          %v5416 = vpop.f32.mrf.mxu0
          %5417 = vdwg.mxu0
          %5418 = vmatprep.subr.mxu0 0.0
          %5419 = vmatpush1.msra.mxu0 0.0
          %5420 = vmatprep.subr.mxu0 0.0
          %5421 = vmatpush1.msra.mxu0 0.0
          %5422 = vmatprep.subr.mxu0 0.0
          %5423 = vmatpush1.msra.mxu0 0.0
          %5424 = vmatprep.subr.mxu0 0.0
          %5425 = vmatpush1.msra.mxu0 0.0
          %5426 = vmatprep.subr.mxu0 0.0
          %5427 = vmatpush1.msra.mxu0 0.0
          %5428 = vmatprep.subr.mxu0 0.0
          %5429 = vmatpush1.msra.mxu0 0.0
          %5430 = vmatprep.subr.mxu0 0.0
          %5431 = vmatpush1.msra.mxu0 0.0
          %5432 = vmatprep.subr.mxu0 0.0
          %5433 = vmatpush1.msra.mxu0 0.0
          %5434 = vmatprep.subr.mxu0 0.0
          %5435 = vmatpush1.msra.mxu0 0.0
          %5436 = vmatprep.subr.mxu0 0.0
          %5437 = vmatpush1.msra.mxu0 0.0
          %5438 = vmatprep.subr.mxu0 0.0
          %5439 = vmatpush1.msra.mxu0 0.0
          %5440 = vmatprep.subr.mxu0 0.0
          %5441 = vmatpush1.msra.mxu0 0.0
          %5442 = vmatprep.subr.mxu0 0.0
          %5443 = vmatpush1.msra.mxu0 0.0
          %5444 = vmatprep.subr.mxu0 0.0
          %5445 = vmatpush1.msra.mxu0 0.0
          %5446 = vmatprep.subr.mxu0 0.0
          %5447 = vmatpush1.msra.mxu0 0.0
          %5448 = vmatprep.subr.mxu0 0.0
          %v5449 = vand.u32 %v5261, 4294901760
          %v5450 = vsub.f32 %v5261, %v5449
          %5451 = vmatpush1.msra.mxu0 %v5450
          %5452 = vmatprep.subr.mxu0 0.0
          %5453 = vmatpush2.msra.mxu0 0.0
          %5454 = vmatprep.subr.mxu0 0.0
          %5455 = vmatpush2.msra.mxu0 0.0
          %5456 = vmatprep.subr.mxu0 0.0
          %5457 = vmatpush2.msra.mxu0 0.0
          %5458 = vmatprep.subr.mxu0 0.0
          %5459 = vmatpush2.msra.mxu0 0.0
          %5460 = vmatprep.subr.mxu0 0.0
          %5461 = vmatpush2.msra.mxu0 0.0
          %5462 = vmatprep.subr.mxu0 0.0
          %5463 = vmatpush2.msra.mxu0 0.0
          %5464 = vmatprep.subr.mxu0 0.0
          %5465 = vmatpush2.msra.mxu0 0.0
          %5466 = vmatprep.subr.mxu0 0.0
          %5467 = vmatpush2.msra.mxu0 0.0
          %5468 = vmatprep.subr.mxu0 0.0
          %5469 = vmatpush2.msra.mxu0 0.0
          %5470 = vmatprep.subr.mxu0 0.0
          %5471 = vmatpush2.msra.mxu0 0.0
          %5472 = vmatprep.subr.mxu0 0.0
          %5473 = vmatpush2.msra.mxu0 0.0
          %5474 = vmatprep.subr.mxu0 0.0
          %5475 = vmatpush2.msra.mxu0 0.0
          %5476 = vmatprep.subr.mxu0 0.0
          %5477 = vmatpush2.msra.mxu0 0.0
          %5478 = vmatprep.subr.mxu0 0.0
          %5479 = vmatpush2.msra.mxu0 0.0
          %5480 = vmatprep.subr.mxu0 0.0
          %5481 = vmatpush2.msra.mxu0 0.0
          %5482 = vmatprep.subr.mxu0 0.0
          %5483 = vmatpush2.msra.mxu0 0.0
          %5484 = vmatprep.mubr.f32.mxu0 0.0
          %v5485 = vand.u32 %v5264, 4294901760
          %v5486 = vsub.f32 %v5264, %v5485
          %5487 = vmatmul.mubr.f32.gmra.mxu0 %v5486
          %v5488 = vpop.f32.mrf.mxu0
          %v5489 = vadd.f32 %v5415, %v5488
          %v5490 = vpop.f32.mrf.mxu0
          %5491 = vdwg.mxu0
          %5492 = vmatprep.subr.mxu0 0.0
          %5493 = vmatpush1.msra.mxu0 0.0
          %5494 = vmatprep.subr.mxu0 0.0
          %5495 = vmatpush1.msra.mxu0 0.0
          %5496 = vmatprep.subr.mxu0 0.0
          %5497 = vmatpush1.msra.mxu0 0.0
          %5498 = vmatprep.subr.mxu0 0.0
          %5499 = vmatpush1.msra.mxu0 0.0
          %5500 = vmatprep.subr.mxu0 0.0
          %5501 = vmatpush1.msra.mxu0 0.0
          %5502 = vmatprep.subr.mxu0 0.0
          %5503 = vmatpush1.msra.mxu0 0.0
          %5504 = vmatprep.subr.mxu0 0.0
          %5505 = vmatpush1.msra.mxu0 0.0
          %5506 = vmatprep.subr.mxu0 0.0
          %5507 = vmatpush1.msra.mxu0 0.0
          %5508 = vmatprep.subr.mxu0 0.0
          %5509 = vmatpush1.msra.mxu0 0.0
          %5510 = vmatprep.subr.mxu0 0.0
          %5511 = vmatpush1.msra.mxu0 0.0
          %5512 = vmatprep.subr.mxu0 0.0
          %5513 = vmatpush1.msra.mxu0 0.0
          %5514 = vmatprep.subr.mxu0 0.0
          %5515 = vmatpush1.msra.mxu0 0.0
          %5516 = vmatprep.subr.mxu0 0.0
          %5517 = vmatpush1.msra.mxu0 0.0
          %5518 = vmatprep.subr.mxu0 0.0
          %5519 = vmatpush1.msra.mxu0 0.0
          %5520 = vmatprep.subr.mxu0 0.0
          %5521 = vmatpush1.msra.mxu0 0.0
          %5522 = vmatprep.subr.mxu0 0.0
          %v5523 = vand.u32 %v5261, 4294901760
          %5524 = vmatpush1.msra.mxu0 %v5523
          %5525 = vmatprep.subr.mxu0 0.0
          %5526 = vmatpush2.msra.mxu0 0.0
          %5527 = vmatprep.subr.mxu0 0.0
          %5528 = vmatpush2.msra.mxu0 0.0
          %5529 = vmatprep.subr.mxu0 0.0
          %5530 = vmatpush2.msra.mxu0 0.0
          %5531 = vmatprep.subr.mxu0 0.0
          %5532 = vmatpush2.msra.mxu0 0.0
          %5533 = vmatprep.subr.mxu0 0.0
          %5534 = vmatpush2.msra.mxu0 0.0
          %5535 = vmatprep.subr.mxu0 0.0
          %5536 = vmatpush2.msra.mxu0 0.0
          %5537 = vmatprep.subr.mxu0 0.0
          %5538 = vmatpush2.msra.mxu0 0.0
          %5539 = vmatprep.subr.mxu0 0.0
          %5540 = vmatpush2.msra.mxu0 0.0
          %5541 = vmatprep.subr.mxu0 0.0
          %5542 = vmatpush2.msra.mxu0 0.0
          %5543 = vmatprep.subr.mxu0 0.0
          %5544 = vmatpush2.msra.mxu0 0.0
          %5545 = vmatprep.subr.mxu0 0.0
          %5546 = vmatpush2.msra.mxu0 0.0
          %5547 = vmatprep.subr.mxu0 0.0
          %5548 = vmatpush2.msra.mxu0 0.0
          %5549 = vmatprep.subr.mxu0 0.0
          %5550 = vmatpush2.msra.mxu0 0.0
          %5551 = vmatprep.subr.mxu0 0.0
          %5552 = vmatpush2.msra.mxu0 0.0
          %5553 = vmatprep.subr.mxu0 0.0
          %5554 = vmatpush2.msra.mxu0 0.0
          %5555 = vmatprep.subr.mxu0 0.0
          %5556 = vmatpush2.msra.mxu0 0.0
          %5557 = vmatprep.mubr.f32.mxu0 0.0
          %v5558 = vand.u32 %v5264, 4294901760
          %v5559 = vsub.f32 %v5264, %v5558
          %v5560 = vand.u32 %v5559, 4294901760
          %5561 = vmatmul.mubr.f32.gmra.mxu0 %v5560
          %v5562 = vpop.f32.mrf.mxu0
          %v5563 = vadd.f32 %v5489, %v5562
          %v5564 = vpop.f32.mrf.mxu0
          %5565 = vdwg.mxu0
          %5566 = vmatprep.subr.mxu0 0.0
          %5567 = vmatpush1.msra.mxu0 0.0
          %5568 = vmatprep.subr.mxu0 0.0
          %5569 = vmatpush1.msra.mxu0 0.0
          %5570 = vmatprep.subr.mxu0 0.0
          %5571 = vmatpush1.msra.mxu0 0.0
          %5572 = vmatprep.subr.mxu0 0.0
          %5573 = vmatpush1.msra.mxu0 0.0
          %5574 = vmatprep.subr.mxu0 0.0
          %5575 = vmatpush1.msra.mxu0 0.0
          %5576 = vmatprep.subr.mxu0 0.0
          %5577 = vmatpush1.msra.mxu0 0.0
          %5578 = vmatprep.subr.mxu0 0.0
          %5579 = vmatpush1.msra.mxu0 0.0
          %5580 = vmatprep.subr.mxu0 0.0
          %5581 = vmatpush1.msra.mxu0 0.0
          %5582 = vmatprep.subr.mxu0 0.0
          %5583 = vmatpush1.msra.mxu0 0.0
          %5584 = vmatprep.subr.mxu0 0.0
          %5585 = vmatpush1.msra.mxu0 0.0
          %5586 = vmatprep.subr.mxu0 0.0
          %5587 = vmatpush1.msra.mxu0 0.0
          %5588 = vmatprep.subr.mxu0 0.0
          %5589 = vmatpush1.msra.mxu0 0.0
          %5590 = vmatprep.subr.mxu0 0.0
          %5591 = vmatpush1.msra.mxu0 0.0
          %5592 = vmatprep.subr.mxu0 0.0
          %5593 = vmatpush1.msra.mxu0 0.0
          %5594 = vmatprep.subr.mxu0 0.0
          %5595 = vmatpush1.msra.mxu0 0.0
          %5596 = vmatprep.subr.mxu0 0.0
          %v5597 = vand.u32 %v5261, 4294901760
          %v5598 = vsub.f32 %v5261, %v5597
          %v5599 = vand.u32 %v5598, 4294901760
          %5600 = vmatpush1.msra.mxu0 %v5599
          %5601 = vmatprep.subr.mxu0 0.0
          %5602 = vmatpush2.msra.mxu0 0.0
          %5603 = vmatprep.subr.mxu0 0.0
          %5604 = vmatpush2.msra.mxu0 0.0
          %5605 = vmatprep.subr.mxu0 0.0
          %5606 = vmatpush2.msra.mxu0 0.0
          %5607 = vmatprep.subr.mxu0 0.0
          %5608 = vmatpush2.msra.mxu0 0.0
          %5609 = vmatprep.subr.mxu0 0.0
          %5610 = vmatpush2.msra.mxu0 0.0
          %5611 = vmatprep.subr.mxu0 0.0
          %5612 = vmatpush2.msra.mxu0 0.0
          %5613 = vmatprep.subr.mxu0 0.0
          %5614 = vmatpush2.msra.mxu0 0.0
          %5615 = vmatprep.subr.mxu0 0.0
          %5616 = vmatpush2.msra.mxu0 0.0
          %5617 = vmatprep.subr.mxu0 0.0
          %5618 = vmatpush2.msra.mxu0 0.0
          %5619 = vmatprep.subr.mxu0 0.0
          %5620 = vmatpush2.msra.mxu0 0.0
          %5621 = vmatprep.subr.mxu0 0.0
          %5622 = vmatpush2.msra.mxu0 0.0
          %5623 = vmatprep.subr.mxu0 0.0
          %5624 = vmatpush2.msra.mxu0 0.0
          %5625 = vmatprep.subr.mxu0 0.0
          %5626 = vmatpush2.msra.mxu0 0.0
          %5627 = vmatprep.subr.mxu0 0.0
          %5628 = vmatpush2.msra.mxu0 0.0
          %5629 = vmatprep.subr.mxu0 0.0
          %5630 = vmatpush2.msra.mxu0 0.0
          %5631 = vmatprep.subr.mxu0 0.0
          %5632 = vmatpush2.msra.mxu0 0.0
          %5633 = vmatprep.mubr.f32.mxu0 0.0
          %v5634 = vand.u32 %v5264, 4294901760
          %5635 = vmatmul.mubr.f32.gmra.mxu0 %v5634
          %v5636 = vpop.f32.mrf.mxu0
          %v5637 = vadd.f32 %v5563, %v5636
          %v5638 = vpop.f32.mrf.mxu0
          %5639 = vdwg.mxu0
          %5640 = vmatprep.subr.mxu0 0.0
          %5641 = vmatpush1.msra.mxu0 0.0
          %5642 = vmatprep.subr.mxu0 0.0
          %5643 = vmatpush1.msra.mxu0 0.0
          %5644 = vmatprep.subr.mxu0 0.0
          %5645 = vmatpush1.msra.mxu0 0.0
          %5646 = vmatprep.subr.mxu0 0.0
          %5647 = vmatpush1.msra.mxu0 0.0
          %5648 = vmatprep.subr.mxu0 0.0
          %5649 = vmatpush1.msra.mxu0 0.0
          %5650 = vmatprep.subr.mxu0 0.0
          %5651 = vmatpush1.msra.mxu0 0.0
          %5652 = vmatprep.subr.mxu0 0.0
          %5653 = vmatpush1.msra.mxu0 0.0
          %5654 = vmatprep.subr.mxu0 0.0
          %5655 = vmatpush1.msra.mxu0 0.0
          %5656 = vmatprep.subr.mxu0 0.0
          %5657 = vmatpush1.msra.mxu0 0.0
          %5658 = vmatprep.subr.mxu0 0.0
          %5659 = vmatpush1.msra.mxu0 0.0
          %5660 = vmatprep.subr.mxu0 0.0
          %5661 = vmatpush1.msra.mxu0 0.0
          %5662 = vmatprep.subr.mxu0 0.0
          %5663 = vmatpush1.msra.mxu0 0.0
          %5664 = vmatprep.subr.mxu0 0.0
          %5665 = vmatpush1.msra.mxu0 0.0
          %5666 = vmatprep.subr.mxu0 0.0
          %5667 = vmatpush1.msra.mxu0 0.0
          %5668 = vmatprep.subr.mxu0 0.0
          %5669 = vmatpush1.msra.mxu0 0.0
          %5670 = vmatprep.subr.mxu0 0.0
          %v5671 = vand.u32 %v5261, 4294901760
          %5672 = vmatpush1.msra.mxu0 %v5671
          %5673 = vmatprep.subr.mxu0 0.0
          %5674 = vmatpush2.msra.mxu0 0.0
          %5675 = vmatprep.subr.mxu0 0.0
          %5676 = vmatpush2.msra.mxu0 0.0
          %5677 = vmatprep.subr.mxu0 0.0
          %5678 = vmatpush2.msra.mxu0 0.0
          %5679 = vmatprep.subr.mxu0 0.0
          %5680 = vmatpush2.msra.mxu0 0.0
          %5681 = vmatprep.subr.mxu0 0.0
          %5682 = vmatpush2.msra.mxu0 0.0
          %5683 = vmatprep.subr.mxu0 0.0
          %5684 = vmatpush2.msra.mxu0 0.0
          %5685 = vmatprep.subr.mxu0 0.0
          %5686 = vmatpush2.msra.mxu0 0.0
          %5687 = vmatprep.subr.mxu0 0.0
          %5688 = vmatpush2.msra.mxu0 0.0
          %5689 = vmatprep.subr.mxu0 0.0
          %5690 = vmatpush2.msra.mxu0 0.0
          %5691 = vmatprep.subr.mxu0 0.0
          %5692 = vmatpush2.msra.mxu0 0.0
          %5693 = vmatprep.subr.mxu0 0.0
          %5694 = vmatpush2.msra.mxu0 0.0
          %5695 = vmatprep.subr.mxu0 0.0
          %5696 = vmatpush2.msra.mxu0 0.0
          %5697 = vmatprep.subr.mxu0 0.0
          %5698 = vmatpush2.msra.mxu0 0.0
          %5699 = vmatprep.subr.mxu0 0.0
          %5700 = vmatpush2.msra.mxu0 0.0
          %5701 = vmatprep.subr.mxu0 0.0
          %5702 = vmatpush2.msra.mxu0 0.0
          %5703 = vmatprep.subr.mxu0 0.0
          %5704 = vmatpush2.msra.mxu0 0.0
          %5705 = vmatprep.mubr.f32.mxu0 0.0
          %v5706 = vand.u32 %v5264, 4294901760
          %5707 = vmatmul.mubr.f32.gmra.mxu0 %v5706
          %v5708 = vpop.f32.mrf.mxu0
          %v5709 = vadd.f32 %v5637, %v5708
          %v5710 = vpop.f32.mrf.mxu0
          %5711 = vdwg.mxu0
          %v5712 = vadd.f32 %v5232, %v5709
          %v5713 = vadd.f32 %v5712, %v358
          %v5714 = vmul.f32 %v5242, %v5713
          %v5715 = vmul.f32 %v5261, %v358
          %v5716 = vsub.f32 %v5714, %v5715
          %v5717 = vld [vmem:[#allocation3] sm:$0xff]
          %v5718 = vlaneseq
          %v5719 = vshrl.u32 %v5718, 7
          %v5720 = vsub.s32 1, %v5719
          %v5721 = vrot.slane %v5235, %v5720
          %v5722 = vmul.f32 %v5721, %v5716
          %v5723 = vadd.f32 %v5717, %v5722
          %5724 = vst [vmem:[#allocation3] sm:$0xff] %v5723
          %v5725 = vld [vmem:[#allocation2] sm:$0xff]
          %v5726 = vrot.slane %v5725, 4
          %v5727 = vmax.f32 %v5725, %v5726
          %v5728 = vrot.slane %v5727, 2
          %v5729 = vmax.f32 %v5727, %v5728
          %v5730 = vrot.slane %v5729, 1
          %v5731 = vmax.f32 %v5729, %v5730
          %v5732 = vsub.f32 %v5725, %v5731
          %v5733 = vmul.f32 %v5732, 1.442695
          %v5734 = vpow.pop %v5733
          %v5736 = vsel %vm5262, %v353, 0
          %5738 = vmatprep.subr.mxu0 0.0
          %5739 = vmatpush1.msra.mxu0 0.0
          %5740 = vmatprep.subr.mxu0 0.0
          %5741 = vmatpush1.msra.mxu0 0.0
          %5742 = vmatprep.subr.mxu0 0.0
          %5743 = vmatpush1.msra.mxu0 0.0
          %5744 = vmatprep.subr.mxu0 0.0
          %5745 = vmatpush1.msra.mxu0 0.0
          %5746 = vmatprep.subr.mxu0 0.0
          %5747 = vmatpush1.msra.mxu0 0.0
          %5748 = vmatprep.subr.mxu0 0.0
          %5749 = vmatpush1.msra.mxu0 0.0
          %5750 = vmatprep.subr.mxu0 0.0
          %5751 = vmatpush1.msra.mxu0 0.0
          %5752 = vmatprep.subr.mxu0 0.0
          %5753 = vmatpush1.msra.mxu0 0.0
          %5754 = vmatprep.subr.mxu0 0.0
          %5755 = vmatpush1.msra.mxu0 0.0
          %5756 = vmatprep.subr.mxu0 0.0
          %5757 = vmatpush1.msra.mxu0 0.0
          %5758 = vmatprep.subr.mxu0 0.0
          %5759 = vmatpush1.msra.mxu0 0.0
          %5760 = vmatprep.subr.mxu0 0.0
          %5761 = vmatpush1.msra.mxu0 0.0
          %5762 = vmatprep.subr.mxu0 0.0
          %5763 = vmatpush1.msra.mxu0 0.0
          %5764 = vmatprep.subr.mxu0 0.0
          %5765 = vmatpush1.msra.mxu0 0.0
          %5766 = vmatprep.subr.mxu0 0.0
          %5767 = vmatpush1.msra.mxu0 0.0
          %5768 = vmatprep.subr.mxu0 0.0
          %v5769 = vand.u32 %v5734, 4294901760
          %5770 = vmatpush1.msra.mxu0 %v5769
          %5771 = vmatprep.subr.mxu0 0.0
          %5772 = vmatpush2.msra.mxu0 0.0
          %5773 = vmatprep.subr.mxu0 0.0
          %5774 = vmatpush2.msra.mxu0 0.0
          %5775 = vmatprep.subr.mxu0 0.0
          %5776 = vmatpush2.msra.mxu0 0.0
          %5777 = vmatprep.subr.mxu0 0.0
          %5778 = vmatpush2.msra.mxu0 0.0
          %5779 = vmatprep.subr.mxu0 0.0
          %5780 = vmatpush2.msra.mxu0 0.0
          %5781 = vmatprep.subr.mxu0 0.0
          %5782 = vmatpush2.msra.mxu0 0.0
          %5783 = vmatprep.subr.mxu0 0.0
          %5784 = vmatpush2.msra.mxu0 0.0
          %5785 = vmatprep.subr.mxu0 0.0
          %5786 = vmatpush2.msra.mxu0 0.0
          %5787 = vmatprep.subr.mxu0 0.0
          %5788 = vmatpush2.msra.mxu0 0.0
          %5789 = vmatprep.subr.mxu0 0.0
          %5790 = vmatpush2.msra.mxu0 0.0
          %5791 = vmatprep.subr.mxu0 0.0
          %5792 = vmatpush2.msra.mxu0 0.0
          %5793 = vmatprep.subr.mxu0 0.0
          %5794 = vmatpush2.msra.mxu0 0.0
          %5795 = vmatprep.subr.mxu0 0.0
          %5796 = vmatpush2.msra.mxu0 0.0
          %5797 = vmatprep.subr.mxu0 0.0
          %5798 = vmatpush2.msra.mxu0 0.0
          %5799 = vmatprep.subr.mxu0 0.0
          %5800 = vmatpush2.msra.mxu0 0.0
          %5801 = vmatprep.subr.mxu0 0.0
          %5802 = vmatpush2.msra.mxu0 0.0
          %5803 = vmatprep.mubr.f32.mxu0 0.0
          %v5804 = vand.u32 %v5736, 4294901760
          %v5805 = vsub.f32 %v5736, %v5804
          %v5806 = vand.u32 %v5805, 4294901760
          %v5807 = vsub.f32 %v5805, %v5806
          %v5808 = vand.u32 %v5807, 4294901760
          %5809 = vmatmul.mubr.f32.gmra.mxu0 %v5808
          %v5810 = vpop.f32.mrf.mxu0
          %v5811 = vadd.f32 0.0, %v5810
          %v5812 = vpop.f32.mrf.mxu0
          %5813 = vdwg.mxu0
          %5814 = vmatprep.subr.mxu0 0.0
          %5815 = vmatpush1.msra.mxu0 0.0
          %5816 = vmatprep.subr.mxu0 0.0
          %5817 = vmatpush1.msra.mxu0 0.0
          %5818 = vmatprep.subr.mxu0 0.0
          %5819 = vmatpush1.msra.mxu0 0.0
          %5820 = vmatprep.subr.mxu0 0.0
          %5821 = vmatpush1.msra.mxu0 0.0
          %5822 = vmatprep.subr.mxu0 0.0
          %5823 = vmatpush1.msra.mxu0 0.0
          %5824 = vmatprep.subr.mxu0 0.0
          %5825 = vmatpush1.msra.mxu0 0.0
          %5826 = vmatprep.subr.mxu0 0.0
          %5827 = vmatpush1.msra.mxu0 0.0
          %5828 = vmatprep.subr.mxu0 0.0
          %5829 = vmatpush1.msra.mxu0 0.0
          %5830 = vmatprep.subr.mxu0 0.0
          %5831 = vmatpush1.msra.mxu0 0.0
          %5832 = vmatprep.subr.mxu0 0.0
          %5833 = vmatpush1.msra.mxu0 0.0
          %5834 = vmatprep.subr.mxu0 0.0
          %5835 = vmatpush1.msra.mxu0 0.0
          %5836 = vmatprep.subr.mxu0 0.0
          %5837 = vmatpush1.msra.mxu0 0.0
          %5838 = vmatprep.subr.mxu0 0.0
          %5839 = vmatpush1.msra.mxu0 0.0
          %5840 = vmatprep.subr.mxu0 0.0
          %5841 = vmatpush1.msra.mxu0 0.0
          %5842 = vmatprep.subr.mxu0 0.0
          %5843 = vmatpush1.msra.mxu0 0.0
          %5844 = vmatprep.subr.mxu0 0.0
          %v5845 = vand.u32 %v5734, 4294901760
          %v5846 = vsub.f32 %v5734, %v5845
          %v5847 = vand.u32 %v5846, 4294901760
          %v5848 = vsub.f32 %v5846, %v5847
          %v5849 = vand.u32 %v5848, 4294901760
          %5850 = vmatpush1.msra.mxu0 %v5849
          %5851 = vmatprep.subr.mxu0 0.0
          %5852 = vmatpush2.msra.mxu0 0.0
          %5853 = vmatprep.subr.mxu0 0.0
          %5854 = vmatpush2.msra.mxu0 0.0
          %5855 = vmatprep.subr.mxu0 0.0
          %5856 = vmatpush2.msra.mxu0 0.0
          %5857 = vmatprep.subr.mxu0 0.0
          %5858 = vmatpush2.msra.mxu0 0.0
          %5859 = vmatprep.subr.mxu0 0.0
          %5860 = vmatpush2.msra.mxu0 0.0
          %5861 = vmatprep.subr.mxu0 0.0
          %5862 = vmatpush2.msra.mxu0 0.0
          %5863 = vmatprep.subr.mxu0 0.0
          %5864 = vmatpush2.msra.mxu0 0.0
          %5865 = vmatprep.subr.mxu0 0.0
          %5866 = vmatpush2.msra.mxu0 0.0
          %5867 = vmatprep.subr.mxu0 0.0
          %5868 = vmatpush2.msra.mxu0 0.0
          %5869 = vmatprep.subr.mxu0 0.0
          %5870 = vmatpush2.msra.mxu0 0.0
          %5871 = vmatprep.subr.mxu0 0.0
          %5872 = vmatpush2.msra.mxu0 0.0
          %5873 = vmatprep.subr.mxu0 0.0
          %5874 = vmatpush2.msra.mxu0 0.0
          %5875 = vmatprep.subr.mxu0 0.0
          %5876 = vmatpush2.msra.mxu0 0.0
          %5877 = vmatprep.subr.mxu0 0.0
          %5878 = vmatpush2.msra.mxu0 0.0
          %5879 = vmatprep.subr.mxu0 0.0
          %5880 = vmatpush2.msra.mxu0 0.0
          %5881 = vmatprep.subr.mxu0 0.0
          %5882 = vmatpush2.msra.mxu0 0.0
          %5883 = vmatprep.mubr.f32.mxu0 0.0
          %v5884 = vand.u32 %v5736, 4294901760
          %5885 = vmatmul.mubr.f32.gmra.mxu0 %v5884
          %v5886 = vpop.f32.mrf.mxu0
          %v5887 = vadd.f32 %v5811, %v5886
          %v5888 = vpop.f32.mrf.mxu0
          %5889 = vdwg.mxu0
          %5890 = vmatprep.subr.mxu0 0.0
          %5891 = vmatpush1.msra.mxu0 0.0
          %5892 = vmatprep.subr.mxu0 0.0
          %5893 = vmatpush1.msra.mxu0 0.0
          %5894 = vmatprep.subr.mxu0 0.0
          %5895 = vmatpush1.msra.mxu0 0.0
          %5896 = vmatprep.subr.mxu0 0.0
          %5897 = vmatpush1.msra.mxu0 0.0
          %5898 = vmatprep.subr.mxu0 0.0
          %5899 = vmatpush1.msra.mxu0 0.0
          %5900 = vmatprep.subr.mxu0 0.0
          %5901 = vmatpush1.msra.mxu0 0.0
          %5902 = vmatprep.subr.mxu0 0.0
          %5903 = vmatpush1.msra.mxu0 0.0
          %5904 = vmatprep.subr.mxu0 0.0
          %5905 = vmatpush1.msra.mxu0 0.0
          %5906 = vmatprep.subr.mxu0 0.0
          %5907 = vmatpush1.msra.mxu0 0.0
          %5908 = vmatprep.subr.mxu0 0.0
          %5909 = vmatpush1.msra.mxu0 0.0
          %5910 = vmatprep.subr.mxu0 0.0
          %5911 = vmatpush1.msra.mxu0 0.0
          %5912 = vmatprep.subr.mxu0 0.0
          %5913 = vmatpush1.msra.mxu0 0.0
          %5914 = vmatprep.subr.mxu0 0.0
          %5915 = vmatpush1.msra.mxu0 0.0
          %5916 = vmatprep.subr.mxu0 0.0
          %5917 = vmatpush1.msra.mxu0 0.0
          %5918 = vmatprep.subr.mxu0 0.0
          %5919 = vmatpush1.msra.mxu0 0.0
          %5920 = vmatprep.subr.mxu0 0.0
          %v5921 = vand.u32 %v5734, 4294901760
          %v5922 = vsub.f32 %v5734, %v5921
          %5923 = vmatpush1.msra.mxu0 %v5922
          %5924 = vmatprep.subr.mxu0 0.0
          %5925 = vmatpush2.msra.mxu0 0.0
          %5926 = vmatprep.subr.mxu0 0.0
          %5927 = vmatpush2.msra.mxu0 0.0
          %5928 = vmatprep.subr.mxu0 0.0
          %5929 = vmatpush2.msra.mxu0 0.0
          %5930 = vmatprep.subr.mxu0 0.0
          %5931 = vmatpush2.msra.mxu0 0.0
          %5932 = vmatprep.subr.mxu0 0.0
          %5933 = vmatpush2.msra.mxu0 0.0
          %5934 = vmatprep.subr.mxu0 0.0
          %5935 = vmatpush2.msra.mxu0 0.0
          %5936 = vmatprep.subr.mxu0 0.0
          %5937 = vmatpush2.msra.mxu0 0.0
          %5938 = vmatprep.subr.mxu0 0.0
          %5939 = vmatpush2.msra.mxu0 0.0
          %5940 = vmatprep.subr.mxu0 0.0
          %5941 = vmatpush2.msra.mxu0 0.0
          %5942 = vmatprep.subr.mxu0 0.0
          %5943 = vmatpush2.msra.mxu0 0.0
          %5944 = vmatprep.subr.mxu0 0.0
          %5945 = vmatpush2.msra.mxu0 0.0
          %5946 = vmatprep.subr.mxu0 0.0
          %5947 = vmatpush2.msra.mxu0 0.0
          %5948 = vmatprep.subr.mxu0 0.0
          %5949 = vmatpush2.msra.mxu0 0.0
          %5950 = vmatprep.subr.mxu0 0.0
          %5951 = vmatpush2.msra.mxu0 0.0
          %5952 = vmatprep.subr.mxu0 0.0
          %5953 = vmatpush2.msra.mxu0 0.0
          %5954 = vmatprep.subr.mxu0 0.0
          %5955 = vmatpush2.msra.mxu0 0.0
          %5956 = vmatprep.mubr.f32.mxu0 0.0
          %v5957 = vand.u32 %v5736, 4294901760
          %v5958 = vsub.f32 %v5736, %v5957
          %5959 = vmatmul.mubr.f32.gmra.mxu0 %v5958
          %v5960 = vpop.f32.mrf.mxu0
          %v5961 = vadd.f32 %v5887, %v5960
          %v5962 = vpop.f32.mrf.mxu0
          %5963 = vdwg.mxu0
          %5964 = vmatprep.subr.mxu0 0.0
          %5965 = vmatpush1.msra.mxu0 0.0
          %5966 = vmatprep.subr.mxu0 0.0
          %5967 = vmatpush1.msra.mxu0 0.0
          %5968 = vmatprep.subr.mxu0 0.0
          %5969 = vmatpush1.msra.mxu0 0.0
          %5970 = vmatprep.subr.mxu0 0.0
          %5971 = vmatpush1.msra.mxu0 0.0
          %5972 = vmatprep.subr.mxu0 0.0
          %5973 = vmatpush1.msra.mxu0 0.0
          %5974 = vmatprep.subr.mxu0 0.0
          %5975 = vmatpush1.msra.mxu0 0.0
          %5976 = vmatprep.subr.mxu0 0.0
          %5977 = vmatpush1.msra.mxu0 0.0
          %5978 = vmatprep.subr.mxu0 0.0
          %5979 = vmatpush1.msra.mxu0 0.0
          %5980 = vmatprep.subr.mxu0 0.0
          %5981 = vmatpush1.msra.mxu0 0.0
          %5982 = vmatprep.subr.mxu0 0.0
          %5983 = vmatpush1.msra.mxu0 0.0
          %5984 = vmatprep.subr.mxu0 0.0
          %5985 = vmatpush1.msra.mxu0 0.0
          %5986 = vmatprep.subr.mxu0 0.0
          %5987 = vmatpush1.msra.mxu0 0.0
          %5988 = vmatprep.subr.mxu0 0.0
          %5989 = vmatpush1.msra.mxu0 0.0
          %5990 = vmatprep.subr.mxu0 0.0
          %5991 = vmatpush1.msra.mxu0 0.0
          %5992 = vmatprep.subr.mxu0 0.0
          %5993 = vmatpush1.msra.mxu0 0.0
          %5994 = vmatprep.subr.mxu0 0.0
          %v5995 = vand.u32 %v5734, 4294901760
          %5996 = vmatpush1.msra.mxu0 %v5995
          %5997 = vmatprep.subr.mxu0 0.0
          %5998 = vmatpush2.msra.mxu0 0.0
          %5999 = vmatprep.subr.mxu0 0.0
          %6000 = vmatpush2.msra.mxu0 0.0
          %6001 = vmatprep.subr.mxu0 0.0
          %6002 = vmatpush2.msra.mxu0 0.0
          %6003 = vmatprep.subr.mxu0 0.0
          %6004 = vmatpush2.msra.mxu0 0.0
          %6005 = vmatprep.subr.mxu0 0.0
          %6006 = vmatpush2.msra.mxu0 0.0
          %6007 = vmatprep.subr.mxu0 0.0
          %6008 = vmatpush2.msra.mxu0 0.0
          %6009 = vmatprep.subr.mxu0 0.0
          %6010 = vmatpush2.msra.mxu0 0.0
          %6011 = vmatprep.subr.mxu0 0.0
          %6012 = vmatpush2.msra.mxu0 0.0
          %6013 = vmatprep.subr.mxu0 0.0
          %6014 = vmatpush2.msra.mxu0 0.0
          %6015 = vmatprep.subr.mxu0 0.0
          %6016 = vmatpush2.msra.mxu0 0.0
          %6017 = vmatprep.subr.mxu0 0.0
          %6018 = vmatpush2.msra.mxu0 0.0
          %6019 = vmatprep.subr.mxu0 0.0
          %6020 = vmatpush2.msra.mxu0 0.0
          %6021 = vmatprep.subr.mxu0 0.0
          %6022 = vmatpush2.msra.mxu0 0.0
          %6023 = vmatprep.subr.mxu0 0.0
          %6024 = vmatpush2.msra.mxu0 0.0
          %6025 = vmatprep.subr.mxu0 0.0
          %6026 = vmatpush2.msra.mxu0 0.0
          %6027 = vmatprep.subr.mxu0 0.0
          %6028 = vmatpush2.msra.mxu0 0.0
          %6029 = vmatprep.mubr.f32.mxu0 0.0
          %v6030 = vand.u32 %v5736, 4294901760
          %v6031 = vsub.f32 %v5736, %v6030
          %v6032 = vand.u32 %v6031, 4294901760
          %6033 = vmatmul.mubr.f32.gmra.mxu0 %v6032
          %v6034 = vpop.f32.mrf.mxu0
          %v6035 = vadd.f32 %v5961, %v6034
          %v6036 = vpop.f32.mrf.mxu0
          %6037 = vdwg.mxu0
          %6038 = vmatprep.subr.mxu0 0.0
          %6039 = vmatpush1.msra.mxu0 0.0
          %6040 = vmatprep.subr.mxu0 0.0
          %6041 = vmatpush1.msra.mxu0 0.0
          %6042 = vmatprep.subr.mxu0 0.0
          %6043 = vmatpush1.msra.mxu0 0.0
          %6044 = vmatprep.subr.mxu0 0.0
          %6045 = vmatpush1.msra.mxu0 0.0
          %6046 = vmatprep.subr.mxu0 0.0
          %6047 = vmatpush1.msra.mxu0 0.0
          %6048 = vmatprep.subr.mxu0 0.0
          %6049 = vmatpush1.msra.mxu0 0.0
          %6050 = vmatprep.subr.mxu0 0.0
          %6051 = vmatpush1.msra.mxu0 0.0
          %6052 = vmatprep.subr.mxu0 0.0
          %6053 = vmatpush1.msra.mxu0 0.0
          %6054 = vmatprep.subr.mxu0 0.0
          %6055 = vmatpush1.msra.mxu0 0.0
          %6056 = vmatprep.subr.mxu0 0.0
          %6057 = vmatpush1.msra.mxu0 0.0
          %6058 = vmatprep.subr.mxu0 0.0
          %6059 = vmatpush1.msra.mxu0 0.0
          %6060 = vmatprep.subr.mxu0 0.0
          %6061 = vmatpush1.msra.mxu0 0.0
          %6062 = vmatprep.subr.mxu0 0.0
          %6063 = vmatpush1.msra.mxu0 0.0
          %6064 = vmatprep.subr.mxu0 0.0
          %6065 = vmatpush1.msra.mxu0 0.0
          %6066 = vmatprep.subr.mxu0 0.0
          %6067 = vmatpush1.msra.mxu0 0.0
          %6068 = vmatprep.subr.mxu0 0.0
          %v6069 = vand.u32 %v5734, 4294901760
          %v6070 = vsub.f32 %v5734, %v6069
          %v6071 = vand.u32 %v6070, 4294901760
          %6072 = vmatpush1.msra.mxu0 %v6071
          %6073 = vmatprep.subr.mxu0 0.0
          %6074 = vmatpush2.msra.mxu0 0.0
          %6075 = vmatprep.subr.mxu0 0.0
          %6076 = vmatpush2.msra.mxu0 0.0
          %6077 = vmatprep.subr.mxu0 0.0
          %6078 = vmatpush2.msra.mxu0 0.0
          %6079 = vmatprep.subr.mxu0 0.0
          %6080 = vmatpush2.msra.mxu0 0.0
          %6081 = vmatprep.subr.mxu0 0.0
          %6082 = vmatpush2.msra.mxu0 0.0
          %6083 = vmatprep.subr.mxu0 0.0
          %6084 = vmatpush2.msra.mxu0 0.0
          %6085 = vmatprep.subr.mxu0 0.0
          %6086 = vmatpush2.msra.mxu0 0.0
          %6087 = vmatprep.subr.mxu0 0.0
          %6088 = vmatpush2.msra.mxu0 0.0
          %6089 = vmatprep.subr.mxu0 0.0
          %6090 = vmatpush2.msra.mxu0 0.0
          %6091 = vmatprep.subr.mxu0 0.0
          %6092 = vmatpush2.msra.mxu0 0.0
          %6093 = vmatprep.subr.mxu0 0.0
          %6094 = vmatpush2.msra.mxu0 0.0
          %6095 = vmatprep.subr.mxu0 0.0
          %6096 = vmatpush2.msra.mxu0 0.0
          %6097 = vmatprep.subr.mxu0 0.0
          %6098 = vmatpush2.msra.mxu0 0.0
          %6099 = vmatprep.subr.mxu0 0.0
          %6100 = vmatpush2.msra.mxu0 0.0
          %6101 = vmatprep.subr.mxu0 0.0
          %6102 = vmatpush2.msra.mxu0 0.0
          %6103 = vmatprep.subr.mxu0 0.0
          %6104 = vmatpush2.msra.mxu0 0.0
          %6105 = vmatprep.mubr.f32.mxu0 0.0
          %v6106 = vand.u32 %v5736, 4294901760
          %6107 = vmatmul.mubr.f32.gmra.mxu0 %v6106
          %v6108 = vpop.f32.mrf.mxu0
          %v6109 = vadd.f32 %v6035, %v6108
          %v6110 = vpop.f32.mrf.mxu0
          %6111 = vdwg.mxu0
          %6112 = vmatprep.subr.mxu0 0.0
          %6113 = vmatpush1.msra.mxu0 0.0
          %6114 = vmatprep.subr.mxu0 0.0
          %6115 = vmatpush1.msra.mxu0 0.0
          %6116 = vmatprep.subr.mxu0 0.0
          %6117 = vmatpush1.msra.mxu0 0.0
          %6118 = vmatprep.subr.mxu0 0.0
          %6119 = vmatpush1.msra.mxu0 0.0
          %6120 = vmatprep.subr.mxu0 0.0
          %6121 = vmatpush1.msra.mxu0 0.0
          %6122 = vmatprep.subr.mxu0 0.0
          %6123 = vmatpush1.msra.mxu0 0.0
          %6124 = vmatprep.subr.mxu0 0.0
          %6125 = vmatpush1.msra.mxu0 0.0
          %6126 = vmatprep.subr.mxu0 0.0
          %6127 = vmatpush1.msra.mxu0 0.0
          %6128 = vmatprep.subr.mxu0 0.0
          %6129 = vmatpush1.msra.mxu0 0.0
          %6130 = vmatprep.subr.mxu0 0.0
          %6131 = vmatpush1.msra.mxu0 0.0
          %6132 = vmatprep.subr.mxu0 0.0
          %6133 = vmatpush1.msra.mxu0 0.0
          %6134 = vmatprep.subr.mxu0 0.0
          %6135 = vmatpush1.msra.mxu0 0.0
          %6136 = vmatprep.subr.mxu0 0.0
          %6137 = vmatpush1.msra.mxu0 0.0
          %6138 = vmatprep.subr.mxu0 0.0
          %6139 = vmatpush1.msra.mxu0 0.0
          %6140 = vmatprep.subr.mxu0 0.0
          %6141 = vmatpush1.msra.mxu0 0.0
          %6142 = vmatprep.subr.mxu0 0.0
          %v6143 = vand.u32 %v5734, 4294901760
          %6144 = vmatpush1.msra.mxu0 %v6143
          %6145 = vmatprep.subr.mxu0 0.0
          %6146 = vmatpush2.msra.mxu0 0.0
          %6147 = vmatprep.subr.mxu0 0.0
          %6148 = vmatpush2.msra.mxu0 0.0
          %6149 = vmatprep.subr.mxu0 0.0
          %6150 = vmatpush2.msra.mxu0 0.0
          %6151 = vmatprep.subr.mxu0 0.0
          %6152 = vmatpush2.msra.mxu0 0.0
          %6153 = vmatprep.subr.mxu0 0.0
          %6154 = vmatpush2.msra.mxu0 0.0
          %6155 = vmatprep.subr.mxu0 0.0
          %6156 = vmatpush2.msra.mxu0 0.0
          %6157 = vmatprep.subr.mxu0 0.0
          %6158 = vmatpush2.msra.mxu0 0.0
          %6159 = vmatprep.subr.mxu0 0.0
          %6160 = vmatpush2.msra.mxu0 0.0
          %6161 = vmatprep.subr.mxu0 0.0
          %6162 = vmatpush2.msra.mxu0 0.0
          %6163 = vmatprep.subr.mxu0 0.0
          %6164 = vmatpush2.msra.mxu0 0.0
          %6165 = vmatprep.subr.mxu0 0.0
          %6166 = vmatpush2.msra.mxu0 0.0
          %6167 = vmatprep.subr.mxu0 0.0
          %6168 = vmatpush2.msra.mxu0 0.0
          %6169 = vmatprep.subr.mxu0 0.0
          %6170 = vmatpush2.msra.mxu0 0.0
          %6171 = vmatprep.subr.mxu0 0.0
          %6172 = vmatpush2.msra.mxu0 0.0
          %6173 = vmatprep.subr.mxu0 0.0
          %6174 = vmatpush2.msra.mxu0 0.0
          %6175 = vmatprep.subr.mxu0 0.0
          %6176 = vmatpush2.msra.mxu0 0.0
          %6177 = vmatprep.mubr.f32.mxu0 0.0
          %v6178 = vand.u32 %v5736, 4294901760
          %6179 = vmatmul.mubr.f32.gmra.mxu0 %v6178
          %v6180 = vpop.f32.mrf.mxu0
          %v6181 = vadd.f32 %v6109, %v6180
          %v6182 = vpop.f32.mrf.mxu0
          %6183 = vdwg.mxu0
          %6185 = vset.pattern.permute.xlu0 0
          %6186 = vperm.xlu0 %6185, %v354
          %v6187 = vpop.permute.xlu0 %6186
          %v6189 = vadd.f32 %v5731, %v6187
          %v6190 = vlog2.pop %v6181
          %v6191 = vmul.f32 %v6190, 0.6931472
          %v6192 = vadd.f32 %v6189, %v6191
          %v6193 = vadd.f32 %v6192, %v5232
          %vm6194 = vcmp.gt.f32.partialorder %v5235, 0.5
          %v6195 = vsel %vm6194, 1, 0
          %v6196 = vlaneseq
          %v6197 = vshrl.u32 %v6196, 7
          %v6198 = vsub.s32 1, %v6197
          %v6199 = vrot.slane %v6195, %v6198
          %vm6200 = vcmp.eq.s32.totalorder %v6199, 1
          %v6201 = vsel %vm6200, %v6193, %v5725
          %6202 = vst [vmem:[#allocation2] sm:$0xff] %v6201
        $region104: #{tpu_custom_call.1} parent=47 // pred_fallthru
          _
        %6203 = vst [vmem:[#allocation4] sm:$0xff] %v5242
        %s6204 = sadd.s32 %s362, 6
        %s6205 = scalar_lea.vmem %s308, 48 [#allocation5]
        %v6206 = vld [vmem:[%s6205] sm:$0xff]
        %s6207 = scalar_lea.vmem %s317, 12 [#allocation8]
        %v6208 = vld [vmem:[%s6207] sm:$0x3]
        %v6209 = vcvt.s32.f32 %v6208
        %v6210 = vlaneseq
        %v6211 = vshrl.u32 %v6210, 7
        %v6212 = vsub.s32 0, %v6211
        %v6213 = vrot.slane %v6208, %v6212
        %vm6214 = vcmp.eq.s32.totalorder %v361, %v6213
        %v6215 = vsel %vm6214, 1, 0
        %v6216 = vcvt.s32.f32 %v6215
        %p6217 = scmp.eq.s32.totalorder %s6204, 0
        // Predicated region
        $region105: #{tpu_custom_call.1} parent=47 // pred_check
          %p6218 = pneg %p6217
        $region106: #{tpu_custom_call.1} parent=47 // pred_check_branch
          %6220 = sbr.rel (%p6218) target = $region108
        $region107: #{tpu_custom_call.1} parent=47 // pred_region
          %6222 = vset.pattern.permute.xlu0 0
          %6223 = vperm.xlu0 %6222, %v350
          %v6224 = vpop.permute.xlu0 %6223
          %v6226 = vadd.f32 %v6224, %v6206
          %v6227 = vadd.f32 %v6226, %v358
          %v6228 = vmul.f32 %v6216, %v6227
          %6229 = vst [vmem:[#allocation3] sm:$0xff] %v6228
          %6230 = vst [vmem:[#allocation2] sm:$0xff] %v6226
        $region108: #{tpu_custom_call.1} parent=47 // pred_fallthru
          _
        %p6231 = scmp.gt.s32.totalorder %s6204, 0
        // Predicated region
        $region109: #{tpu_custom_call.1} parent=47 // pred_check
          %p6232 = pneg %p6231
        $region110: #{tpu_custom_call.1} parent=47 // pred_check_branch
          %6234 = sbr.rel (%p6232) target = $region112
        $region111: #{tpu_custom_call.1} parent=47 // pred_region
          %v6235 = vld [vmem:[#allocation4] sm:$0xff]
          %vm6236 = vcmask 64512
          %v6238 = vsel %vm6236, %v352, 0
          %6240 = vmatprep.subr.mxu0 0.0
          %6241 = vmatpush1.msra.mxu0 0.0
          %6242 = vmatprep.subr.mxu0 0.0
          %6243 = vmatpush1.msra.mxu0 0.0
          %6244 = vmatprep.subr.mxu0 0.0
          %6245 = vmatpush1.msra.mxu0 0.0
          %6246 = vmatprep.subr.mxu0 0.0
          %6247 = vmatpush1.msra.mxu0 0.0
          %6248 = vmatprep.subr.mxu0 0.0
          %6249 = vmatpush1.msra.mxu0 0.0
          %6250 = vmatprep.subr.mxu0 0.0
          %6251 = vmatpush1.msra.mxu0 0.0
          %6252 = vmatprep.subr.mxu0 0.0
          %6253 = vmatpush1.msra.mxu0 0.0
          %6254 = vmatprep.subr.mxu0 0.0
          %6255 = vmatpush1.msra.mxu0 0.0
          %6256 = vmatprep.subr.mxu0 0.0
          %6257 = vmatpush1.msra.mxu0 0.0
          %6258 = vmatprep.subr.mxu0 0.0
          %6259 = vmatpush1.msra.mxu0 0.0
          %6260 = vmatprep.subr.mxu0 0.0
          %6261 = vmatpush1.msra.mxu0 0.0
          %6262 = vmatprep.subr.mxu0 0.0
          %6263 = vmatpush1.msra.mxu0 0.0
          %6264 = vmatprep.subr.mxu0 0.0
          %6265 = vmatpush1.msra.mxu0 0.0
          %6266 = vmatprep.subr.mxu0 0.0
          %6267 = vmatpush1.msra.mxu0 0.0
          %6268 = vmatprep.subr.mxu0 0.0
          %6269 = vmatpush1.msra.mxu0 0.0
          %6270 = vmatprep.subr.mxu0 0.0
          %v6271 = vand.u32 %v6235, 4294901760
          %6272 = vmatpush1.msra.mxu0 %v6271
          %6273 = vmatprep.subr.mxu0 0.0
          %6274 = vmatpush2.msra.mxu0 0.0
          %6275 = vmatprep.subr.mxu0 0.0
          %6276 = vmatpush2.msra.mxu0 0.0
          %6277 = vmatprep.subr.mxu0 0.0
          %6278 = vmatpush2.msra.mxu0 0.0
          %6279 = vmatprep.subr.mxu0 0.0
          %6280 = vmatpush2.msra.mxu0 0.0
          %6281 = vmatprep.subr.mxu0 0.0
          %6282 = vmatpush2.msra.mxu0 0.0
          %6283 = vmatprep.subr.mxu0 0.0
          %6284 = vmatpush2.msra.mxu0 0.0
          %6285 = vmatprep.subr.mxu0 0.0
          %6286 = vmatpush2.msra.mxu0 0.0
          %6287 = vmatprep.subr.mxu0 0.0
          %6288 = vmatpush2.msra.mxu0 0.0
          %6289 = vmatprep.subr.mxu0 0.0
          %6290 = vmatpush2.msra.mxu0 0.0
          %6291 = vmatprep.subr.mxu0 0.0
          %6292 = vmatpush2.msra.mxu0 0.0
          %6293 = vmatprep.subr.mxu0 0.0
          %6294 = vmatpush2.msra.mxu0 0.0
          %6295 = vmatprep.subr.mxu0 0.0
          %6296 = vmatpush2.msra.mxu0 0.0
          %6297 = vmatprep.subr.mxu0 0.0
          %6298 = vmatpush2.msra.mxu0 0.0
          %6299 = vmatprep.subr.mxu0 0.0
          %6300 = vmatpush2.msra.mxu0 0.0
          %6301 = vmatprep.subr.mxu0 0.0
          %6302 = vmatpush2.msra.mxu0 0.0
          %6303 = vmatprep.subr.mxu0 0.0
          %6304 = vmatpush2.msra.mxu0 0.0
          %6305 = vmatprep.mubr.f32.mxu0 0.0
          %v6306 = vand.u32 %v6238, 4294901760
          %v6307 = vsub.f32 %v6238, %v6306
          %v6308 = vand.u32 %v6307, 4294901760
          %v6309 = vsub.f32 %v6307, %v6308
          %v6310 = vand.u32 %v6309, 4294901760
          %6311 = vmatmul.mubr.f32.gmra.mxu0 %v6310
          %v6312 = vpop.f32.mrf.mxu0
          %v6313 = vadd.f32 0.0, %v6312
          %v6314 = vpop.f32.mrf.mxu0
          %6315 = vdwg.mxu0
          %6316 = vmatprep.subr.mxu0 0.0
          %6317 = vmatpush1.msra.mxu0 0.0
          %6318 = vmatprep.subr.mxu0 0.0
          %6319 = vmatpush1.msra.mxu0 0.0
          %6320 = vmatprep.subr.mxu0 0.0
          %6321 = vmatpush1.msra.mxu0 0.0
          %6322 = vmatprep.subr.mxu0 0.0
          %6323 = vmatpush1.msra.mxu0 0.0
          %6324 = vmatprep.subr.mxu0 0.0
          %6325 = vmatpush1.msra.mxu0 0.0
          %6326 = vmatprep.subr.mxu0 0.0
          %6327 = vmatpush1.msra.mxu0 0.0
          %6328 = vmatprep.subr.mxu0 0.0
          %6329 = vmatpush1.msra.mxu0 0.0
          %6330 = vmatprep.subr.mxu0 0.0
          %6331 = vmatpush1.msra.mxu0 0.0
          %6332 = vmatprep.subr.mxu0 0.0
          %6333 = vmatpush1.msra.mxu0 0.0
          %6334 = vmatprep.subr.mxu0 0.0
          %6335 = vmatpush1.msra.mxu0 0.0
          %6336 = vmatprep.subr.mxu0 0.0
          %6337 = vmatpush1.msra.mxu0 0.0
          %6338 = vmatprep.subr.mxu0 0.0
          %6339 = vmatpush1.msra.mxu0 0.0
          %6340 = vmatprep.subr.mxu0 0.0
          %6341 = vmatpush1.msra.mxu0 0.0
          %6342 = vmatprep.subr.mxu0 0.0
          %6343 = vmatpush1.msra.mxu0 0.0
          %6344 = vmatprep.subr.mxu0 0.0
          %6345 = vmatpush1.msra.mxu0 0.0
          %6346 = vmatprep.subr.mxu0 0.0
          %v6347 = vand.u32 %v6235, 4294901760
          %v6348 = vsub.f32 %v6235, %v6347
          %v6349 = vand.u32 %v6348, 4294901760
          %v6350 = vsub.f32 %v6348, %v6349
          %v6351 = vand.u32 %v6350, 4294901760
          %6352 = vmatpush1.msra.mxu0 %v6351
          %6353 = vmatprep.subr.mxu0 0.0
          %6354 = vmatpush2.msra.mxu0 0.0
          %6355 = vmatprep.subr.mxu0 0.0
          %6356 = vmatpush2.msra.mxu0 0.0
          %6357 = vmatprep.subr.mxu0 0.0
          %6358 = vmatpush2.msra.mxu0 0.0
          %6359 = vmatprep.subr.mxu0 0.0
          %6360 = vmatpush2.msra.mxu0 0.0
          %6361 = vmatprep.subr.mxu0 0.0
          %6362 = vmatpush2.msra.mxu0 0.0
          %6363 = vmatprep.subr.mxu0 0.0
          %6364 = vmatpush2.msra.mxu0 0.0
          %6365 = vmatprep.subr.mxu0 0.0
          %6366 = vmatpush2.msra.mxu0 0.0
          %6367 = vmatprep.subr.mxu0 0.0
          %6368 = vmatpush2.msra.mxu0 0.0
          %6369 = vmatprep.subr.mxu0 0.0
          %6370 = vmatpush2.msra.mxu0 0.0
          %6371 = vmatprep.subr.mxu0 0.0
          %6372 = vmatpush2.msra.mxu0 0.0
          %6373 = vmatprep.subr.mxu0 0.0
          %6374 = vmatpush2.msra.mxu0 0.0
          %6375 = vmatprep.subr.mxu0 0.0
          %6376 = vmatpush2.msra.mxu0 0.0
          %6377 = vmatprep.subr.mxu0 0.0
          %6378 = vmatpush2.msra.mxu0 0.0
          %6379 = vmatprep.subr.mxu0 0.0
          %6380 = vmatpush2.msra.mxu0 0.0
          %6381 = vmatprep.subr.mxu0 0.0
          %6382 = vmatpush2.msra.mxu0 0.0
          %6383 = vmatprep.subr.mxu0 0.0
          %6384 = vmatpush2.msra.mxu0 0.0
          %6385 = vmatprep.mubr.f32.mxu0 0.0
          %v6386 = vand.u32 %v6238, 4294901760
          %6387 = vmatmul.mubr.f32.gmra.mxu0 %v6386
          %v6388 = vpop.f32.mrf.mxu0
          %v6389 = vadd.f32 %v6313, %v6388
          %v6390 = vpop.f32.mrf.mxu0
          %6391 = vdwg.mxu0
          %6392 = vmatprep.subr.mxu0 0.0
          %6393 = vmatpush1.msra.mxu0 0.0
          %6394 = vmatprep.subr.mxu0 0.0
          %6395 = vmatpush1.msra.mxu0 0.0
          %6396 = vmatprep.subr.mxu0 0.0
          %6397 = vmatpush1.msra.mxu0 0.0
          %6398 = vmatprep.subr.mxu0 0.0
          %6399 = vmatpush1.msra.mxu0 0.0
          %6400 = vmatprep.subr.mxu0 0.0
          %6401 = vmatpush1.msra.mxu0 0.0
          %6402 = vmatprep.subr.mxu0 0.0
          %6403 = vmatpush1.msra.mxu0 0.0
          %6404 = vmatprep.subr.mxu0 0.0
          %6405 = vmatpush1.msra.mxu0 0.0
          %6406 = vmatprep.subr.mxu0 0.0
          %6407 = vmatpush1.msra.mxu0 0.0
          %6408 = vmatprep.subr.mxu0 0.0
          %6409 = vmatpush1.msra.mxu0 0.0
          %6410 = vmatprep.subr.mxu0 0.0
          %6411 = vmatpush1.msra.mxu0 0.0
          %6412 = vmatprep.subr.mxu0 0.0
          %6413 = vmatpush1.msra.mxu0 0.0
          %6414 = vmatprep.subr.mxu0 0.0
          %6415 = vmatpush1.msra.mxu0 0.0
          %6416 = vmatprep.subr.mxu0 0.0
          %6417 = vmatpush1.msra.mxu0 0.0
          %6418 = vmatprep.subr.mxu0 0.0
          %6419 = vmatpush1.msra.mxu0 0.0
          %6420 = vmatprep.subr.mxu0 0.0
          %6421 = vmatpush1.msra.mxu0 0.0
          %6422 = vmatprep.subr.mxu0 0.0
          %v6423 = vand.u32 %v6235, 4294901760
          %v6424 = vsub.f32 %v6235, %v6423
          %6425 = vmatpush1.msra.mxu0 %v6424
          %6426 = vmatprep.subr.mxu0 0.0
          %6427 = vmatpush2.msra.mxu0 0.0
          %6428 = vmatprep.subr.mxu0 0.0
          %6429 = vmatpush2.msra.mxu0 0.0
          %6430 = vmatprep.subr.mxu0 0.0
          %6431 = vmatpush2.msra.mxu0 0.0
          %6432 = vmatprep.subr.mxu0 0.0
          %6433 = vmatpush2.msra.mxu0 0.0
          %6434 = vmatprep.subr.mxu0 0.0
          %6435 = vmatpush2.msra.mxu0 0.0
          %6436 = vmatprep.subr.mxu0 0.0
          %6437 = vmatpush2.msra.mxu0 0.0
          %6438 = vmatprep.subr.mxu0 0.0
          %6439 = vmatpush2.msra.mxu0 0.0
          %6440 = vmatprep.subr.mxu0 0.0
          %6441 = vmatpush2.msra.mxu0 0.0
          %6442 = vmatprep.subr.mxu0 0.0
          %6443 = vmatpush2.msra.mxu0 0.0
          %6444 = vmatprep.subr.mxu0 0.0
          %6445 = vmatpush2.msra.mxu0 0.0
          %6446 = vmatprep.subr.mxu0 0.0
          %6447 = vmatpush2.msra.mxu0 0.0
          %6448 = vmatprep.subr.mxu0 0.0
          %6449 = vmatpush2.msra.mxu0 0.0
          %6450 = vmatprep.subr.mxu0 0.0
          %6451 = vmatpush2.msra.mxu0 0.0
          %6452 = vmatprep.subr.mxu0 0.0
          %6453 = vmatpush2.msra.mxu0 0.0
          %6454 = vmatprep.subr.mxu0 0.0
          %6455 = vmatpush2.msra.mxu0 0.0
          %6456 = vmatprep.subr.mxu0 0.0
          %6457 = vmatpush2.msra.mxu0 0.0
          %6458 = vmatprep.mubr.f32.mxu0 0.0
          %v6459 = vand.u32 %v6238, 4294901760
          %v6460 = vsub.f32 %v6238, %v6459
          %6461 = vmatmul.mubr.f32.gmra.mxu0 %v6460
          %v6462 = vpop.f32.mrf.mxu0
          %v6463 = vadd.f32 %v6389, %v6462
          %v6464 = vpop.f32.mrf.mxu0
          %6465 = vdwg.mxu0
          %6466 = vmatprep.subr.mxu0 0.0
          %6467 = vmatpush1.msra.mxu0 0.0
          %6468 = vmatprep.subr.mxu0 0.0
          %6469 = vmatpush1.msra.mxu0 0.0
          %6470 = vmatprep.subr.mxu0 0.0
          %6471 = vmatpush1.msra.mxu0 0.0
          %6472 = vmatprep.subr.mxu0 0.0
          %6473 = vmatpush1.msra.mxu0 0.0
          %6474 = vmatprep.subr.mxu0 0.0
          %6475 = vmatpush1.msra.mxu0 0.0
          %6476 = vmatprep.subr.mxu0 0.0
          %6477 = vmatpush1.msra.mxu0 0.0
          %6478 = vmatprep.subr.mxu0 0.0
          %6479 = vmatpush1.msra.mxu0 0.0
          %6480 = vmatprep.subr.mxu0 0.0
          %6481 = vmatpush1.msra.mxu0 0.0
          %6482 = vmatprep.subr.mxu0 0.0
          %6483 = vmatpush1.msra.mxu0 0.0
          %6484 = vmatprep.subr.mxu0 0.0
          %6485 = vmatpush1.msra.mxu0 0.0
          %6486 = vmatprep.subr.mxu0 0.0
          %6487 = vmatpush1.msra.mxu0 0.0
          %6488 = vmatprep.subr.mxu0 0.0
          %6489 = vmatpush1.msra.mxu0 0.0
          %6490 = vmatprep.subr.mxu0 0.0
          %6491 = vmatpush1.msra.mxu0 0.0
          %6492 = vmatprep.subr.mxu0 0.0
          %6493 = vmatpush1.msra.mxu0 0.0
          %6494 = vmatprep.subr.mxu0 0.0
          %6495 = vmatpush1.msra.mxu0 0.0
          %6496 = vmatprep.subr.mxu0 0.0
          %v6497 = vand.u32 %v6235, 4294901760
          %6498 = vmatpush1.msra.mxu0 %v6497
          %6499 = vmatprep.subr.mxu0 0.0
          %6500 = vmatpush2.msra.mxu0 0.0
          %6501 = vmatprep.subr.mxu0 0.0
          %6502 = vmatpush2.msra.mxu0 0.0
          %6503 = vmatprep.subr.mxu0 0.0
          %6504 = vmatpush2.msra.mxu0 0.0
          %6505 = vmatprep.subr.mxu0 0.0
          %6506 = vmatpush2.msra.mxu0 0.0
          %6507 = vmatprep.subr.mxu0 0.0
          %6508 = vmatpush2.msra.mxu0 0.0
          %6509 = vmatprep.subr.mxu0 0.0
          %6510 = vmatpush2.msra.mxu0 0.0
          %6511 = vmatprep.subr.mxu0 0.0
          %6512 = vmatpush2.msra.mxu0 0.0
          %6513 = vmatprep.subr.mxu0 0.0
          %6514 = vmatpush2.msra.mxu0 0.0
          %6515 = vmatprep.subr.mxu0 0.0
          %6516 = vmatpush2.msra.mxu0 0.0
          %6517 = vmatprep.subr.mxu0 0.0
          %6518 = vmatpush2.msra.mxu0 0.0
          %6519 = vmatprep.subr.mxu0 0.0
          %6520 = vmatpush2.msra.mxu0 0.0
          %6521 = vmatprep.subr.mxu0 0.0
          %6522 = vmatpush2.msra.mxu0 0.0
          %6523 = vmatprep.subr.mxu0 0.0
          %6524 = vmatpush2.msra.mxu0 0.0
          %6525 = vmatprep.subr.mxu0 0.0
          %6526 = vmatpush2.msra.mxu0 0.0
          %6527 = vmatprep.subr.mxu0 0.0
          %6528 = vmatpush2.msra.mxu0 0.0
          %6529 = vmatprep.subr.mxu0 0.0
          %6530 = vmatpush2.msra.mxu0 0.0
          %6531 = vmatprep.mubr.f32.mxu0 0.0
          %v6532 = vand.u32 %v6238, 4294901760
          %v6533 = vsub.f32 %v6238, %v6532
          %v6534 = vand.u32 %v6533, 4294901760
          %6535 = vmatmul.mubr.f32.gmra.mxu0 %v6534
          %v6536 = vpop.f32.mrf.mxu0
          %v6537 = vadd.f32 %v6463, %v6536
          %v6538 = vpop.f32.mrf.mxu0
          %6539 = vdwg.mxu0
          %6540 = vmatprep.subr.mxu0 0.0
          %6541 = vmatpush1.msra.mxu0 0.0
          %6542 = vmatprep.subr.mxu0 0.0
          %6543 = vmatpush1.msra.mxu0 0.0
          %6544 = vmatprep.subr.mxu0 0.0
          %6545 = vmatpush1.msra.mxu0 0.0
          %6546 = vmatprep.subr.mxu0 0.0
          %6547 = vmatpush1.msra.mxu0 0.0
          %6548 = vmatprep.subr.mxu0 0.0
          %6549 = vmatpush1.msra.mxu0 0.0
          %6550 = vmatprep.subr.mxu0 0.0
          %6551 = vmatpush1.msra.mxu0 0.0
          %6552 = vmatprep.subr.mxu0 0.0
          %6553 = vmatpush1.msra.mxu0 0.0
          %6554 = vmatprep.subr.mxu0 0.0
          %6555 = vmatpush1.msra.mxu0 0.0
          %6556 = vmatprep.subr.mxu0 0.0
          %6557 = vmatpush1.msra.mxu0 0.0
          %6558 = vmatprep.subr.mxu0 0.0
          %6559 = vmatpush1.msra.mxu0 0.0
          %6560 = vmatprep.subr.mxu0 0.0
          %6561 = vmatpush1.msra.mxu0 0.0
          %6562 = vmatprep.subr.mxu0 0.0
          %6563 = vmatpush1.msra.mxu0 0.0
          %6564 = vmatprep.subr.mxu0 0.0
          %6565 = vmatpush1.msra.mxu0 0.0
          %6566 = vmatprep.subr.mxu0 0.0
          %6567 = vmatpush1.msra.mxu0 0.0
          %6568 = vmatprep.subr.mxu0 0.0
          %6569 = vmatpush1.msra.mxu0 0.0
          %6570 = vmatprep.subr.mxu0 0.0
          %v6571 = vand.u32 %v6235, 4294901760
          %v6572 = vsub.f32 %v6235, %v6571
          %v6573 = vand.u32 %v6572, 4294901760
          %6574 = vmatpush1.msra.mxu0 %v6573
          %6575 = vmatprep.subr.mxu0 0.0
          %6576 = vmatpush2.msra.mxu0 0.0
          %6577 = vmatprep.subr.mxu0 0.0
          %6578 = vmatpush2.msra.mxu0 0.0
          %6579 = vmatprep.subr.mxu0 0.0
          %6580 = vmatpush2.msra.mxu0 0.0
          %6581 = vmatprep.subr.mxu0 0.0
          %6582 = vmatpush2.msra.mxu0 0.0
          %6583 = vmatprep.subr.mxu0 0.0
          %6584 = vmatpush2.msra.mxu0 0.0
          %6585 = vmatprep.subr.mxu0 0.0
          %6586 = vmatpush2.msra.mxu0 0.0
          %6587 = vmatprep.subr.mxu0 0.0
          %6588 = vmatpush2.msra.mxu0 0.0
          %6589 = vmatprep.subr.mxu0 0.0
          %6590 = vmatpush2.msra.mxu0 0.0
          %6591 = vmatprep.subr.mxu0 0.0
          %6592 = vmatpush2.msra.mxu0 0.0
          %6593 = vmatprep.subr.mxu0 0.0
          %6594 = vmatpush2.msra.mxu0 0.0
          %6595 = vmatprep.subr.mxu0 0.0
          %6596 = vmatpush2.msra.mxu0 0.0
          %6597 = vmatprep.subr.mxu0 0.0
          %6598 = vmatpush2.msra.mxu0 0.0
          %6599 = vmatprep.subr.mxu0 0.0
          %6600 = vmatpush2.msra.mxu0 0.0
          %6601 = vmatprep.subr.mxu0 0.0
          %6602 = vmatpush2.msra.mxu0 0.0
          %6603 = vmatprep.subr.mxu0 0.0
          %6604 = vmatpush2.msra.mxu0 0.0
          %6605 = vmatprep.subr.mxu0 0.0
          %6606 = vmatpush2.msra.mxu0 0.0
          %6607 = vmatprep.mubr.f32.mxu0 0.0
          %v6608 = vand.u32 %v6238, 4294901760
          %6609 = vmatmul.mubr.f32.gmra.mxu0 %v6608
          %v6610 = vpop.f32.mrf.mxu0
          %v6611 = vadd.f32 %v6537, %v6610
          %v6612 = vpop.f32.mrf.mxu0
          %6613 = vdwg.mxu0
          %6614 = vmatprep.subr.mxu0 0.0
          %6615 = vmatpush1.msra.mxu0 0.0
          %6616 = vmatprep.subr.mxu0 0.0
          %6617 = vmatpush1.msra.mxu0 0.0
          %6618 = vmatprep.subr.mxu0 0.0
          %6619 = vmatpush1.msra.mxu0 0.0
          %6620 = vmatprep.subr.mxu0 0.0
          %6621 = vmatpush1.msra.mxu0 0.0
          %6622 = vmatprep.subr.mxu0 0.0
          %6623 = vmatpush1.msra.mxu0 0.0
          %6624 = vmatprep.subr.mxu0 0.0
          %6625 = vmatpush1.msra.mxu0 0.0
          %6626 = vmatprep.subr.mxu0 0.0
          %6627 = vmatpush1.msra.mxu0 0.0
          %6628 = vmatprep.subr.mxu0 0.0
          %6629 = vmatpush1.msra.mxu0 0.0
          %6630 = vmatprep.subr.mxu0 0.0
          %6631 = vmatpush1.msra.mxu0 0.0
          %6632 = vmatprep.subr.mxu0 0.0
          %6633 = vmatpush1.msra.mxu0 0.0
          %6634 = vmatprep.subr.mxu0 0.0
          %6635 = vmatpush1.msra.mxu0 0.0
          %6636 = vmatprep.subr.mxu0 0.0
          %6637 = vmatpush1.msra.mxu0 0.0
          %6638 = vmatprep.subr.mxu0 0.0
          %6639 = vmatpush1.msra.mxu0 0.0
          %6640 = vmatprep.subr.mxu0 0.0
          %6641 = vmatpush1.msra.mxu0 0.0
          %6642 = vmatprep.subr.mxu0 0.0
          %6643 = vmatpush1.msra.mxu0 0.0
          %6644 = vmatprep.subr.mxu0 0.0
          %v6645 = vand.u32 %v6235, 4294901760
          %6646 = vmatpush1.msra.mxu0 %v6645
          %6647 = vmatprep.subr.mxu0 0.0
          %6648 = vmatpush2.msra.mxu0 0.0
          %6649 = vmatprep.subr.mxu0 0.0
          %6650 = vmatpush2.msra.mxu0 0.0
          %6651 = vmatprep.subr.mxu0 0.0
          %6652 = vmatpush2.msra.mxu0 0.0
          %6653 = vmatprep.subr.mxu0 0.0
          %6654 = vmatpush2.msra.mxu0 0.0
          %6655 = vmatprep.subr.mxu0 0.0
          %6656 = vmatpush2.msra.mxu0 0.0
          %6657 = vmatprep.subr.mxu0 0.0
          %6658 = vmatpush2.msra.mxu0 0.0
          %6659 = vmatprep.subr.mxu0 0.0
          %6660 = vmatpush2.msra.mxu0 0.0
          %6661 = vmatprep.subr.mxu0 0.0
          %6662 = vmatpush2.msra.mxu0 0.0
          %6663 = vmatprep.subr.mxu0 0.0
          %6664 = vmatpush2.msra.mxu0 0.0
          %6665 = vmatprep.subr.mxu0 0.0
          %6666 = vmatpush2.msra.mxu0 0.0
          %6667 = vmatprep.subr.mxu0 0.0
          %6668 = vmatpush2.msra.mxu0 0.0
          %6669 = vmatprep.subr.mxu0 0.0
          %6670 = vmatpush2.msra.mxu0 0.0
          %6671 = vmatprep.subr.mxu0 0.0
          %6672 = vmatpush2.msra.mxu0 0.0
          %6673 = vmatprep.subr.mxu0 0.0
          %6674 = vmatpush2.msra.mxu0 0.0
          %6675 = vmatprep.subr.mxu0 0.0
          %6676 = vmatpush2.msra.mxu0 0.0
          %6677 = vmatprep.subr.mxu0 0.0
          %6678 = vmatpush2.msra.mxu0 0.0
          %6679 = vmatprep.mubr.f32.mxu0 0.0
          %v6680 = vand.u32 %v6238, 4294901760
          %6681 = vmatmul.mubr.f32.gmra.mxu0 %v6680
          %v6682 = vpop.f32.mrf.mxu0
          %v6683 = vadd.f32 %v6611, %v6682
          %v6684 = vpop.f32.mrf.mxu0
          %6685 = vdwg.mxu0
          %v6686 = vadd.f32 %v6206, %v6683
          %v6687 = vadd.f32 %v6686, %v358
          %v6688 = vmul.f32 %v6216, %v6687
          %v6689 = vmul.f32 %v6235, %v358
          %v6690 = vsub.f32 %v6688, %v6689
          %v6691 = vld [vmem:[#allocation3] sm:$0xff]
          %v6692 = vlaneseq
          %v6693 = vshrl.u32 %v6692, 7
          %v6694 = vsub.s32 1, %v6693
          %v6695 = vrot.slane %v6209, %v6694
          %v6696 = vmul.f32 %v6695, %v6690
          %v6697 = vadd.f32 %v6691, %v6696
          %6698 = vst [vmem:[#allocation3] sm:$0xff] %v6697
          %v6699 = vld [vmem:[#allocation2] sm:$0xff]
          %v6700 = vrot.slane %v6699, 4
          %v6701 = vmax.f32 %v6699, %v6700
          %v6702 = vrot.slane %v6701, 2
          %v6703 = vmax.f32 %v6701, %v6702
          %v6704 = vrot.slane %v6703, 1
          %v6705 = vmax.f32 %v6703, %v6704
          %v6706 = vsub.f32 %v6699, %v6705
          %v6707 = vmul.f32 %v6706, 1.442695
          %v6708 = vpow.pop %v6707
          %v6710 = vsel %vm6236, %v353, 0
          %6712 = vmatprep.subr.mxu0 0.0
          %6713 = vmatpush1.msra.mxu0 0.0
          %6714 = vmatprep.subr.mxu0 0.0
          %6715 = vmatpush1.msra.mxu0 0.0
          %6716 = vmatprep.subr.mxu0 0.0
          %6717 = vmatpush1.msra.mxu0 0.0
          %6718 = vmatprep.subr.mxu0 0.0
          %6719 = vmatpush1.msra.mxu0 0.0
          %6720 = vmatprep.subr.mxu0 0.0
          %6721 = vmatpush1.msra.mxu0 0.0
          %6722 = vmatprep.subr.mxu0 0.0
          %6723 = vmatpush1.msra.mxu0 0.0
          %6724 = vmatprep.subr.mxu0 0.0
          %6725 = vmatpush1.msra.mxu0 0.0
          %6726 = vmatprep.subr.mxu0 0.0
          %6727 = vmatpush1.msra.mxu0 0.0
          %6728 = vmatprep.subr.mxu0 0.0
          %6729 = vmatpush1.msra.mxu0 0.0
          %6730 = vmatprep.subr.mxu0 0.0
          %6731 = vmatpush1.msra.mxu0 0.0
          %6732 = vmatprep.subr.mxu0 0.0
          %6733 = vmatpush1.msra.mxu0 0.0
          %6734 = vmatprep.subr.mxu0 0.0
          %6735 = vmatpush1.msra.mxu0 0.0
          %6736 = vmatprep.subr.mxu0 0.0
          %6737 = vmatpush1.msra.mxu0 0.0
          %6738 = vmatprep.subr.mxu0 0.0
          %6739 = vmatpush1.msra.mxu0 0.0
          %6740 = vmatprep.subr.mxu0 0.0
          %6741 = vmatpush1.msra.mxu0 0.0
          %6742 = vmatprep.subr.mxu0 0.0
          %v6743 = vand.u32 %v6708, 4294901760
          %6744 = vmatpush1.msra.mxu0 %v6743
          %6745 = vmatprep.subr.mxu0 0.0
          %6746 = vmatpush2.msra.mxu0 0.0
          %6747 = vmatprep.subr.mxu0 0.0
          %6748 = vmatpush2.msra.mxu0 0.0
          %6749 = vmatprep.subr.mxu0 0.0
          %6750 = vmatpush2.msra.mxu0 0.0
          %6751 = vmatprep.subr.mxu0 0.0
          %6752 = vmatpush2.msra.mxu0 0.0
          %6753 = vmatprep.subr.mxu0 0.0
          %6754 = vmatpush2.msra.mxu0 0.0
          %6755 = vmatprep.subr.mxu0 0.0
          %6756 = vmatpush2.msra.mxu0 0.0
          %6757 = vmatprep.subr.mxu0 0.0
          %6758 = vmatpush2.msra.mxu0 0.0
          %6759 = vmatprep.subr.mxu0 0.0
          %6760 = vmatpush2.msra.mxu0 0.0
          %6761 = vmatprep.subr.mxu0 0.0
          %6762 = vmatpush2.msra.mxu0 0.0
          %6763 = vmatprep.subr.mxu0 0.0
          %6764 = vmatpush2.msra.mxu0 0.0
          %6765 = vmatprep.subr.mxu0 0.0
          %6766 = vmatpush2.msra.mxu0 0.0
          %6767 = vmatprep.subr.mxu0 0.0
          %6768 = vmatpush2.msra.mxu0 0.0
          %6769 = vmatprep.subr.mxu0 0.0
          %6770 = vmatpush2.msra.mxu0 0.0
          %6771 = vmatprep.subr.mxu0 0.0
          %6772 = vmatpush2.msra.mxu0 0.0
          %6773 = vmatprep.subr.mxu0 0.0
          %6774 = vmatpush2.msra.mxu0 0.0
          %6775 = vmatprep.subr.mxu0 0.0
          %6776 = vmatpush2.msra.mxu0 0.0
          %6777 = vmatprep.mubr.f32.mxu0 0.0
          %v6778 = vand.u32 %v6710, 4294901760
          %v6779 = vsub.f32 %v6710, %v6778
          %v6780 = vand.u32 %v6779, 4294901760
          %v6781 = vsub.f32 %v6779, %v6780
          %v6782 = vand.u32 %v6781, 4294901760
          %6783 = vmatmul.mubr.f32.gmra.mxu0 %v6782
          %v6784 = vpop.f32.mrf.mxu0
          %v6785 = vadd.f32 0.0, %v6784
          %v6786 = vpop.f32.mrf.mxu0
          %6787 = vdwg.mxu0
          %6788 = vmatprep.subr.mxu0 0.0
          %6789 = vmatpush1.msra.mxu0 0.0
          %6790 = vmatprep.subr.mxu0 0.0
          %6791 = vmatpush1.msra.mxu0 0.0
          %6792 = vmatprep.subr.mxu0 0.0
          %6793 = vmatpush1.msra.mxu0 0.0
          %6794 = vmatprep.subr.mxu0 0.0
          %6795 = vmatpush1.msra.mxu0 0.0
          %6796 = vmatprep.subr.mxu0 0.0
          %6797 = vmatpush1.msra.mxu0 0.0
          %6798 = vmatprep.subr.mxu0 0.0
          %6799 = vmatpush1.msra.mxu0 0.0
          %6800 = vmatprep.subr.mxu0 0.0
          %6801 = vmatpush1.msra.mxu0 0.0
          %6802 = vmatprep.subr.mxu0 0.0
          %6803 = vmatpush1.msra.mxu0 0.0
          %6804 = vmatprep.subr.mxu0 0.0
          %6805 = vmatpush1.msra.mxu0 0.0
          %6806 = vmatprep.subr.mxu0 0.0
          %6807 = vmatpush1.msra.mxu0 0.0
          %6808 = vmatprep.subr.mxu0 0.0
          %6809 = vmatpush1.msra.mxu0 0.0
          %6810 = vmatprep.subr.mxu0 0.0
          %6811 = vmatpush1.msra.mxu0 0.0
          %6812 = vmatprep.subr.mxu0 0.0
          %6813 = vmatpush1.msra.mxu0 0.0
          %6814 = vmatprep.subr.mxu0 0.0
          %6815 = vmatpush1.msra.mxu0 0.0
          %6816 = vmatprep.subr.mxu0 0.0
          %6817 = vmatpush1.msra.mxu0 0.0
          %6818 = vmatprep.subr.mxu0 0.0
          %v6819 = vand.u32 %v6708, 4294901760
          %v6820 = vsub.f32 %v6708, %v6819
          %v6821 = vand.u32 %v6820, 4294901760
          %v6822 = vsub.f32 %v6820, %v6821
          %v6823 = vand.u32 %v6822, 4294901760
          %6824 = vmatpush1.msra.mxu0 %v6823
          %6825 = vmatprep.subr.mxu0 0.0
          %6826 = vmatpush2.msra.mxu0 0.0
          %6827 = vmatprep.subr.mxu0 0.0
          %6828 = vmatpush2.msra.mxu0 0.0
          %6829 = vmatprep.subr.mxu0 0.0
          %6830 = vmatpush2.msra.mxu0 0.0
          %6831 = vmatprep.subr.mxu0 0.0
          %6832 = vmatpush2.msra.mxu0 0.0
          %6833 = vmatprep.subr.mxu0 0.0
          %6834 = vmatpush2.msra.mxu0 0.0
          %6835 = vmatprep.subr.mxu0 0.0
          %6836 = vmatpush2.msra.mxu0 0.0
          %6837 = vmatprep.subr.mxu0 0.0
          %6838 = vmatpush2.msra.mxu0 0.0
          %6839 = vmatprep.subr.mxu0 0.0
          %6840 = vmatpush2.msra.mxu0 0.0
          %6841 = vmatprep.subr.mxu0 0.0
          %6842 = vmatpush2.msra.mxu0 0.0
          %6843 = vmatprep.subr.mxu0 0.0
          %6844 = vmatpush2.msra.mxu0 0.0
          %6845 = vmatprep.subr.mxu0 0.0
          %6846 = vmatpush2.msra.mxu0 0.0
          %6847 = vmatprep.subr.mxu0 0.0
          %6848 = vmatpush2.msra.mxu0 0.0
          %6849 = vmatprep.subr.mxu0 0.0
          %6850 = vmatpush2.msra.mxu0 0.0
          %6851 = vmatprep.subr.mxu0 0.0
          %6852 = vmatpush2.msra.mxu0 0.0
          %6853 = vmatprep.subr.mxu0 0.0
          %6854 = vmatpush2.msra.mxu0 0.0
          %6855 = vmatprep.subr.mxu0 0.0
          %6856 = vmatpush2.msra.mxu0 0.0
          %6857 = vmatprep.mubr.f32.mxu0 0.0
          %v6858 = vand.u32 %v6710, 4294901760
          %6859 = vmatmul.mubr.f32.gmra.mxu0 %v6858
          %v6860 = vpop.f32.mrf.mxu0
          %v6861 = vadd.f32 %v6785, %v6860
          %v6862 = vpop.f32.mrf.mxu0
          %6863 = vdwg.mxu0
          %6864 = vmatprep.subr.mxu0 0.0
          %6865 = vmatpush1.msra.mxu0 0.0
          %6866 = vmatprep.subr.mxu0 0.0
          %6867 = vmatpush1.msra.mxu0 0.0
          %6868 = vmatprep.subr.mxu0 0.0
          %6869 = vmatpush1.msra.mxu0 0.0
          %6870 = vmatprep.subr.mxu0 0.0
          %6871 = vmatpush1.msra.mxu0 0.0
          %6872 = vmatprep.subr.mxu0 0.0
          %6873 = vmatpush1.msra.mxu0 0.0
          %6874 = vmatprep.subr.mxu0 0.0
          %6875 = vmatpush1.msra.mxu0 0.0
          %6876 = vmatprep.subr.mxu0 0.0
          %6877 = vmatpush1.msra.mxu0 0.0
          %6878 = vmatprep.subr.mxu0 0.0
          %6879 = vmatpush1.msra.mxu0 0.0
          %6880 = vmatprep.subr.mxu0 0.0
          %6881 = vmatpush1.msra.mxu0 0.0
          %6882 = vmatprep.subr.mxu0 0.0
          %6883 = vmatpush1.msra.mxu0 0.0
          %6884 = vmatprep.subr.mxu0 0.0
          %6885 = vmatpush1.msra.mxu0 0.0
          %6886 = vmatprep.subr.mxu0 0.0
          %6887 = vmatpush1.msra.mxu0 0.0
          %6888 = vmatprep.subr.mxu0 0.0
          %6889 = vmatpush1.msra.mxu0 0.0
          %6890 = vmatprep.subr.mxu0 0.0
          %6891 = vmatpush1.msra.mxu0 0.0
          %6892 = vmatprep.subr.mxu0 0.0
          %6893 = vmatpush1.msra.mxu0 0.0
          %6894 = vmatprep.subr.mxu0 0.0
          %v6895 = vand.u32 %v6708, 4294901760
          %v6896 = vsub.f32 %v6708, %v6895
          %6897 = vmatpush1.msra.mxu0 %v6896
          %6898 = vmatprep.subr.mxu0 0.0
          %6899 = vmatpush2.msra.mxu0 0.0
          %6900 = vmatprep.subr.mxu0 0.0
          %6901 = vmatpush2.msra.mxu0 0.0
          %6902 = vmatprep.subr.mxu0 0.0
          %6903 = vmatpush2.msra.mxu0 0.0
          %6904 = vmatprep.subr.mxu0 0.0
          %6905 = vmatpush2.msra.mxu0 0.0
          %6906 = vmatprep.subr.mxu0 0.0
          %6907 = vmatpush2.msra.mxu0 0.0
          %6908 = vmatprep.subr.mxu0 0.0
          %6909 = vmatpush2.msra.mxu0 0.0
          %6910 = vmatprep.subr.mxu0 0.0
          %6911 = vmatpush2.msra.mxu0 0.0
          %6912 = vmatprep.subr.mxu0 0.0
          %6913 = vmatpush2.msra.mxu0 0.0
          %6914 = vmatprep.subr.mxu0 0.0
          %6915 = vmatpush2.msra.mxu0 0.0
          %6916 = vmatprep.subr.mxu0 0.0
          %6917 = vmatpush2.msra.mxu0 0.0
          %6918 = vmatprep.subr.mxu0 0.0
          %6919 = vmatpush2.msra.mxu0 0.0
          %6920 = vmatprep.subr.mxu0 0.0
          %6921 = vmatpush2.msra.mxu0 0.0
          %6922 = vmatprep.subr.mxu0 0.0
          %6923 = vmatpush2.msra.mxu0 0.0
          %6924 = vmatprep.subr.mxu0 0.0
          %6925 = vmatpush2.msra.mxu0 0.0
          %6926 = vmatprep.subr.mxu0 0.0
          %6927 = vmatpush2.msra.mxu0 0.0
          %6928 = vmatprep.subr.mxu0 0.0
          %6929 = vmatpush2.msra.mxu0 0.0
          %6930 = vmatprep.mubr.f32.mxu0 0.0
          %v6931 = vand.u32 %v6710, 4294901760
          %v6932 = vsub.f32 %v6710, %v6931
          %6933 = vmatmul.mubr.f32.gmra.mxu0 %v6932
          %v6934 = vpop.f32.mrf.mxu0
          %v6935 = vadd.f32 %v6861, %v6934
          %v6936 = vpop.f32.mrf.mxu0
          %6937 = vdwg.mxu0
          %6938 = vmatprep.subr.mxu0 0.0
          %6939 = vmatpush1.msra.mxu0 0.0
          %6940 = vmatprep.subr.mxu0 0.0
          %6941 = vmatpush1.msra.mxu0 0.0
          %6942 = vmatprep.subr.mxu0 0.0
          %6943 = vmatpush1.msra.mxu0 0.0
          %6944 = vmatprep.subr.mxu0 0.0
          %6945 = vmatpush1.msra.mxu0 0.0
          %6946 = vmatprep.subr.mxu0 0.0
          %6947 = vmatpush1.msra.mxu0 0.0
          %6948 = vmatprep.subr.mxu0 0.0
          %6949 = vmatpush1.msra.mxu0 0.0
          %6950 = vmatprep.subr.mxu0 0.0
          %6951 = vmatpush1.msra.mxu0 0.0
          %6952 = vmatprep.subr.mxu0 0.0
          %6953 = vmatpush1.msra.mxu0 0.0
          %6954 = vmatprep.subr.mxu0 0.0
          %6955 = vmatpush1.msra.mxu0 0.0
          %6956 = vmatprep.subr.mxu0 0.0
          %6957 = vmatpush1.msra.mxu0 0.0
          %6958 = vmatprep.subr.mxu0 0.0
          %6959 = vmatpush1.msra.mxu0 0.0
          %6960 = vmatprep.subr.mxu0 0.0
          %6961 = vmatpush1.msra.mxu0 0.0
          %6962 = vmatprep.subr.mxu0 0.0
          %6963 = vmatpush1.msra.mxu0 0.0
          %6964 = vmatprep.subr.mxu0 0.0
          %6965 = vmatpush1.msra.mxu0 0.0
          %6966 = vmatprep.subr.mxu0 0.0
          %6967 = vmatpush1.msra.mxu0 0.0
          %6968 = vmatprep.subr.mxu0 0.0
          %v6969 = vand.u32 %v6708, 4294901760
          %6970 = vmatpush1.msra.mxu0 %v6969
          %6971 = vmatprep.subr.mxu0 0.0
          %6972 = vmatpush2.msra.mxu0 0.0
          %6973 = vmatprep.subr.mxu0 0.0
          %6974 = vmatpush2.msra.mxu0 0.0
          %6975 = vmatprep.subr.mxu0 0.0
          %6976 = vmatpush2.msra.mxu0 0.0
          %6977 = vmatprep.subr.mxu0 0.0
          %6978 = vmatpush2.msra.mxu0 0.0
          %6979 = vmatprep.subr.mxu0 0.0
          %6980 = vmatpush2.msra.mxu0 0.0
          %6981 = vmatprep.subr.mxu0 0.0
          %6982 = vmatpush2.msra.mxu0 0.0
          %6983 = vmatprep.subr.mxu0 0.0
          %6984 = vmatpush2.msra.mxu0 0.0
          %6985 = vmatprep.subr.mxu0 0.0
          %6986 = vmatpush2.msra.mxu0 0.0
          %6987 = vmatprep.subr.mxu0 0.0
          %6988 = vmatpush2.msra.mxu0 0.0
          %6989 = vmatprep.subr.mxu0 0.0
          %6990 = vmatpush2.msra.mxu0 0.0
          %6991 = vmatprep.subr.mxu0 0.0
          %6992 = vmatpush2.msra.mxu0 0.0
          %6993 = vmatprep.subr.mxu0 0.0
          %6994 = vmatpush2.msra.mxu0 0.0
          %6995 = vmatprep.subr.mxu0 0.0
          %6996 = vmatpush2.msra.mxu0 0.0
          %6997 = vmatprep.subr.mxu0 0.0
          %6998 = vmatpush2.msra.mxu0 0.0
          %6999 = vmatprep.subr.mxu0 0.0
          %7000 = vmatpush2.msra.mxu0 0.0
          %7001 = vmatprep.subr.mxu0 0.0
          %7002 = vmatpush2.msra.mxu0 0.0
          %7003 = vmatprep.mubr.f32.mxu0 0.0
          %v7004 = vand.u32 %v6710, 4294901760
          %v7005 = vsub.f32 %v6710, %v7004
          %v7006 = vand.u32 %v7005, 4294901760
          %7007 = vmatmul.mubr.f32.gmra.mxu0 %v7006
          %v7008 = vpop.f32.mrf.mxu0
          %v7009 = vadd.f32 %v6935, %v7008
          %v7010 = vpop.f32.mrf.mxu0
          %7011 = vdwg.mxu0
          %7012 = vmatprep.subr.mxu0 0.0
          %7013 = vmatpush1.msra.mxu0 0.0
          %7014 = vmatprep.subr.mxu0 0.0
          %7015 = vmatpush1.msra.mxu0 0.0
          %7016 = vmatprep.subr.mxu0 0.0
          %7017 = vmatpush1.msra.mxu0 0.0
          %7018 = vmatprep.subr.mxu0 0.0
          %7019 = vmatpush1.msra.mxu0 0.0
          %7020 = vmatprep.subr.mxu0 0.0
          %7021 = vmatpush1.msra.mxu0 0.0
          %7022 = vmatprep.subr.mxu0 0.0
          %7023 = vmatpush1.msra.mxu0 0.0
          %7024 = vmatprep.subr.mxu0 0.0
          %7025 = vmatpush1.msra.mxu0 0.0
          %7026 = vmatprep.subr.mxu0 0.0
          %7027 = vmatpush1.msra.mxu0 0.0
          %7028 = vmatprep.subr.mxu0 0.0
          %7029 = vmatpush1.msra.mxu0 0.0
          %7030 = vmatprep.subr.mxu0 0.0
          %7031 = vmatpush1.msra.mxu0 0.0
          %7032 = vmatprep.subr.mxu0 0.0
          %7033 = vmatpush1.msra.mxu0 0.0
          %7034 = vmatprep.subr.mxu0 0.0
          %7035 = vmatpush1.msra.mxu0 0.0
          %7036 = vmatprep.subr.mxu0 0.0
          %7037 = vmatpush1.msra.mxu0 0.0
          %7038 = vmatprep.subr.mxu0 0.0
          %7039 = vmatpush1.msra.mxu0 0.0
          %7040 = vmatprep.subr.mxu0 0.0
          %7041 = vmatpush1.msra.mxu0 0.0
          %7042 = vmatprep.subr.mxu0 0.0
          %v7043 = vand.u32 %v6708, 4294901760
          %v7044 = vsub.f32 %v6708, %v7043
          %v7045 = vand.u32 %v7044, 4294901760
          %7046 = vmatpush1.msra.mxu0 %v7045
          %7047 = vmatprep.subr.mxu0 0.0
          %7048 = vmatpush2.msra.mxu0 0.0
          %7049 = vmatprep.subr.mxu0 0.0
          %7050 = vmatpush2.msra.mxu0 0.0
          %7051 = vmatprep.subr.mxu0 0.0
          %7052 = vmatpush2.msra.mxu0 0.0
          %7053 = vmatprep.subr.mxu0 0.0
          %7054 = vmatpush2.msra.mxu0 0.0
          %7055 = vmatprep.subr.mxu0 0.0
          %7056 = vmatpush2.msra.mxu0 0.0
          %7057 = vmatprep.subr.mxu0 0.0
          %7058 = vmatpush2.msra.mxu0 0.0
          %7059 = vmatprep.subr.mxu0 0.0
          %7060 = vmatpush2.msra.mxu0 0.0
          %7061 = vmatprep.subr.mxu0 0.0
          %7062 = vmatpush2.msra.mxu0 0.0
          %7063 = vmatprep.subr.mxu0 0.0
          %7064 = vmatpush2.msra.mxu0 0.0
          %7065 = vmatprep.subr.mxu0 0.0
          %7066 = vmatpush2.msra.mxu0 0.0
          %7067 = vmatprep.subr.mxu0 0.0
          %7068 = vmatpush2.msra.mxu0 0.0
          %7069 = vmatprep.subr.mxu0 0.0
          %7070 = vmatpush2.msra.mxu0 0.0
          %7071 = vmatprep.subr.mxu0 0.0
          %7072 = vmatpush2.msra.mxu0 0.0
          %7073 = vmatprep.subr.mxu0 0.0
          %7074 = vmatpush2.msra.mxu0 0.0
          %7075 = vmatprep.subr.mxu0 0.0
          %7076 = vmatpush2.msra.mxu0 0.0
          %7077 = vmatprep.subr.mxu0 0.0
          %7078 = vmatpush2.msra.mxu0 0.0
          %7079 = vmatprep.mubr.f32.mxu0 0.0
          %v7080 = vand.u32 %v6710, 4294901760
          %7081 = vmatmul.mubr.f32.gmra.mxu0 %v7080
          %v7082 = vpop.f32.mrf.mxu0
          %v7083 = vadd.f32 %v7009, %v7082
          %v7084 = vpop.f32.mrf.mxu0
          %7085 = vdwg.mxu0
          %7086 = vmatprep.subr.mxu0 0.0
          %7087 = vmatpush1.msra.mxu0 0.0
          %7088 = vmatprep.subr.mxu0 0.0
          %7089 = vmatpush1.msra.mxu0 0.0
          %7090 = vmatprep.subr.mxu0 0.0
          %7091 = vmatpush1.msra.mxu0 0.0
          %7092 = vmatprep.subr.mxu0 0.0
          %7093 = vmatpush1.msra.mxu0 0.0
          %7094 = vmatprep.subr.mxu0 0.0
          %7095 = vmatpush1.msra.mxu0 0.0
          %7096 = vmatprep.subr.mxu0 0.0
          %7097 = vmatpush1.msra.mxu0 0.0
          %7098 = vmatprep.subr.mxu0 0.0
          %7099 = vmatpush1.msra.mxu0 0.0
          %7100 = vmatprep.subr.mxu0 0.0
          %7101 = vmatpush1.msra.mxu0 0.0
          %7102 = vmatprep.subr.mxu0 0.0
          %7103 = vmatpush1.msra.mxu0 0.0
          %7104 = vmatprep.subr.mxu0 0.0
          %7105 = vmatpush1.msra.mxu0 0.0
          %7106 = vmatprep.subr.mxu0 0.0
          %7107 = vmatpush1.msra.mxu0 0.0
          %7108 = vmatprep.subr.mxu0 0.0
          %7109 = vmatpush1.msra.mxu0 0.0
          %7110 = vmatprep.subr.mxu0 0.0
          %7111 = vmatpush1.msra.mxu0 0.0
          %7112 = vmatprep.subr.mxu0 0.0
          %7113 = vmatpush1.msra.mxu0 0.0
          %7114 = vmatprep.subr.mxu0 0.0
          %7115 = vmatpush1.msra.mxu0 0.0
          %7116 = vmatprep.subr.mxu0 0.0
          %v7117 = vand.u32 %v6708, 4294901760
          %7118 = vmatpush1.msra.mxu0 %v7117
          %7119 = vmatprep.subr.mxu0 0.0
          %7120 = vmatpush2.msra.mxu0 0.0
          %7121 = vmatprep.subr.mxu0 0.0
          %7122 = vmatpush2.msra.mxu0 0.0
          %7123 = vmatprep.subr.mxu0 0.0
          %7124 = vmatpush2.msra.mxu0 0.0
          %7125 = vmatprep.subr.mxu0 0.0
          %7126 = vmatpush2.msra.mxu0 0.0
          %7127 = vmatprep.subr.mxu0 0.0
          %7128 = vmatpush2.msra.mxu0 0.0
          %7129 = vmatprep.subr.mxu0 0.0
          %7130 = vmatpush2.msra.mxu0 0.0
          %7131 = vmatprep.subr.mxu0 0.0
          %7132 = vmatpush2.msra.mxu0 0.0
          %7133 = vmatprep.subr.mxu0 0.0
          %7134 = vmatpush2.msra.mxu0 0.0
          %7135 = vmatprep.subr.mxu0 0.0
          %7136 = vmatpush2.msra.mxu0 0.0
          %7137 = vmatprep.subr.mxu0 0.0
          %7138 = vmatpush2.msra.mxu0 0.0
          %7139 = vmatprep.subr.mxu0 0.0
          %7140 = vmatpush2.msra.mxu0 0.0
          %7141 = vmatprep.subr.mxu0 0.0
          %7142 = vmatpush2.msra.mxu0 0.0
          %7143 = vmatprep.subr.mxu0 0.0
          %7144 = vmatpush2.msra.mxu0 0.0
          %7145 = vmatprep.subr.mxu0 0.0
          %7146 = vmatpush2.msra.mxu0 0.0
          %7147 = vmatprep.subr.mxu0 0.0
          %7148 = vmatpush2.msra.mxu0 0.0
          %7149 = vmatprep.subr.mxu0 0.0
          %7150 = vmatpush2.msra.mxu0 0.0
          %7151 = vmatprep.mubr.f32.mxu0 0.0
          %v7152 = vand.u32 %v6710, 4294901760
          %7153 = vmatmul.mubr.f32.gmra.mxu0 %v7152
          %v7154 = vpop.f32.mrf.mxu0
          %v7155 = vadd.f32 %v7083, %v7154
          %v7156 = vpop.f32.mrf.mxu0
          %7157 = vdwg.mxu0
          %7159 = vset.pattern.permute.xlu0 0
          %7160 = vperm.xlu0 %7159, %v354
          %v7161 = vpop.permute.xlu0 %7160
          %v7163 = vadd.f32 %v6705, %v7161
          %v7164 = vlog2.pop %v7155
          %v7165 = vmul.f32 %v7164, 0.6931472
          %v7166 = vadd.f32 %v7163, %v7165
          %v7167 = vadd.f32 %v7166, %v6206
          %vm7168 = vcmp.gt.f32.partialorder %v6209, 0.5
          %v7169 = vsel %vm7168, 1, 0
          %v7170 = vlaneseq
          %v7171 = vshrl.u32 %v7170, 7
          %v7172 = vsub.s32 1, %v7171
          %v7173 = vrot.slane %v7169, %v7172
          %vm7174 = vcmp.eq.s32.totalorder %v7173, 1
          %v7175 = vsel %vm7174, %v7167, %v6699
          %7176 = vst [vmem:[#allocation2] sm:$0xff] %v7175
        $region112: #{tpu_custom_call.1} parent=47 // pred_fallthru
          _
        %7177 = vst [vmem:[#allocation4] sm:$0xff] %v6216
        %s7178 = sadd.s32 %s362, 7
        %s7179 = scalar_lea.vmem %s308, 56 [#allocation5]
        %v7180 = vld [vmem:[%s7179] sm:$0xff]
        %s7181 = scalar_lea.vmem %s317, 14 [#allocation8]
        %v7182 = vld [vmem:[%s7181] sm:$0x3]
        %v7183 = vcvt.s32.f32 %v7182
        %v7184 = vlaneseq
        %v7185 = vshrl.u32 %v7184, 7
        %v7186 = vsub.s32 0, %v7185
        %v7187 = vrot.slane %v7182, %v7186
        %vm7188 = vcmp.eq.s32.totalorder %v361, %v7187
        %v7189 = vsel %vm7188, 1, 0
        %v7190 = vcvt.s32.f32 %v7189
        %p7191 = scmp.eq.s32.totalorder %s7178, 0
        // Predicated region
        $region113: #{tpu_custom_call.1} parent=47 // pred_check
          %p7192 = pneg %p7191
        $region114: #{tpu_custom_call.1} parent=47 // pred_check_branch
          %7194 = sbr.rel (%p7192) target = $region116
        $region115: #{tpu_custom_call.1} parent=47 // pred_region
          %7196 = vset.pattern.permute.xlu0 0
          %7197 = vperm.xlu0 %7196, %v350
          %v7198 = vpop.permute.xlu0 %7197
          %v7200 = vadd.f32 %v7198, %v7180
          %v7201 = vadd.f32 %v7200, %v358
          %v7202 = vmul.f32 %v7190, %v7201
          %7203 = vst [vmem:[#allocation3] sm:$0xff] %v7202
          %7204 = vst [vmem:[#allocation2] sm:$0xff] %v7200
        $region116: #{tpu_custom_call.1} parent=47 // pred_fallthru
          _
        %p7205 = scmp.gt.s32.totalorder %s7178, 0
        // Predicated region
        $region117: #{tpu_custom_call.1} parent=47 // pred_check
          %p7206 = pneg %p7205
        $region118: #{tpu_custom_call.1} parent=47 // pred_check_branch
          %7208 = sbr.rel (%p7206) target = $region120
        $region119: #{tpu_custom_call.1} parent=47 // pred_region
          %v7209 = vld [vmem:[#allocation4] sm:$0xff]
          %vm7210 = vcmask 64512
          %v7212 = vsel %vm7210, %v352, 0
          %7214 = vmatprep.subr.mxu0 0.0
          %7215 = vmatpush1.msra.mxu0 0.0
          %7216 = vmatprep.subr.mxu0 0.0
          %7217 = vmatpush1.msra.mxu0 0.0
          %7218 = vmatprep.subr.mxu0 0.0
          %7219 = vmatpush1.msra.mxu0 0.0
          %7220 = vmatprep.subr.mxu0 0.0
          %7221 = vmatpush1.msra.mxu0 0.0
          %7222 = vmatprep.subr.mxu0 0.0
          %7223 = vmatpush1.msra.mxu0 0.0
          %7224 = vmatprep.subr.mxu0 0.0
          %7225 = vmatpush1.msra.mxu0 0.0
          %7226 = vmatprep.subr.mxu0 0.0
          %7227 = vmatpush1.msra.mxu0 0.0
          %7228 = vmatprep.subr.mxu0 0.0
          %7229 = vmatpush1.msra.mxu0 0.0
          %7230 = vmatprep.subr.mxu0 0.0
          %7231 = vmatpush1.msra.mxu0 0.0
          %7232 = vmatprep.subr.mxu0 0.0
          %7233 = vmatpush1.msra.mxu0 0.0
          %7234 = vmatprep.subr.mxu0 0.0
          %7235 = vmatpush1.msra.mxu0 0.0
          %7236 = vmatprep.subr.mxu0 0.0
          %7237 = vmatpush1.msra.mxu0 0.0
          %7238 = vmatprep.subr.mxu0 0.0
          %7239 = vmatpush1.msra.mxu0 0.0
          %7240 = vmatprep.subr.mxu0 0.0
          %7241 = vmatpush1.msra.mxu0 0.0
          %7242 = vmatprep.subr.mxu0 0.0
          %7243 = vmatpush1.msra.mxu0 0.0
          %7244 = vmatprep.subr.mxu0 0.0
          %v7245 = vand.u32 %v7209, 4294901760
          %7246 = vmatpush1.msra.mxu0 %v7245
          %7247 = vmatprep.subr.mxu0 0.0
          %7248 = vmatpush2.msra.mxu0 0.0
          %7249 = vmatprep.subr.mxu0 0.0
          %7250 = vmatpush2.msra.mxu0 0.0
          %7251 = vmatprep.subr.mxu0 0.0
          %7252 = vmatpush2.msra.mxu0 0.0
          %7253 = vmatprep.subr.mxu0 0.0
          %7254 = vmatpush2.msra.mxu0 0.0
          %7255 = vmatprep.subr.mxu0 0.0
          %7256 = vmatpush2.msra.mxu0 0.0
          %7257 = vmatprep.subr.mxu0 0.0
          %7258 = vmatpush2.msra.mxu0 0.0
          %7259 = vmatprep.subr.mxu0 0.0
          %7260 = vmatpush2.msra.mxu0 0.0
          %7261 = vmatprep.subr.mxu0 0.0
          %7262 = vmatpush2.msra.mxu0 0.0
          %7263 = vmatprep.subr.mxu0 0.0
          %7264 = vmatpush2.msra.mxu0 0.0
          %7265 = vmatprep.subr.mxu0 0.0
          %7266 = vmatpush2.msra.mxu0 0.0
          %7267 = vmatprep.subr.mxu0 0.0
          %7268 = vmatpush2.msra.mxu0 0.0
          %7269 = vmatprep.subr.mxu0 0.0
          %7270 = vmatpush2.msra.mxu0 0.0
          %7271 = vmatprep.subr.mxu0 0.0
          %7272 = vmatpush2.msra.mxu0 0.0
          %7273 = vmatprep.subr.mxu0 0.0
          %7274 = vmatpush2.msra.mxu0 0.0
          %7275 = vmatprep.subr.mxu0 0.0
          %7276 = vmatpush2.msra.mxu0 0.0
          %7277 = vmatprep.subr.mxu0 0.0
          %7278 = vmatpush2.msra.mxu0 0.0
          %7279 = vmatprep.mubr.f32.mxu0 0.0
          %v7280 = vand.u32 %v7212, 4294901760
          %v7281 = vsub.f32 %v7212, %v7280
          %v7282 = vand.u32 %v7281, 4294901760
          %v7283 = vsub.f32 %v7281, %v7282
          %v7284 = vand.u32 %v7283, 4294901760
          %7285 = vmatmul.mubr.f32.gmra.mxu0 %v7284
          %v7286 = vpop.f32.mrf.mxu0
          %v7287 = vadd.f32 0.0, %v7286
          %v7288 = vpop.f32.mrf.mxu0
          %7289 = vdwg.mxu0
          %7290 = vmatprep.subr.mxu0 0.0
          %7291 = vmatpush1.msra.mxu0 0.0
          %7292 = vmatprep.subr.mxu0 0.0
          %7293 = vmatpush1.msra.mxu0 0.0
          %7294 = vmatprep.subr.mxu0 0.0
          %7295 = vmatpush1.msra.mxu0 0.0
          %7296 = vmatprep.subr.mxu0 0.0
          %7297 = vmatpush1.msra.mxu0 0.0
          %7298 = vmatprep.subr.mxu0 0.0
          %7299 = vmatpush1.msra.mxu0 0.0
          %7300 = vmatprep.subr.mxu0 0.0
          %7301 = vmatpush1.msra.mxu0 0.0
          %7302 = vmatprep.subr.mxu0 0.0
          %7303 = vmatpush1.msra.mxu0 0.0
          %7304 = vmatprep.subr.mxu0 0.0
          %7305 = vmatpush1.msra.mxu0 0.0
          %7306 = vmatprep.subr.mxu0 0.0
          %7307 = vmatpush1.msra.mxu0 0.0
          %7308 = vmatprep.subr.mxu0 0.0
          %7309 = vmatpush1.msra.mxu0 0.0
          %7310 = vmatprep.subr.mxu0 0.0
          %7311 = vmatpush1.msra.mxu0 0.0
          %7312 = vmatprep.subr.mxu0 0.0
          %7313 = vmatpush1.msra.mxu0 0.0
          %7314 = vmatprep.subr.mxu0 0.0
          %7315 = vmatpush1.msra.mxu0 0.0
          %7316 = vmatprep.subr.mxu0 0.0
          %7317 = vmatpush1.msra.mxu0 0.0
          %7318 = vmatprep.subr.mxu0 0.0
          %7319 = vmatpush1.msra.mxu0 0.0
          %7320 = vmatprep.subr.mxu0 0.0
          %v7321 = vand.u32 %v7209, 4294901760
          %v7322 = vsub.f32 %v7209, %v7321
          %v7323 = vand.u32 %v7322, 4294901760
          %v7324 = vsub.f32 %v7322, %v7323
          %v7325 = vand.u32 %v7324, 4294901760
          %7326 = vmatpush1.msra.mxu0 %v7325
          %7327 = vmatprep.subr.mxu0 0.0
          %7328 = vmatpush2.msra.mxu0 0.0
          %7329 = vmatprep.subr.mxu0 0.0
          %7330 = vmatpush2.msra.mxu0 0.0
          %7331 = vmatprep.subr.mxu0 0.0
          %7332 = vmatpush2.msra.mxu0 0.0
          %7333 = vmatprep.subr.mxu0 0.0
          %7334 = vmatpush2.msra.mxu0 0.0
          %7335 = vmatprep.subr.mxu0 0.0
          %7336 = vmatpush2.msra.mxu0 0.0
          %7337 = vmatprep.subr.mxu0 0.0
          %7338 = vmatpush2.msra.mxu0 0.0
          %7339 = vmatprep.subr.mxu0 0.0
          %7340 = vmatpush2.msra.mxu0 0.0
          %7341 = vmatprep.subr.mxu0 0.0
          %7342 = vmatpush2.msra.mxu0 0.0
          %7343 = vmatprep.subr.mxu0 0.0
          %7344 = vmatpush2.msra.mxu0 0.0
          %7345 = vmatprep.subr.mxu0 0.0
          %7346 = vmatpush2.msra.mxu0 0.0
          %7347 = vmatprep.subr.mxu0 0.0
          %7348 = vmatpush2.msra.mxu0 0.0
          %7349 = vmatprep.subr.mxu0 0.0
          %7350 = vmatpush2.msra.mxu0 0.0
          %7351 = vmatprep.subr.mxu0 0.0
          %7352 = vmatpush2.msra.mxu0 0.0
          %7353 = vmatprep.subr.mxu0 0.0
          %7354 = vmatpush2.msra.mxu0 0.0
          %7355 = vmatprep.subr.mxu0 0.0
          %7356 = vmatpush2.msra.mxu0 0.0
          %7357 = vmatprep.subr.mxu0 0.0
          %7358 = vmatpush2.msra.mxu0 0.0
          %7359 = vmatprep.mubr.f32.mxu0 0.0
          %v7360 = vand.u32 %v7212, 4294901760
          %7361 = vmatmul.mubr.f32.gmra.mxu0 %v7360
          %v7362 = vpop.f32.mrf.mxu0
          %v7363 = vadd.f32 %v7287, %v7362
          %v7364 = vpop.f32.mrf.mxu0
          %7365 = vdwg.mxu0
          %7366 = vmatprep.subr.mxu0 0.0
          %7367 = vmatpush1.msra.mxu0 0.0
          %7368 = vmatprep.subr.mxu0 0.0
          %7369 = vmatpush1.msra.mxu0 0.0
          %7370 = vmatprep.subr.mxu0 0.0
          %7371 = vmatpush1.msra.mxu0 0.0
          %7372 = vmatprep.subr.mxu0 0.0
          %7373 = vmatpush1.msra.mxu0 0.0
          %7374 = vmatprep.subr.mxu0 0.0
          %7375 = vmatpush1.msra.mxu0 0.0
          %7376 = vmatprep.subr.mxu0 0.0
          %7377 = vmatpush1.msra.mxu0 0.0
          %7378 = vmatprep.subr.mxu0 0.0
          %7379 = vmatpush1.msra.mxu0 0.0
          %7380 = vmatprep.subr.mxu0 0.0
          %7381 = vmatpush1.msra.mxu0 0.0
          %7382 = vmatprep.subr.mxu0 0.0
          %7383 = vmatpush1.msra.mxu0 0.0
          %7384 = vmatprep.subr.mxu0 0.0
          %7385 = vmatpush1.msra.mxu0 0.0
          %7386 = vmatprep.subr.mxu0 0.0
          %7387 = vmatpush1.msra.mxu0 0.0
          %7388 = vmatprep.subr.mxu0 0.0
          %7389 = vmatpush1.msra.mxu0 0.0
          %7390 = vmatprep.subr.mxu0 0.0
          %7391 = vmatpush1.msra.mxu0 0.0
          %7392 = vmatprep.subr.mxu0 0.0
          %7393 = vmatpush1.msra.mxu0 0.0
          %7394 = vmatprep.subr.mxu0 0.0
          %7395 = vmatpush1.msra.mxu0 0.0
          %7396 = vmatprep.subr.mxu0 0.0
          %v7397 = vand.u32 %v7209, 4294901760
          %v7398 = vsub.f32 %v7209, %v7397
          %7399 = vmatpush1.msra.mxu0 %v7398
          %7400 = vmatprep.subr.mxu0 0.0
          %7401 = vmatpush2.msra.mxu0 0.0
          %7402 = vmatprep.subr.mxu0 0.0
          %7403 = vmatpush2.msra.mxu0 0.0
          %7404 = vmatprep.subr.mxu0 0.0
          %7405 = vmatpush2.msra.mxu0 0.0
          %7406 = vmatprep.subr.mxu0 0.0
          %7407 = vmatpush2.msra.mxu0 0.0
          %7408 = vmatprep.subr.mxu0 0.0
          %7409 = vmatpush2.msra.mxu0 0.0
          %7410 = vmatprep.subr.mxu0 0.0
          %7411 = vmatpush2.msra.mxu0 0.0
          %7412 = vmatprep.subr.mxu0 0.0
          %7413 = vmatpush2.msra.mxu0 0.0
          %7414 = vmatprep.subr.mxu0 0.0
          %7415 = vmatpush2.msra.mxu0 0.0
          %7416 = vmatprep.subr.mxu0 0.0
          %7417 = vmatpush2.msra.mxu0 0.0
          %7418 = vmatprep.subr.mxu0 0.0
          %7419 = vmatpush2.msra.mxu0 0.0
          %7420 = vmatprep.subr.mxu0 0.0
          %7421 = vmatpush2.msra.mxu0 0.0
          %7422 = vmatprep.subr.mxu0 0.0
          %7423 = vmatpush2.msra.mxu0 0.0
          %7424 = vmatprep.subr.mxu0 0.0
          %7425 = vmatpush2.msra.mxu0 0.0
          %7426 = vmatprep.subr.mxu0 0.0
          %7427 = vmatpush2.msra.mxu0 0.0
          %7428 = vmatprep.subr.mxu0 0.0
          %7429 = vmatpush2.msra.mxu0 0.0
          %7430 = vmatprep.subr.mxu0 0.0
          %7431 = vmatpush2.msra.mxu0 0.0
          %7432 = vmatprep.mubr.f32.mxu0 0.0
          %v7433 = vand.u32 %v7212, 4294901760
          %v7434 = vsub.f32 %v7212, %v7433
          %7435 = vmatmul.mubr.f32.gmra.mxu0 %v7434
          %v7436 = vpop.f32.mrf.mxu0
          %v7437 = vadd.f32 %v7363, %v7436
          %v7438 = vpop.f32.mrf.mxu0
          %7439 = vdwg.mxu0
          %7440 = vmatprep.subr.mxu0 0.0
          %7441 = vmatpush1.msra.mxu0 0.0
          %7442 = vmatprep.subr.mxu0 0.0
          %7443 = vmatpush1.msra.mxu0 0.0
          %7444 = vmatprep.subr.mxu0 0.0
          %7445 = vmatpush1.msra.mxu0 0.0
          %7446 = vmatprep.subr.mxu0 0.0
          %7447 = vmatpush1.msra.mxu0 0.0
          %7448 = vmatprep.subr.mxu0 0.0
          %7449 = vmatpush1.msra.mxu0 0.0
          %7450 = vmatprep.subr.mxu0 0.0
          %7451 = vmatpush1.msra.mxu0 0.0
          %7452 = vmatprep.subr.mxu0 0.0
          %7453 = vmatpush1.msra.mxu0 0.0
          %7454 = vmatprep.subr.mxu0 0.0
          %7455 = vmatpush1.msra.mxu0 0.0
          %7456 = vmatprep.subr.mxu0 0.0
          %7457 = vmatpush1.msra.mxu0 0.0
          %7458 = vmatprep.subr.mxu0 0.0
          %7459 = vmatpush1.msra.mxu0 0.0
          %7460 = vmatprep.subr.mxu0 0.0
          %7461 = vmatpush1.msra.mxu0 0.0
          %7462 = vmatprep.subr.mxu0 0.0
          %7463 = vmatpush1.msra.mxu0 0.0
          %7464 = vmatprep.subr.mxu0 0.0
          %7465 = vmatpush1.msra.mxu0 0.0
          %7466 = vmatprep.subr.mxu0 0.0
          %7467 = vmatpush1.msra.mxu0 0.0
          %7468 = vmatprep.subr.mxu0 0.0
          %7469 = vmatpush1.msra.mxu0 0.0
          %7470 = vmatprep.subr.mxu0 0.0
          %v7471 = vand.u32 %v7209, 4294901760
          %7472 = vmatpush1.msra.mxu0 %v7471
          %7473 = vmatprep.subr.mxu0 0.0
          %7474 = vmatpush2.msra.mxu0 0.0
          %7475 = vmatprep.subr.mxu0 0.0
          %7476 = vmatpush2.msra.mxu0 0.0
          %7477 = vmatprep.subr.mxu0 0.0
          %7478 = vmatpush2.msra.mxu0 0.0
          %7479 = vmatprep.subr.mxu0 0.0
          %7480 = vmatpush2.msra.mxu0 0.0
          %7481 = vmatprep.subr.mxu0 0.0
          %7482 = vmatpush2.msra.mxu0 0.0
          %7483 = vmatprep.subr.mxu0 0.0
          %7484 = vmatpush2.msra.mxu0 0.0
          %7485 = vmatprep.subr.mxu0 0.0
          %7486 = vmatpush2.msra.mxu0 0.0
          %7487 = vmatprep.subr.mxu0 0.0
          %7488 = vmatpush2.msra.mxu0 0.0
          %7489 = vmatprep.subr.mxu0 0.0
          %7490 = vmatpush2.msra.mxu0 0.0
          %7491 = vmatprep.subr.mxu0 0.0
          %7492 = vmatpush2.msra.mxu0 0.0
          %7493 = vmatprep.subr.mxu0 0.0
          %7494 = vmatpush2.msra.mxu0 0.0
          %7495 = vmatprep.subr.mxu0 0.0
          %7496 = vmatpush2.msra.mxu0 0.0
          %7497 = vmatprep.subr.mxu0 0.0
          %7498 = vmatpush2.msra.mxu0 0.0
          %7499 = vmatprep.subr.mxu0 0.0
          %7500 = vmatpush2.msra.mxu0 0.0
          %7501 = vmatprep.subr.mxu0 0.0
          %7502 = vmatpush2.msra.mxu0 0.0
          %7503 = vmatprep.subr.mxu0 0.0
          %7504 = vmatpush2.msra.mxu0 0.0
          %7505 = vmatprep.mubr.f32.mxu0 0.0
          %v7506 = vand.u32 %v7212, 4294901760
          %v7507 = vsub.f32 %v7212, %v7506
          %v7508 = vand.u32 %v7507, 4294901760
          %7509 = vmatmul.mubr.f32.gmra.mxu0 %v7508
          %v7510 = vpop.f32.mrf.mxu0
          %v7511 = vadd.f32 %v7437, %v7510
          %v7512 = vpop.f32.mrf.mxu0
          %7513 = vdwg.mxu0
          %7514 = vmatprep.subr.mxu0 0.0
          %7515 = vmatpush1.msra.mxu0 0.0
          %7516 = vmatprep.subr.mxu0 0.0
          %7517 = vmatpush1.msra.mxu0 0.0
          %7518 = vmatprep.subr.mxu0 0.0
          %7519 = vmatpush1.msra.mxu0 0.0
          %7520 = vmatprep.subr.mxu0 0.0
          %7521 = vmatpush1.msra.mxu0 0.0
          %7522 = vmatprep.subr.mxu0 0.0
          %7523 = vmatpush1.msra.mxu0 0.0
          %7524 = vmatprep.subr.mxu0 0.0
          %7525 = vmatpush1.msra.mxu0 0.0
          %7526 = vmatprep.subr.mxu0 0.0
          %7527 = vmatpush1.msra.mxu0 0.0
          %7528 = vmatprep.subr.mxu0 0.0
          %7529 = vmatpush1.msra.mxu0 0.0
          %7530 = vmatprep.subr.mxu0 0.0
          %7531 = vmatpush1.msra.mxu0 0.0
          %7532 = vmatprep.subr.mxu0 0.0
          %7533 = vmatpush1.msra.mxu0 0.0
          %7534 = vmatprep.subr.mxu0 0.0
          %7535 = vmatpush1.msra.mxu0 0.0
          %7536 = vmatprep.subr.mxu0 0.0
          %7537 = vmatpush1.msra.mxu0 0.0
          %7538 = vmatprep.subr.mxu0 0.0
          %7539 = vmatpush1.msra.mxu0 0.0
          %7540 = vmatprep.subr.mxu0 0.0
          %7541 = vmatpush1.msra.mxu0 0.0
          %7542 = vmatprep.subr.mxu0 0.0
          %7543 = vmatpush1.msra.mxu0 0.0
          %7544 = vmatprep.subr.mxu0 0.0
          %v7545 = vand.u32 %v7209, 4294901760
          %v7546 = vsub.f32 %v7209, %v7545
          %v7547 = vand.u32 %v7546, 4294901760
          %7548 = vmatpush1.msra.mxu0 %v7547
          %7549 = vmatprep.subr.mxu0 0.0
          %7550 = vmatpush2.msra.mxu0 0.0
          %7551 = vmatprep.subr.mxu0 0.0
          %7552 = vmatpush2.msra.mxu0 0.0
          %7553 = vmatprep.subr.mxu0 0.0
          %7554 = vmatpush2.msra.mxu0 0.0
          %7555 = vmatprep.subr.mxu0 0.0
          %7556 = vmatpush2.msra.mxu0 0.0
          %7557 = vmatprep.subr.mxu0 0.0
          %7558 = vmatpush2.msra.mxu0 0.0
          %7559 = vmatprep.subr.mxu0 0.0
          %7560 = vmatpush2.msra.mxu0 0.0
          %7561 = vmatprep.subr.mxu0 0.0
          %7562 = vmatpush2.msra.mxu0 0.0
          %7563 = vmatprep.subr.mxu0 0.0
          %7564 = vmatpush2.msra.mxu0 0.0
          %7565 = vmatprep.subr.mxu0 0.0
          %7566 = vmatpush2.msra.mxu0 0.0
          %7567 = vmatprep.subr.mxu0 0.0
          %7568 = vmatpush2.msra.mxu0 0.0
          %7569 = vmatprep.subr.mxu0 0.0
          %7570 = vmatpush2.msra.mxu0 0.0
          %7571 = vmatprep.subr.mxu0 0.0
          %7572 = vmatpush2.msra.mxu0 0.0
          %7573 = vmatprep.subr.mxu0 0.0
          %7574 = vmatpush2.msra.mxu0 0.0
          %7575 = vmatprep.subr.mxu0 0.0
          %7576 = vmatpush2.msra.mxu0 0.0
          %7577 = vmatprep.subr.mxu0 0.0
          %7578 = vmatpush2.msra.mxu0 0.0
          %7579 = vmatprep.subr.mxu0 0.0
          %7580 = vmatpush2.msra.mxu0 0.0
          %7581 = vmatprep.mubr.f32.mxu0 0.0
          %v7582 = vand.u32 %v7212, 4294901760
          %7583 = vmatmul.mubr.f32.gmra.mxu0 %v7582
          %v7584 = vpop.f32.mrf.mxu0
          %v7585 = vadd.f32 %v7511, %v7584
          %v7586 = vpop.f32.mrf.mxu0
          %7587 = vdwg.mxu0
          %7588 = vmatprep.subr.mxu0 0.0
          %7589 = vmatpush1.msra.mxu0 0.0
          %7590 = vmatprep.subr.mxu0 0.0
          %7591 = vmatpush1.msra.mxu0 0.0
          %7592 = vmatprep.subr.mxu0 0.0
          %7593 = vmatpush1.msra.mxu0 0.0
          %7594 = vmatprep.subr.mxu0 0.0
          %7595 = vmatpush1.msra.mxu0 0.0
          %7596 = vmatprep.subr.mxu0 0.0
          %7597 = vmatpush1.msra.mxu0 0.0
          %7598 = vmatprep.subr.mxu0 0.0
          %7599 = vmatpush1.msra.mxu0 0.0
          %7600 = vmatprep.subr.mxu0 0.0
          %7601 = vmatpush1.msra.mxu0 0.0
          %7602 = vmatprep.subr.mxu0 0.0
          %7603 = vmatpush1.msra.mxu0 0.0
          %7604 = vmatprep.subr.mxu0 0.0
          %7605 = vmatpush1.msra.mxu0 0.0
          %7606 = vmatprep.subr.mxu0 0.0
          %7607 = vmatpush1.msra.mxu0 0.0
          %7608 = vmatprep.subr.mxu0 0.0
          %7609 = vmatpush1.msra.mxu0 0.0
          %7610 = vmatprep.subr.mxu0 0.0
          %7611 = vmatpush1.msra.mxu0 0.0
          %7612 = vmatprep.subr.mxu0 0.0
          %7613 = vmatpush1.msra.mxu0 0.0
          %7614 = vmatprep.subr.mxu0 0.0
          %7615 = vmatpush1.msra.mxu0 0.0
          %7616 = vmatprep.subr.mxu0 0.0
          %7617 = vmatpush1.msra.mxu0 0.0
          %7618 = vmatprep.subr.mxu0 0.0
          %v7619 = vand.u32 %v7209, 4294901760
          %7620 = vmatpush1.msra.mxu0 %v7619
          %7621 = vmatprep.subr.mxu0 0.0
          %7622 = vmatpush2.msra.mxu0 0.0
          %7623 = vmatprep.subr.mxu0 0.0
          %7624 = vmatpush2.msra.mxu0 0.0
          %7625 = vmatprep.subr.mxu0 0.0
          %7626 = vmatpush2.msra.mxu0 0.0
          %7627 = vmatprep.subr.mxu0 0.0
          %7628 = vmatpush2.msra.mxu0 0.0
          %7629 = vmatprep.subr.mxu0 0.0
          %7630 = vmatpush2.msra.mxu0 0.0
          %7631 = vmatprep.subr.mxu0 0.0
          %7632 = vmatpush2.msra.mxu0 0.0
          %7633 = vmatprep.subr.mxu0 0.0
          %7634 = vmatpush2.msra.mxu0 0.0
          %7635 = vmatprep.subr.mxu0 0.0
          %7636 = vmatpush2.msra.mxu0 0.0
          %7637 = vmatprep.subr.mxu0 0.0
          %7638 = vmatpush2.msra.mxu0 0.0
          %7639 = vmatprep.subr.mxu0 0.0
          %7640 = vmatpush2.msra.mxu0 0.0
          %7641 = vmatprep.subr.mxu0 0.0
          %7642 = vmatpush2.msra.mxu0 0.0
          %7643 = vmatprep.subr.mxu0 0.0
          %7644 = vmatpush2.msra.mxu0 0.0
          %7645 = vmatprep.subr.mxu0 0.0
          %7646 = vmatpush2.msra.mxu0 0.0
          %7647 = vmatprep.subr.mxu0 0.0
          %7648 = vmatpush2.msra.mxu0 0.0
          %7649 = vmatprep.subr.mxu0 0.0
          %7650 = vmatpush2.msra.mxu0 0.0
          %7651 = vmatprep.subr.mxu0 0.0
          %7652 = vmatpush2.msra.mxu0 0.0
          %7653 = vmatprep.mubr.f32.mxu0 0.0
          %v7654 = vand.u32 %v7212, 4294901760
          %7655 = vmatmul.mubr.f32.gmra.mxu0 %v7654
          %v7656 = vpop.f32.mrf.mxu0
          %v7657 = vadd.f32 %v7585, %v7656
          %v7658 = vpop.f32.mrf.mxu0
          %7659 = vdwg.mxu0
          %v7660 = vadd.f32 %v7180, %v7657
          %v7661 = vadd.f32 %v7660, %v358
          %v7662 = vmul.f32 %v7190, %v7661
          %v7663 = vmul.f32 %v7209, %v358
          %v7664 = vsub.f32 %v7662, %v7663
          %v7665 = vld [vmem:[#allocation3] sm:$0xff]
          %v7666 = vlaneseq
          %v7667 = vshrl.u32 %v7666, 7
          %v7668 = vsub.s32 1, %v7667
          %v7669 = vrot.slane %v7183, %v7668
          %v7670 = vmul.f32 %v7669, %v7664
          %v7671 = vadd.f32 %v7665, %v7670
          %7672 = vst [vmem:[#allocation3] sm:$0xff] %v7671
          %v7673 = vld [vmem:[#allocation2] sm:$0xff]
          %v7674 = vrot.slane %v7673, 4
          %v7675 = vmax.f32 %v7673, %v7674
          %v7676 = vrot.slane %v7675, 2
          %v7677 = vmax.f32 %v7675, %v7676
          %v7678 = vrot.slane %v7677, 1
          %v7679 = vmax.f32 %v7677, %v7678
          %v7680 = vsub.f32 %v7673, %v7679
          %v7681 = vmul.f32 %v7680, 1.442695
          %v7682 = vpow.pop %v7681
          %v7684 = vsel %vm7210, %v353, 0
          %7686 = vmatprep.subr.mxu0 0.0
          %7687 = vmatpush1.msra.mxu0 0.0
          %7688 = vmatprep.subr.mxu0 0.0
          %7689 = vmatpush1.msra.mxu0 0.0
          %7690 = vmatprep.subr.mxu0 0.0
          %7691 = vmatpush1.msra.mxu0 0.0
          %7692 = vmatprep.subr.mxu0 0.0
          %7693 = vmatpush1.msra.mxu0 0.0
          %7694 = vmatprep.subr.mxu0 0.0
          %7695 = vmatpush1.msra.mxu0 0.0
          %7696 = vmatprep.subr.mxu0 0.0
          %7697 = vmatpush1.msra.mxu0 0.0
          %7698 = vmatprep.subr.mxu0 0.0
          %7699 = vmatpush1.msra.mxu0 0.0
          %7700 = vmatprep.subr.mxu0 0.0
          %7701 = vmatpush1.msra.mxu0 0.0
          %7702 = vmatprep.subr.mxu0 0.0
          %7703 = vmatpush1.msra.mxu0 0.0
          %7704 = vmatprep.subr.mxu0 0.0
          %7705 = vmatpush1.msra.mxu0 0.0
          %7706 = vmatprep.subr.mxu0 0.0
          %7707 = vmatpush1.msra.mxu0 0.0
          %7708 = vmatprep.subr.mxu0 0.0
          %7709 = vmatpush1.msra.mxu0 0.0
          %7710 = vmatprep.subr.mxu0 0.0
          %7711 = vmatpush1.msra.mxu0 0.0
          %7712 = vmatprep.subr.mxu0 0.0
          %7713 = vmatpush1.msra.mxu0 0.0
          %7714 = vmatprep.subr.mxu0 0.0
          %7715 = vmatpush1.msra.mxu0 0.0
          %7716 = vmatprep.subr.mxu0 0.0
          %v7717 = vand.u32 %v7682, 4294901760
          %7718 = vmatpush1.msra.mxu0 %v7717
          %7719 = vmatprep.subr.mxu0 0.0
          %7720 = vmatpush2.msra.mxu0 0.0
          %7721 = vmatprep.subr.mxu0 0.0
          %7722 = vmatpush2.msra.mxu0 0.0
          %7723 = vmatprep.subr.mxu0 0.0
          %7724 = vmatpush2.msra.mxu0 0.0
          %7725 = vmatprep.subr.mxu0 0.0
          %7726 = vmatpush2.msra.mxu0 0.0
          %7727 = vmatprep.subr.mxu0 0.0
          %7728 = vmatpush2.msra.mxu0 0.0
          %7729 = vmatprep.subr.mxu0 0.0
          %7730 = vmatpush2.msra.mxu0 0.0
          %7731 = vmatprep.subr.mxu0 0.0
          %7732 = vmatpush2.msra.mxu0 0.0
          %7733 = vmatprep.subr.mxu0 0.0
          %7734 = vmatpush2.msra.mxu0 0.0
          %7735 = vmatprep.subr.mxu0 0.0
          %7736 = vmatpush2.msra.mxu0 0.0
          %7737 = vmatprep.subr.mxu0 0.0
          %7738 = vmatpush2.msra.mxu0 0.0
          %7739 = vmatprep.subr.mxu0 0.0
          %7740 = vmatpush2.msra.mxu0 0.0
          %7741 = vmatprep.subr.mxu0 0.0
          %7742 = vmatpush2.msra.mxu0 0.0
          %7743 = vmatprep.subr.mxu0 0.0
          %7744 = vmatpush2.msra.mxu0 0.0
          %7745 = vmatprep.subr.mxu0 0.0
          %7746 = vmatpush2.msra.mxu0 0.0
          %7747 = vmatprep.subr.mxu0 0.0
          %7748 = vmatpush2.msra.mxu0 0.0
          %7749 = vmatprep.subr.mxu0 0.0
          %7750 = vmatpush2.msra.mxu0 0.0
          %7751 = vmatprep.mubr.f32.mxu0 0.0
          %v7752 = vand.u32 %v7684, 4294901760
          %v7753 = vsub.f32 %v7684, %v7752
          %v7754 = vand.u32 %v7753, 4294901760
          %v7755 = vsub.f32 %v7753, %v7754
          %v7756 = vand.u32 %v7755, 4294901760
          %7757 = vmatmul.mubr.f32.gmra.mxu0 %v7756
          %v7758 = vpop.f32.mrf.mxu0
          %v7759 = vadd.f32 0.0, %v7758
          %v7760 = vpop.f32.mrf.mxu0
          %7761 = vdwg.mxu0
          %7762 = vmatprep.subr.mxu0 0.0
          %7763 = vmatpush1.msra.mxu0 0.0
          %7764 = vmatprep.subr.mxu0 0.0
          %7765 = vmatpush1.msra.mxu0 0.0
          %7766 = vmatprep.subr.mxu0 0.0
          %7767 = vmatpush1.msra.mxu0 0.0
          %7768 = vmatprep.subr.mxu0 0.0
          %7769 = vmatpush1.msra.mxu0 0.0
          %7770 = vmatprep.subr.mxu0 0.0
          %7771 = vmatpush1.msra.mxu0 0.0
          %7772 = vmatprep.subr.mxu0 0.0
          %7773 = vmatpush1.msra.mxu0 0.0
          %7774 = vmatprep.subr.mxu0 0.0
          %7775 = vmatpush1.msra.mxu0 0.0
          %7776 = vmatprep.subr.mxu0 0.0
          %7777 = vmatpush1.msra.mxu0 0.0
          %7778 = vmatprep.subr.mxu0 0.0
          %7779 = vmatpush1.msra.mxu0 0.0
          %7780 = vmatprep.subr.mxu0 0.0
          %7781 = vmatpush1.msra.mxu0 0.0
          %7782 = vmatprep.subr.mxu0 0.0
          %7783 = vmatpush1.msra.mxu0 0.0
          %7784 = vmatprep.subr.mxu0 0.0
          %7785 = vmatpush1.msra.mxu0 0.0
          %7786 = vmatprep.subr.mxu0 0.0
          %7787 = vmatpush1.msra.mxu0 0.0
          %7788 = vmatprep.subr.mxu0 0.0
          %7789 = vmatpush1.msra.mxu0 0.0
          %7790 = vmatprep.subr.mxu0 0.0
          %7791 = vmatpush1.msra.mxu0 0.0
          %7792 = vmatprep.subr.mxu0 0.0
          %v7793 = vand.u32 %v7682, 4294901760
          %v7794 = vsub.f32 %v7682, %v7793
          %v7795 = vand.u32 %v7794, 4294901760
          %v7796 = vsub.f32 %v7794, %v7795
          %v7797 = vand.u32 %v7796, 4294901760
          %7798 = vmatpush1.msra.mxu0 %v7797
          %7799 = vmatprep.subr.mxu0 0.0
          %7800 = vmatpush2.msra.mxu0 0.0
          %7801 = vmatprep.subr.mxu0 0.0
          %7802 = vmatpush2.msra.mxu0 0.0
          %7803 = vmatprep.subr.mxu0 0.0
          %7804 = vmatpush2.msra.mxu0 0.0
          %7805 = vmatprep.subr.mxu0 0.0
          %7806 = vmatpush2.msra.mxu0 0.0
          %7807 = vmatprep.subr.mxu0 0.0
          %7808 = vmatpush2.msra.mxu0 0.0
          %7809 = vmatprep.subr.mxu0 0.0
          %7810 = vmatpush2.msra.mxu0 0.0
          %7811 = vmatprep.subr.mxu0 0.0
          %7812 = vmatpush2.msra.mxu0 0.0
          %7813 = vmatprep.subr.mxu0 0.0
          %7814 = vmatpush2.msra.mxu0 0.0
          %7815 = vmatprep.subr.mxu0 0.0
          %7816 = vmatpush2.msra.mxu0 0.0
          %7817 = vmatprep.subr.mxu0 0.0
          %7818 = vmatpush2.msra.mxu0 0.0
          %7819 = vmatprep.subr.mxu0 0.0
          %7820 = vmatpush2.msra.mxu0 0.0
          %7821 = vmatprep.subr.mxu0 0.0
          %7822 = vmatpush2.msra.mxu0 0.0
          %7823 = vmatprep.subr.mxu0 0.0
          %7824 = vmatpush2.msra.mxu0 0.0
          %7825 = vmatprep.subr.mxu0 0.0
          %7826 = vmatpush2.msra.mxu0 0.0
          %7827 = vmatprep.subr.mxu0 0.0
          %7828 = vmatpush2.msra.mxu0 0.0
          %7829 = vmatprep.subr.mxu0 0.0
          %7830 = vmatpush2.msra.mxu0 0.0
          %7831 = vmatprep.mubr.f32.mxu0 0.0
          %v7832 = vand.u32 %v7684, 4294901760
          %7833 = vmatmul.mubr.f32.gmra.mxu0 %v7832
          %v7834 = vpop.f32.mrf.mxu0
          %v7835 = vadd.f32 %v7759, %v7834
          %v7836 = vpop.f32.mrf.mxu0
          %7837 = vdwg.mxu0
          %7838 = vmatprep.subr.mxu0 0.0
          %7839 = vmatpush1.msra.mxu0 0.0
          %7840 = vmatprep.subr.mxu0 0.0
          %7841 = vmatpush1.msra.mxu0 0.0
          %7842 = vmatprep.subr.mxu0 0.0
          %7843 = vmatpush1.msra.mxu0 0.0
          %7844 = vmatprep.subr.mxu0 0.0
          %7845 = vmatpush1.msra.mxu0 0.0
          %7846 = vmatprep.subr.mxu0 0.0
          %7847 = vmatpush1.msra.mxu0 0.0
          %7848 = vmatprep.subr.mxu0 0.0
          %7849 = vmatpush1.msra.mxu0 0.0
          %7850 = vmatprep.subr.mxu0 0.0
          %7851 = vmatpush1.msra.mxu0 0.0
          %7852 = vmatprep.subr.mxu0 0.0
          %7853 = vmatpush1.msra.mxu0 0.0
          %7854 = vmatprep.subr.mxu0 0.0
          %7855 = vmatpush1.msra.mxu0 0.0
          %7856 = vmatprep.subr.mxu0 0.0
          %7857 = vmatpush1.msra.mxu0 0.0
          %7858 = vmatprep.subr.mxu0 0.0
          %7859 = vmatpush1.msra.mxu0 0.0
          %7860 = vmatprep.subr.mxu0 0.0
          %7861 = vmatpush1.msra.mxu0 0.0
          %7862 = vmatprep.subr.mxu0 0.0
          %7863 = vmatpush1.msra.mxu0 0.0
          %7864 = vmatprep.subr.mxu0 0.0
          %7865 = vmatpush1.msra.mxu0 0.0
          %7866 = vmatprep.subr.mxu0 0.0
          %7867 = vmatpush1.msra.mxu0 0.0
          %7868 = vmatprep.subr.mxu0 0.0
          %v7869 = vand.u32 %v7682, 4294901760
          %v7870 = vsub.f32 %v7682, %v7869
          %7871 = vmatpush1.msra.mxu0 %v7870
          %7872 = vmatprep.subr.mxu0 0.0
          %7873 = vmatpush2.msra.mxu0 0.0
          %7874 = vmatprep.subr.mxu0 0.0
          %7875 = vmatpush2.msra.mxu0 0.0
          %7876 = vmatprep.subr.mxu0 0.0
          %7877 = vmatpush2.msra.mxu0 0.0
          %7878 = vmatprep.subr.mxu0 0.0
          %7879 = vmatpush2.msra.mxu0 0.0
          %7880 = vmatprep.subr.mxu0 0.0
          %7881 = vmatpush2.msra.mxu0 0.0
          %7882 = vmatprep.subr.mxu0 0.0
          %7883 = vmatpush2.msra.mxu0 0.0
          %7884 = vmatprep.subr.mxu0 0.0
          %7885 = vmatpush2.msra.mxu0 0.0
          %7886 = vmatprep.subr.mxu0 0.0
          %7887 = vmatpush2.msra.mxu0 0.0
          %7888 = vmatprep.subr.mxu0 0.0
          %7889 = vmatpush2.msra.mxu0 0.0
          %7890 = vmatprep.subr.mxu0 0.0
          %7891 = vmatpush2.msra.mxu0 0.0
          %7892 = vmatprep.subr.mxu0 0.0
          %7893 = vmatpush2.msra.mxu0 0.0
          %7894 = vmatprep.subr.mxu0 0.0
          %7895 = vmatpush2.msra.mxu0 0.0
          %7896 = vmatprep.subr.mxu0 0.0
          %7897 = vmatpush2.msra.mxu0 0.0
          %7898 = vmatprep.subr.mxu0 0.0
          %7899 = vmatpush2.msra.mxu0 0.0
          %7900 = vmatprep.subr.mxu0 0.0
          %7901 = vmatpush2.msra.mxu0 0.0
          %7902 = vmatprep.subr.mxu0 0.0
          %7903 = vmatpush2.msra.mxu0 0.0
          %7904 = vmatprep.mubr.f32.mxu0 0.0
          %v7905 = vand.u32 %v7684, 4294901760
          %v7906 = vsub.f32 %v7684, %v7905
          %7907 = vmatmul.mubr.f32.gmra.mxu0 %v7906
          %v7908 = vpop.f32.mrf.mxu0
          %v7909 = vadd.f32 %v7835, %v7908
          %v7910 = vpop.f32.mrf.mxu0
          %7911 = vdwg.mxu0
          %7912 = vmatprep.subr.mxu0 0.0
          %7913 = vmatpush1.msra.mxu0 0.0
          %7914 = vmatprep.subr.mxu0 0.0
          %7915 = vmatpush1.msra.mxu0 0.0
          %7916 = vmatprep.subr.mxu0 0.0
          %7917 = vmatpush1.msra.mxu0 0.0
          %7918 = vmatprep.subr.mxu0 0.0
          %7919 = vmatpush1.msra.mxu0 0.0
          %7920 = vmatprep.subr.mxu0 0.0
          %7921 = vmatpush1.msra.mxu0 0.0
          %7922 = vmatprep.subr.mxu0 0.0
          %7923 = vmatpush1.msra.mxu0 0.0
          %7924 = vmatprep.subr.mxu0 0.0
          %7925 = vmatpush1.msra.mxu0 0.0
          %7926 = vmatprep.subr.mxu0 0.0
          %7927 = vmatpush1.msra.mxu0 0.0
          %7928 = vmatprep.subr.mxu0 0.0
          %7929 = vmatpush1.msra.mxu0 0.0
          %7930 = vmatprep.subr.mxu0 0.0
          %7931 = vmatpush1.msra.mxu0 0.0
          %7932 = vmatprep.subr.mxu0 0.0
          %7933 = vmatpush1.msra.mxu0 0.0
          %7934 = vmatprep.subr.mxu0 0.0
          %7935 = vmatpush1.msra.mxu0 0.0
          %7936 = vmatprep.subr.mxu0 0.0
          %7937 = vmatpush1.msra.mxu0 0.0
          %7938 = vmatprep.subr.mxu0 0.0
          %7939 = vmatpush1.msra.mxu0 0.0
          %7940 = vmatprep.subr.mxu0 0.0
          %7941 = vmatpush1.msra.mxu0 0.0
          %7942 = vmatprep.subr.mxu0 0.0
          %v7943 = vand.u32 %v7682, 4294901760
          %7944 = vmatpush1.msra.mxu0 %v7943
          %7945 = vmatprep.subr.mxu0 0.0
          %7946 = vmatpush2.msra.mxu0 0.0
          %7947 = vmatprep.subr.mxu0 0.0
          %7948 = vmatpush2.msra.mxu0 0.0
          %7949 = vmatprep.subr.mxu0 0.0
          %7950 = vmatpush2.msra.mxu0 0.0
          %7951 = vmatprep.subr.mxu0 0.0
          %7952 = vmatpush2.msra.mxu0 0.0
          %7953 = vmatprep.subr.mxu0 0.0
          %7954 = vmatpush2.msra.mxu0 0.0
          %7955 = vmatprep.subr.mxu0 0.0
          %7956 = vmatpush2.msra.mxu0 0.0
          %7957 = vmatprep.subr.mxu0 0.0
          %7958 = vmatpush2.msra.mxu0 0.0
          %7959 = vmatprep.subr.mxu0 0.0
          %7960 = vmatpush2.msra.mxu0 0.0
          %7961 = vmatprep.subr.mxu0 0.0
          %7962 = vmatpush2.msra.mxu0 0.0
          %7963 = vmatprep.subr.mxu0 0.0
          %7964 = vmatpush2.msra.mxu0 0.0
          %7965 = vmatprep.subr.mxu0 0.0
          %7966 = vmatpush2.msra.mxu0 0.0
          %7967 = vmatprep.subr.mxu0 0.0
          %7968 = vmatpush2.msra.mxu0 0.0
          %7969 = vmatprep.subr.mxu0 0.0
          %7970 = vmatpush2.msra.mxu0 0.0
          %7971 = vmatprep.subr.mxu0 0.0
          %7972 = vmatpush2.msra.mxu0 0.0
          %7973 = vmatprep.subr.mxu0 0.0
          %7974 = vmatpush2.msra.mxu0 0.0
          %7975 = vmatprep.subr.mxu0 0.0
          %7976 = vmatpush2.msra.mxu0 0.0
          %7977 = vmatprep.mubr.f32.mxu0 0.0
          %v7978 = vand.u32 %v7684, 4294901760
          %v7979 = vsub.f32 %v7684, %v7978
          %v7980 = vand.u32 %v7979, 4294901760
          %7981 = vmatmul.mubr.f32.gmra.mxu0 %v7980
          %v7982 = vpop.f32.mrf.mxu0
          %v7983 = vadd.f32 %v7909, %v7982
          %v7984 = vpop.f32.mrf.mxu0
          %7985 = vdwg.mxu0
          %7986 = vmatprep.subr.mxu0 0.0
          %7987 = vmatpush1.msra.mxu0 0.0
          %7988 = vmatprep.subr.mxu0 0.0
          %7989 = vmatpush1.msra.mxu0 0.0
          %7990 = vmatprep.subr.mxu0 0.0
          %7991 = vmatpush1.msra.mxu0 0.0
          %7992 = vmatprep.subr.mxu0 0.0
          %7993 = vmatpush1.msra.mxu0 0.0
          %7994 = vmatprep.subr.mxu0 0.0
          %7995 = vmatpush1.msra.mxu0 0.0
          %7996 = vmatprep.subr.mxu0 0.0
          %7997 = vmatpush1.msra.mxu0 0.0
          %7998 = vmatprep.subr.mxu0 0.0
          %7999 = vmatpush1.msra.mxu0 0.0
          %8000 = vmatprep.subr.mxu0 0.0
          %8001 = vmatpush1.msra.mxu0 0.0
          %8002 = vmatprep.subr.mxu0 0.0
          %8003 = vmatpush1.msra.mxu0 0.0
          %8004 = vmatprep.subr.mxu0 0.0
          %8005 = vmatpush1.msra.mxu0 0.0
          %8006 = vmatprep.subr.mxu0 0.0
          %8007 = vmatpush1.msra.mxu0 0.0
          %8008 = vmatprep.subr.mxu0 0.0
          %8009 = vmatpush1.msra.mxu0 0.0
          %8010 = vmatprep.subr.mxu0 0.0
          %8011 = vmatpush1.msra.mxu0 0.0
          %8012 = vmatprep.subr.mxu0 0.0
          %8013 = vmatpush1.msra.mxu0 0.0
          %8014 = vmatprep.subr.mxu0 0.0
          %8015 = vmatpush1.msra.mxu0 0.0
          %8016 = vmatprep.subr.mxu0 0.0
          %v8017 = vand.u32 %v7682, 4294901760
          %v8018 = vsub.f32 %v7682, %v8017
          %v8019 = vand.u32 %v8018, 4294901760
          %8020 = vmatpush1.msra.mxu0 %v8019
          %8021 = vmatprep.subr.mxu0 0.0
          %8022 = vmatpush2.msra.mxu0 0.0
          %8023 = vmatprep.subr.mxu0 0.0
          %8024 = vmatpush2.msra.mxu0 0.0
          %8025 = vmatprep.subr.mxu0 0.0
          %8026 = vmatpush2.msra.mxu0 0.0
          %8027 = vmatprep.subr.mxu0 0.0
          %8028 = vmatpush2.msra.mxu0 0.0
          %8029 = vmatprep.subr.mxu0 0.0
          %8030 = vmatpush2.msra.mxu0 0.0
          %8031 = vmatprep.subr.mxu0 0.0
          %8032 = vmatpush2.msra.mxu0 0.0
          %8033 = vmatprep.subr.mxu0 0.0
          %8034 = vmatpush2.msra.mxu0 0.0
          %8035 = vmatprep.subr.mxu0 0.0
          %8036 = vmatpush2.msra.mxu0 0.0
          %8037 = vmatprep.subr.mxu0 0.0
          %8038 = vmatpush2.msra.mxu0 0.0
          %8039 = vmatprep.subr.mxu0 0.0
          %8040 = vmatpush2.msra.mxu0 0.0
          %8041 = vmatprep.subr.mxu0 0.0
          %8042 = vmatpush2.msra.mxu0 0.0
          %8043 = vmatprep.subr.mxu0 0.0
          %8044 = vmatpush2.msra.mxu0 0.0
          %8045 = vmatprep.subr.mxu0 0.0
          %8046 = vmatpush2.msra.mxu0 0.0
          %8047 = vmatprep.subr.mxu0 0.0
          %8048 = vmatpush2.msra.mxu0 0.0
          %8049 = vmatprep.subr.mxu0 0.0
          %8050 = vmatpush2.msra.mxu0 0.0
          %8051 = vmatprep.subr.mxu0 0.0
          %8052 = vmatpush2.msra.mxu0 0.0
          %8053 = vmatprep.mubr.f32.mxu0 0.0
          %v8054 = vand.u32 %v7684, 4294901760
          %8055 = vmatmul.mubr.f32.gmra.mxu0 %v8054
          %v8056 = vpop.f32.mrf.mxu0
          %v8057 = vadd.f32 %v7983, %v8056
          %v8058 = vpop.f32.mrf.mxu0
          %8059 = vdwg.mxu0
          %8060 = vmatprep.subr.mxu0 0.0
          %8061 = vmatpush1.msra.mxu0 0.0
          %8062 = vmatprep.subr.mxu0 0.0
          %8063 = vmatpush1.msra.mxu0 0.0
          %8064 = vmatprep.subr.mxu0 0.0
          %8065 = vmatpush1.msra.mxu0 0.0
          %8066 = vmatprep.subr.mxu0 0.0
          %8067 = vmatpush1.msra.mxu0 0.0
          %8068 = vmatprep.subr.mxu0 0.0
          %8069 = vmatpush1.msra.mxu0 0.0
          %8070 = vmatprep.subr.mxu0 0.0
          %8071 = vmatpush1.msra.mxu0 0.0
          %8072 = vmatprep.subr.mxu0 0.0
          %8073 = vmatpush1.msra.mxu0 0.0
          %8074 = vmatprep.subr.mxu0 0.0
          %8075 = vmatpush1.msra.mxu0 0.0
          %8076 = vmatprep.subr.mxu0 0.0
          %8077 = vmatpush1.msra.mxu0 0.0
          %8078 = vmatprep.subr.mxu0 0.0
          %8079 = vmatpush1.msra.mxu0 0.0
          %8080 = vmatprep.subr.mxu0 0.0
          %8081 = vmatpush1.msra.mxu0 0.0
          %8082 = vmatprep.subr.mxu0 0.0
          %8083 = vmatpush1.msra.mxu0 0.0
          %8084 = vmatprep.subr.mxu0 0.0
          %8085 = vmatpush1.msra.mxu0 0.0
          %8086 = vmatprep.subr.mxu0 0.0
          %8087 = vmatpush1.msra.mxu0 0.0
          %8088 = vmatprep.subr.mxu0 0.0
          %8089 = vmatpush1.msra.mxu0 0.0
          %8090 = vmatprep.subr.mxu0 0.0
          %v8091 = vand.u32 %v7682, 4294901760
          %8092 = vmatpush1.msra.mxu0 %v8091
          %8093 = vmatprep.subr.mxu0 0.0
          %8094 = vmatpush2.msra.mxu0 0.0
          %8095 = vmatprep.subr.mxu0 0.0
          %8096 = vmatpush2.msra.mxu0 0.0
          %8097 = vmatprep.subr.mxu0 0.0
          %8098 = vmatpush2.msra.mxu0 0.0
          %8099 = vmatprep.subr.mxu0 0.0
          %8100 = vmatpush2.msra.mxu0 0.0
          %8101 = vmatprep.subr.mxu0 0.0
          %8102 = vmatpush2.msra.mxu0 0.0
          %8103 = vmatprep.subr.mxu0 0.0
          %8104 = vmatpush2.msra.mxu0 0.0
          %8105 = vmatprep.subr.mxu0 0.0
          %8106 = vmatpush2.msra.mxu0 0.0
          %8107 = vmatprep.subr.mxu0 0.0
          %8108 = vmatpush2.msra.mxu0 0.0
          %8109 = vmatprep.subr.mxu0 0.0
          %8110 = vmatpush2.msra.mxu0 0.0
          %8111 = vmatprep.subr.mxu0 0.0
          %8112 = vmatpush2.msra.mxu0 0.0
          %8113 = vmatprep.subr.mxu0 0.0
          %8114 = vmatpush2.msra.mxu0 0.0
          %8115 = vmatprep.subr.mxu0 0.0
          %8116 = vmatpush2.msra.mxu0 0.0
          %8117 = vmatprep.subr.mxu0 0.0
          %8118 = vmatpush2.msra.mxu0 0.0
          %8119 = vmatprep.subr.mxu0 0.0
          %8120 = vmatpush2.msra.mxu0 0.0
          %8121 = vmatprep.subr.mxu0 0.0
          %8122 = vmatpush2.msra.mxu0 0.0
          %8123 = vmatprep.subr.mxu0 0.0
          %8124 = vmatpush2.msra.mxu0 0.0
          %8125 = vmatprep.mubr.f32.mxu0 0.0
          %v8126 = vand.u32 %v7684, 4294901760
          %8127 = vmatmul.mubr.f32.gmra.mxu0 %v8126
          %v8128 = vpop.f32.mrf.mxu0
          %v8129 = vadd.f32 %v8057, %v8128
          %v8130 = vpop.f32.mrf.mxu0
          %8131 = vdwg.mxu0
          %8133 = vset.pattern.permute.xlu0 0
          %8134 = vperm.xlu0 %8133, %v354
          %v8135 = vpop.permute.xlu0 %8134
          %v8137 = vadd.f32 %v7679, %v8135
          %v8138 = vlog2.pop %v8129
          %v8139 = vmul.f32 %v8138, 0.6931472
          %v8140 = vadd.f32 %v8137, %v8139
          %v8141 = vadd.f32 %v8140, %v7180
          %vm8142 = vcmp.gt.f32.partialorder %v7183, 0.5
          %v8143 = vsel %vm8142, 1, 0
          %v8144 = vlaneseq
          %v8145 = vshrl.u32 %v8144, 7
          %v8146 = vsub.s32 1, %v8145
          %v8147 = vrot.slane %v8143, %v8146
          %vm8148 = vcmp.eq.s32.totalorder %v8147, 1
          %v8149 = vsel %vm8148, %v8141, %v7673
          %8150 = vst [vmem:[#allocation2] sm:$0xff] %v8149
        $region120: #{tpu_custom_call.1} parent=47 // pred_fallthru
          _
        %8151 = vst [vmem:[#allocation4] sm:$0xff] %v7190
        %p8152 = scmp.eq.s32.totalorder %s30, 2
        // Predicated region
        $region121: #{tpu_custom_call.1} parent=47 // pred_check
          %p8153 = pneg %p8152
        $region122: #{tpu_custom_call.1} parent=47 // pred_check_branch
          %8155 = sbr.rel (%p8153) target = $region124
        $region123: #{tpu_custom_call.1} parent=47 // pred_region
          %v8156 = vld [vmem:[#allocation2] sm:$0xff]
          %v8157 = vadd.f32 %v8156, %v358
          %v8158 = vrot.slane %v8157, 4
          %v8159 = vmax.f32 %v8157, %v8158
          %v8160 = vrot.slane %v8159, 2
          %v8161 = vmax.f32 %v8159, %v8160
          %v8162 = vrot.slane %v8161, 1
          %v8163 = vmax.f32 %v8161, %v8162
          %v8164 = vsub.f32 %v8157, %v8163
          %v8165 = vmul.f32 %v8164, 1.442695
          %v8166 = vpow.pop %v8165
          %v8167 = vrot.slane %v8166, 4
          %v8168 = vadd.f32 %v8166, %v8167
          %v8169 = vrot.slane %v8168, 2
          %v8170 = vadd.f32 %v8168, %v8169
          %v8171 = vrot.slane %v8170, 1
          %v8172 = vadd.f32 %v8170, %v8171
          %v8173 = vlog2.pop %v8172
          %v8174 = vmul.f32 %v8173, 0.6931472
          %v8175 = vadd.f32 %v8163, %v8174
          %v8176 = vld [vmem:[#allocation3] sm:$0xff]
          %v8177 = vrot.slane %v8176, 4
          %v8178 = vadd.f32 %v8176, %v8177
          %v8179 = vrot.slane %v8178, 2
          %v8180 = vadd.f32 %v8178, %v8179
          %v8181 = vrot.slane %v8180, 1
          %v8182 = vadd.f32 %v8180, %v8181
          %v8183 = vsub.f32 %v8182, %v8175
          %8184 = vst [vmem:[#allocation10] sm:$0x1] %v8183
        $region124: #{tpu_custom_call.1} parent=47 // pred_fallthru
          _
        // Predicated region
        $region125: #{tpu_custom_call.1} parent=47 // pred_check
          %p8185 = pneg %p216
        $region126: #{tpu_custom_call.1} parent=47 // pred_check_branch
          %8187 = sbr.rel (%p8185) target = $region128
        $region127: #{tpu_custom_call.1} parent=47 // pred_region
          %s8189 = ssub.s32 16, 16
          %8190 = vsyncadd [#allocation7], %s8189
          %s8191 = smul.addr %s29, 16
          %s8192 = scalar_lea.hbm %s7, %s8191
          %s8194 = sshll.u32 [#allocation10], 4
          %s8195 = int_to_ptr.vmem [resolvable:$true] %s8194
          %8197 = dma.vmem_to_hbm [thread:$0]  %s8195, 16, %s8192, [#allocation7]
        $region128: #{tpu_custom_call.1} parent=47 // pred_fallthru
          _
        // Predicated region
        $region129: #{tpu_custom_call.1} parent=47 // pred_check
          %p8198 = pneg %p216
        $region130: #{tpu_custom_call.1} parent=47 // pred_check_branch
          %8200 = sbr.rel (%p8198) target = $region132
        $region131: #{tpu_custom_call.1} parent=47 // pred_region
          %8201 = dma.done [#allocation7], 16
        $region132: #{tpu_custom_call.1} parent=47 // pred_fallthru
          _
      $region48: #{tpu_custom_call.1} parent=5 // pred_fallthru
        _
      %p8202 = scmp.le.s32.totalorder 2, %s20
      // Predicated region
      $region133: #{tpu_custom_call.1} parent=5 // pred_check
        %p8203 = pneg %p8202
      $region134: #{tpu_custom_call.1} parent=5 // pred_check_branch
        %8205 = sbr.rel (%p8203) target = $region136
      $region135: #{tpu_custom_call.1} parent=5 // pred_region
        %s8206 = ssub.s32 %s20, 2
      $region136: #{tpu_custom_call.1} parent=5 // pred_fallthru
        _
    $region6: #{tpu_custom_call.1} parent=1 // loop_footer
      %s24 = sadd.s32 1, %s20
    $region7: #{tpu_custom_call.1} parent=1 // loop_footer_branch
      %19 = sbr.rel target = $region3
    $region8: #{tpu_custom_call.1} parent=1 // loop_exit
      _
    %8207 = vsyncpa [#allocation6], 1
    %s8208 = scalar_lea.sflag [#allocation6], 1
    %8209 = vsyncpa %s8208, 1
    %8210 = vsyncpa [#allocation9], 1
    %s8211 = scalar_lea.sflag [#allocation9], 1
    %8212 = vsyncpa %s8211, 1
    %8213 = vsyncpa [#allocation7], 1
    %s8214 = scalar_lea.sflag [#allocation7], 1
    %8215 = vsyncpa %s8214, 1

</llo_original>
